<compile_context>
chip_gen: v7x
topology: tpu7x:2x2x1
jax: 0.10.0
libtpu: 0.0.40
codegen_flags: <defaults>
</compile_context>

<pallas_src>
import functools

import jax
import jax.numpy as jnp
from jax.experimental import pallas as pl
from jax.experimental.pallas import tpu as pltpu


# ------------------------------ conv helper ---------------------------------


def _conv3x3_samepad(src, w, ext, h_idx, w_idx, wstride):
    """3x3 same-convolution (zero padding) on a lane-flattened spatial grid.

    src   : (N, C, S) f32; pixel (h, w) of image n, channel c lives at lane
            h*wstride + w.  The valid image is the [0, ext) x [0, ext) corner.
    w     : (3, 3, Cin, Cout, 1) f32 value (HWIO + trailing singleton lane dim,
            so w[dy, dx, ci] is a (Cout, 1) sublane-oriented column).
    h_idx, w_idx : (1, 1, S) int32 lane -> (h, w) decomposition.
    Returns (N, Cout, S) f32; lanes whose (h, w) lie in [0, ext)^2 hold the
    convolution output, other lanes hold harmless finite junk.
    """
    n, c, s = src.shape
    acc = jnp.zeros(src.shape, jnp.float32)
    for dy in range(3):
        for dx in range(3):
            # source lane = destination lane + shift
            shift = (dy - 1) * wstride + (dx - 1)
            tap = pltpu.roll(src, (-shift) % s, axis=2) if shift else src
            hh = h_idx + (dy - 1)
            ww = w_idx + (dx - 1)
            ok = (hh >= 0) & (hh < ext) & (ww >= 0) & (ww < ext)
            tap = jnp.where(ok, tap, 0.0)                 # zero-padding taps
            for ci in range(c):
                # acc[n, co, :] += tap[n, ci, :] * w[dy, dx, ci, co]
                acc = acc + tap[:, ci:ci + 1, :] * w[dy, dx, ci]
    return acc


# ------------------------------ fused kernel --------------------------------


def _fused_kernel(H, W, x_ref, wp1_ref, gamma_ref, beta_ref,
                  w4_ref, b4_ref, w5_ref, b5_ref, o_ref):
    N, C, S = x_ref.shape                       # S == H * W, W a power of two
    lane = jax.lax.broadcasted_iota(jnp.int32, (1, 1, S), 2)
    h_idx = jnp.right_shift(lane, W.bit_length() - 1)
    w_idx = jnp.bitwise_and(lane, W - 1)

    x = x_ref[...].astype(jnp.float32)
    w1 = wp1_ref[...].astype(jnp.float32)
    w4 = w4_ref[...].astype(jnp.float32)
    w5 = w5_ref[...].astype(jnp.float32)

    # ---- phase1_1: conv (no bias) -> LeakyReLU(0.1) -> BatchNorm2d (training)
    a1 = _conv3x3_samepad(x, w1, H, h_idx, w_idx, W)
    a1 = jnp.where(a1 >= 0.0, a1, 0.1 * a1)
    inv_m = 1.0 / float(N * S)
    mean = jnp.sum(jnp.sum(a1, axis=2, keepdims=True),
                   axis=0, keepdims=True) * inv_m          # (1, C, 1)
    cen = a1 - mean
    var = jnp.sum(jnp.sum(cen * cen, axis=2, keepdims=True),
                  axis=0, keepdims=True) * inv_m           # biased variance
    inv = jax.lax.rsqrt(var + 1e-5)
    out6 = cen * (inv * gamma_ref[...]) + beta_ref[...]

    # ---- conv4 (3x3, pad=1, bias); input is out6 (+ out7 == 0) --------------
    a4 = _conv3x3_samepad(out6, w4, H, h_idx, w_idx, W) + b4_ref[...]

    # ---- maxpool3: MaxPool2d(kernel=2, stride=1) -> valid extent (H-1, W-1) -
    mp = jnp.maximum(
        jnp.maximum(a4, pltpu.roll(a4, S - 1, axis=2)),
        jnp.maximum(pltpu.roll(a4, S - W, axis=2),
                    pltpu.roll(a4, S - W - 1, axis=2)))

    # ---- conv5 (3x3, pad=1, bias) on the (H-1, W-1) image --------------------
    a5 = _conv3x3_samepad(mp, w5, H - 1, h_idx, w_idx, W) + b5_ref[...]

    # ---- compact stride-W grid -> dense (H-1)*(W-1) trailing dim, one store --
    Ho, Wo = H - 1, W - 1
    compact = jnp.zeros_like(a5)
    for h in range(Ho):
        rolled = pltpu.roll(a5, (S - h) % S, axis=2) if h else a5
        row = (lane >= h * Wo) & (lane < (h + 1) * Wo)
        compact = compact + jnp.where(row, rolled, 0.0)
    o_ref[...] = compact[:, :, :Ho * Wo].astype(o_ref.dtype)


# ------------------------------ model forward --------------------------------


def architecture_forward(x_nchw, params):
    p = params
    N, C, H, W = x_nchw.shape
    assert W & (W - 1) == 0, "kernel assumes W is a power of two"
    Cout = p["w4"].shape[-1]
    assert C == Cout, "forward only type-checks when in_channels == out_channels"
    Ho, Wo = H - 1, W - 1

    # Everything outside the pallas_call is a free, layout-preserving reshape
    # (bitcast): no extra XLA kernels, no HBM round trips.
    x_flat = x_nchw.reshape(N, C, H * W).astype(jnp.float32)
    col = lambda v: v.reshape(Cout, 1)
    hwio = lambda w: w.reshape(3, 3, C, Cout, 1)

    vmem = lambda: pl.BlockSpec(memory_space=pltpu.MemorySpace.VMEM)
    out_flat = pl.pallas_call(
        functools.partial(_fused_kernel, H, W),
        out_shape=jax.ShapeDtypeStruct((N, Cout, Ho * Wo), jnp.float32),
        in_specs=[vmem() for _ in range(8)],
        out_specs=vmem(),
        compiler_params=pltpu.CompilerParams(
            vmem_limit_bytes=8 * 1024 * 1024),  # actual use < 1 MiB; headroom
    )(x_flat,
      hwio(p["w_p1"]), col(p["bn_gamma"]), col(p["bn_beta"]),
      hwio(p["w4"]), col(p["b4"]),
      hwio(p["w5"]), col(p["b5"]))

    return out_flat.reshape(N, Cout, Ho, Wo)


def make_params(key, c_in, c_out):
    # Only parameters reachable from the returned branch are needed
    # (phase1_1 conv + BN, conv4, conv5).  Conv weights built directly in HWIO.
    ks = jax.random.split(key, 5)

    def w_hwio(k, cin, cout):
        return jax.random.normal(k, (3, 3, cin, cout), jnp.float32) * 0.1

    def bias(k, cout):
        return jax.random.normal(k, (cout,), jnp.float32) * 0.05

    return {
        "w_p1": w_hwio(ks[0], c_in, c_out),
        "bn_gamma": jnp.ones((c_out,), jnp.float32),
        "bn_beta": jnp.zeros((c_out,), jnp.float32),
        "w4": w_hwio(ks[1], c_out, c_out), "b4": bias(ks[2], c_out),
        "w5": w_hwio(ks[3], c_out, c_out), "b5": bias(ks[4], c_out),
    }


if __name__ == "__main__":
    key = jax.random.PRNGKey(0)
    kx, kp = jax.random.split(key)
    # forward only type-checks when in_channels == out_channels
    N, C, H, W = 2, 4, 16, 16
    x = jax.random.normal(kx, (N, C, H, W), jnp.float32)
    params = make_params(kp, C, C)

    out = jax.jit(architecture_forward)(x, params)
    out = jax.block_until_ready(out)
    assert out.shape == (N, C, H - 1, W - 1), out.shape
    assert bool(jnp.all(jnp.isfinite(out)))
    print("KERNEL_OK")
</pallas_src>

<mosaic_0001>
module attributes {stable_mosaic.version = 11 : i64} {
  func.func @_fused_kernel(%arg0: memref<2x4x256xf32, #tpu.memory_space<vmem>>, %arg1: memref<3x3x4x4x1xf32, #tpu.memory_space<vmem>>, %arg2: memref<4x1xf32, #tpu.memory_space<vmem>>, %arg3: memref<4x1xf32, #tpu.memory_space<vmem>>, %arg4: memref<3x3x4x4x1xf32, #tpu.memory_space<vmem>>, %arg5: memref<4x1xf32, #tpu.memory_space<vmem>>, %arg6: memref<3x3x4x4x1xf32, #tpu.memory_space<vmem>>, %arg7: memref<4x1xf32, #tpu.memory_space<vmem>>, %arg8: memref<2x4x225xf32, #tpu.memory_space<vmem>>) attributes {dimension_semantics = [], scalar_prefetch = 0 : i64, scratch_operands = 0 : i64, tpu.core_type = #tpu.core_type<tc>} {
    %0 = tpu.iota {dimensions = array<i32: 2>} : vector<1x1x256xi32>
    %c4_i32 = arith.constant 4 : i32
    %1 = vector.broadcast %c4_i32 : i32 to vector<1x1x256xi32>
    %2 = arith.shrsi %0, %1 : vector<1x1x256xi32>
    %c15_i32 = arith.constant 15 : i32
    %3 = vector.broadcast %c15_i32 : i32 to vector<1x1x256xi32>
    %4 = arith.andi %0, %3 : vector<1x1x256xi32>
    %c0 = arith.constant 0 : index
    %c0_0 = arith.constant 0 : index
    %c0_1 = arith.constant 0 : index
    %5 = vector.load %arg0[%c0, %c0_0, %c0_1] : memref<2x4x256xf32, #tpu.memory_space<vmem>>, vector<2x4x256xf32>
    %c0_2 = arith.constant 0 : index
    %c0_3 = arith.constant 0 : index
    %c0_4 = arith.constant 0 : index
    %c0_5 = arith.constant 0 : index
    %c0_6 = arith.constant 0 : index
    %6 = vector.load %arg1[%c0_2, %c0_3, %c0_4, %c0_5, %c0_6] : memref<3x3x4x4x1xf32, #tpu.memory_space<vmem>>, vector<3x3x4x4x1xf32>
    %c0_7 = arith.constant 0 : index
    %c0_8 = arith.constant 0 : index
    %c0_9 = arith.constant 0 : index
    %c0_10 = arith.constant 0 : index
    %c0_11 = arith.constant 0 : index
    %7 = vector.load %arg4[%c0_7, %c0_8, %c0_9, %c0_10, %c0_11] : memref<3x3x4x4x1xf32, #tpu.memory_space<vmem>>, vector<3x3x4x4x1xf32>
    %c0_12 = arith.constant 0 : index
    %c0_13 = arith.constant 0 : index
    %c0_14 = arith.constant 0 : index
    %c0_15 = arith.constant 0 : index
    %c0_16 = arith.constant 0 : index
    %8 = vector.load %arg6[%c0_12, %c0_13, %c0_14, %c0_15, %c0_16] : memref<3x3x4x4x1xf32, #tpu.memory_space<vmem>>, vector<3x3x4x4x1xf32>
    %cst = arith.constant 0.000000e+00 : f32
    %9 = vector.broadcast %cst : f32 to vector<2x4x256xf32>
    %c17_i32 = arith.constant 17 : i32
    %10 = tpu.dynamic_rotate %5 by %c17_i32 dim 2 : vector<2x4x256xf32>, i32 -> vector<2x4x256xf32>
    %c-1_i32 = arith.constant -1 : i32
    %11 = vector.broadcast %c-1_i32 : i32 to vector<1x1x256xi32>
    %12 = arith.addi %2, %11 : vector<1x1x256xi32>
    %c-1_i32_17 = arith.constant -1 : i32
    %13 = vector.broadcast %c-1_i32_17 : i32 to vector<1x1x256xi32>
    %14 = arith.addi %4, %13 : vector<1x1x256xi32>
    %c0_i32 = arith.constant 0 : i32
    %15 = vector.broadcast %c0_i32 : i32 to vector<1x1x256xi32>
    %16 = arith.cmpi sge, %12, %15 : vector<1x1x256xi32>
    %c16_i32 = arith.constant 16 : i32
    %17 = vector.broadcast %c16_i32 : i32 to vector<1x1x256xi32>
    %18 = arith.cmpi slt, %12, %17 : vector<1x1x256xi32>
    %19 = arith.andi %16, %18 : vector<1x1x256xi1>
    %c0_i32_18 = arith.constant 0 : i32
    %20 = vector.broadcast %c0_i32_18 : i32 to vector<1x1x256xi32>
    %21 = arith.cmpi sge, %14, %20 : vector<1x1x256xi32>
    %22 = arith.andi %19, %21 : vector<1x1x256xi1>
    %c16_i32_19 = arith.constant 16 : i32
    %23 = vector.broadcast %c16_i32_19 : i32 to vector<1x1x256xi32>
    %24 = arith.cmpi slt, %14, %23 : vector<1x1x256xi32>
    %25 = arith.andi %22, %24 : vector<1x1x256xi1>
    %cst_20 = arith.constant 0.000000e+00 : f32
    %26 = vector.shape_cast %25 : vector<1x1x256xi1> to vector<1x1x256xi1>
    %27 = vector.broadcast %26 : vector<1x1x256xi1> to vector<2x4x256xi1>
    %28 = vector.broadcast %cst_20 : f32 to vector<2x4x256xf32>
    %29 = arith.select %27, %10, %28 : vector<2x4x256xi1>, vector<2x4x256xf32>
    %30 = vector.extract_strided_slice %29 {offsets = [0, 0, 0], sizes = [2, 1, 256], strides = [1, 1, 1]} : vector<2x4x256xf32> to vector<2x1x256xf32>
    %31 = vector.extract_strided_slice %6 {offsets = [0, 0, 0, 0, 0], sizes = [1, 1, 1, 4, 1], strides = [1, 1, 1, 1, 1]} : vector<3x3x4x4x1xf32> to vector<1x1x1x4x1xf32>
    %32 = vector.shape_cast %31 : vector<1x1x1x4x1xf32> to vector<4x1xf32>
    %33 = vector.shape_cast %32 : vector<4x1xf32> to vector<1x4x1xf32>
    %34 = vector.broadcast %30 : vector<2x1x256xf32> to vector<2x4x256xf32>
    %35 = vector.broadcast %33 : vector<1x4x1xf32> to vector<2x4x256xf32>
    %36 = arith.mulf %34, %35 : vector<2x4x256xf32>
    %37 = arith.addf %9, %36 : vector<2x4x256xf32>
    %38 = vector.extract_strided_slice %29 {offsets = [0, 1, 0], sizes = [2, 1, 256], strides = [1, 1, 1]} : vector<2x4x256xf32> to vector<2x1x256xf32>
    %39 = vector.extract_strided_slice %6 {offsets = [0, 0, 1, 0, 0], sizes = [1, 1, 1, 4, 1], strides = [1, 1, 1, 1, 1]} : vector<3x3x4x4x1xf32> to vector<1x1x1x4x1xf32>
    %40 = vector.shape_cast %39 : vector<1x1x1x4x1xf32> to vector<4x1xf32>
    %41 = vector.shape_cast %40 : vector<4x1xf32> to vector<1x4x1xf32>
    %42 = vector.broadcast %38 : vector<2x1x256xf32> to vector<2x4x256xf32>
    %43 = vector.broadcast %41 : vector<1x4x1xf32> to vector<2x4x256xf32>
    %44 = arith.mulf %42, %43 : vector<2x4x256xf32>
    %45 = arith.addf %37, %44 : vector<2x4x256xf32>
    %46 = vector.extract_strided_slice %29 {offsets = [0, 2, 0], sizes = [2, 1, 256], strides = [1, 1, 1]} : vector<2x4x256xf32> to vector<2x1x256xf32>
    %47 = vector.extract_strided_slice %6 {offsets = [0, 0, 2, 0, 0], sizes = [1, 1, 1, 4, 1], strides = [1, 1, 1, 1, 1]} : vector<3x3x4x4x1xf32> to vector<1x1x1x4x1xf32>
    %48 = vector.shape_cast %47 : vector<1x1x1x4x1xf32> to vector<4x1xf32>
    %49 = vector.shape_cast %48 : vector<4x1xf32> to vector<1x4x1xf32>
    %50 = vector.broadcast %46 : vector<2x1x256xf32> to vector<2x4x256xf32>
    %51 = vector.broadcast %49 : vector<1x4x1xf32> to vector<2x4x256xf32>
    %52 = arith.mulf %50, %51 : vector<2x4x256xf32>
    %53 = arith.addf %45, %52 : vector<2x4x256xf32>
    %54 = vector.extract_strided_slice %29 {offsets = [0, 3, 0], sizes = [2, 1, 256], strides = [1, 1, 1]} : vector<2x4x256xf32> to vector<2x1x256xf32>
    %55 = vector.extract_strided_slice %6 {offsets = [0, 0, 3, 0, 0], sizes = [1, 1, 1, 4, 1], strides = [1, 1, 1, 1, 1]} : vector<3x3x4x4x1xf32> to vector<1x1x1x4x1xf32>
    %56 = vector.shape_cast %55 : vector<1x1x1x4x1xf32> to vector<4x1xf32>
    %57 = vector.shape_cast %56 : vector<4x1xf32> to vector<1x4x1xf32>
    %58 = vector.broadcast %54 : vector<2x1x256xf32> to vector<2x4x256xf32>
    %59 = vector.broadcast %57 : vector<1x4x1xf32> to vector<2x4x256xf32>
    %60 = arith.mulf %58, %59 : vector<2x4x256xf32>
    %61 = arith.addf %53, %60 : vector<2x4x256xf32>
    %c16_i32_21 = arith.constant 16 : i32
    %62 = tpu.dynamic_rotate %5 by %c16_i32_21 dim 2 : vector<2x4x256xf32>, i32 -> vector<2x4x256xf32>
    %c-1_i32_22 = arith.constant -1 : i32
    %63 = vector.broadcast %c-1_i32_22 : i32 to vector<1x1x256xi32>
    %64 = arith.addi %2, %63 : vector<1x1x256xi32>
    %c0_i32_23 = arith.constant 0 : i32
    %65 = vector.broadcast %c0_i32_23 : i32 to vector<1x1x256xi32>
    %66 = arith.addi %4, %65 : vector<1x1x256xi32>
    %c0_i32_24 = arith.constant 0 : i32
    %67 = vector.broadcast %c0_i32_24 : i32 to vector<1x1x256xi32>
    %68 = arith.cmpi sge, %64, %67 : vector<1x1x256xi32>
    %c16_i32_25 = arith.constant 16 : i32
    %69 = vector.broadcast %c16_i32_25 : i32 to vector<1x1x256xi32>
    %70 = arith.cmpi slt, %64, %69 : vector<1x1x256xi32>
    %71 = arith.andi %68, %70 : vector<1x1x256xi1>
    %c0_i32_26 = arith.constant 0 : i32
    %72 = vector.broadcast %c0_i32_26 : i32 to vector<1x1x256xi32>
    %73 = arith.cmpi sge, %66, %72 : vector<1x1x256xi32>
    %74 = arith.andi %71, %73 : vector<1x1x256xi1>
    %c16_i32_27 = arith.constant 16 : i32
    %75 = vector.broadcast %c16_i32_27 : i32 to vector<1x1x256xi32>
    %76 = arith.cmpi slt, %66, %75 : vector<1x1x256xi32>
    %77 = arith.andi %74, %76 : vector<1x1x256xi1>
    %cst_28 = arith.constant 0.000000e+00 : f32
    %78 = vector.shape_cast %77 : vector<1x1x256xi1> to vector<1x1x256xi1>
    %79 = vector.broadcast %78 : vector<1x1x256xi1> to vector<2x4x256xi1>
    %80 = vector.broadcast %cst_28 : f32 to vector<2x4x256xf32>
    %81 = arith.select %79, %62, %80 : vector<2x4x256xi1>, vector<2x4x256xf32>
    %82 = vector.extract_strided_slice %81 {offsets = [0, 0, 0], sizes = [2, 1, 256], strides = [1, 1, 1]} : vector<2x4x256xf32> to vector<2x1x256xf32>
    %83 = vector.extract_strided_slice %6 {offsets = [0, 1, 0, 0, 0], sizes = [1, 1, 1, 4, 1], strides = [1, 1, 1, 1, 1]} : vector<3x3x4x4x1xf32> to vector<1x1x1x4x1xf32>
    %84 = vector.shape_cast %83 : vector<1x1x1x4x1xf32> to vector<4x1xf32>
    %85 = vector.shape_cast %84 : vector<4x1xf32> to vector<1x4x1xf32>
    %86 = vector.broadcast %82 : vector<2x1x256xf32> to vector<2x4x256xf32>
    %87 = vector.broadcast %85 : vector<1x4x1xf32> to vector<2x4x256xf32>
    %88 = arith.mulf %86, %87 : vector<2x4x256xf32>
    %89 = arith.addf %61, %88 : vector<2x4x256xf32>
    %90 = vector.extract_strided_slice %81 {offsets = [0, 1, 0], sizes = [2, 1, 256], strides = [1, 1, 1]} : vector<2x4x256xf32> to vector<2x1x256xf32>
    %91 = vector.extract_strided_slice %6 {offsets = [0, 1, 1, 0, 0], sizes = [1, 1, 1, 4, 1], strides = [1, 1, 1, 1, 1]} : vector<3x3x4x4x1xf32> to vector<1x1x1x4x1xf32>
    %92 = vector.shape_cast %91 : vector<1x1x1x4x1xf32> to vector<4x1xf32>
    %93 = vector.shape_cast %92 : vector<4x1xf32> to vector<1x4x1xf32>
    %94 = vector.broadcast %90 : vector<2x1x256xf32> to vector<2x4x256xf32>
    %95 = vector.broadcast %93 : vector<1x4x1xf32> to vector<2x4x256xf32>
    %96 = arith.mulf %94, %95 : vector<2x4x256xf32>
    %97 = arith.addf %89, %96 : vector<2x4x256xf32>
    %98 = vector.extract_strided_slice %81 {offsets = [0, 2, 0], sizes = [2, 1, 256], strides = [1, 1, 1]} : vector<2x4x256xf32> to vector<2x1x256xf32>
    %99 = vector.extract_strided_slice %6 {offsets = [0, 1, 2, 0, 0], sizes = [1, 1, 1, 4, 1], strides = [1, 1, 1, 1, 1]} : vector<3x3x4x4x1xf32> to vector<1x1x1x4x1xf32>
    %100 = vector.shape_cast %99 : vector<1x1x1x4x1xf32> to vector<4x1xf32>
    %101 = vector.shape_cast %100 : vector<4x1xf32> to vector<1x4x1xf32>
    %102 = vector.broadcast %98 : vector<2x1x256xf32> to vector<2x4x256xf32>
    %103 = vector.broadcast %101 : vector<1x4x1xf32> to vector<2x4x256xf32>
    %104 = arith.mulf %102, %103 : vector<2x4x256xf32>
    %105 = arith.addf %97, %104 : vector<2x4x256xf32>
    %106 = vector.extract_strided_slice %81 {offsets = [0, 3, 0], sizes = [2, 1, 256], strides = [1, 1, 1]} : vector<2x4x256xf32> to vector<2x1x256xf32>
    %107 = vector.extract_strided_slice %6 {offsets = [0, 1, 3, 0, 0], sizes = [1, 1, 1, 4, 1], strides = [1, 1, 1, 1, 1]} : vector<3x3x4x4x1xf32> to vector<1x1x1x4x1xf32>
    %108 = vector.shape_cast %107 : vector<1x1x1x4x1xf32> to vector<4x1xf32>
    %109 = vector.shape_cast %108 : vector<4x1xf32> to vector<1x4x1xf32>
    %110 = vector.broadcast %106 : vector<2x1x256xf32> to vector<2x4x256xf32>
    %111 = vector.broadcast %109 : vector<1x4x1xf32> to vector<2x4x256xf32>
    %112 = arith.mulf %110, %111 : vector<2x4x256xf32>
    %113 = arith.addf %105, %112 : vector<2x4x256xf32>
    %c15_i32_29 = arith.constant 15 : i32
    %114 = tpu.dynamic_rotate %5 by %c15_i32_29 dim 2 : vector<2x4x256xf32>, i32 -> vector<2x4x256xf32>
    %c-1_i32_30 = arith.constant -1 : i32
    %115 = vector.broadcast %c-1_i32_30 : i32 to vector<1x1x256xi32>
    %116 = arith.addi %2, %115 : vector<1x1x256xi32>
    %c1_i32 = arith.constant 1 : i32
    %117 = vector.broadcast %c1_i32 : i32 to vector<1x1x256xi32>
    %118 = arith.addi %4, %117 : vector<1x1x256xi32>
    %c0_i32_31 = arith.constant 0 : i32
    %119 = vector.broadcast %c0_i32_31 : i32 to vector<1x1x256xi32>
    %120 = arith.cmpi sge, %116, %119 : vector<1x1x256xi32>
    %c16_i32_32 = arith.constant 16 : i32
    %121 = vector.broadcast %c16_i32_32 : i32 to vector<1x1x256xi32>
    %122 = arith.cmpi slt, %116, %121 : vector<1x1x256xi32>
    %123 = arith.andi %120, %122 : vector<1x1x256xi1>
    %c0_i32_33 = arith.constant 0 : i32
    %124 = vector.broadcast %c0_i32_33 : i32 to vector<1x1x256xi32>
    %125 = arith.cmpi sge, %118, %124 : vector<1x1x256xi32>
    %126 = arith.andi %123, %125 : vector<1x1x256xi1>
    %c16_i32_34 = arith.constant 16 : i32
    %127 = vector.broadcast %c16_i32_34 : i32 to vector<1x1x256xi32>
    %128 = arith.cmpi slt, %118, %127 : vector<1x1x256xi32>
    %129 = arith.andi %126, %128 : vector<1x1x256xi1>
    %cst_35 = arith.constant 0.000000e+00 : f32
    %130 = vector.shape_cast %129 : vector<1x1x256xi1> to vector<1x1x256xi1>
    %131 = vector.broadcast %130 : vector<1x1x256xi1> to vector<2x4x256xi1>
    %132 = vector.broadcast %cst_35 : f32 to vector<2x4x256xf32>
    %133 = arith.select %131, %114, %132 : vector<2x4x256xi1>, vector<2x4x256xf32>
    %134 = vector.extract_strided_slice %133 {offsets = [0, 0, 0], sizes = [2, 1, 256], strides = [1, 1, 1]} : vector<2x4x256xf32> to vector<2x1x256xf32>
    %135 = vector.extract_strided_slice %6 {offsets = [0, 2, 0, 0, 0], sizes = [1, 1, 1, 4, 1], strides = [1, 1, 1, 1, 1]} : vector<3x3x4x4x1xf32> to vector<1x1x1x4x1xf32>
    %136 = vector.shape_cast %135 : vector<1x1x1x4x1xf32> to vector<4x1xf32>
    %137 = vector.shape_cast %136 : vector<4x1xf32> to vector<1x4x1xf32>
    %138 = vector.broadcast %134 : vector<2x1x256xf32> to vector<2x4x256xf32>
    %139 = vector.broadcast %137 : vector<1x4x1xf32> to vector<2x4x256xf32>
    %140 = arith.mulf %138, %139 : vector<2x4x256xf32>
    %141 = arith.addf %113, %140 : vector<2x4x256xf32>
    %142 = vector.extract_strided_slice %133 {offsets = [0, 1, 0], sizes = [2, 1, 256], strides = [1, 1, 1]} : vector<2x4x256xf32> to vector<2x1x256xf32>
    %143 = vector.extract_strided_slice %6 {offsets = [0, 2, 1, 0, 0], sizes = [1, 1, 1, 4, 1], strides = [1, 1, 1, 1, 1]} : vector<3x3x4x4x1xf32> to vector<1x1x1x4x1xf32>
    %144 = vector.shape_cast %143 : vector<1x1x1x4x1xf32> to vector<4x1xf32>
    %145 = vector.shape_cast %144 : vector<4x1xf32> to vector<1x4x1xf32>
    %146 = vector.broadcast %142 : vector<2x1x256xf32> to vector<2x4x256xf32>
    %147 = vector.broadcast %145 : vector<1x4x1xf32> to vector<2x4x256xf32>
    %148 = arith.mulf %146, %147 : vector<2x4x256xf32>
    %149 = arith.addf %141, %148 : vector<2x4x256xf32>
    %150 = vector.extract_strided_slice %133 {offsets = [0, 2, 0], sizes = [2, 1, 256], strides = [1, 1, 1]} : vector<2x4x256xf32> to vector<2x1x256xf32>
    %151 = vector.extract_strided_slice %6 {offsets = [0, 2, 2, 0, 0], sizes = [1, 1, 1, 4, 1], strides = [1, 1, 1, 1, 1]} : vector<3x3x4x4x1xf32> to vector<1x1x1x4x1xf32>
    %152 = vector.shape_cast %151 : vector<1x1x1x4x1xf32> to vector<4x1xf32>
    %153 = vector.shape_cast %152 : vector<4x1xf32> to vector<1x4x1xf32>
    %154 = vector.broadcast %150 : vector<2x1x256xf32> to vector<2x4x256xf32>
    %155 = vector.broadcast %153 : vector<1x4x1xf32> to vector<2x4x256xf32>
    %156 = arith.mulf %154, %155 : vector<2x4x256xf32>
    %157 = arith.addf %149, %156 : vector<2x4x256xf32>
    %158 = vector.extract_strided_slice %133 {offsets = [0, 3, 0], sizes = [2, 1, 256], strides = [1, 1, 1]} : vector<2x4x256xf32> to vector<2x1x256xf32>
    %159 = vector.extract_strided_slice %6 {offsets = [0, 2, 3, 0, 0], sizes = [1, 1, 1, 4, 1], strides = [1, 1, 1, 1, 1]} : vector<3x3x4x4x1xf32> to vector<1x1x1x4x1xf32>
    %160 = vector.shape_cast %159 : vector<1x1x1x4x1xf32> to vector<4x1xf32>
    %161 = vector.shape_cast %160 : vector<4x1xf32> to vector<1x4x1xf32>
    %162 = vector.broadcast %158 : vector<2x1x256xf32> to vector<2x4x256xf32>
    %163 = vector.broadcast %161 : vector<1x4x1xf32> to vector<2x4x256xf32>
    %164 = arith.mulf %162, %163 : vector<2x4x256xf32>
    %165 = arith.addf %157, %164 : vector<2x4x256xf32>
    %c1_i32_36 = arith.constant 1 : i32
    %166 = tpu.dynamic_rotate %5 by %c1_i32_36 dim 2 : vector<2x4x256xf32>, i32 -> vector<2x4x256xf32>
    %c0_i32_37 = arith.constant 0 : i32
    %167 = vector.broadcast %c0_i32_37 : i32 to vector<1x1x256xi32>
    %168 = arith.addi %2, %167 : vector<1x1x256xi32>
    %c-1_i32_38 = arith.constant -1 : i32
    %169 = vector.broadcast %c-1_i32_38 : i32 to vector<1x1x256xi32>
    %170 = arith.addi %4, %169 : vector<1x1x256xi32>
    %c0_i32_39 = arith.constant 0 : i32
    %171 = vector.broadcast %c0_i32_39 : i32 to vector<1x1x256xi32>
    %172 = arith.cmpi sge, %168, %171 : vector<1x1x256xi32>
    %c16_i32_40 = arith.constant 16 : i32
    %173 = vector.broadcast %c16_i32_40 : i32 to vector<1x1x256xi32>
    %174 = arith.cmpi slt, %168, %173 : vector<1x1x256xi32>
    %175 = arith.andi %172, %174 : vector<1x1x256xi1>
    %c0_i32_41 = arith.constant 0 : i32
    %176 = vector.broadcast %c0_i32_41 : i32 to vector<1x1x256xi32>
    %177 = arith.cmpi sge, %170, %176 : vector<1x1x256xi32>
    %178 = arith.andi %175, %177 : vector<1x1x256xi1>
    %c16_i32_42 = arith.constant 16 : i32
    %179 = vector.broadcast %c16_i32_42 : i32 to vector<1x1x256xi32>
    %180 = arith.cmpi slt, %170, %179 : vector<1x1x256xi32>
    %181 = arith.andi %178, %180 : vector<1x1x256xi1>
    %cst_43 = arith.constant 0.000000e+00 : f32
    %182 = vector.shape_cast %181 : vector<1x1x256xi1> to vector<1x1x256xi1>
    %183 = vector.broadcast %182 : vector<1x1x256xi1> to vector<2x4x256xi1>
    %184 = vector.broadcast %cst_43 : f32 to vector<2x4x256xf32>
    %185 = arith.select %183, %166, %184 : vector<2x4x256xi1>, vector<2x4x256xf32>
    %186 = vector.extract_strided_slice %185 {offsets = [0, 0, 0], sizes = [2, 1, 256], strides = [1, 1, 1]} : vector<2x4x256xf32> to vector<2x1x256xf32>
    %187 = vector.extract_strided_slice %6 {offsets = [1, 0, 0, 0, 0], sizes = [1, 1, 1, 4, 1], strides = [1, 1, 1, 1, 1]} : vector<3x3x4x4x1xf32> to vector<1x1x1x4x1xf32>
    %188 = vector.shape_cast %187 : vector<1x1x1x4x1xf32> to vector<4x1xf32>
    %189 = vector.shape_cast %188 : vector<4x1xf32> to vector<1x4x1xf32>
    %190 = vector.broadcast %186 : vector<2x1x256xf32> to vector<2x4x256xf32>
    %191 = vector.broadcast %189 : vector<1x4x1xf32> to vector<2x4x256xf32>
    %192 = arith.mulf %190, %191 : vector<2x4x256xf32>
    %193 = arith.addf %165, %192 : vector<2x4x256xf32>
    %194 = vector.extract_strided_slice %185 {offsets = [0, 1, 0], sizes = [2, 1, 256], strides = [1, 1, 1]} : vector<2x4x256xf32> to vector<2x1x256xf32>
    %195 = vector.extract_strided_slice %6 {offsets = [1, 0, 1, 0, 0], sizes = [1, 1, 1, 4, 1], strides = [1, 1, 1, 1, 1]} : vector<3x3x4x4x1xf32> to vector<1x1x1x4x1xf32>
    %196 = vector.shape_cast %195 : vector<1x1x1x4x1xf32> to vector<4x1xf32>
    %197 = vector.shape_cast %196 : vector<4x1xf32> to vector<1x4x1xf32>
    %198 = vector.broadcast %194 : vector<2x1x256xf32> to vector<2x4x256xf32>
    %199 = vector.broadcast %197 : vector<1x4x1xf32> to vector<2x4x256xf32>
    %200 = arith.mulf %198, %199 : vector<2x4x256xf32>
    %201 = arith.addf %193, %200 : vector<2x4x256xf32>
    %202 = vector.extract_strided_slice %185 {offsets = [0, 2, 0], sizes = [2, 1, 256], strides = [1, 1, 1]} : vector<2x4x256xf32> to vector<2x1x256xf32>
    %203 = vector.extract_strided_slice %6 {offsets = [1, 0, 2, 0, 0], sizes = [1, 1, 1, 4, 1], strides = [1, 1, 1, 1, 1]} : vector<3x3x4x4x1xf32> to vector<1x1x1x4x1xf32>
    %204 = vector.shape_cast %203 : vector<1x1x1x4x1xf32> to vector<4x1xf32>
    %205 = vector.shape_cast %204 : vector<4x1xf32> to vector<1x4x1xf32>
    %206 = vector.broadcast %202 : vector<2x1x256xf32> to vector<2x4x256xf32>
    %207 = vector.broadcast %205 : vector<1x4x1xf32> to vector<2x4x256xf32>
    %208 = arith.mulf %206, %207 : vector<2x4x256xf32>
    %209 = arith.addf %201, %208 : vector<2x4x256xf32>
    %210 = vector.extract_strided_slice %185 {offsets = [0, 3, 0], sizes = [2, 1, 256], strides = [1, 1, 1]} : vector<2x4x256xf32> to vector<2x1x256xf32>
    %211 = vector.extract_strided_slice %6 {offsets = [1, 0, 3, 0, 0], sizes = [1, 1, 1, 4, 1], strides = [1, 1, 1, 1, 1]} : vector<3x3x4x4x1xf32> to vector<1x1x1x4x1xf32>
    %212 = vector.shape_cast %211 : vector<1x1x1x4x1xf32> to vector<4x1xf32>
    %213 = vector.shape_cast %212 : vector<4x1xf32> to vector<1x4x1xf32>
    %214 = vector.broadcast %210 : vector<2x1x256xf32> to vector<2x4x256xf32>
    %215 = vector.broadcast %213 : vector<1x4x1xf32> to vector<2x4x256xf32>
    %216 = arith.mulf %214, %215 : vector<2x4x256xf32>
    %217 = arith.addf %209, %216 : vector<2x4x256xf32>
    %c0_i32_44 = arith.constant 0 : i32
    %218 = vector.broadcast %c0_i32_44 : i32 to vector<1x1x256xi32>
    %219 = arith.addi %2, %218 : vector<1x1x256xi32>
    %c0_i32_45 = arith.constant 0 : i32
    %220 = vector.broadcast %c0_i32_45 : i32 to vector<1x1x256xi32>
    %221 = arith.addi %4, %220 : vector<1x1x256xi32>
    %c0_i32_46 = arith.constant 0 : i32
    %222 = vector.broadcast %c0_i32_46 : i32 to vector<1x1x256xi32>
    %223 = arith.cmpi sge, %219, %222 : vector<1x1x256xi32>
    %c16_i32_47 = arith.constant 16 : i32
    %224 = vector.broadcast %c16_i32_47 : i32 to vector<1x1x256xi32>
    %225 = arith.cmpi slt, %219, %224 : vector<1x1x256xi32>
    %226 = arith.andi %223, %225 : vector<1x1x256xi1>
    %c0_i32_48 = arith.constant 0 : i32
    %227 = vector.broadcast %c0_i32_48 : i32 to vector<1x1x256xi32>
    %228 = arith.cmpi sge, %221, %227 : vector<1x1x256xi32>
    %229 = arith.andi %226, %228 : vector<1x1x256xi1>
    %c16_i32_49 = arith.constant 16 : i32
    %230 = vector.broadcast %c16_i32_49 : i32 to vector<1x1x256xi32>
    %231 = arith.cmpi slt, %221, %230 : vector<1x1x256xi32>
    %232 = arith.andi %229, %231 : vector<1x1x256xi1>
    %cst_50 = arith.constant 0.000000e+00 : f32
    %233 = vector.shape_cast %232 : vector<1x1x256xi1> to vector<1x1x256xi1>
    %234 = vector.broadcast %233 : vector<1x1x256xi1> to vector<2x4x256xi1>
    %235 = vector.broadcast %cst_50 : f32 to vector<2x4x256xf32>
    %236 = arith.select %234, %5, %235 : vector<2x4x256xi1>, vector<2x4x256xf32>
    %237 = vector.extract_strided_slice %236 {offsets = [0, 0, 0], sizes = [2, 1, 256], strides = [1, 1, 1]} : vector<2x4x256xf32> to vector<2x1x256xf32>
    %238 = vector.extract_strided_slice %6 {offsets = [1, 1, 0, 0, 0], sizes = [1, 1, 1, 4, 1], strides = [1, 1, 1, 1, 1]} : vector<3x3x4x4x1xf32> to vector<1x1x1x4x1xf32>
    %239 = vector.shape_cast %238 : vector<1x1x1x4x1xf32> to vector<4x1xf32>
    %240 = vector.shape_cast %239 : vector<4x1xf32> to vector<1x4x1xf32>
    %241 = vector.broadcast %237 : vector<2x1x256xf32> to vector<2x4x256xf32>
    %242 = vector.broadcast %240 : vector<1x4x1xf32> to vector<2x4x256xf32>
    %243 = arith.mulf %241, %242 : vector<2x4x256xf32>
    %244 = arith.addf %217, %243 : vector<2x4x256xf32>
    %245 = vector.extract_strided_slice %236 {offsets = [0, 1, 0], sizes = [2, 1, 256], strides = [1, 1, 1]} : vector<2x4x256xf32> to vector<2x1x256xf32>
    %246 = vector.extract_strided_slice %6 {offsets = [1, 1, 1, 0, 0], sizes = [1, 1, 1, 4, 1], strides = [1, 1, 1, 1, 1]} : vector<3x3x4x4x1xf32> to vector<1x1x1x4x1xf32>
    %247 = vector.shape_cast %246 : vector<1x1x1x4x1xf32> to vector<4x1xf32>
    %248 = vector.shape_cast %247 : vector<4x1xf32> to vector<1x4x1xf32>
    %249 = vector.broadcast %245 : vector<2x1x256xf32> to vector<2x4x256xf32>
    %250 = vector.broadcast %248 : vector<1x4x1xf32> to vector<2x4x256xf32>
    %251 = arith.mulf %249, %250 : vector<2x4x256xf32>
    %252 = arith.addf %244, %251 : vector<2x4x256xf32>
    %253 = vector.extract_strided_slice %236 {offsets = [0, 2, 0], sizes = [2, 1, 256], strides = [1, 1, 1]} : vector<2x4x256xf32> to vector<2x1x256xf32>
    %254 = vector.extract_strided_slice %6 {offsets = [1, 1, 2, 0, 0], sizes = [1, 1, 1, 4, 1], strides = [1, 1, 1, 1, 1]} : vector<3x3x4x4x1xf32> to vector<1x1x1x4x1xf32>
    %255 = vector.shape_cast %254 : vector<1x1x1x4x1xf32> to vector<4x1xf32>
    %256 = vector.shape_cast %255 : vector<4x1xf32> to vector<1x4x1xf32>
    %257 = vector.broadcast %253 : vector<2x1x256xf32> to vector<2x4x256xf32>
    %258 = vector.broadcast %256 : vector<1x4x1xf32> to vector<2x4x256xf32>
    %259 = arith.mulf %257, %258 : vector<2x4x256xf32>
    %260 = arith.addf %252, %259 : vector<2x4x256xf32>
    %261 = vector.extract_strided_slice %236 {offsets = [0, 3, 0], sizes = [2, 1, 256], strides = [1, 1, 1]} : vector<2x4x256xf32> to vector<2x1x256xf32>
    %262 = vector.extract_strided_slice %6 {offsets = [1, 1, 3, 0, 0], sizes = [1, 1, 1, 4, 1], strides = [1, 1, 1, 1, 1]} : vector<3x3x4x4x1xf32> to vector<1x1x1x4x1xf32>
    %263 = vector.shape_cast %262 : vector<1x1x1x4x1xf32> to vector<4x1xf32>
    %264 = vector.shape_cast %263 : vector<4x1xf32> to vector<1x4x1xf32>
    %265 = vector.broadcast %261 : vector<2x1x256xf32> to vector<2x4x256xf32>
    %266 = vector.broadcast %264 : vector<1x4x1xf32> to vector<2x4x256xf32>
    %267 = arith.mulf %265, %266 : vector<2x4x256xf32>
    %268 = arith.addf %260, %267 : vector<2x4x256xf32>
    %c255_i32 = arith.constant 255 : i32
    %269 = tpu.dynamic_rotate %5 by %c255_i32 dim 2 : vector<2x4x256xf32>, i32 -> vector<2x4x256xf32>
    %c0_i32_51 = arith.constant 0 : i32
    %270 = vector.broadcast %c0_i32_51 : i32 to vector<1x1x256xi32>
    %271 = arith.addi %2, %270 : vector<1x1x256xi32>
    %c1_i32_52 = arith.constant 1 : i32
    %272 = vector.broadcast %c1_i32_52 : i32 to vector<1x1x256xi32>
    %273 = arith.addi %4, %272 : vector<1x1x256xi32>
    %c0_i32_53 = arith.constant 0 : i32
    %274 = vector.broadcast %c0_i32_53 : i32 to vector<1x1x256xi32>
    %275 = arith.cmpi sge, %271, %274 : vector<1x1x256xi32>
    %c16_i32_54 = arith.constant 16 : i32
    %276 = vector.broadcast %c16_i32_54 : i32 to vector<1x1x256xi32>
    %277 = arith.cmpi slt, %271, %276 : vector<1x1x256xi32>
    %278 = arith.andi %275, %277 : vector<1x1x256xi1>
    %c0_i32_55 = arith.constant 0 : i32
    %279 = vector.broadcast %c0_i32_55 : i32 to vector<1x1x256xi32>
    %280 = arith.cmpi sge, %273, %279 : vector<1x1x256xi32>
    %281 = arith.andi %278, %280 : vector<1x1x256xi1>
    %c16_i32_56 = arith.constant 16 : i32
    %282 = vector.broadcast %c16_i32_56 : i32 to vector<1x1x256xi32>
    %283 = arith.cmpi slt, %273, %282 : vector<1x1x256xi32>
    %284 = arith.andi %281, %283 : vector<1x1x256xi1>
    %cst_57 = arith.constant 0.000000e+00 : f32
    %285 = vector.shape_cast %284 : vector<1x1x256xi1> to vector<1x1x256xi1>
    %286 = vector.broadcast %285 : vector<1x1x256xi1> to vector<2x4x256xi1>
    %287 = vector.broadcast %cst_57 : f32 to vector<2x4x256xf32>
    %288 = arith.select %286, %269, %287 : vector<2x4x256xi1>, vector<2x4x256xf32>
    %289 = vector.extract_strided_slice %288 {offsets = [0, 0, 0], sizes = [2, 1, 256], strides = [1, 1, 1]} : vector<2x4x256xf32> to vector<2x1x256xf32>
    %290 = vector.extract_strided_slice %6 {offsets = [1, 2, 0, 0, 0], sizes = [1, 1, 1, 4, 1], strides = [1, 1, 1, 1, 1]} : vector<3x3x4x4x1xf32> to vector<1x1x1x4x1xf32>
    %291 = vector.shape_cast %290 : vector<1x1x1x4x1xf32> to vector<4x1xf32>
    %292 = vector.shape_cast %291 : vector<4x1xf32> to vector<1x4x1xf32>
    %293 = vector.broadcast %289 : vector<2x1x256xf32> to vector<2x4x256xf32>
    %294 = vector.broadcast %292 : vector<1x4x1xf32> to vector<2x4x256xf32>
    %295 = arith.mulf %293, %294 : vector<2x4x256xf32>
    %296 = arith.addf %268, %295 : vector<2x4x256xf32>
    %297 = vector.extract_strided_slice %288 {offsets = [0, 1, 0], sizes = [2, 1, 256], strides = [1, 1, 1]} : vector<2x4x256xf32> to vector<2x1x256xf32>
    %298 = vector.extract_strided_slice %6 {offsets = [1, 2, 1, 0, 0], sizes = [1, 1, 1, 4, 1], strides = [1, 1, 1, 1, 1]} : vector<3x3x4x4x1xf32> to vector<1x1x1x4x1xf32>
    %299 = vector.shape_cast %298 : vector<1x1x1x4x1xf32> to vector<4x1xf32>
    %300 = vector.shape_cast %299 : vector<4x1xf32> to vector<1x4x1xf32>
    %301 = vector.broadcast %297 : vector<2x1x256xf32> to vector<2x4x256xf32>
    %302 = vector.broadcast %300 : vector<1x4x1xf32> to vector<2x4x256xf32>
    %303 = arith.mulf %301, %302 : vector<2x4x256xf32>
    %304 = arith.addf %296, %303 : vector<2x4x256xf32>
    %305 = vector.extract_strided_slice %288 {offsets = [0, 2, 0], sizes = [2, 1, 256], strides = [1, 1, 1]} : vector<2x4x256xf32> to vector<2x1x256xf32>
    %306 = vector.extract_strided_slice %6 {offsets = [1, 2, 2, 0, 0], sizes = [1, 1, 1, 4, 1], strides = [1, 1, 1, 1, 1]} : vector<3x3x4x4x1xf32> to vector<1x1x1x4x1xf32>
    %307 = vector.shape_cast %306 : vector<1x1x1x4x1xf32> to vector<4x1xf32>
    %308 = vector.shape_cast %307 : vector<4x1xf32> to vector<1x4x1xf32>
    %309 = vector.broadcast %305 : vector<2x1x256xf32> to vector<2x4x256xf32>
    %310 = vector.broadcast %308 : vector<1x4x1xf32> to vector<2x4x256xf32>
    %311 = arith.mulf %309, %310 : vector<2x4x256xf32>
    %312 = arith.addf %304, %311 : vector<2x4x256xf32>
    %313 = vector.extract_strided_slice %288 {offsets = [0, 3, 0], sizes = [2, 1, 256], strides = [1, 1, 1]} : vector<2x4x256xf32> to vector<2x1x256xf32>
    %314 = vector.extract_strided_slice %6 {offsets = [1, 2, 3, 0, 0], sizes = [1, 1, 1, 4, 1], strides = [1, 1, 1, 1, 1]} : vector<3x3x4x4x1xf32> to vector<1x1x1x4x1xf32>
    %315 = vector.shape_cast %314 : vector<1x1x1x4x1xf32> to vector<4x1xf32>
    %316 = vector.shape_cast %315 : vector<4x1xf32> to vector<1x4x1xf32>
    %317 = vector.broadcast %313 : vector<2x1x256xf32> to vector<2x4x256xf32>
    %318 = vector.broadcast %316 : vector<1x4x1xf32> to vector<2x4x256xf32>
    %319 = arith.mulf %317, %318 : vector<2x4x256xf32>
    %320 = arith.addf %312, %319 : vector<2x4x256xf32>
    %c241_i32 = arith.constant 241 : i32
    %321 = tpu.dynamic_rotate %5 by %c241_i32 dim 2 : vector<2x4x256xf32>, i32 -> vector<2x4x256xf32>
    %c1_i32_58 = arith.constant 1 : i32
    %322 = vector.broadcast %c1_i32_58 : i32 to vector<1x1x256xi32>
    %323 = arith.addi %2, %322 : vector<1x1x256xi32>
    %c-1_i32_59 = arith.constant -1 : i32
    %324 = vector.broadcast %c-1_i32_59 : i32 to vector<1x1x256xi32>
    %325 = arith.addi %4, %324 : vector<1x1x256xi32>
    %c0_i32_60 = arith.constant 0 : i32
    %326 = vector.broadcast %c0_i32_60 : i32 to vector<1x1x256xi32>
    %327 = arith.cmpi sge, %323, %326 : vector<1x1x256xi32>
    %c16_i32_61 = arith.constant 16 : i32
    %328 = vector.broadcast %c16_i32_61 : i32 to vector<1x1x256xi32>
    %329 = arith.cmpi slt, %323, %328 : vector<1x1x256xi32>
    %330 = arith.andi %327, %329 : vector<1x1x256xi1>
    %c0_i32_62 = arith.constant 0 : i32
    %331 = vector.broadcast %c0_i32_62 : i32 to vector<1x1x256xi32>
    %332 = arith.cmpi sge, %325, %331 : vector<1x1x256xi32>
    %333 = arith.andi %330, %332 : vector<1x1x256xi1>
    %c16_i32_63 = arith.constant 16 : i32
    %334 = vector.broadcast %c16_i32_63 : i32 to vector<1x1x256xi32>
    %335 = arith.cmpi slt, %325, %334 : vector<1x1x256xi32>
    %336 = arith.andi %333, %335 : vector<1x1x256xi1>
    %cst_64 = arith.constant 0.000000e+00 : f32
    %337 = vector.shape_cast %336 : vector<1x1x256xi1> to vector<1x1x256xi1>
    %338 = vector.broadcast %337 : vector<1x1x256xi1> to vector<2x4x256xi1>
    %339 = vector.broadcast %cst_64 : f32 to vector<2x4x256xf32>
    %340 = arith.select %338, %321, %339 : vector<2x4x256xi1>, vector<2x4x256xf32>
    %341 = vector.extract_strided_slice %340 {offsets = [0, 0, 0], sizes = [2, 1, 256], strides = [1, 1, 1]} : vector<2x4x256xf32> to vector<2x1x256xf32>
    %342 = vector.extract_strided_slice %6 {offsets = [2, 0, 0, 0, 0], sizes = [1, 1, 1, 4, 1], strides = [1, 1, 1, 1, 1]} : vector<3x3x4x4x1xf32> to vector<1x1x1x4x1xf32>
    %343 = vector.shape_cast %342 : vector<1x1x1x4x1xf32> to vector<4x1xf32>
    %344 = vector.shape_cast %343 : vector<4x1xf32> to vector<1x4x1xf32>
    %345 = vector.broadcast %341 : vector<2x1x256xf32> to vector<2x4x256xf32>
    %346 = vector.broadcast %344 : vector<1x4x1xf32> to vector<2x4x256xf32>
    %347 = arith.mulf %345, %346 : vector<2x4x256xf32>
    %348 = arith.addf %320, %347 : vector<2x4x256xf32>
    %349 = vector.extract_strided_slice %340 {offsets = [0, 1, 0], sizes = [2, 1, 256], strides = [1, 1, 1]} : vector<2x4x256xf32> to vector<2x1x256xf32>
    %350 = vector.extract_strided_slice %6 {offsets = [2, 0, 1, 0, 0], sizes = [1, 1, 1, 4, 1], strides = [1, 1, 1, 1, 1]} : vector<3x3x4x4x1xf32> to vector<1x1x1x4x1xf32>
    %351 = vector.shape_cast %350 : vector<1x1x1x4x1xf32> to vector<4x1xf32>
    %352 = vector.shape_cast %351 : vector<4x1xf32> to vector<1x4x1xf32>
    %353 = vector.broadcast %349 : vector<2x1x256xf32> to vector<2x4x256xf32>
    %354 = vector.broadcast %352 : vector<1x4x1xf32> to vector<2x4x256xf32>
    %355 = arith.mulf %353, %354 : vector<2x4x256xf32>
    %356 = arith.addf %348, %355 : vector<2x4x256xf32>
    %357 = vector.extract_strided_slice %340 {offsets = [0, 2, 0], sizes = [2, 1, 256], strides = [1, 1, 1]} : vector<2x4x256xf32> to vector<2x1x256xf32>
    %358 = vector.extract_strided_slice %6 {offsets = [2, 0, 2, 0, 0], sizes = [1, 1, 1, 4, 1], strides = [1, 1, 1, 1, 1]} : vector<3x3x4x4x1xf32> to vector<1x1x1x4x1xf32>
    %359 = vector.shape_cast %358 : vector<1x1x1x4x1xf32> to vector<4x1xf32>
    %360 = vector.shape_cast %359 : vector<4x1xf32> to vector<1x4x1xf32>
    %361 = vector.broadcast %357 : vector<2x1x256xf32> to vector<2x4x256xf32>
    %362 = vector.broadcast %360 : vector<1x4x1xf32> to vector<2x4x256xf32>
    %363 = arith.mulf %361, %362 : vector<2x4x256xf32>
    %364 = arith.addf %356, %363 : vector<2x4x256xf32>
    %365 = vector.extract_strided_slice %340 {offsets = [0, 3, 0], sizes = [2, 1, 256], strides = [1, 1, 1]} : vector<2x4x256xf32> to vector<2x1x256xf32>
    %366 = vector.extract_strided_slice %6 {offsets = [2, 0, 3, 0, 0], sizes = [1, 1, 1, 4, 1], strides = [1, 1, 1, 1, 1]} : vector<3x3x4x4x1xf32> to vector<1x1x1x4x1xf32>
    %367 = vector.shape_cast %366 : vector<1x1x1x4x1xf32> to vector<4x1xf32>
    %368 = vector.shape_cast %367 : vector<4x1xf32> to vector<1x4x1xf32>
    %369 = vector.broadcast %365 : vector<2x1x256xf32> to vector<2x4x256xf32>
    %370 = vector.broadcast %368 : vector<1x4x1xf32> to vector<2x4x256xf32>
    %371 = arith.mulf %369, %370 : vector<2x4x256xf32>
    %372 = arith.addf %364, %371 : vector<2x4x256xf32>
    %c240_i32 = arith.constant 240 : i32
    %373 = tpu.dynamic_rotate %5 by %c240_i32 dim 2 : vector<2x4x256xf32>, i32 -> vector<2x4x256xf32>
    %c1_i32_65 = arith.constant 1 : i32
    %374 = vector.broadcast %c1_i32_65 : i32 to vector<1x1x256xi32>
    %375 = arith.addi %2, %374 : vector<1x1x256xi32>
    %c0_i32_66 = arith.constant 0 : i32
    %376 = vector.broadcast %c0_i32_66 : i32 to vector<1x1x256xi32>
    %377 = arith.addi %4, %376 : vector<1x1x256xi32>
    %c0_i32_67 = arith.constant 0 : i32
    %378 = vector.broadcast %c0_i32_67 : i32 to vector<1x1x256xi32>
    %379 = arith.cmpi sge, %375, %378 : vector<1x1x256xi32>
    %c16_i32_68 = arith.constant 16 : i32
    %380 = vector.broadcast %c16_i32_68 : i32 to vector<1x1x256xi32>
    %381 = arith.cmpi slt, %375, %380 : vector<1x1x256xi32>
    %382 = arith.andi %379, %381 : vector<1x1x256xi1>
    %c0_i32_69 = arith.constant 0 : i32
    %383 = vector.broadcast %c0_i32_69 : i32 to vector<1x1x256xi32>
    %384 = arith.cmpi sge, %377, %383 : vector<1x1x256xi32>
    %385 = arith.andi %382, %384 : vector<1x1x256xi1>
    %c16_i32_70 = arith.constant 16 : i32
    %386 = vector.broadcast %c16_i32_70 : i32 to vector<1x1x256xi32>
    %387 = arith.cmpi slt, %377, %386 : vector<1x1x256xi32>
    %388 = arith.andi %385, %387 : vector<1x1x256xi1>
    %cst_71 = arith.constant 0.000000e+00 : f32
    %389 = vector.shape_cast %388 : vector<1x1x256xi1> to vector<1x1x256xi1>
    %390 = vector.broadcast %389 : vector<1x1x256xi1> to vector<2x4x256xi1>
    %391 = vector.broadcast %cst_71 : f32 to vector<2x4x256xf32>
    %392 = arith.select %390, %373, %391 : vector<2x4x256xi1>, vector<2x4x256xf32>
    %393 = vector.extract_strided_slice %392 {offsets = [0, 0, 0], sizes = [2, 1, 256], strides = [1, 1, 1]} : vector<2x4x256xf32> to vector<2x1x256xf32>
    %394 = vector.extract_strided_slice %6 {offsets = [2, 1, 0, 0, 0], sizes = [1, 1, 1, 4, 1], strides = [1, 1, 1, 1, 1]} : vector<3x3x4x4x1xf32> to vector<1x1x1x4x1xf32>
    %395 = vector.shape_cast %394 : vector<1x1x1x4x1xf32> to vector<4x1xf32>
    %396 = vector.shape_cast %395 : vector<4x1xf32> to vector<1x4x1xf32>
    %397 = vector.broadcast %393 : vector<2x1x256xf32> to vector<2x4x256xf32>
    %398 = vector.broadcast %396 : vector<1x4x1xf32> to vector<2x4x256xf32>
    %399 = arith.mulf %397, %398 : vector<2x4x256xf32>
    %400 = arith.addf %372, %399 : vector<2x4x256xf32>
    %401 = vector.extract_strided_slice %392 {offsets = [0, 1, 0], sizes = [2, 1, 256], strides = [1, 1, 1]} : vector<2x4x256xf32> to vector<2x1x256xf32>
    %402 = vector.extract_strided_slice %6 {offsets = [2, 1, 1, 0, 0], sizes = [1, 1, 1, 4, 1], strides = [1, 1, 1, 1, 1]} : vector<3x3x4x4x1xf32> to vector<1x1x1x4x1xf32>
    %403 = vector.shape_cast %402 : vector<1x1x1x4x1xf32> to vector<4x1xf32>
    %404 = vector.shape_cast %403 : vector<4x1xf32> to vector<1x4x1xf32>
    %405 = vector.broadcast %401 : vector<2x1x256xf32> to vector<2x4x256xf32>
    %406 = vector.broadcast %404 : vector<1x4x1xf32> to vector<2x4x256xf32>
    %407 = arith.mulf %405, %406 : vector<2x4x256xf32>
    %408 = arith.addf %400, %407 : vector<2x4x256xf32>
    %409 = vector.extract_strided_slice %392 {offsets = [0, 2, 0], sizes = [2, 1, 256], strides = [1, 1, 1]} : vector<2x4x256xf32> to vector<2x1x256xf32>
    %410 = vector.extract_strided_slice %6 {offsets = [2, 1, 2, 0, 0], sizes = [1, 1, 1, 4, 1], strides = [1, 1, 1, 1, 1]} : vector<3x3x4x4x1xf32> to vector<1x1x1x4x1xf32>
    %411 = vector.shape_cast %410 : vector<1x1x1x4x1xf32> to vector<4x1xf32>
    %412 = vector.shape_cast %411 : vector<4x1xf32> to vector<1x4x1xf32>
    %413 = vector.broadcast %409 : vector<2x1x256xf32> to vector<2x4x256xf32>
    %414 = vector.broadcast %412 : vector<1x4x1xf32> to vector<2x4x256xf32>
    %415 = arith.mulf %413, %414 : vector<2x4x256xf32>
    %416 = arith.addf %408, %415 : vector<2x4x256xf32>
    %417 = vector.extract_strided_slice %392 {offsets = [0, 3, 0], sizes = [2, 1, 256], strides = [1, 1, 1]} : vector<2x4x256xf32> to vector<2x1x256xf32>
    %418 = vector.extract_strided_slice %6 {offsets = [2, 1, 3, 0, 0], sizes = [1, 1, 1, 4, 1], strides = [1, 1, 1, 1, 1]} : vector<3x3x4x4x1xf32> to vector<1x1x1x4x1xf32>
    %419 = vector.shape_cast %418 : vector<1x1x1x4x1xf32> to vector<4x1xf32>
    %420 = vector.shape_cast %419 : vector<4x1xf32> to vector<1x4x1xf32>
    %421 = vector.broadcast %417 : vector<2x1x256xf32> to vector<2x4x256xf32>
    %422 = vector.broadcast %420 : vector<1x4x1xf32> to vector<2x4x256xf32>
    %423 = arith.mulf %421, %422 : vector<2x4x256xf32>
    %424 = arith.addf %416, %423 : vector<2x4x256xf32>
    %c239_i32 = arith.constant 239 : i32
    %425 = tpu.dynamic_rotate %5 by %c239_i32 dim 2 : vector<2x4x256xf32>, i32 -> vector<2x4x256xf32>
    %c1_i32_72 = arith.constant 1 : i32
    %426 = vector.broadcast %c1_i32_72 : i32 to vector<1x1x256xi32>
    %427 = arith.addi %2, %426 : vector<1x1x256xi32>
    %c1_i32_73 = arith.constant 1 : i32
    %428 = vector.broadcast %c1_i32_73 : i32 to vector<1x1x256xi32>
    %429 = arith.addi %4, %428 : vector<1x1x256xi32>
    %c0_i32_74 = arith.constant 0 : i32
    %430 = vector.broadcast %c0_i32_74 : i32 to vector<1x1x256xi32>
    %431 = arith.cmpi sge, %427, %430 : vector<1x1x256xi32>
    %c16_i32_75 = arith.constant 16 : i32
    %432 = vector.broadcast %c16_i32_75 : i32 to vector<1x1x256xi32>
    %433 = arith.cmpi slt, %427, %432 : vector<1x1x256xi32>
    %434 = arith.andi %431, %433 : vector<1x1x256xi1>
    %c0_i32_76 = arith.constant 0 : i32
    %435 = vector.broadcast %c0_i32_76 : i32 to vector<1x1x256xi32>
    %436 = arith.cmpi sge, %429, %435 : vector<1x1x256xi32>
    %437 = arith.andi %434, %436 : vector<1x1x256xi1>
    %c16_i32_77 = arith.constant 16 : i32
    %438 = vector.broadcast %c16_i32_77 : i32 to vector<1x1x256xi32>
    %439 = arith.cmpi slt, %429, %438 : vector<1x1x256xi32>
    %440 = arith.andi %437, %439 : vector<1x1x256xi1>
    %cst_78 = arith.constant 0.000000e+00 : f32
    %441 = vector.shape_cast %440 : vector<1x1x256xi1> to vector<1x1x256xi1>
    %442 = vector.broadcast %441 : vector<1x1x256xi1> to vector<2x4x256xi1>
    %443 = vector.broadcast %cst_78 : f32 to vector<2x4x256xf32>
    %444 = arith.select %442, %425, %443 : vector<2x4x256xi1>, vector<2x4x256xf32>
    %445 = vector.extract_strided_slice %444 {offsets = [0, 0, 0], sizes = [2, 1, 256], strides = [1, 1, 1]} : vector<2x4x256xf32> to vector<2x1x256xf32>
    %446 = vector.extract_strided_slice %6 {offsets = [2, 2, 0, 0, 0], sizes = [1, 1, 1, 4, 1], strides = [1, 1, 1, 1, 1]} : vector<3x3x4x4x1xf32> to vector<1x1x1x4x1xf32>
    %447 = vector.shape_cast %446 : vector<1x1x1x4x1xf32> to vector<4x1xf32>
    %448 = vector.shape_cast %447 : vector<4x1xf32> to vector<1x4x1xf32>
    %449 = vector.broadcast %445 : vector<2x1x256xf32> to vector<2x4x256xf32>
    %450 = vector.broadcast %448 : vector<1x4x1xf32> to vector<2x4x256xf32>
    %451 = arith.mulf %449, %450 : vector<2x4x256xf32>
    %452 = arith.addf %424, %451 : vector<2x4x256xf32>
    %453 = vector.extract_strided_slice %444 {offsets = [0, 1, 0], sizes = [2, 1, 256], strides = [1, 1, 1]} : vector<2x4x256xf32> to vector<2x1x256xf32>
    %454 = vector.extract_strided_slice %6 {offsets = [2, 2, 1, 0, 0], sizes = [1, 1, 1, 4, 1], strides = [1, 1, 1, 1, 1]} : vector<3x3x4x4x1xf32> to vector<1x1x1x4x1xf32>
    %455 = vector.shape_cast %454 : vector<1x1x1x4x1xf32> to vector<4x1xf32>
    %456 = vector.shape_cast %455 : vector<4x1xf32> to vector<1x4x1xf32>
    %457 = vector.broadcast %453 : vector<2x1x256xf32> to vector<2x4x256xf32>
    %458 = vector.broadcast %456 : vector<1x4x1xf32> to vector<2x4x256xf32>
    %459 = arith.mulf %457, %458 : vector<2x4x256xf32>
    %460 = arith.addf %452, %459 : vector<2x4x256xf32>
    %461 = vector.extract_strided_slice %444 {offsets = [0, 2, 0], sizes = [2, 1, 256], strides = [1, 1, 1]} : vector<2x4x256xf32> to vector<2x1x256xf32>
    %462 = vector.extract_strided_slice %6 {offsets = [2, 2, 2, 0, 0], sizes = [1, 1, 1, 4, 1], strides = [1, 1, 1, 1, 1]} : vector<3x3x4x4x1xf32> to vector<1x1x1x4x1xf32>
    %463 = vector.shape_cast %462 : vector<1x1x1x4x1xf32> to vector<4x1xf32>
    %464 = vector.shape_cast %463 : vector<4x1xf32> to vector<1x4x1xf32>
    %465 = vector.broadcast %461 : vector<2x1x256xf32> to vector<2x4x256xf32>
    %466 = vector.broadcast %464 : vector<1x4x1xf32> to vector<2x4x256xf32>
    %467 = arith.mulf %465, %466 : vector<2x4x256xf32>
    %468 = arith.addf %460, %467 : vector<2x4x256xf32>
    %469 = vector.extract_strided_slice %444 {offsets = [0, 3, 0], sizes = [2, 1, 256], strides = [1, 1, 1]} : vector<2x4x256xf32> to vector<2x1x256xf32>
    %470 = vector.extract_strided_slice %6 {offsets = [2, 2, 3, 0, 0], sizes = [1, 1, 1, 4, 1], strides = [1, 1, 1, 1, 1]} : vector<3x3x4x4x1xf32> to vector<1x1x1x4x1xf32>
    %471 = vector.shape_cast %470 : vector<1x1x1x4x1xf32> to vector<4x1xf32>
    %472 = vector.shape_cast %471 : vector<4x1xf32> to vector<1x4x1xf32>
    %473 = vector.broadcast %469 : vector<2x1x256xf32> to vector<2x4x256xf32>
    %474 = vector.broadcast %472 : vector<1x4x1xf32> to vector<2x4x256xf32>
    %475 = arith.mulf %473, %474 : vector<2x4x256xf32>
    %476 = arith.addf %468, %475 : vector<2x4x256xf32>
    %cst_79 = arith.constant 0.000000e+00 : f32
    %477 = vector.broadcast %cst_79 : f32 to vector<2x4x256xf32>
    %478 = arith.cmpf oge, %476, %477 : vector<2x4x256xf32>
    %cst_80 = arith.constant 1.000000e-01 : f32
    %479 = vector.broadcast %cst_80 : f32 to vector<2x4x256xf32>
    %480 = arith.mulf %479, %476 : vector<2x4x256xf32>
    %481 = arith.select %478, %476, %480 : vector<2x4x256xi1>, vector<2x4x256xf32>
    %cst_81 = arith.constant dense<0.000000e+00> : vector<2x4xf32>
    %482 = vector.multi_reduction <add>, %481, %cst_81 [2] : vector<2x4x256xf32> to vector<2x4xf32>
    %483 = vector.shape_cast %482 : vector<2x4xf32> to vector<2x4x1xf32>
    %cst_82 = arith.constant dense<0.000000e+00> : vector<4x1xf32>
    %484 = vector.multi_reduction <add>, %483, %cst_82 [0] : vector<2x4x1xf32> to vector<4x1xf32>
    %485 = vector.shape_cast %484 : vector<4x1xf32> to vector<1x4x1xf32>
    %cst_83 = arith.constant 0.001953125 : f32
    %486 = vector.broadcast %cst_83 : f32 to vector<1x4x1xf32>
    %487 = arith.mulf %485, %486 : vector<1x4x1xf32>
    %488 = vector.broadcast %487 : vector<1x4x1xf32> to vector<2x4x256xf32>
    %489 = arith.subf %481, %488 : vector<2x4x256xf32>
    %490 = arith.mulf %489, %489 : vector<2x4x256xf32>
    %cst_84 = arith.constant dense<0.000000e+00> : vector<2x4xf32>
    %491 = vector.multi_reduction <add>, %490, %cst_84 [2] : vector<2x4x256xf32> to vector<2x4xf32>
    %492 = vector.shape_cast %491 : vector<2x4xf32> to vector<2x4x1xf32>
    %cst_85 = arith.constant dense<0.000000e+00> : vector<4x1xf32>
    %493 = vector.multi_reduction <add>, %492, %cst_85 [0] : vector<2x4x1xf32> to vector<4x1xf32>
    %494 = vector.shape_cast %493 : vector<4x1xf32> to vector<1x4x1xf32>
    %cst_86 = arith.constant 0.001953125 : f32
    %495 = vector.broadcast %cst_86 : f32 to vector<1x4x1xf32>
    %496 = arith.mulf %494, %495 : vector<1x4x1xf32>
    %cst_87 = arith.constant 9.99999974E-6 : f32
    %497 = vector.broadcast %cst_87 : f32 to vector<1x4x1xf32>
    %498 = arith.addf %496, %497 : vector<1x4x1xf32>
    %499 = math.rsqrt %498 : vector<1x4x1xf32>
    %c0_88 = arith.constant 0 : index
    %c0_89 = arith.constant 0 : index
    %500 = vector.load %arg2[%c0_88, %c0_89] : memref<4x1xf32, #tpu.memory_space<vmem>>, vector<4x1xf32>
    %501 = vector.shape_cast %500 : vector<4x1xf32> to vector<1x4x1xf32>
    %502 = arith.mulf %499, %501 : vector<1x4x1xf32>
    %503 = vector.broadcast %502 : vector<1x4x1xf32> to vector<2x4x256xf32>
    %504 = arith.mulf %489, %503 : vector<2x4x256xf32>
    %c0_90 = arith.constant 0 : index
    %c0_91 = arith.constant 0 : index
    %505 = vector.load %arg3[%c0_90, %c0_91] : memref<4x1xf32, #tpu.memory_space<vmem>>, vector<4x1xf32>
    %506 = vector.shape_cast %505 : vector<4x1xf32> to vector<1x4x1xf32>
    %507 = vector.broadcast %506 : vector<1x4x1xf32> to vector<2x4x256xf32>
    %508 = arith.addf %504, %507 : vector<2x4x256xf32>
    %cst_92 = arith.constant 0.000000e+00 : f32
    %509 = vector.broadcast %cst_92 : f32 to vector<2x4x256xf32>
    %c17_i32_93 = arith.constant 17 : i32
    %510 = tpu.dynamic_rotate %508 by %c17_i32_93 dim 2 : vector<2x4x256xf32>, i32 -> vector<2x4x256xf32>
    %c-1_i32_94 = arith.constant -1 : i32
    %511 = vector.broadcast %c-1_i32_94 : i32 to vector<1x1x256xi32>
    %512 = arith.addi %2, %511 : vector<1x1x256xi32>
    %c-1_i32_95 = arith.constant -1 : i32
    %513 = vector.broadcast %c-1_i32_95 : i32 to vector<1x1x256xi32>
    %514 = arith.addi %4, %513 : vector<1x1x256xi32>
    %c0_i32_96 = arith.constant 0 : i32
    %515 = vector.broadcast %c0_i32_96 : i32 to vector<1x1x256xi32>
    %516 = arith.cmpi sge, %512, %515 : vector<1x1x256xi32>
    %c16_i32_97 = arith.constant 16 : i32
    %517 = vector.broadcast %c16_i32_97 : i32 to vector<1x1x256xi32>
    %518 = arith.cmpi slt, %512, %517 : vector<1x1x256xi32>
    %519 = arith.andi %516, %518 : vector<1x1x256xi1>
    %c0_i32_98 = arith.constant 0 : i32
    %520 = vector.broadcast %c0_i32_98 : i32 to vector<1x1x256xi32>
    %521 = arith.cmpi sge, %514, %520 : vector<1x1x256xi32>
    %522 = arith.andi %519, %521 : vector<1x1x256xi1>
    %c16_i32_99 = arith.constant 16 : i32
    %523 = vector.broadcast %c16_i32_99 : i32 to vector<1x1x256xi32>
    %524 = arith.cmpi slt, %514, %523 : vector<1x1x256xi32>
    %525 = arith.andi %522, %524 : vector<1x1x256xi1>
    %cst_100 = arith.constant 0.000000e+00 : f32
    %526 = vector.shape_cast %525 : vector<1x1x256xi1> to vector<1x1x256xi1>
    %527 = vector.broadcast %526 : vector<1x1x256xi1> to vector<2x4x256xi1>
    %528 = vector.broadcast %cst_100 : f32 to vector<2x4x256xf32>
    %529 = arith.select %527, %510, %528 : vector<2x4x256xi1>, vector<2x4x256xf32>
    %530 = vector.extract_strided_slice %529 {offsets = [0, 0, 0], sizes = [2, 1, 256], strides = [1, 1, 1]} : vector<2x4x256xf32> to vector<2x1x256xf32>
    %531 = vector.extract_strided_slice %7 {offsets = [0, 0, 0, 0, 0], sizes = [1, 1, 1, 4, 1], strides = [1, 1, 1, 1, 1]} : vector<3x3x4x4x1xf32> to vector<1x1x1x4x1xf32>
    %532 = vector.shape_cast %531 : vector<1x1x1x4x1xf32> to vector<4x1xf32>
    %533 = vector.shape_cast %532 : vector<4x1xf32> to vector<1x4x1xf32>
    %534 = vector.broadcast %530 : vector<2x1x256xf32> to vector<2x4x256xf32>
    %535 = vector.broadcast %533 : vector<1x4x1xf32> to vector<2x4x256xf32>
    %536 = arith.mulf %534, %535 : vector<2x4x256xf32>
    %537 = arith.addf %509, %536 : vector<2x4x256xf32>
    %538 = vector.extract_strided_slice %529 {offsets = [0, 1, 0], sizes = [2, 1, 256], strides = [1, 1, 1]} : vector<2x4x256xf32> to vector<2x1x256xf32>
    %539 = vector.extract_strided_slice %7 {offsets = [0, 0, 1, 0, 0], sizes = [1, 1, 1, 4, 1], strides = [1, 1, 1, 1, 1]} : vector<3x3x4x4x1xf32> to vector<1x1x1x4x1xf32>
    %540 = vector.shape_cast %539 : vector<1x1x1x4x1xf32> to vector<4x1xf32>
    %541 = vector.shape_cast %540 : vector<4x1xf32> to vector<1x4x1xf32>
    %542 = vector.broadcast %538 : vector<2x1x256xf32> to vector<2x4x256xf32>
    %543 = vector.broadcast %541 : vector<1x4x1xf32> to vector<2x4x256xf32>
    %544 = arith.mulf %542, %543 : vector<2x4x256xf32>
    %545 = arith.addf %537, %544 : vector<2x4x256xf32>
    %546 = vector.extract_strided_slice %529 {offsets = [0, 2, 0], sizes = [2, 1, 256], strides = [1, 1, 1]} : vector<2x4x256xf32> to vector<2x1x256xf32>
    %547 = vector.extract_strided_slice %7 {offsets = [0, 0, 2, 0, 0], sizes = [1, 1, 1, 4, 1], strides = [1, 1, 1, 1, 1]} : vector<3x3x4x4x1xf32> to vector<1x1x1x4x1xf32>
    %548 = vector.shape_cast %547 : vector<1x1x1x4x1xf32> to vector<4x1xf32>
    %549 = vector.shape_cast %548 : vector<4x1xf32> to vector<1x4x1xf32>
    %550 = vector.broadcast %546 : vector<2x1x256xf32> to vector<2x4x256xf32>
    %551 = vector.broadcast %549 : vector<1x4x1xf32> to vector<2x4x256xf32>
    %552 = arith.mulf %550, %551 : vector<2x4x256xf32>
    %553 = arith.addf %545, %552 : vector<2x4x256xf32>
    %554 = vector.extract_strided_slice %529 {offsets = [0, 3, 0], sizes = [2, 1, 256], strides = [1, 1, 1]} : vector<2x4x256xf32> to vector<2x1x256xf32>
    %555 = vector.extract_strided_slice %7 {offsets = [0, 0, 3, 0, 0], sizes = [1, 1, 1, 4, 1], strides = [1, 1, 1, 1, 1]} : vector<3x3x4x4x1xf32> to vector<1x1x1x4x1xf32>
    %556 = vector.shape_cast %555 : vector<1x1x1x4x1xf32> to vector<4x1xf32>
    %557 = vector.shape_cast %556 : vector<4x1xf32> to vector<1x4x1xf32>
    %558 = vector.broadcast %554 : vector<2x1x256xf32> to vector<2x4x256xf32>
    %559 = vector.broadcast %557 : vector<1x4x1xf32> to vector<2x4x256xf32>
    %560 = arith.mulf %558, %559 : vector<2x4x256xf32>
    %561 = arith.addf %553, %560 : vector<2x4x256xf32>
    %c16_i32_101 = arith.constant 16 : i32
    %562 = tpu.dynamic_rotate %508 by %c16_i32_101 dim 2 : vector<2x4x256xf32>, i32 -> vector<2x4x256xf32>
    %c-1_i32_102 = arith.constant -1 : i32
    %563 = vector.broadcast %c-1_i32_102 : i32 to vector<1x1x256xi32>
    %564 = arith.addi %2, %563 : vector<1x1x256xi32>
    %c0_i32_103 = arith.constant 0 : i32
    %565 = vector.broadcast %c0_i32_103 : i32 to vector<1x1x256xi32>
    %566 = arith.addi %4, %565 : vector<1x1x256xi32>
    %c0_i32_104 = arith.constant 0 : i32
    %567 = vector.broadcast %c0_i32_104 : i32 to vector<1x1x256xi32>
    %568 = arith.cmpi sge, %564, %567 : vector<1x1x256xi32>
    %c16_i32_105 = arith.constant 16 : i32
    %569 = vector.broadcast %c16_i32_105 : i32 to vector<1x1x256xi32>
    %570 = arith.cmpi slt, %564, %569 : vector<1x1x256xi32>
    %571 = arith.andi %568, %570 : vector<1x1x256xi1>
    %c0_i32_106 = arith.constant 0 : i32
    %572 = vector.broadcast %c0_i32_106 : i32 to vector<1x1x256xi32>
    %573 = arith.cmpi sge, %566, %572 : vector<1x1x256xi32>
    %574 = arith.andi %571, %573 : vector<1x1x256xi1>
    %c16_i32_107 = arith.constant 16 : i32
    %575 = vector.broadcast %c16_i32_107 : i32 to vector<1x1x256xi32>
    %576 = arith.cmpi slt, %566, %575 : vector<1x1x256xi32>
    %577 = arith.andi %574, %576 : vector<1x1x256xi1>
    %cst_108 = arith.constant 0.000000e+00 : f32
    %578 = vector.shape_cast %577 : vector<1x1x256xi1> to vector<1x1x256xi1>
    %579 = vector.broadcast %578 : vector<1x1x256xi1> to vector<2x4x256xi1>
    %580 = vector.broadcast %cst_108 : f32 to vector<2x4x256xf32>
    %581 = arith.select %579, %562, %580 : vector<2x4x256xi1>, vector<2x4x256xf32>
    %582 = vector.extract_strided_slice %581 {offsets = [0, 0, 0], sizes = [2, 1, 256], strides = [1, 1, 1]} : vector<2x4x256xf32> to vector<2x1x256xf32>
    %583 = vector.extract_strided_slice %7 {offsets = [0, 1, 0, 0, 0], sizes = [1, 1, 1, 4, 1], strides = [1, 1, 1, 1, 1]} : vector<3x3x4x4x1xf32> to vector<1x1x1x4x1xf32>
    %584 = vector.shape_cast %583 : vector<1x1x1x4x1xf32> to vector<4x1xf32>
    %585 = vector.shape_cast %584 : vector<4x1xf32> to vector<1x4x1xf32>
    %586 = vector.broadcast %582 : vector<2x1x256xf32> to vector<2x4x256xf32>
    %587 = vector.broadcast %585 : vector<1x4x1xf32> to vector<2x4x256xf32>
    %588 = arith.mulf %586, %587 : vector<2x4x256xf32>
    %589 = arith.addf %561, %588 : vector<2x4x256xf32>
    %590 = vector.extract_strided_slice %581 {offsets = [0, 1, 0], sizes = [2, 1, 256], strides = [1, 1, 1]} : vector<2x4x256xf32> to vector<2x1x256xf32>
    %591 = vector.extract_strided_slice %7 {offsets = [0, 1, 1, 0, 0], sizes = [1, 1, 1, 4, 1], strides = [1, 1, 1, 1, 1]} : vector<3x3x4x4x1xf32> to vector<1x1x1x4x1xf32>
    %592 = vector.shape_cast %591 : vector<1x1x1x4x1xf32> to vector<4x1xf32>
    %593 = vector.shape_cast %592 : vector<4x1xf32> to vector<1x4x1xf32>
    %594 = vector.broadcast %590 : vector<2x1x256xf32> to vector<2x4x256xf32>
    %595 = vector.broadcast %593 : vector<1x4x1xf32> to vector<2x4x256xf32>
    %596 = arith.mulf %594, %595 : vector<2x4x256xf32>
    %597 = arith.addf %589, %596 : vector<2x4x256xf32>
    %598 = vector.extract_strided_slice %581 {offsets = [0, 2, 0], sizes = [2, 1, 256], strides = [1, 1, 1]} : vector<2x4x256xf32> to vector<2x1x256xf32>
    %599 = vector.extract_strided_slice %7 {offsets = [0, 1, 2, 0, 0], sizes = [1, 1, 1, 4, 1], strides = [1, 1, 1, 1, 1]} : vector<3x3x4x4x1xf32> to vector<1x1x1x4x1xf32>
    %600 = vector.shape_cast %599 : vector<1x1x1x4x1xf32> to vector<4x1xf32>
    %601 = vector.shape_cast %600 : vector<4x1xf32> to vector<1x4x1xf32>
    %602 = vector.broadcast %598 : vector<2x1x256xf32> to vector<2x4x256xf32>
    %603 = vector.broadcast %601 : vector<1x4x1xf32> to vector<2x4x256xf32>
    %604 = arith.mulf %602, %603 : vector<2x4x256xf32>
    %605 = arith.addf %597, %604 : vector<2x4x256xf32>
    %606 = vector.extract_strided_slice %581 {offsets = [0, 3, 0], sizes = [2, 1, 256], strides = [1, 1, 1]} : vector<2x4x256xf32> to vector<2x1x256xf32>
    %607 = vector.extract_strided_slice %7 {offsets = [0, 1, 3, 0, 0], sizes = [1, 1, 1, 4, 1], strides = [1, 1, 1, 1, 1]} : vector<3x3x4x4x1xf32> to vector<1x1x1x4x1xf32>
    %608 = vector.shape_cast %607 : vector<1x1x1x4x1xf32> to vector<4x1xf32>
    %609 = vector.shape_cast %608 : vector<4x1xf32> to vector<1x4x1xf32>
    %610 = vector.broadcast %606 : vector<2x1x256xf32> to vector<2x4x256xf32>
    %611 = vector.broadcast %609 : vector<1x4x1xf32> to vector<2x4x256xf32>
    %612 = arith.mulf %610, %611 : vector<2x4x256xf32>
    %613 = arith.addf %605, %612 : vector<2x4x256xf32>
    %c15_i32_109 = arith.constant 15 : i32
    %614 = tpu.dynamic_rotate %508 by %c15_i32_109 dim 2 : vector<2x4x256xf32>, i32 -> vector<2x4x256xf32>
    %c-1_i32_110 = arith.constant -1 : i32
    %615 = vector.broadcast %c-1_i32_110 : i32 to vector<1x1x256xi32>
    %616 = arith.addi %2, %615 : vector<1x1x256xi32>
    %c1_i32_111 = arith.constant 1 : i32
    %617 = vector.broadcast %c1_i32_111 : i32 to vector<1x1x256xi32>
    %618 = arith.addi %4, %617 : vector<1x1x256xi32>
    %c0_i32_112 = arith.constant 0 : i32
    %619 = vector.broadcast %c0_i32_112 : i32 to vector<1x1x256xi32>
    %620 = arith.cmpi sge, %616, %619 : vector<1x1x256xi32>
    %c16_i32_113 = arith.constant 16 : i32
    %621 = vector.broadcast %c16_i32_113 : i32 to vector<1x1x256xi32>
    %622 = arith.cmpi slt, %616, %621 : vector<1x1x256xi32>
    %623 = arith.andi %620, %622 : vector<1x1x256xi1>
    %c0_i32_114 = arith.constant 0 : i32
    %624 = vector.broadcast %c0_i32_114 : i32 to vector<1x1x256xi32>
    %625 = arith.cmpi sge, %618, %624 : vector<1x1x256xi32>
    %626 = arith.andi %623, %625 : vector<1x1x256xi1>
    %c16_i32_115 = arith.constant 16 : i32
    %627 = vector.broadcast %c16_i32_115 : i32 to vector<1x1x256xi32>
    %628 = arith.cmpi slt, %618, %627 : vector<1x1x256xi32>
    %629 = arith.andi %626, %628 : vector<1x1x256xi1>
    %cst_116 = arith.constant 0.000000e+00 : f32
    %630 = vector.shape_cast %629 : vector<1x1x256xi1> to vector<1x1x256xi1>
    %631 = vector.broadcast %630 : vector<1x1x256xi1> to vector<2x4x256xi1>
    %632 = vector.broadcast %cst_116 : f32 to vector<2x4x256xf32>
    %633 = arith.select %631, %614, %632 : vector<2x4x256xi1>, vector<2x4x256xf32>
    %634 = vector.extract_strided_slice %633 {offsets = [0, 0, 0], sizes = [2, 1, 256], strides = [1, 1, 1]} : vector<2x4x256xf32> to vector<2x1x256xf32>
    %635 = vector.extract_strided_slice %7 {offsets = [0, 2, 0, 0, 0], sizes = [1, 1, 1, 4, 1], strides = [1, 1, 1, 1, 1]} : vector<3x3x4x4x1xf32> to vector<1x1x1x4x1xf32>
    %636 = vector.shape_cast %635 : vector<1x1x1x4x1xf32> to vector<4x1xf32>
    %637 = vector.shape_cast %636 : vector<4x1xf32> to vector<1x4x1xf32>
    %638 = vector.broadcast %634 : vector<2x1x256xf32> to vector<2x4x256xf32>
    %639 = vector.broadcast %637 : vector<1x4x1xf32> to vector<2x4x256xf32>
    %640 = arith.mulf %638, %639 : vector<2x4x256xf32>
    %641 = arith.addf %613, %640 : vector<2x4x256xf32>
    %642 = vector.extract_strided_slice %633 {offsets = [0, 1, 0], sizes = [2, 1, 256], strides = [1, 1, 1]} : vector<2x4x256xf32> to vector<2x1x256xf32>
    %643 = vector.extract_strided_slice %7 {offsets = [0, 2, 1, 0, 0], sizes = [1, 1, 1, 4, 1], strides = [1, 1, 1, 1, 1]} : vector<3x3x4x4x1xf32> to vector<1x1x1x4x1xf32>
    %644 = vector.shape_cast %643 : vector<1x1x1x4x1xf32> to vector<4x1xf32>
    %645 = vector.shape_cast %644 : vector<4x1xf32> to vector<1x4x1xf32>
    %646 = vector.broadcast %642 : vector<2x1x256xf32> to vector<2x4x256xf32>
    %647 = vector.broadcast %645 : vector<1x4x1xf32> to vector<2x4x256xf32>
    %648 = arith.mulf %646, %647 : vector<2x4x256xf32>
    %649 = arith.addf %641, %648 : vector<2x4x256xf32>
    %650 = vector.extract_strided_slice %633 {offsets = [0, 2, 0], sizes = [2, 1, 256], strides = [1, 1, 1]} : vector<2x4x256xf32> to vector<2x1x256xf32>
    %651 = vector.extract_strided_slice %7 {offsets = [0, 2, 2, 0, 0], sizes = [1, 1, 1, 4, 1], strides = [1, 1, 1, 1, 1]} : vector<3x3x4x4x1xf32> to vector<1x1x1x4x1xf32>
    %652 = vector.shape_cast %651 : vector<1x1x1x4x1xf32> to vector<4x1xf32>
    %653 = vector.shape_cast %652 : vector<4x1xf32> to vector<1x4x1xf32>
    %654 = vector.broadcast %650 : vector<2x1x256xf32> to vector<2x4x256xf32>
    %655 = vector.broadcast %653 : vector<1x4x1xf32> to vector<2x4x256xf32>
    %656 = arith.mulf %654, %655 : vector<2x4x256xf32>
    %657 = arith.addf %649, %656 : vector<2x4x256xf32>
    %658 = vector.extract_strided_slice %633 {offsets = [0, 3, 0], sizes = [2, 1, 256], strides = [1, 1, 1]} : vector<2x4x256xf32> to vector<2x1x256xf32>
    %659 = vector.extract_strided_slice %7 {offsets = [0, 2, 3, 0, 0], sizes = [1, 1, 1, 4, 1], strides = [1, 1, 1, 1, 1]} : vector<3x3x4x4x1xf32> to vector<1x1x1x4x1xf32>
    %660 = vector.shape_cast %659 : vector<1x1x1x4x1xf32> to vector<4x1xf32>
    %661 = vector.shape_cast %660 : vector<4x1xf32> to vector<1x4x1xf32>
    %662 = vector.broadcast %658 : vector<2x1x256xf32> to vector<2x4x256xf32>
    %663 = vector.broadcast %661 : vector<1x4x1xf32> to vector<2x4x256xf32>
    %664 = arith.mulf %662, %663 : vector<2x4x256xf32>
    %665 = arith.addf %657, %664 : vector<2x4x256xf32>
    %c1_i32_117 = arith.constant 1 : i32
    %666 = tpu.dynamic_rotate %508 by %c1_i32_117 dim 2 : vector<2x4x256xf32>, i32 -> vector<2x4x256xf32>
    %c0_i32_118 = arith.constant 0 : i32
    %667 = vector.broadcast %c0_i32_118 : i32 to vector<1x1x256xi32>
    %668 = arith.addi %2, %667 : vector<1x1x256xi32>
    %c-1_i32_119 = arith.constant -1 : i32
    %669 = vector.broadcast %c-1_i32_119 : i32 to vector<1x1x256xi32>
    %670 = arith.addi %4, %669 : vector<1x1x256xi32>
    %c0_i32_120 = arith.constant 0 : i32
    %671 = vector.broadcast %c0_i32_120 : i32 to vector<1x1x256xi32>
    %672 = arith.cmpi sge, %668, %671 : vector<1x1x256xi32>
    %c16_i32_121 = arith.constant 16 : i32
    %673 = vector.broadcast %c16_i32_121 : i32 to vector<1x1x256xi32>
    %674 = arith.cmpi slt, %668, %673 : vector<1x1x256xi32>
    %675 = arith.andi %672, %674 : vector<1x1x256xi1>
    %c0_i32_122 = arith.constant 0 : i32
    %676 = vector.broadcast %c0_i32_122 : i32 to vector<1x1x256xi32>
    %677 = arith.cmpi sge, %670, %676 : vector<1x1x256xi32>
    %678 = arith.andi %675, %677 : vector<1x1x256xi1>
    %c16_i32_123 = arith.constant 16 : i32
    %679 = vector.broadcast %c16_i32_123 : i32 to vector<1x1x256xi32>
    %680 = arith.cmpi slt, %670, %679 : vector<1x1x256xi32>
    %681 = arith.andi %678, %680 : vector<1x1x256xi1>
    %cst_124 = arith.constant 0.000000e+00 : f32
    %682 = vector.shape_cast %681 : vector<1x1x256xi1> to vector<1x1x256xi1>
    %683 = vector.broadcast %682 : vector<1x1x256xi1> to vector<2x4x256xi1>
    %684 = vector.broadcast %cst_124 : f32 to vector<2x4x256xf32>
    %685 = arith.select %683, %666, %684 : vector<2x4x256xi1>, vector<2x4x256xf32>
    %686 = vector.extract_strided_slice %685 {offsets = [0, 0, 0], sizes = [2, 1, 256], strides = [1, 1, 1]} : vector<2x4x256xf32> to vector<2x1x256xf32>
    %687 = vector.extract_strided_slice %7 {offsets = [1, 0, 0, 0, 0], sizes = [1, 1, 1, 4, 1], strides = [1, 1, 1, 1, 1]} : vector<3x3x4x4x1xf32> to vector<1x1x1x4x1xf32>
    %688 = vector.shape_cast %687 : vector<1x1x1x4x1xf32> to vector<4x1xf32>
    %689 = vector.shape_cast %688 : vector<4x1xf32> to vector<1x4x1xf32>
    %690 = vector.broadcast %686 : vector<2x1x256xf32> to vector<2x4x256xf32>
    %691 = vector.broadcast %689 : vector<1x4x1xf32> to vector<2x4x256xf32>
    %692 = arith.mulf %690, %691 : vector<2x4x256xf32>
    %693 = arith.addf %665, %692 : vector<2x4x256xf32>
    %694 = vector.extract_strided_slice %685 {offsets = [0, 1, 0], sizes = [2, 1, 256], strides = [1, 1, 1]} : vector<2x4x256xf32> to vector<2x1x256xf32>
    %695 = vector.extract_strided_slice %7 {offsets = [1, 0, 1, 0, 0], sizes = [1, 1, 1, 4, 1], strides = [1, 1, 1, 1, 1]} : vector<3x3x4x4x1xf32> to vector<1x1x1x4x1xf32>
    %696 = vector.shape_cast %695 : vector<1x1x1x4x1xf32> to vector<4x1xf32>
    %697 = vector.shape_cast %696 : vector<4x1xf32> to vector<1x4x1xf32>
    %698 = vector.broadcast %694 : vector<2x1x256xf32> to vector<2x4x256xf32>
    %699 = vector.broadcast %697 : vector<1x4x1xf32> to vector<2x4x256xf32>
    %700 = arith.mulf %698, %699 : vector<2x4x256xf32>
    %701 = arith.addf %693, %700 : vector<2x4x256xf32>
    %702 = vector.extract_strided_slice %685 {offsets = [0, 2, 0], sizes = [2, 1, 256], strides = [1, 1, 1]} : vector<2x4x256xf32> to vector<2x1x256xf32>
    %703 = vector.extract_strided_slice %7 {offsets = [1, 0, 2, 0, 0], sizes = [1, 1, 1, 4, 1], strides = [1, 1, 1, 1, 1]} : vector<3x3x4x4x1xf32> to vector<1x1x1x4x1xf32>
    %704 = vector.shape_cast %703 : vector<1x1x1x4x1xf32> to vector<4x1xf32>
    %705 = vector.shape_cast %704 : vector<4x1xf32> to vector<1x4x1xf32>
    %706 = vector.broadcast %702 : vector<2x1x256xf32> to vector<2x4x256xf32>
    %707 = vector.broadcast %705 : vector<1x4x1xf32> to vector<2x4x256xf32>
    %708 = arith.mulf %706, %707 : vector<2x4x256xf32>
    %709 = arith.addf %701, %708 : vector<2x4x256xf32>
    %710 = vector.extract_strided_slice %685 {offsets = [0, 3, 0], sizes = [2, 1, 256], strides = [1, 1, 1]} : vector<2x4x256xf32> to vector<2x1x256xf32>
    %711 = vector.extract_strided_slice %7 {offsets = [1, 0, 3, 0, 0], sizes = [1, 1, 1, 4, 1], strides = [1, 1, 1, 1, 1]} : vector<3x3x4x4x1xf32> to vector<1x1x1x4x1xf32>
    %712 = vector.shape_cast %711 : vector<1x1x1x4x1xf32> to vector<4x1xf32>
    %713 = vector.shape_cast %712 : vector<4x1xf32> to vector<1x4x1xf32>
    %714 = vector.broadcast %710 : vector<2x1x256xf32> to vector<2x4x256xf32>
    %715 = vector.broadcast %713 : vector<1x4x1xf32> to vector<2x4x256xf32>
    %716 = arith.mulf %714, %715 : vector<2x4x256xf32>
    %717 = arith.addf %709, %716 : vector<2x4x256xf32>
    %c0_i32_125 = arith.constant 0 : i32
    %718 = vector.broadcast %c0_i32_125 : i32 to vector<1x1x256xi32>
    %719 = arith.addi %2, %718 : vector<1x1x256xi32>
    %c0_i32_126 = arith.constant 0 : i32
    %720 = vector.broadcast %c0_i32_126 : i32 to vector<1x1x256xi32>
    %721 = arith.addi %4, %720 : vector<1x1x256xi32>
    %c0_i32_127 = arith.constant 0 : i32
    %722 = vector.broadcast %c0_i32_127 : i32 to vector<1x1x256xi32>
    %723 = arith.cmpi sge, %719, %722 : vector<1x1x256xi32>
    %c16_i32_128 = arith.constant 16 : i32
    %724 = vector.broadcast %c16_i32_128 : i32 to vector<1x1x256xi32>
    %725 = arith.cmpi slt, %719, %724 : vector<1x1x256xi32>
    %726 = arith.andi %723, %725 : vector<1x1x256xi1>
    %c0_i32_129 = arith.constant 0 : i32
    %727 = vector.broadcast %c0_i32_129 : i32 to vector<1x1x256xi32>
    %728 = arith.cmpi sge, %721, %727 : vector<1x1x256xi32>
    %729 = arith.andi %726, %728 : vector<1x1x256xi1>
    %c16_i32_130 = arith.constant 16 : i32
    %730 = vector.broadcast %c16_i32_130 : i32 to vector<1x1x256xi32>
    %731 = arith.cmpi slt, %721, %730 : vector<1x1x256xi32>
    %732 = arith.andi %729, %731 : vector<1x1x256xi1>
    %cst_131 = arith.constant 0.000000e+00 : f32
    %733 = vector.shape_cast %732 : vector<1x1x256xi1> to vector<1x1x256xi1>
    %734 = vector.broadcast %733 : vector<1x1x256xi1> to vector<2x4x256xi1>
    %735 = vector.broadcast %cst_131 : f32 to vector<2x4x256xf32>
    %736 = arith.select %734, %508, %735 : vector<2x4x256xi1>, vector<2x4x256xf32>
    %737 = vector.extract_strided_slice %736 {offsets = [0, 0, 0], sizes = [2, 1, 256], strides = [1, 1, 1]} : vector<2x4x256xf32> to vector<2x1x256xf32>
    %738 = vector.extract_strided_slice %7 {offsets = [1, 1, 0, 0, 0], sizes = [1, 1, 1, 4, 1], strides = [1, 1, 1, 1, 1]} : vector<3x3x4x4x1xf32> to vector<1x1x1x4x1xf32>
    %739 = vector.shape_cast %738 : vector<1x1x1x4x1xf32> to vector<4x1xf32>
    %740 = vector.shape_cast %739 : vector<4x1xf32> to vector<1x4x1xf32>
    %741 = vector.broadcast %737 : vector<2x1x256xf32> to vector<2x4x256xf32>
    %742 = vector.broadcast %740 : vector<1x4x1xf32> to vector<2x4x256xf32>
    %743 = arith.mulf %741, %742 : vector<2x4x256xf32>
    %744 = arith.addf %717, %743 : vector<2x4x256xf32>
    %745 = vector.extract_strided_slice %736 {offsets = [0, 1, 0], sizes = [2, 1, 256], strides = [1, 1, 1]} : vector<2x4x256xf32> to vector<2x1x256xf32>
    %746 = vector.extract_strided_slice %7 {offsets = [1, 1, 1, 0, 0], sizes = [1, 1, 1, 4, 1], strides = [1, 1, 1, 1, 1]} : vector<3x3x4x4x1xf32> to vector<1x1x1x4x1xf32>
    %747 = vector.shape_cast %746 : vector<1x1x1x4x1xf32> to vector<4x1xf32>
    %748 = vector.shape_cast %747 : vector<4x1xf32> to vector<1x4x1xf32>
    %749 = vector.broadcast %745 : vector<2x1x256xf32> to vector<2x4x256xf32>
    %750 = vector.broadcast %748 : vector<1x4x1xf32> to vector<2x4x256xf32>
    %751 = arith.mulf %749, %750 : vector<2x4x256xf32>
    %752 = arith.addf %744, %751 : vector<2x4x256xf32>
    %753 = vector.extract_strided_slice %736 {offsets = [0, 2, 0], sizes = [2, 1, 256], strides = [1, 1, 1]} : vector<2x4x256xf32> to vector<2x1x256xf32>
    %754 = vector.extract_strided_slice %7 {offsets = [1, 1, 2, 0, 0], sizes = [1, 1, 1, 4, 1], strides = [1, 1, 1, 1, 1]} : vector<3x3x4x4x1xf32> to vector<1x1x1x4x1xf32>
    %755 = vector.shape_cast %754 : vector<1x1x1x4x1xf32> to vector<4x1xf32>
    %756 = vector.shape_cast %755 : vector<4x1xf32> to vector<1x4x1xf32>
    %757 = vector.broadcast %753 : vector<2x1x256xf32> to vector<2x4x256xf32>
    %758 = vector.broadcast %756 : vector<1x4x1xf32> to vector<2x4x256xf32>
    %759 = arith.mulf %757, %758 : vector<2x4x256xf32>
    %760 = arith.addf %752, %759 : vector<2x4x256xf32>
    %761 = vector.extract_strided_slice %736 {offsets = [0, 3, 0], sizes = [2, 1, 256], strides = [1, 1, 1]} : vector<2x4x256xf32> to vector<2x1x256xf32>
    %762 = vector.extract_strided_slice %7 {offsets = [1, 1, 3, 0, 0], sizes = [1, 1, 1, 4, 1], strides = [1, 1, 1, 1, 1]} : vector<3x3x4x4x1xf32> to vector<1x1x1x4x1xf32>
    %763 = vector.shape_cast %762 : vector<1x1x1x4x1xf32> to vector<4x1xf32>
    %764 = vector.shape_cast %763 : vector<4x1xf32> to vector<1x4x1xf32>
    %765 = vector.broadcast %761 : vector<2x1x256xf32> to vector<2x4x256xf32>
    %766 = vector.broadcast %764 : vector<1x4x1xf32> to vector<2x4x256xf32>
    %767 = arith.mulf %765, %766 : vector<2x4x256xf32>
    %768 = arith.addf %760, %767 : vector<2x4x256xf32>
    %c255_i32_132 = arith.constant 255 : i32
    %769 = tpu.dynamic_rotate %508 by %c255_i32_132 dim 2 : vector<2x4x256xf32>, i32 -> vector<2x4x256xf32>
    %c0_i32_133 = arith.constant 0 : i32
    %770 = vector.broadcast %c0_i32_133 : i32 to vector<1x1x256xi32>
    %771 = arith.addi %2, %770 : vector<1x1x256xi32>
    %c1_i32_134 = arith.constant 1 : i32
    %772 = vector.broadcast %c1_i32_134 : i32 to vector<1x1x256xi32>
    %773 = arith.addi %4, %772 : vector<1x1x256xi32>
    %c0_i32_135 = arith.constant 0 : i32
    %774 = vector.broadcast %c0_i32_135 : i32 to vector<1x1x256xi32>
    %775 = arith.cmpi sge, %771, %774 : vector<1x1x256xi32>
    %c16_i32_136 = arith.constant 16 : i32
    %776 = vector.broadcast %c16_i32_136 : i32 to vector<1x1x256xi32>
    %777 = arith.cmpi slt, %771, %776 : vector<1x1x256xi32>
    %778 = arith.andi %775, %777 : vector<1x1x256xi1>
    %c0_i32_137 = arith.constant 0 : i32
    %779 = vector.broadcast %c0_i32_137 : i32 to vector<1x1x256xi32>
    %780 = arith.cmpi sge, %773, %779 : vector<1x1x256xi32>
    %781 = arith.andi %778, %780 : vector<1x1x256xi1>
    %c16_i32_138 = arith.constant 16 : i32
    %782 = vector.broadcast %c16_i32_138 : i32 to vector<1x1x256xi32>
    %783 = arith.cmpi slt, %773, %782 : vector<1x1x256xi32>
    %784 = arith.andi %781, %783 : vector<1x1x256xi1>
    %cst_139 = arith.constant 0.000000e+00 : f32
    %785 = vector.shape_cast %784 : vector<1x1x256xi1> to vector<1x1x256xi1>
    %786 = vector.broadcast %785 : vector<1x1x256xi1> to vector<2x4x256xi1>
    %787 = vector.broadcast %cst_139 : f32 to vector<2x4x256xf32>
    %788 = arith.select %786, %769, %787 : vector<2x4x256xi1>, vector<2x4x256xf32>
    %789 = vector.extract_strided_slice %788 {offsets = [0, 0, 0], sizes = [2, 1, 256], strides = [1, 1, 1]} : vector<2x4x256xf32> to vector<2x1x256xf32>
    %790 = vector.extract_strided_slice %7 {offsets = [1, 2, 0, 0, 0], sizes = [1, 1, 1, 4, 1], strides = [1, 1, 1, 1, 1]} : vector<3x3x4x4x1xf32> to vector<1x1x1x4x1xf32>
    %791 = vector.shape_cast %790 : vector<1x1x1x4x1xf32> to vector<4x1xf32>
    %792 = vector.shape_cast %791 : vector<4x1xf32> to vector<1x4x1xf32>
    %793 = vector.broadcast %789 : vector<2x1x256xf32> to vector<2x4x256xf32>
    %794 = vector.broadcast %792 : vector<1x4x1xf32> to vector<2x4x256xf32>
    %795 = arith.mulf %793, %794 : vector<2x4x256xf32>
    %796 = arith.addf %768, %795 : vector<2x4x256xf32>
    %797 = vector.extract_strided_slice %788 {offsets = [0, 1, 0], sizes = [2, 1, 256], strides = [1, 1, 1]} : vector<2x4x256xf32> to vector<2x1x256xf32>
    %798 = vector.extract_strided_slice %7 {offsets = [1, 2, 1, 0, 0], sizes = [1, 1, 1, 4, 1], strides = [1, 1, 1, 1, 1]} : vector<3x3x4x4x1xf32> to vector<1x1x1x4x1xf32>
    %799 = vector.shape_cast %798 : vector<1x1x1x4x1xf32> to vector<4x1xf32>
    %800 = vector.shape_cast %799 : vector<4x1xf32> to vector<1x4x1xf32>
    %801 = vector.broadcast %797 : vector<2x1x256xf32> to vector<2x4x256xf32>
    %802 = vector.broadcast %800 : vector<1x4x1xf32> to vector<2x4x256xf32>
    %803 = arith.mulf %801, %802 : vector<2x4x256xf32>
    %804 = arith.addf %796, %803 : vector<2x4x256xf32>
    %805 = vector.extract_strided_slice %788 {offsets = [0, 2, 0], sizes = [2, 1, 256], strides = [1, 1, 1]} : vector<2x4x256xf32> to vector<2x1x256xf32>
    %806 = vector.extract_strided_slice %7 {offsets = [1, 2, 2, 0, 0], sizes = [1, 1, 1, 4, 1], strides = [1, 1, 1, 1, 1]} : vector<3x3x4x4x1xf32> to vector<1x1x1x4x1xf32>
    %807 = vector.shape_cast %806 : vector<1x1x1x4x1xf32> to vector<4x1xf32>
    %808 = vector.shape_cast %807 : vector<4x1xf32> to vector<1x4x1xf32>
    %809 = vector.broadcast %805 : vector<2x1x256xf32> to vector<2x4x256xf32>
    %810 = vector.broadcast %808 : vector<1x4x1xf32> to vector<2x4x256xf32>
    %811 = arith.mulf %809, %810 : vector<2x4x256xf32>
    %812 = arith.addf %804, %811 : vector<2x4x256xf32>
    %813 = vector.extract_strided_slice %788 {offsets = [0, 3, 0], sizes = [2, 1, 256], strides = [1, 1, 1]} : vector<2x4x256xf32> to vector<2x1x256xf32>
    %814 = vector.extract_strided_slice %7 {offsets = [1, 2, 3, 0, 0], sizes = [1, 1, 1, 4, 1], strides = [1, 1, 1, 1, 1]} : vector<3x3x4x4x1xf32> to vector<1x1x1x4x1xf32>
    %815 = vector.shape_cast %814 : vector<1x1x1x4x1xf32> to vector<4x1xf32>
    %816 = vector.shape_cast %815 : vector<4x1xf32> to vector<1x4x1xf32>
    %817 = vector.broadcast %813 : vector<2x1x256xf32> to vector<2x4x256xf32>
    %818 = vector.broadcast %816 : vector<1x4x1xf32> to vector<2x4x256xf32>
    %819 = arith.mulf %817, %818 : vector<2x4x256xf32>
    %820 = arith.addf %812, %819 : vector<2x4x256xf32>
    %c241_i32_140 = arith.constant 241 : i32
    %821 = tpu.dynamic_rotate %508 by %c241_i32_140 dim 2 : vector<2x4x256xf32>, i32 -> vector<2x4x256xf32>
    %c1_i32_141 = arith.constant 1 : i32
    %822 = vector.broadcast %c1_i32_141 : i32 to vector<1x1x256xi32>
    %823 = arith.addi %2, %822 : vector<1x1x256xi32>
    %c-1_i32_142 = arith.constant -1 : i32
    %824 = vector.broadcast %c-1_i32_142 : i32 to vector<1x1x256xi32>
    %825 = arith.addi %4, %824 : vector<1x1x256xi32>
    %c0_i32_143 = arith.constant 0 : i32
    %826 = vector.broadcast %c0_i32_143 : i32 to vector<1x1x256xi32>
    %827 = arith.cmpi sge, %823, %826 : vector<1x1x256xi32>
    %c16_i32_144 = arith.constant 16 : i32
    %828 = vector.broadcast %c16_i32_144 : i32 to vector<1x1x256xi32>
    %829 = arith.cmpi slt, %823, %828 : vector<1x1x256xi32>
    %830 = arith.andi %827, %829 : vector<1x1x256xi1>
    %c0_i32_145 = arith.constant 0 : i32
    %831 = vector.broadcast %c0_i32_145 : i32 to vector<1x1x256xi32>
    %832 = arith.cmpi sge, %825, %831 : vector<1x1x256xi32>
    %833 = arith.andi %830, %832 : vector<1x1x256xi1>
    %c16_i32_146 = arith.constant 16 : i32
    %834 = vector.broadcast %c16_i32_146 : i32 to vector<1x1x256xi32>
    %835 = arith.cmpi slt, %825, %834 : vector<1x1x256xi32>
    %836 = arith.andi %833, %835 : vector<1x1x256xi1>
    %cst_147 = arith.constant 0.000000e+00 : f32
    %837 = vector.shape_cast %836 : vector<1x1x256xi1> to vector<1x1x256xi1>
    %838 = vector.broadcast %837 : vector<1x1x256xi1> to vector<2x4x256xi1>
    %839 = vector.broadcast %cst_147 : f32 to vector<2x4x256xf32>
    %840 = arith.select %838, %821, %839 : vector<2x4x256xi1>, vector<2x4x256xf32>
    %841 = vector.extract_strided_slice %840 {offsets = [0, 0, 0], sizes = [2, 1, 256], strides = [1, 1, 1]} : vector<2x4x256xf32> to vector<2x1x256xf32>
    %842 = vector.extract_strided_slice %7 {offsets = [2, 0, 0, 0, 0], sizes = [1, 1, 1, 4, 1], strides = [1, 1, 1, 1, 1]} : vector<3x3x4x4x1xf32> to vector<1x1x1x4x1xf32>
    %843 = vector.shape_cast %842 : vector<1x1x1x4x1xf32> to vector<4x1xf32>
    %844 = vector.shape_cast %843 : vector<4x1xf32> to vector<1x4x1xf32>
    %845 = vector.broadcast %841 : vector<2x1x256xf32> to vector<2x4x256xf32>
    %846 = vector.broadcast %844 : vector<1x4x1xf32> to vector<2x4x256xf32>
    %847 = arith.mulf %845, %846 : vector<2x4x256xf32>
    %848 = arith.addf %820, %847 : vector<2x4x256xf32>
    %849 = vector.extract_strided_slice %840 {offsets = [0, 1, 0], sizes = [2, 1, 256], strides = [1, 1, 1]} : vector<2x4x256xf32> to vector<2x1x256xf32>
    %850 = vector.extract_strided_slice %7 {offsets = [2, 0, 1, 0, 0], sizes = [1, 1, 1, 4, 1], strides = [1, 1, 1, 1, 1]} : vector<3x3x4x4x1xf32> to vector<1x1x1x4x1xf32>
    %851 = vector.shape_cast %850 : vector<1x1x1x4x1xf32> to vector<4x1xf32>
    %852 = vector.shape_cast %851 : vector<4x1xf32> to vector<1x4x1xf32>
    %853 = vector.broadcast %849 : vector<2x1x256xf32> to vector<2x4x256xf32>
    %854 = vector.broadcast %852 : vector<1x4x1xf32> to vector<2x4x256xf32>
    %855 = arith.mulf %853, %854 : vector<2x4x256xf32>
    %856 = arith.addf %848, %855 : vector<2x4x256xf32>
    %857 = vector.extract_strided_slice %840 {offsets = [0, 2, 0], sizes = [2, 1, 256], strides = [1, 1, 1]} : vector<2x4x256xf32> to vector<2x1x256xf32>
    %858 = vector.extract_strided_slice %7 {offsets = [2, 0, 2, 0, 0], sizes = [1, 1, 1, 4, 1], strides = [1, 1, 1, 1, 1]} : vector<3x3x4x4x1xf32> to vector<1x1x1x4x1xf32>
    %859 = vector.shape_cast %858 : vector<1x1x1x4x1xf32> to vector<4x1xf32>
    %860 = vector.shape_cast %859 : vector<4x1xf32> to vector<1x4x1xf32>
    %861 = vector.broadcast %857 : vector<2x1x256xf32> to vector<2x4x256xf32>
    %862 = vector.broadcast %860 : vector<1x4x1xf32> to vector<2x4x256xf32>
    %863 = arith.mulf %861, %862 : vector<2x4x256xf32>
    %864 = arith.addf %856, %863 : vector<2x4x256xf32>
    %865 = vector.extract_strided_slice %840 {offsets = [0, 3, 0], sizes = [2, 1, 256], strides = [1, 1, 1]} : vector<2x4x256xf32> to vector<2x1x256xf32>
    %866 = vector.extract_strided_slice %7 {offsets = [2, 0, 3, 0, 0], sizes = [1, 1, 1, 4, 1], strides = [1, 1, 1, 1, 1]} : vector<3x3x4x4x1xf32> to vector<1x1x1x4x1xf32>
    %867 = vector.shape_cast %866 : vector<1x1x1x4x1xf32> to vector<4x1xf32>
    %868 = vector.shape_cast %867 : vector<4x1xf32> to vector<1x4x1xf32>
    %869 = vector.broadcast %865 : vector<2x1x256xf32> to vector<2x4x256xf32>
    %870 = vector.broadcast %868 : vector<1x4x1xf32> to vector<2x4x256xf32>
    %871 = arith.mulf %869, %870 : vector<2x4x256xf32>
    %872 = arith.addf %864, %871 : vector<2x4x256xf32>
    %c240_i32_148 = arith.constant 240 : i32
    %873 = tpu.dynamic_rotate %508 by %c240_i32_148 dim 2 : vector<2x4x256xf32>, i32 -> vector<2x4x256xf32>
    %c1_i32_149 = arith.constant 1 : i32
    %874 = vector.broadcast %c1_i32_149 : i32 to vector<1x1x256xi32>
    %875 = arith.addi %2, %874 : vector<1x1x256xi32>
    %c0_i32_150 = arith.constant 0 : i32
    %876 = vector.broadcast %c0_i32_150 : i32 to vector<1x1x256xi32>
    %877 = arith.addi %4, %876 : vector<1x1x256xi32>
    %c0_i32_151 = arith.constant 0 : i32
    %878 = vector.broadcast %c0_i32_151 : i32 to vector<1x1x256xi32>
    %879 = arith.cmpi sge, %875, %878 : vector<1x1x256xi32>
    %c16_i32_152 = arith.constant 16 : i32
    %880 = vector.broadcast %c16_i32_152 : i32 to vector<1x1x256xi32>
    %881 = arith.cmpi slt, %875, %880 : vector<1x1x256xi32>
    %882 = arith.andi %879, %881 : vector<1x1x256xi1>
    %c0_i32_153 = arith.constant 0 : i32
    %883 = vector.broadcast %c0_i32_153 : i32 to vector<1x1x256xi32>
    %884 = arith.cmpi sge, %877, %883 : vector<1x1x256xi32>
    %885 = arith.andi %882, %884 : vector<1x1x256xi1>
    %c16_i32_154 = arith.constant 16 : i32
    %886 = vector.broadcast %c16_i32_154 : i32 to vector<1x1x256xi32>
    %887 = arith.cmpi slt, %877, %886 : vector<1x1x256xi32>
    %888 = arith.andi %885, %887 : vector<1x1x256xi1>
    %cst_155 = arith.constant 0.000000e+00 : f32
    %889 = vector.shape_cast %888 : vector<1x1x256xi1> to vector<1x1x256xi1>
    %890 = vector.broadcast %889 : vector<1x1x256xi1> to vector<2x4x256xi1>
    %891 = vector.broadcast %cst_155 : f32 to vector<2x4x256xf32>
    %892 = arith.select %890, %873, %891 : vector<2x4x256xi1>, vector<2x4x256xf32>
    %893 = vector.extract_strided_slice %892 {offsets = [0, 0, 0], sizes = [2, 1, 256], strides = [1, 1, 1]} : vector<2x4x256xf32> to vector<2x1x256xf32>
    %894 = vector.extract_strided_slice %7 {offsets = [2, 1, 0, 0, 0], sizes = [1, 1, 1, 4, 1], strides = [1, 1, 1, 1, 1]} : vector<3x3x4x4x1xf32> to vector<1x1x1x4x1xf32>
    %895 = vector.shape_cast %894 : vector<1x1x1x4x1xf32> to vector<4x1xf32>
    %896 = vector.shape_cast %895 : vector<4x1xf32> to vector<1x4x1xf32>
    %897 = vector.broadcast %893 : vector<2x1x256xf32> to vector<2x4x256xf32>
    %898 = vector.broadcast %896 : vector<1x4x1xf32> to vector<2x4x256xf32>
    %899 = arith.mulf %897, %898 : vector<2x4x256xf32>
    %900 = arith.addf %872, %899 : vector<2x4x256xf32>
    %901 = vector.extract_strided_slice %892 {offsets = [0, 1, 0], sizes = [2, 1, 256], strides = [1, 1, 1]} : vector<2x4x256xf32> to vector<2x1x256xf32>
    %902 = vector.extract_strided_slice %7 {offsets = [2, 1, 1, 0, 0], sizes = [1, 1, 1, 4, 1], strides = [1, 1, 1, 1, 1]} : vector<3x3x4x4x1xf32> to vector<1x1x1x4x1xf32>
    %903 = vector.shape_cast %902 : vector<1x1x1x4x1xf32> to vector<4x1xf32>
    %904 = vector.shape_cast %903 : vector<4x1xf32> to vector<1x4x1xf32>
    %905 = vector.broadcast %901 : vector<2x1x256xf32> to vector<2x4x256xf32>
    %906 = vector.broadcast %904 : vector<1x4x1xf32> to vector<2x4x256xf32>
    %907 = arith.mulf %905, %906 : vector<2x4x256xf32>
    %908 = arith.addf %900, %907 : vector<2x4x256xf32>
    %909 = vector.extract_strided_slice %892 {offsets = [0, 2, 0], sizes = [2, 1, 256], strides = [1, 1, 1]} : vector<2x4x256xf32> to vector<2x1x256xf32>
    %910 = vector.extract_strided_slice %7 {offsets = [2, 1, 2, 0, 0], sizes = [1, 1, 1, 4, 1], strides = [1, 1, 1, 1, 1]} : vector<3x3x4x4x1xf32> to vector<1x1x1x4x1xf32>
    %911 = vector.shape_cast %910 : vector<1x1x1x4x1xf32> to vector<4x1xf32>
    %912 = vector.shape_cast %911 : vector<4x1xf32> to vector<1x4x1xf32>
    %913 = vector.broadcast %909 : vector<2x1x256xf32> to vector<2x4x256xf32>
    %914 = vector.broadcast %912 : vector<1x4x1xf32> to vector<2x4x256xf32>
    %915 = arith.mulf %913, %914 : vector<2x4x256xf32>
    %916 = arith.addf %908, %915 : vector<2x4x256xf32>
    %917 = vector.extract_strided_slice %892 {offsets = [0, 3, 0], sizes = [2, 1, 256], strides = [1, 1, 1]} : vector<2x4x256xf32> to vector<2x1x256xf32>
    %918 = vector.extract_strided_slice %7 {offsets = [2, 1, 3, 0, 0], sizes = [1, 1, 1, 4, 1], strides = [1, 1, 1, 1, 1]} : vector<3x3x4x4x1xf32> to vector<1x1x1x4x1xf32>
    %919 = vector.shape_cast %918 : vector<1x1x1x4x1xf32> to vector<4x1xf32>
    %920 = vector.shape_cast %919 : vector<4x1xf32> to vector<1x4x1xf32>
    %921 = vector.broadcast %917 : vector<2x1x256xf32> to vector<2x4x256xf32>
    %922 = vector.broadcast %920 : vector<1x4x1xf32> to vector<2x4x256xf32>
    %923 = arith.mulf %921, %922 : vector<2x4x256xf32>
    %924 = arith.addf %916, %923 : vector<2x4x256xf32>
    %c239_i32_156 = arith.constant 239 : i32
    %925 = tpu.dynamic_rotate %508 by %c239_i32_156 dim 2 : vector<2x4x256xf32>, i32 -> vector<2x4x256xf32>
    %c1_i32_157 = arith.constant 1 : i32
    %926 = vector.broadcast %c1_i32_157 : i32 to vector<1x1x256xi32>
    %927 = arith.addi %2, %926 : vector<1x1x256xi32>
    %c1_i32_158 = arith.constant 1 : i32
    %928 = vector.broadcast %c1_i32_158 : i32 to vector<1x1x256xi32>
    %929 = arith.addi %4, %928 : vector<1x1x256xi32>
    %c0_i32_159 = arith.constant 0 : i32
    %930 = vector.broadcast %c0_i32_159 : i32 to vector<1x1x256xi32>
    %931 = arith.cmpi sge, %927, %930 : vector<1x1x256xi32>
    %c16_i32_160 = arith.constant 16 : i32
    %932 = vector.broadcast %c16_i32_160 : i32 to vector<1x1x256xi32>
    %933 = arith.cmpi slt, %927, %932 : vector<1x1x256xi32>
    %934 = arith.andi %931, %933 : vector<1x1x256xi1>
    %c0_i32_161 = arith.constant 0 : i32
    %935 = vector.broadcast %c0_i32_161 : i32 to vector<1x1x256xi32>
    %936 = arith.cmpi sge, %929, %935 : vector<1x1x256xi32>
    %937 = arith.andi %934, %936 : vector<1x1x256xi1>
    %c16_i32_162 = arith.constant 16 : i32
    %938 = vector.broadcast %c16_i32_162 : i32 to vector<1x1x256xi32>
    %939 = arith.cmpi slt, %929, %938 : vector<1x1x256xi32>
    %940 = arith.andi %937, %939 : vector<1x1x256xi1>
    %cst_163 = arith.constant 0.000000e+00 : f32
    %941 = vector.shape_cast %940 : vector<1x1x256xi1> to vector<1x1x256xi1>
    %942 = vector.broadcast %941 : vector<1x1x256xi1> to vector<2x4x256xi1>
    %943 = vector.broadcast %cst_163 : f32 to vector<2x4x256xf32>
    %944 = arith.select %942, %925, %943 : vector<2x4x256xi1>, vector<2x4x256xf32>
    %945 = vector.extract_strided_slice %944 {offsets = [0, 0, 0], sizes = [2, 1, 256], strides = [1, 1, 1]} : vector<2x4x256xf32> to vector<2x1x256xf32>
    %946 = vector.extract_strided_slice %7 {offsets = [2, 2, 0, 0, 0], sizes = [1, 1, 1, 4, 1], strides = [1, 1, 1, 1, 1]} : vector<3x3x4x4x1xf32> to vector<1x1x1x4x1xf32>
    %947 = vector.shape_cast %946 : vector<1x1x1x4x1xf32> to vector<4x1xf32>
    %948 = vector.shape_cast %947 : vector<4x1xf32> to vector<1x4x1xf32>
    %949 = vector.broadcast %945 : vector<2x1x256xf32> to vector<2x4x256xf32>
    %950 = vector.broadcast %948 : vector<1x4x1xf32> to vector<2x4x256xf32>
    %951 = arith.mulf %949, %950 : vector<2x4x256xf32>
    %952 = arith.addf %924, %951 : vector<2x4x256xf32>
    %953 = vector.extract_strided_slice %944 {offsets = [0, 1, 0], sizes = [2, 1, 256], strides = [1, 1, 1]} : vector<2x4x256xf32> to vector<2x1x256xf32>
    %954 = vector.extract_strided_slice %7 {offsets = [2, 2, 1, 0, 0], sizes = [1, 1, 1, 4, 1], strides = [1, 1, 1, 1, 1]} : vector<3x3x4x4x1xf32> to vector<1x1x1x4x1xf32>
    %955 = vector.shape_cast %954 : vector<1x1x1x4x1xf32> to vector<4x1xf32>
    %956 = vector.shape_cast %955 : vector<4x1xf32> to vector<1x4x1xf32>
    %957 = vector.broadcast %953 : vector<2x1x256xf32> to vector<2x4x256xf32>
    %958 = vector.broadcast %956 : vector<1x4x1xf32> to vector<2x4x256xf32>
    %959 = arith.mulf %957, %958 : vector<2x4x256xf32>
    %960 = arith.addf %952, %959 : vector<2x4x256xf32>
    %961 = vector.extract_strided_slice %944 {offsets = [0, 2, 0], sizes = [2, 1, 256], strides = [1, 1, 1]} : vector<2x4x256xf32> to vector<2x1x256xf32>
    %962 = vector.extract_strided_slice %7 {offsets = [2, 2, 2, 0, 0], sizes = [1, 1, 1, 4, 1], strides = [1, 1, 1, 1, 1]} : vector<3x3x4x4x1xf32> to vector<1x1x1x4x1xf32>
    %963 = vector.shape_cast %962 : vector<1x1x1x4x1xf32> to vector<4x1xf32>
    %964 = vector.shape_cast %963 : vector<4x1xf32> to vector<1x4x1xf32>
    %965 = vector.broadcast %961 : vector<2x1x256xf32> to vector<2x4x256xf32>
    %966 = vector.broadcast %964 : vector<1x4x1xf32> to vector<2x4x256xf32>
    %967 = arith.mulf %965, %966 : vector<2x4x256xf32>
    %968 = arith.addf %960, %967 : vector<2x4x256xf32>
    %969 = vector.extract_strided_slice %944 {offsets = [0, 3, 0], sizes = [2, 1, 256], strides = [1, 1, 1]} : vector<2x4x256xf32> to vector<2x1x256xf32>
    %970 = vector.extract_strided_slice %7 {offsets = [2, 2, 3, 0, 0], sizes = [1, 1, 1, 4, 1], strides = [1, 1, 1, 1, 1]} : vector<3x3x4x4x1xf32> to vector<1x1x1x4x1xf32>
    %971 = vector.shape_cast %970 : vector<1x1x1x4x1xf32> to vector<4x1xf32>
    %972 = vector.shape_cast %971 : vector<4x1xf32> to vector<1x4x1xf32>
    %973 = vector.broadcast %969 : vector<2x1x256xf32> to vector<2x4x256xf32>
    %974 = vector.broadcast %972 : vector<1x4x1xf32> to vector<2x4x256xf32>
    %975 = arith.mulf %973, %974 : vector<2x4x256xf32>
    %976 = arith.addf %968, %975 : vector<2x4x256xf32>
    %c0_164 = arith.constant 0 : index
    %c0_165 = arith.constant 0 : index
    %977 = vector.load %arg5[%c0_164, %c0_165] : memref<4x1xf32, #tpu.memory_space<vmem>>, vector<4x1xf32>
    %978 = vector.shape_cast %977 : vector<4x1xf32> to vector<1x4x1xf32>
    %979 = vector.broadcast %978 : vector<1x4x1xf32> to vector<2x4x256xf32>
    %980 = arith.addf %976, %979 : vector<2x4x256xf32>
    %c255_i32_166 = arith.constant 255 : i32
    %981 = tpu.dynamic_rotate %980 by %c255_i32_166 dim 2 : vector<2x4x256xf32>, i32 -> vector<2x4x256xf32>
    %982 = arith.maximumf %980, %981 : vector<2x4x256xf32>
    %c240_i32_167 = arith.constant 240 : i32
    %983 = tpu.dynamic_rotate %980 by %c240_i32_167 dim 2 : vector<2x4x256xf32>, i32 -> vector<2x4x256xf32>
    %c239_i32_168 = arith.constant 239 : i32
    %984 = tpu.dynamic_rotate %980 by %c239_i32_168 dim 2 : vector<2x4x256xf32>, i32 -> vector<2x4x256xf32>
    %985 = arith.maximumf %983, %984 : vector<2x4x256xf32>
    %986 = arith.maximumf %982, %985 : vector<2x4x256xf32>
    %cst_169 = arith.constant 0.000000e+00 : f32
    %987 = vector.broadcast %cst_169 : f32 to vector<2x4x256xf32>
    %c17_i32_170 = arith.constant 17 : i32
    %988 = tpu.dynamic_rotate %986 by %c17_i32_170 dim 2 : vector<2x4x256xf32>, i32 -> vector<2x4x256xf32>
    %c-1_i32_171 = arith.constant -1 : i32
    %989 = vector.broadcast %c-1_i32_171 : i32 to vector<1x1x256xi32>
    %990 = arith.addi %2, %989 : vector<1x1x256xi32>
    %c-1_i32_172 = arith.constant -1 : i32
    %991 = vector.broadcast %c-1_i32_172 : i32 to vector<1x1x256xi32>
    %992 = arith.addi %4, %991 : vector<1x1x256xi32>
    %c0_i32_173 = arith.constant 0 : i32
    %993 = vector.broadcast %c0_i32_173 : i32 to vector<1x1x256xi32>
    %994 = arith.cmpi sge, %990, %993 : vector<1x1x256xi32>
    %c15_i32_174 = arith.constant 15 : i32
    %995 = vector.broadcast %c15_i32_174 : i32 to vector<1x1x256xi32>
    %996 = arith.cmpi slt, %990, %995 : vector<1x1x256xi32>
    %997 = arith.andi %994, %996 : vector<1x1x256xi1>
    %c0_i32_175 = arith.constant 0 : i32
    %998 = vector.broadcast %c0_i32_175 : i32 to vector<1x1x256xi32>
    %999 = arith.cmpi sge, %992, %998 : vector<1x1x256xi32>
    %1000 = arith.andi %997, %999 : vector<1x1x256xi1>
    %c15_i32_176 = arith.constant 15 : i32
    %1001 = vector.broadcast %c15_i32_176 : i32 to vector<1x1x256xi32>
    %1002 = arith.cmpi slt, %992, %1001 : vector<1x1x256xi32>
    %1003 = arith.andi %1000, %1002 : vector<1x1x256xi1>
    %cst_177 = arith.constant 0.000000e+00 : f32
    %1004 = vector.shape_cast %1003 : vector<1x1x256xi1> to vector<1x1x256xi1>
    %1005 = vector.broadcast %1004 : vector<1x1x256xi1> to vector<2x4x256xi1>
    %1006 = vector.broadcast %cst_177 : f32 to vector<2x4x256xf32>
    %1007 = arith.select %1005, %988, %1006 : vector<2x4x256xi1>, vector<2x4x256xf32>
    %1008 = vector.extract_strided_slice %1007 {offsets = [0, 0, 0], sizes = [2, 1, 256], strides = [1, 1, 1]} : vector<2x4x256xf32> to vector<2x1x256xf32>
    %1009 = vector.extract_strided_slice %8 {offsets = [0, 0, 0, 0, 0], sizes = [1, 1, 1, 4, 1], strides = [1, 1, 1, 1, 1]} : vector<3x3x4x4x1xf32> to vector<1x1x1x4x1xf32>
    %1010 = vector.shape_cast %1009 : vector<1x1x1x4x1xf32> to vector<4x1xf32>
    %1011 = vector.shape_cast %1010 : vector<4x1xf32> to vector<1x4x1xf32>
    %1012 = vector.broadcast %1008 : vector<2x1x256xf32> to vector<2x4x256xf32>
    %1013 = vector.broadcast %1011 : vector<1x4x1xf32> to vector<2x4x256xf32>
    %1014 = arith.mulf %1012, %1013 : vector<2x4x256xf32>
    %1015 = arith.addf %987, %1014 : vector<2x4x256xf32>
    %1016 = vector.extract_strided_slice %1007 {offsets = [0, 1, 0], sizes = [2, 1, 256], strides = [1, 1, 1]} : vector<2x4x256xf32> to vector<2x1x256xf32>
    %1017 = vector.extract_strided_slice %8 {offsets = [0, 0, 1, 0, 0], sizes = [1, 1, 1, 4, 1], strides = [1, 1, 1, 1, 1]} : vector<3x3x4x4x1xf32> to vector<1x1x1x4x1xf32>
    %1018 = vector.shape_cast %1017 : vector<1x1x1x4x1xf32> to vector<4x1xf32>
    %1019 = vector.shape_cast %1018 : vector<4x1xf32> to vector<1x4x1xf32>
    %1020 = vector.broadcast %1016 : vector<2x1x256xf32> to vector<2x4x256xf32>
    %1021 = vector.broadcast %1019 : vector<1x4x1xf32> to vector<2x4x256xf32>
    %1022 = arith.mulf %1020, %1021 : vector<2x4x256xf32>
    %1023 = arith.addf %1015, %1022 : vector<2x4x256xf32>
    %1024 = vector.extract_strided_slice %1007 {offsets = [0, 2, 0], sizes = [2, 1, 256], strides = [1, 1, 1]} : vector<2x4x256xf32> to vector<2x1x256xf32>
    %1025 = vector.extract_strided_slice %8 {offsets = [0, 0, 2, 0, 0], sizes = [1, 1, 1, 4, 1], strides = [1, 1, 1, 1, 1]} : vector<3x3x4x4x1xf32> to vector<1x1x1x4x1xf32>
    %1026 = vector.shape_cast %1025 : vector<1x1x1x4x1xf32> to vector<4x1xf32>
    %1027 = vector.shape_cast %1026 : vector<4x1xf32> to vector<1x4x1xf32>
    %1028 = vector.broadcast %1024 : vector<2x1x256xf32> to vector<2x4x256xf32>
    %1029 = vector.broadcast %1027 : vector<1x4x1xf32> to vector<2x4x256xf32>
    %1030 = arith.mulf %1028, %1029 : vector<2x4x256xf32>
    %1031 = arith.addf %1023, %1030 : vector<2x4x256xf32>
    %1032 = vector.extract_strided_slice %1007 {offsets = [0, 3, 0], sizes = [2, 1, 256], strides = [1, 1, 1]} : vector<2x4x256xf32> to vector<2x1x256xf32>
    %1033 = vector.extract_strided_slice %8 {offsets = [0, 0, 3, 0, 0], sizes = [1, 1, 1, 4, 1], strides = [1, 1, 1, 1, 1]} : vector<3x3x4x4x1xf32> to vector<1x1x1x4x1xf32>
    %1034 = vector.shape_cast %1033 : vector<1x1x1x4x1xf32> to vector<4x1xf32>
    %1035 = vector.shape_cast %1034 : vector<4x1xf32> to vector<1x4x1xf32>
    %1036 = vector.broadcast %1032 : vector<2x1x256xf32> to vector<2x4x256xf32>
    %1037 = vector.broadcast %1035 : vector<1x4x1xf32> to vector<2x4x256xf32>
    %1038 = arith.mulf %1036, %1037 : vector<2x4x256xf32>
    %1039 = arith.addf %1031, %1038 : vector<2x4x256xf32>
    %c16_i32_178 = arith.constant 16 : i32
    %1040 = tpu.dynamic_rotate %986 by %c16_i32_178 dim 2 : vector<2x4x256xf32>, i32 -> vector<2x4x256xf32>
    %c-1_i32_179 = arith.constant -1 : i32
    %1041 = vector.broadcast %c-1_i32_179 : i32 to vector<1x1x256xi32>
    %1042 = arith.addi %2, %1041 : vector<1x1x256xi32>
    %c0_i32_180 = arith.constant 0 : i32
    %1043 = vector.broadcast %c0_i32_180 : i32 to vector<1x1x256xi32>
    %1044 = arith.addi %4, %1043 : vector<1x1x256xi32>
    %c0_i32_181 = arith.constant 0 : i32
    %1045 = vector.broadcast %c0_i32_181 : i32 to vector<1x1x256xi32>
    %1046 = arith.cmpi sge, %1042, %1045 : vector<1x1x256xi32>
    %c15_i32_182 = arith.constant 15 : i32
    %1047 = vector.broadcast %c15_i32_182 : i32 to vector<1x1x256xi32>
    %1048 = arith.cmpi slt, %1042, %1047 : vector<1x1x256xi32>
    %1049 = arith.andi %1046, %1048 : vector<1x1x256xi1>
    %c0_i32_183 = arith.constant 0 : i32
    %1050 = vector.broadcast %c0_i32_183 : i32 to vector<1x1x256xi32>
    %1051 = arith.cmpi sge, %1044, %1050 : vector<1x1x256xi32>
    %1052 = arith.andi %1049, %1051 : vector<1x1x256xi1>
    %c15_i32_184 = arith.constant 15 : i32
    %1053 = vector.broadcast %c15_i32_184 : i32 to vector<1x1x256xi32>
    %1054 = arith.cmpi slt, %1044, %1053 : vector<1x1x256xi32>
    %1055 = arith.andi %1052, %1054 : vector<1x1x256xi1>
    %cst_185 = arith.constant 0.000000e+00 : f32
    %1056 = vector.shape_cast %1055 : vector<1x1x256xi1> to vector<1x1x256xi1>
    %1057 = vector.broadcast %1056 : vector<1x1x256xi1> to vector<2x4x256xi1>
    %1058 = vector.broadcast %cst_185 : f32 to vector<2x4x256xf32>
    %1059 = arith.select %1057, %1040, %1058 : vector<2x4x256xi1>, vector<2x4x256xf32>
    %1060 = vector.extract_strided_slice %1059 {offsets = [0, 0, 0], sizes = [2, 1, 256], strides = [1, 1, 1]} : vector<2x4x256xf32> to vector<2x1x256xf32>
    %1061 = vector.extract_strided_slice %8 {offsets = [0, 1, 0, 0, 0], sizes = [1, 1, 1, 4, 1], strides = [1, 1, 1, 1, 1]} : vector<3x3x4x4x1xf32> to vector<1x1x1x4x1xf32>
    %1062 = vector.shape_cast %1061 : vector<1x1x1x4x1xf32> to vector<4x1xf32>
    %1063 = vector.shape_cast %1062 : vector<4x1xf32> to vector<1x4x1xf32>
    %1064 = vector.broadcast %1060 : vector<2x1x256xf32> to vector<2x4x256xf32>
    %1065 = vector.broadcast %1063 : vector<1x4x1xf32> to vector<2x4x256xf32>
    %1066 = arith.mulf %1064, %1065 : vector<2x4x256xf32>
    %1067 = arith.addf %1039, %1066 : vector<2x4x256xf32>
    %1068 = vector.extract_strided_slice %1059 {offsets = [0, 1, 0], sizes = [2, 1, 256], strides = [1, 1, 1]} : vector<2x4x256xf32> to vector<2x1x256xf32>
    %1069 = vector.extract_strided_slice %8 {offsets = [0, 1, 1, 0, 0], sizes = [1, 1, 1, 4, 1], strides = [1, 1, 1, 1, 1]} : vector<3x3x4x4x1xf32> to vector<1x1x1x4x1xf32>
    %1070 = vector.shape_cast %1069 : vector<1x1x1x4x1xf32> to vector<4x1xf32>
    %1071 = vector.shape_cast %1070 : vector<4x1xf32> to vector<1x4x1xf32>
    %1072 = vector.broadcast %1068 : vector<2x1x256xf32> to vector<2x4x256xf32>
    %1073 = vector.broadcast %1071 : vector<1x4x1xf32> to vector<2x4x256xf32>
    %1074 = arith.mulf %1072, %1073 : vector<2x4x256xf32>
    %1075 = arith.addf %1067, %1074 : vector<2x4x256xf32>
    %1076 = vector.extract_strided_slice %1059 {offsets = [0, 2, 0], sizes = [2, 1, 256], strides = [1, 1, 1]} : vector<2x4x256xf32> to vector<2x1x256xf32>
    %1077 = vector.extract_strided_slice %8 {offsets = [0, 1, 2, 0, 0], sizes = [1, 1, 1, 4, 1], strides = [1, 1, 1, 1, 1]} : vector<3x3x4x4x1xf32> to vector<1x1x1x4x1xf32>
    %1078 = vector.shape_cast %1077 : vector<1x1x1x4x1xf32> to vector<4x1xf32>
    %1079 = vector.shape_cast %1078 : vector<4x1xf32> to vector<1x4x1xf32>
    %1080 = vector.broadcast %1076 : vector<2x1x256xf32> to vector<2x4x256xf32>
    %1081 = vector.broadcast %1079 : vector<1x4x1xf32> to vector<2x4x256xf32>
    %1082 = arith.mulf %1080, %1081 : vector<2x4x256xf32>
    %1083 = arith.addf %1075, %1082 : vector<2x4x256xf32>
    %1084 = vector.extract_strided_slice %1059 {offsets = [0, 3, 0], sizes = [2, 1, 256], strides = [1, 1, 1]} : vector<2x4x256xf32> to vector<2x1x256xf32>
    %1085 = vector.extract_strided_slice %8 {offsets = [0, 1, 3, 0, 0], sizes = [1, 1, 1, 4, 1], strides = [1, 1, 1, 1, 1]} : vector<3x3x4x4x1xf32> to vector<1x1x1x4x1xf32>
    %1086 = vector.shape_cast %1085 : vector<1x1x1x4x1xf32> to vector<4x1xf32>
    %1087 = vector.shape_cast %1086 : vector<4x1xf32> to vector<1x4x1xf32>
    %1088 = vector.broadcast %1084 : vector<2x1x256xf32> to vector<2x4x256xf32>
    %1089 = vector.broadcast %1087 : vector<1x4x1xf32> to vector<2x4x256xf32>
    %1090 = arith.mulf %1088, %1089 : vector<2x4x256xf32>
    %1091 = arith.addf %1083, %1090 : vector<2x4x256xf32>
    %c15_i32_186 = arith.constant 15 : i32
    %1092 = tpu.dynamic_rotate %986 by %c15_i32_186 dim 2 : vector<2x4x256xf32>, i32 -> vector<2x4x256xf32>
    %c-1_i32_187 = arith.constant -1 : i32
    %1093 = vector.broadcast %c-1_i32_187 : i32 to vector<1x1x256xi32>
    %1094 = arith.addi %2, %1093 : vector<1x1x256xi32>
    %c1_i32_188 = arith.constant 1 : i32
    %1095 = vector.broadcast %c1_i32_188 : i32 to vector<1x1x256xi32>
    %1096 = arith.addi %4, %1095 : vector<1x1x256xi32>
    %c0_i32_189 = arith.constant 0 : i32
    %1097 = vector.broadcast %c0_i32_189 : i32 to vector<1x1x256xi32>
    %1098 = arith.cmpi sge, %1094, %1097 : vector<1x1x256xi32>
    %c15_i32_190 = arith.constant 15 : i32
    %1099 = vector.broadcast %c15_i32_190 : i32 to vector<1x1x256xi32>
    %1100 = arith.cmpi slt, %1094, %1099 : vector<1x1x256xi32>
    %1101 = arith.andi %1098, %1100 : vector<1x1x256xi1>
    %c0_i32_191 = arith.constant 0 : i32
    %1102 = vector.broadcast %c0_i32_191 : i32 to vector<1x1x256xi32>
    %1103 = arith.cmpi sge, %1096, %1102 : vector<1x1x256xi32>
    %1104 = arith.andi %1101, %1103 : vector<1x1x256xi1>
    %c15_i32_192 = arith.constant 15 : i32
    %1105 = vector.broadcast %c15_i32_192 : i32 to vector<1x1x256xi32>
    %1106 = arith.cmpi slt, %1096, %1105 : vector<1x1x256xi32>
    %1107 = arith.andi %1104, %1106 : vector<1x1x256xi1>
    %cst_193 = arith.constant 0.000000e+00 : f32
    %1108 = vector.shape_cast %1107 : vector<1x1x256xi1> to vector<1x1x256xi1>
    %1109 = vector.broadcast %1108 : vector<1x1x256xi1> to vector<2x4x256xi1>
    %1110 = vector.broadcast %cst_193 : f32 to vector<2x4x256xf32>
    %1111 = arith.select %1109, %1092, %1110 : vector<2x4x256xi1>, vector<2x4x256xf32>
    %1112 = vector.extract_strided_slice %1111 {offsets = [0, 0, 0], sizes = [2, 1, 256], strides = [1, 1, 1]} : vector<2x4x256xf32> to vector<2x1x256xf32>
    %1113 = vector.extract_strided_slice %8 {offsets = [0, 2, 0, 0, 0], sizes = [1, 1, 1, 4, 1], strides = [1, 1, 1, 1, 1]} : vector<3x3x4x4x1xf32> to vector<1x1x1x4x1xf32>
    %1114 = vector.shape_cast %1113 : vector<1x1x1x4x1xf32> to vector<4x1xf32>
    %1115 = vector.shape_cast %1114 : vector<4x1xf32> to vector<1x4x1xf32>
    %1116 = vector.broadcast %1112 : vector<2x1x256xf32> to vector<2x4x256xf32>
    %1117 = vector.broadcast %1115 : vector<1x4x1xf32> to vector<2x4x256xf32>
    %1118 = arith.mulf %1116, %1117 : vector<2x4x256xf32>
    %1119 = arith.addf %1091, %1118 : vector<2x4x256xf32>
    %1120 = vector.extract_strided_slice %1111 {offsets = [0, 1, 0], sizes = [2, 1, 256], strides = [1, 1, 1]} : vector<2x4x256xf32> to vector<2x1x256xf32>
    %1121 = vector.extract_strided_slice %8 {offsets = [0, 2, 1, 0, 0], sizes = [1, 1, 1, 4, 1], strides = [1, 1, 1, 1, 1]} : vector<3x3x4x4x1xf32> to vector<1x1x1x4x1xf32>
    %1122 = vector.shape_cast %1121 : vector<1x1x1x4x1xf32> to vector<4x1xf32>
    %1123 = vector.shape_cast %1122 : vector<4x1xf32> to vector<1x4x1xf32>
    %1124 = vector.broadcast %1120 : vector<2x1x256xf32> to vector<2x4x256xf32>
    %1125 = vector.broadcast %1123 : vector<1x4x1xf32> to vector<2x4x256xf32>
    %1126 = arith.mulf %1124, %1125 : vector<2x4x256xf32>
    %1127 = arith.addf %1119, %1126 : vector<2x4x256xf32>
    %1128 = vector.extract_strided_slice %1111 {offsets = [0, 2, 0], sizes = [2, 1, 256], strides = [1, 1, 1]} : vector<2x4x256xf32> to vector<2x1x256xf32>
    %1129 = vector.extract_strided_slice %8 {offsets = [0, 2, 2, 0, 0], sizes = [1, 1, 1, 4, 1], strides = [1, 1, 1, 1, 1]} : vector<3x3x4x4x1xf32> to vector<1x1x1x4x1xf32>
    %1130 = vector.shape_cast %1129 : vector<1x1x1x4x1xf32> to vector<4x1xf32>
    %1131 = vector.shape_cast %1130 : vector<4x1xf32> to vector<1x4x1xf32>
    %1132 = vector.broadcast %1128 : vector<2x1x256xf32> to vector<2x4x256xf32>
    %1133 = vector.broadcast %1131 : vector<1x4x1xf32> to vector<2x4x256xf32>
    %1134 = arith.mulf %1132, %1133 : vector<2x4x256xf32>
    %1135 = arith.addf %1127, %1134 : vector<2x4x256xf32>
    %1136 = vector.extract_strided_slice %1111 {offsets = [0, 3, 0], sizes = [2, 1, 256], strides = [1, 1, 1]} : vector<2x4x256xf32> to vector<2x1x256xf32>
    %1137 = vector.extract_strided_slice %8 {offsets = [0, 2, 3, 0, 0], sizes = [1, 1, 1, 4, 1], strides = [1, 1, 1, 1, 1]} : vector<3x3x4x4x1xf32> to vector<1x1x1x4x1xf32>
    %1138 = vector.shape_cast %1137 : vector<1x1x1x4x1xf32> to vector<4x1xf32>
    %1139 = vector.shape_cast %1138 : vector<4x1xf32> to vector<1x4x1xf32>
    %1140 = vector.broadcast %1136 : vector<2x1x256xf32> to vector<2x4x256xf32>
    %1141 = vector.broadcast %1139 : vector<1x4x1xf32> to vector<2x4x256xf32>
    %1142 = arith.mulf %1140, %1141 : vector<2x4x256xf32>
    %1143 = arith.addf %1135, %1142 : vector<2x4x256xf32>
    %c1_i32_194 = arith.constant 1 : i32
    %1144 = tpu.dynamic_rotate %986 by %c1_i32_194 dim 2 : vector<2x4x256xf32>, i32 -> vector<2x4x256xf32>
    %c0_i32_195 = arith.constant 0 : i32
    %1145 = vector.broadcast %c0_i32_195 : i32 to vector<1x1x256xi32>
    %1146 = arith.addi %2, %1145 : vector<1x1x256xi32>
    %c-1_i32_196 = arith.constant -1 : i32
    %1147 = vector.broadcast %c-1_i32_196 : i32 to vector<1x1x256xi32>
    %1148 = arith.addi %4, %1147 : vector<1x1x256xi32>
    %c0_i32_197 = arith.constant 0 : i32
    %1149 = vector.broadcast %c0_i32_197 : i32 to vector<1x1x256xi32>
    %1150 = arith.cmpi sge, %1146, %1149 : vector<1x1x256xi32>
    %c15_i32_198 = arith.constant 15 : i32
    %1151 = vector.broadcast %c15_i32_198 : i32 to vector<1x1x256xi32>
    %1152 = arith.cmpi slt, %1146, %1151 : vector<1x1x256xi32>
    %1153 = arith.andi %1150, %1152 : vector<1x1x256xi1>
    %c0_i32_199 = arith.constant 0 : i32
    %1154 = vector.broadcast %c0_i32_199 : i32 to vector<1x1x256xi32>
    %1155 = arith.cmpi sge, %1148, %1154 : vector<1x1x256xi32>
    %1156 = arith.andi %1153, %1155 : vector<1x1x256xi1>
    %c15_i32_200 = arith.constant 15 : i32
    %1157 = vector.broadcast %c15_i32_200 : i32 to vector<1x1x256xi32>
    %1158 = arith.cmpi slt, %1148, %1157 : vector<1x1x256xi32>
    %1159 = arith.andi %1156, %1158 : vector<1x1x256xi1>
    %cst_201 = arith.constant 0.000000e+00 : f32
    %1160 = vector.shape_cast %1159 : vector<1x1x256xi1> to vector<1x1x256xi1>
    %1161 = vector.broadcast %1160 : vector<1x1x256xi1> to vector<2x4x256xi1>
    %1162 = vector.broadcast %cst_201 : f32 to vector<2x4x256xf32>
    %1163 = arith.select %1161, %1144, %1162 : vector<2x4x256xi1>, vector<2x4x256xf32>
    %1164 = vector.extract_strided_slice %1163 {offsets = [0, 0, 0], sizes = [2, 1, 256], strides = [1, 1, 1]} : vector<2x4x256xf32> to vector<2x1x256xf32>
    %1165 = vector.extract_strided_slice %8 {offsets = [1, 0, 0, 0, 0], sizes = [1, 1, 1, 4, 1], strides = [1, 1, 1, 1, 1]} : vector<3x3x4x4x1xf32> to vector<1x1x1x4x1xf32>
    %1166 = vector.shape_cast %1165 : vector<1x1x1x4x1xf32> to vector<4x1xf32>
    %1167 = vector.shape_cast %1166 : vector<4x1xf32> to vector<1x4x1xf32>
    %1168 = vector.broadcast %1164 : vector<2x1x256xf32> to vector<2x4x256xf32>
    %1169 = vector.broadcast %1167 : vector<1x4x1xf32> to vector<2x4x256xf32>
    %1170 = arith.mulf %1168, %1169 : vector<2x4x256xf32>
    %1171 = arith.addf %1143, %1170 : vector<2x4x256xf32>
    %1172 = vector.extract_strided_slice %1163 {offsets = [0, 1, 0], sizes = [2, 1, 256], strides = [1, 1, 1]} : vector<2x4x256xf32> to vector<2x1x256xf32>
    %1173 = vector.extract_strided_slice %8 {offsets = [1, 0, 1, 0, 0], sizes = [1, 1, 1, 4, 1], strides = [1, 1, 1, 1, 1]} : vector<3x3x4x4x1xf32> to vector<1x1x1x4x1xf32>
    %1174 = vector.shape_cast %1173 : vector<1x1x1x4x1xf32> to vector<4x1xf32>
    %1175 = vector.shape_cast %1174 : vector<4x1xf32> to vector<1x4x1xf32>
    %1176 = vector.broadcast %1172 : vector<2x1x256xf32> to vector<2x4x256xf32>
    %1177 = vector.broadcast %1175 : vector<1x4x1xf32> to vector<2x4x256xf32>
    %1178 = arith.mulf %1176, %1177 : vector<2x4x256xf32>
    %1179 = arith.addf %1171, %1178 : vector<2x4x256xf32>
    %1180 = vector.extract_strided_slice %1163 {offsets = [0, 2, 0], sizes = [2, 1, 256], strides = [1, 1, 1]} : vector<2x4x256xf32> to vector<2x1x256xf32>
    %1181 = vector.extract_strided_slice %8 {offsets = [1, 0, 2, 0, 0], sizes = [1, 1, 1, 4, 1], strides = [1, 1, 1, 1, 1]} : vector<3x3x4x4x1xf32> to vector<1x1x1x4x1xf32>
    %1182 = vector.shape_cast %1181 : vector<1x1x1x4x1xf32> to vector<4x1xf32>
    %1183 = vector.shape_cast %1182 : vector<4x1xf32> to vector<1x4x1xf32>
    %1184 = vector.broadcast %1180 : vector<2x1x256xf32> to vector<2x4x256xf32>
    %1185 = vector.broadcast %1183 : vector<1x4x1xf32> to vector<2x4x256xf32>
    %1186 = arith.mulf %1184, %1185 : vector<2x4x256xf32>
    %1187 = arith.addf %1179, %1186 : vector<2x4x256xf32>
    %1188 = vector.extract_strided_slice %1163 {offsets = [0, 3, 0], sizes = [2, 1, 256], strides = [1, 1, 1]} : vector<2x4x256xf32> to vector<2x1x256xf32>
    %1189 = vector.extract_strided_slice %8 {offsets = [1, 0, 3, 0, 0], sizes = [1, 1, 1, 4, 1], strides = [1, 1, 1, 1, 1]} : vector<3x3x4x4x1xf32> to vector<1x1x1x4x1xf32>
    %1190 = vector.shape_cast %1189 : vector<1x1x1x4x1xf32> to vector<4x1xf32>
    %1191 = vector.shape_cast %1190 : vector<4x1xf32> to vector<1x4x1xf32>
    %1192 = vector.broadcast %1188 : vector<2x1x256xf32> to vector<2x4x256xf32>
    %1193 = vector.broadcast %1191 : vector<1x4x1xf32> to vector<2x4x256xf32>
    %1194 = arith.mulf %1192, %1193 : vector<2x4x256xf32>
    %1195 = arith.addf %1187, %1194 : vector<2x4x256xf32>
    %c0_i32_202 = arith.constant 0 : i32
    %1196 = vector.broadcast %c0_i32_202 : i32 to vector<1x1x256xi32>
    %1197 = arith.addi %2, %1196 : vector<1x1x256xi32>
    %c0_i32_203 = arith.constant 0 : i32
    %1198 = vector.broadcast %c0_i32_203 : i32 to vector<1x1x256xi32>
    %1199 = arith.addi %4, %1198 : vector<1x1x256xi32>
    %c0_i32_204 = arith.constant 0 : i32
    %1200 = vector.broadcast %c0_i32_204 : i32 to vector<1x1x256xi32>
    %1201 = arith.cmpi sge, %1197, %1200 : vector<1x1x256xi32>
    %c15_i32_205 = arith.constant 15 : i32
    %1202 = vector.broadcast %c15_i32_205 : i32 to vector<1x1x256xi32>
    %1203 = arith.cmpi slt, %1197, %1202 : vector<1x1x256xi32>
    %1204 = arith.andi %1201, %1203 : vector<1x1x256xi1>
    %c0_i32_206 = arith.constant 0 : i32
    %1205 = vector.broadcast %c0_i32_206 : i32 to vector<1x1x256xi32>
    %1206 = arith.cmpi sge, %1199, %1205 : vector<1x1x256xi32>
    %1207 = arith.andi %1204, %1206 : vector<1x1x256xi1>
    %c15_i32_207 = arith.constant 15 : i32
    %1208 = vector.broadcast %c15_i32_207 : i32 to vector<1x1x256xi32>
    %1209 = arith.cmpi slt, %1199, %1208 : vector<1x1x256xi32>
    %1210 = arith.andi %1207, %1209 : vector<1x1x256xi1>
    %cst_208 = arith.constant 0.000000e+00 : f32
    %1211 = vector.shape_cast %1210 : vector<1x1x256xi1> to vector<1x1x256xi1>
    %1212 = vector.broadcast %1211 : vector<1x1x256xi1> to vector<2x4x256xi1>
    %1213 = vector.broadcast %cst_208 : f32 to vector<2x4x256xf32>
    %1214 = arith.select %1212, %986, %1213 : vector<2x4x256xi1>, vector<2x4x256xf32>
    %1215 = vector.extract_strided_slice %1214 {offsets = [0, 0, 0], sizes = [2, 1, 256], strides = [1, 1, 1]} : vector<2x4x256xf32> to vector<2x1x256xf32>
    %1216 = vector.extract_strided_slice %8 {offsets = [1, 1, 0, 0, 0], sizes = [1, 1, 1, 4, 1], strides = [1, 1, 1, 1, 1]} : vector<3x3x4x4x1xf32> to vector<1x1x1x4x1xf32>
    %1217 = vector.shape_cast %1216 : vector<1x1x1x4x1xf32> to vector<4x1xf32>
    %1218 = vector.shape_cast %1217 : vector<4x1xf32> to vector<1x4x1xf32>
    %1219 = vector.broadcast %1215 : vector<2x1x256xf32> to vector<2x4x256xf32>
    %1220 = vector.broadcast %1218 : vector<1x4x1xf32> to vector<2x4x256xf32>
    %1221 = arith.mulf %1219, %1220 : vector<2x4x256xf32>
    %1222 = arith.addf %1195, %1221 : vector<2x4x256xf32>
    %1223 = vector.extract_strided_slice %1214 {offsets = [0, 1, 0], sizes = [2, 1, 256], strides = [1, 1, 1]} : vector<2x4x256xf32> to vector<2x1x256xf32>
    %1224 = vector.extract_strided_slice %8 {offsets = [1, 1, 1, 0, 0], sizes = [1, 1, 1, 4, 1], strides = [1, 1, 1, 1, 1]} : vector<3x3x4x4x1xf32> to vector<1x1x1x4x1xf32>
    %1225 = vector.shape_cast %1224 : vector<1x1x1x4x1xf32> to vector<4x1xf32>
    %1226 = vector.shape_cast %1225 : vector<4x1xf32> to vector<1x4x1xf32>
    %1227 = vector.broadcast %1223 : vector<2x1x256xf32> to vector<2x4x256xf32>
    %1228 = vector.broadcast %1226 : vector<1x4x1xf32> to vector<2x4x256xf32>
    %1229 = arith.mulf %1227, %1228 : vector<2x4x256xf32>
    %1230 = arith.addf %1222, %1229 : vector<2x4x256xf32>
    %1231 = vector.extract_strided_slice %1214 {offsets = [0, 2, 0], sizes = [2, 1, 256], strides = [1, 1, 1]} : vector<2x4x256xf32> to vector<2x1x256xf32>
    %1232 = vector.extract_strided_slice %8 {offsets = [1, 1, 2, 0, 0], sizes = [1, 1, 1, 4, 1], strides = [1, 1, 1, 1, 1]} : vector<3x3x4x4x1xf32> to vector<1x1x1x4x1xf32>
    %1233 = vector.shape_cast %1232 : vector<1x1x1x4x1xf32> to vector<4x1xf32>
    %1234 = vector.shape_cast %1233 : vector<4x1xf32> to vector<1x4x1xf32>
    %1235 = vector.broadcast %1231 : vector<2x1x256xf32> to vector<2x4x256xf32>
    %1236 = vector.broadcast %1234 : vector<1x4x1xf32> to vector<2x4x256xf32>
    %1237 = arith.mulf %1235, %1236 : vector<2x4x256xf32>
    %1238 = arith.addf %1230, %1237 : vector<2x4x256xf32>
    %1239 = vector.extract_strided_slice %1214 {offsets = [0, 3, 0], sizes = [2, 1, 256], strides = [1, 1, 1]} : vector<2x4x256xf32> to vector<2x1x256xf32>
    %1240 = vector.extract_strided_slice %8 {offsets = [1, 1, 3, 0, 0], sizes = [1, 1, 1, 4, 1], strides = [1, 1, 1, 1, 1]} : vector<3x3x4x4x1xf32> to vector<1x1x1x4x1xf32>
    %1241 = vector.shape_cast %1240 : vector<1x1x1x4x1xf32> to vector<4x1xf32>
    %1242 = vector.shape_cast %1241 : vector<4x1xf32> to vector<1x4x1xf32>
    %1243 = vector.broadcast %1239 : vector<2x1x256xf32> to vector<2x4x256xf32>
    %1244 = vector.broadcast %1242 : vector<1x4x1xf32> to vector<2x4x256xf32>
    %1245 = arith.mulf %1243, %1244 : vector<2x4x256xf32>
    %1246 = arith.addf %1238, %1245 : vector<2x4x256xf32>
    %c255_i32_209 = arith.constant 255 : i32
    %1247 = tpu.dynamic_rotate %986 by %c255_i32_209 dim 2 : vector<2x4x256xf32>, i32 -> vector<2x4x256xf32>
    %c0_i32_210 = arith.constant 0 : i32
    %1248 = vector.broadcast %c0_i32_210 : i32 to vector<1x1x256xi32>
    %1249 = arith.addi %2, %1248 : vector<1x1x256xi32>
    %c1_i32_211 = arith.constant 1 : i32
    %1250 = vector.broadcast %c1_i32_211 : i32 to vector<1x1x256xi32>
    %1251 = arith.addi %4, %1250 : vector<1x1x256xi32>
    %c0_i32_212 = arith.constant 0 : i32
    %1252 = vector.broadcast %c0_i32_212 : i32 to vector<1x1x256xi32>
    %1253 = arith.cmpi sge, %1249, %1252 : vector<1x1x256xi32>
    %c15_i32_213 = arith.constant 15 : i32
    %1254 = vector.broadcast %c15_i32_213 : i32 to vector<1x1x256xi32>
    %1255 = arith.cmpi slt, %1249, %1254 : vector<1x1x256xi32>
    %1256 = arith.andi %1253, %1255 : vector<1x1x256xi1>
    %c0_i32_214 = arith.constant 0 : i32
    %1257 = vector.broadcast %c0_i32_214 : i32 to vector<1x1x256xi32>
    %1258 = arith.cmpi sge, %1251, %1257 : vector<1x1x256xi32>
    %1259 = arith.andi %1256, %1258 : vector<1x1x256xi1>
    %c15_i32_215 = arith.constant 15 : i32
    %1260 = vector.broadcast %c15_i32_215 : i32 to vector<1x1x256xi32>
    %1261 = arith.cmpi slt, %1251, %1260 : vector<1x1x256xi32>
    %1262 = arith.andi %1259, %1261 : vector<1x1x256xi1>
    %cst_216 = arith.constant 0.000000e+00 : f32
    %1263 = vector.shape_cast %1262 : vector<1x1x256xi1> to vector<1x1x256xi1>
    %1264 = vector.broadcast %1263 : vector<1x1x256xi1> to vector<2x4x256xi1>
    %1265 = vector.broadcast %cst_216 : f32 to vector<2x4x256xf32>
    %1266 = arith.select %1264, %1247, %1265 : vector<2x4x256xi1>, vector<2x4x256xf32>
    %1267 = vector.extract_strided_slice %1266 {offsets = [0, 0, 0], sizes = [2, 1, 256], strides = [1, 1, 1]} : vector<2x4x256xf32> to vector<2x1x256xf32>
    %1268 = vector.extract_strided_slice %8 {offsets = [1, 2, 0, 0, 0], sizes = [1, 1, 1, 4, 1], strides = [1, 1, 1, 1, 1]} : vector<3x3x4x4x1xf32> to vector<1x1x1x4x1xf32>
    %1269 = vector.shape_cast %1268 : vector<1x1x1x4x1xf32> to vector<4x1xf32>
    %1270 = vector.shape_cast %1269 : vector<4x1xf32> to vector<1x4x1xf32>
    %1271 = vector.broadcast %1267 : vector<2x1x256xf32> to vector<2x4x256xf32>
    %1272 = vector.broadcast %1270 : vector<1x4x1xf32> to vector<2x4x256xf32>
    %1273 = arith.mulf %1271, %1272 : vector<2x4x256xf32>
    %1274 = arith.addf %1246, %1273 : vector<2x4x256xf32>
    %1275 = vector.extract_strided_slice %1266 {offsets = [0, 1, 0], sizes = [2, 1, 256], strides = [1, 1, 1]} : vector<2x4x256xf32> to vector<2x1x256xf32>
    %1276 = vector.extract_strided_slice %8 {offsets = [1, 2, 1, 0, 0], sizes = [1, 1, 1, 4, 1], strides = [1, 1, 1, 1, 1]} : vector<3x3x4x4x1xf32> to vector<1x1x1x4x1xf32>
    %1277 = vector.shape_cast %1276 : vector<1x1x1x4x1xf32> to vector<4x1xf32>
    %1278 = vector.shape_cast %1277 : vector<4x1xf32> to vector<1x4x1xf32>
    %1279 = vector.broadcast %1275 : vector<2x1x256xf32> to vector<2x4x256xf32>
    %1280 = vector.broadcast %1278 : vector<1x4x1xf32> to vector<2x4x256xf32>
    %1281 = arith.mulf %1279, %1280 : vector<2x4x256xf32>
    %1282 = arith.addf %1274, %1281 : vector<2x4x256xf32>
    %1283 = vector.extract_strided_slice %1266 {offsets = [0, 2, 0], sizes = [2, 1, 256], strides = [1, 1, 1]} : vector<2x4x256xf32> to vector<2x1x256xf32>
    %1284 = vector.extract_strided_slice %8 {offsets = [1, 2, 2, 0, 0], sizes = [1, 1, 1, 4, 1], strides = [1, 1, 1, 1, 1]} : vector<3x3x4x4x1xf32> to vector<1x1x1x4x1xf32>
    %1285 = vector.shape_cast %1284 : vector<1x1x1x4x1xf32> to vector<4x1xf32>
    %1286 = vector.shape_cast %1285 : vector<4x1xf32> to vector<1x4x1xf32>
    %1287 = vector.broadcast %1283 : vector<2x1x256xf32> to vector<2x4x256xf32>
    %1288 = vector.broadcast %1286 : vector<1x4x1xf32> to vector<2x4x256xf32>
    %1289 = arith.mulf %1287, %1288 : vector<2x4x256xf32>
    %1290 = arith.addf %1282, %1289 : vector<2x4x256xf32>
    %1291 = vector.extract_strided_slice %1266 {offsets = [0, 3, 0], sizes = [2, 1, 256], strides = [1, 1, 1]} : vector<2x4x256xf32> to vector<2x1x256xf32>
    %1292 = vector.extract_strided_slice %8 {offsets = [1, 2, 3, 0, 0], sizes = [1, 1, 1, 4, 1], strides = [1, 1, 1, 1, 1]} : vector<3x3x4x4x1xf32> to vector<1x1x1x4x1xf32>
    %1293 = vector.shape_cast %1292 : vector<1x1x1x4x1xf32> to vector<4x1xf32>
    %1294 = vector.shape_cast %1293 : vector<4x1xf32> to vector<1x4x1xf32>
    %1295 = vector.broadcast %1291 : vector<2x1x256xf32> to vector<2x4x256xf32>
    %1296 = vector.broadcast %1294 : vector<1x4x1xf32> to vector<2x4x256xf32>
    %1297 = arith.mulf %1295, %1296 : vector<2x4x256xf32>
    %1298 = arith.addf %1290, %1297 : vector<2x4x256xf32>
    %c241_i32_217 = arith.constant 241 : i32
    %1299 = tpu.dynamic_rotate %986 by %c241_i32_217 dim 2 : vector<2x4x256xf32>, i32 -> vector<2x4x256xf32>
    %c1_i32_218 = arith.constant 1 : i32
    %1300 = vector.broadcast %c1_i32_218 : i32 to vector<1x1x256xi32>
    %1301 = arith.addi %2, %1300 : vector<1x1x256xi32>
    %c-1_i32_219 = arith.constant -1 : i32
    %1302 = vector.broadcast %c-1_i32_219 : i32 to vector<1x1x256xi32>
    %1303 = arith.addi %4, %1302 : vector<1x1x256xi32>
    %c0_i32_220 = arith.constant 0 : i32
    %1304 = vector.broadcast %c0_i32_220 : i32 to vector<1x1x256xi32>
    %1305 = arith.cmpi sge, %1301, %1304 : vector<1x1x256xi32>
    %c15_i32_221 = arith.constant 15 : i32
    %1306 = vector.broadcast %c15_i32_221 : i32 to vector<1x1x256xi32>
    %1307 = arith.cmpi slt, %1301, %1306 : vector<1x1x256xi32>
    %1308 = arith.andi %1305, %1307 : vector<1x1x256xi1>
    %c0_i32_222 = arith.constant 0 : i32
    %1309 = vector.broadcast %c0_i32_222 : i32 to vector<1x1x256xi32>
    %1310 = arith.cmpi sge, %1303, %1309 : vector<1x1x256xi32>
    %1311 = arith.andi %1308, %1310 : vector<1x1x256xi1>
    %c15_i32_223 = arith.constant 15 : i32
    %1312 = vector.broadcast %c15_i32_223 : i32 to vector<1x1x256xi32>
    %1313 = arith.cmpi slt, %1303, %1312 : vector<1x1x256xi32>
    %1314 = arith.andi %1311, %1313 : vector<1x1x256xi1>
    %cst_224 = arith.constant 0.000000e+00 : f32
    %1315 = vector.shape_cast %1314 : vector<1x1x256xi1> to vector<1x1x256xi1>
    %1316 = vector.broadcast %1315 : vector<1x1x256xi1> to vector<2x4x256xi1>
    %1317 = vector.broadcast %cst_224 : f32 to vector<2x4x256xf32>
    %1318 = arith.select %1316, %1299, %1317 : vector<2x4x256xi1>, vector<2x4x256xf32>
    %1319 = vector.extract_strided_slice %1318 {offsets = [0, 0, 0], sizes = [2, 1, 256], strides = [1, 1, 1]} : vector<2x4x256xf32> to vector<2x1x256xf32>
    %1320 = vector.extract_strided_slice %8 {offsets = [2, 0, 0, 0, 0], sizes = [1, 1, 1, 4, 1], strides = [1, 1, 1, 1, 1]} : vector<3x3x4x4x1xf32> to vector<1x1x1x4x1xf32>
    %1321 = vector.shape_cast %1320 : vector<1x1x1x4x1xf32> to vector<4x1xf32>
    %1322 = vector.shape_cast %1321 : vector<4x1xf32> to vector<1x4x1xf32>
    %1323 = vector.broadcast %1319 : vector<2x1x256xf32> to vector<2x4x256xf32>
    %1324 = vector.broadcast %1322 : vector<1x4x1xf32> to vector<2x4x256xf32>
    %1325 = arith.mulf %1323, %1324 : vector<2x4x256xf32>
    %1326 = arith.addf %1298, %1325 : vector<2x4x256xf32>
    %1327 = vector.extract_strided_slice %1318 {offsets = [0, 1, 0], sizes = [2, 1, 256], strides = [1, 1, 1]} : vector<2x4x256xf32> to vector<2x1x256xf32>
    %1328 = vector.extract_strided_slice %8 {offsets = [2, 0, 1, 0, 0], sizes = [1, 1, 1, 4, 1], strides = [1, 1, 1, 1, 1]} : vector<3x3x4x4x1xf32> to vector<1x1x1x4x1xf32>
    %1329 = vector.shape_cast %1328 : vector<1x1x1x4x1xf32> to vector<4x1xf32>
    %1330 = vector.shape_cast %1329 : vector<4x1xf32> to vector<1x4x1xf32>
    %1331 = vector.broadcast %1327 : vector<2x1x256xf32> to vector<2x4x256xf32>
    %1332 = vector.broadcast %1330 : vector<1x4x1xf32> to vector<2x4x256xf32>
    %1333 = arith.mulf %1331, %1332 : vector<2x4x256xf32>
    %1334 = arith.addf %1326, %1333 : vector<2x4x256xf32>
    %1335 = vector.extract_strided_slice %1318 {offsets = [0, 2, 0], sizes = [2, 1, 256], strides = [1, 1, 1]} : vector<2x4x256xf32> to vector<2x1x256xf32>
    %1336 = vector.extract_strided_slice %8 {offsets = [2, 0, 2, 0, 0], sizes = [1, 1, 1, 4, 1], strides = [1, 1, 1, 1, 1]} : vector<3x3x4x4x1xf32> to vector<1x1x1x4x1xf32>
    %1337 = vector.shape_cast %1336 : vector<1x1x1x4x1xf32> to vector<4x1xf32>
    %1338 = vector.shape_cast %1337 : vector<4x1xf32> to vector<1x4x1xf32>
    %1339 = vector.broadcast %1335 : vector<2x1x256xf32> to vector<2x4x256xf32>
    %1340 = vector.broadcast %1338 : vector<1x4x1xf32> to vector<2x4x256xf32>
    %1341 = arith.mulf %1339, %1340 : vector<2x4x256xf32>
    %1342 = arith.addf %1334, %1341 : vector<2x4x256xf32>
    %1343 = vector.extract_strided_slice %1318 {offsets = [0, 3, 0], sizes = [2, 1, 256], strides = [1, 1, 1]} : vector<2x4x256xf32> to vector<2x1x256xf32>
    %1344 = vector.extract_strided_slice %8 {offsets = [2, 0, 3, 0, 0], sizes = [1, 1, 1, 4, 1], strides = [1, 1, 1, 1, 1]} : vector<3x3x4x4x1xf32> to vector<1x1x1x4x1xf32>
    %1345 = vector.shape_cast %1344 : vector<1x1x1x4x1xf32> to vector<4x1xf32>
    %1346 = vector.shape_cast %1345 : vector<4x1xf32> to vector<1x4x1xf32>
    %1347 = vector.broadcast %1343 : vector<2x1x256xf32> to vector<2x4x256xf32>
    %1348 = vector.broadcast %1346 : vector<1x4x1xf32> to vector<2x4x256xf32>
    %1349 = arith.mulf %1347, %1348 : vector<2x4x256xf32>
    %1350 = arith.addf %1342, %1349 : vector<2x4x256xf32>
    %c240_i32_225 = arith.constant 240 : i32
    %1351 = tpu.dynamic_rotate %986 by %c240_i32_225 dim 2 : vector<2x4x256xf32>, i32 -> vector<2x4x256xf32>
    %c1_i32_226 = arith.constant 1 : i32
    %1352 = vector.broadcast %c1_i32_226 : i32 to vector<1x1x256xi32>
    %1353 = arith.addi %2, %1352 : vector<1x1x256xi32>
    %c0_i32_227 = arith.constant 0 : i32
    %1354 = vector.broadcast %c0_i32_227 : i32 to vector<1x1x256xi32>
    %1355 = arith.addi %4, %1354 : vector<1x1x256xi32>
    %c0_i32_228 = arith.constant 0 : i32
    %1356 = vector.broadcast %c0_i32_228 : i32 to vector<1x1x256xi32>
    %1357 = arith.cmpi sge, %1353, %1356 : vector<1x1x256xi32>
    %c15_i32_229 = arith.constant 15 : i32
    %1358 = vector.broadcast %c15_i32_229 : i32 to vector<1x1x256xi32>
    %1359 = arith.cmpi slt, %1353, %1358 : vector<1x1x256xi32>
    %1360 = arith.andi %1357, %1359 : vector<1x1x256xi1>
    %c0_i32_230 = arith.constant 0 : i32
    %1361 = vector.broadcast %c0_i32_230 : i32 to vector<1x1x256xi32>
    %1362 = arith.cmpi sge, %1355, %1361 : vector<1x1x256xi32>
    %1363 = arith.andi %1360, %1362 : vector<1x1x256xi1>
    %c15_i32_231 = arith.constant 15 : i32
    %1364 = vector.broadcast %c15_i32_231 : i32 to vector<1x1x256xi32>
    %1365 = arith.cmpi slt, %1355, %1364 : vector<1x1x256xi32>
    %1366 = arith.andi %1363, %1365 : vector<1x1x256xi1>
    %cst_232 = arith.constant 0.000000e+00 : f32
    %1367 = vector.shape_cast %1366 : vector<1x1x256xi1> to vector<1x1x256xi1>
    %1368 = vector.broadcast %1367 : vector<1x1x256xi1> to vector<2x4x256xi1>
    %1369 = vector.broadcast %cst_232 : f32 to vector<2x4x256xf32>
    %1370 = arith.select %1368, %1351, %1369 : vector<2x4x256xi1>, vector<2x4x256xf32>
    %1371 = vector.extract_strided_slice %1370 {offsets = [0, 0, 0], sizes = [2, 1, 256], strides = [1, 1, 1]} : vector<2x4x256xf32> to vector<2x1x256xf32>
    %1372 = vector.extract_strided_slice %8 {offsets = [2, 1, 0, 0, 0], sizes = [1, 1, 1, 4, 1], strides = [1, 1, 1, 1, 1]} : vector<3x3x4x4x1xf32> to vector<1x1x1x4x1xf32>
    %1373 = vector.shape_cast %1372 : vector<1x1x1x4x1xf32> to vector<4x1xf32>
    %1374 = vector.shape_cast %1373 : vector<4x1xf32> to vector<1x4x1xf32>
    %1375 = vector.broadcast %1371 : vector<2x1x256xf32> to vector<2x4x256xf32>
    %1376 = vector.broadcast %1374 : vector<1x4x1xf32> to vector<2x4x256xf32>
    %1377 = arith.mulf %1375, %1376 : vector<2x4x256xf32>
    %1378 = arith.addf %1350, %1377 : vector<2x4x256xf32>
    %1379 = vector.extract_strided_slice %1370 {offsets = [0, 1, 0], sizes = [2, 1, 256], strides = [1, 1, 1]} : vector<2x4x256xf32> to vector<2x1x256xf32>
    %1380 = vector.extract_strided_slice %8 {offsets = [2, 1, 1, 0, 0], sizes = [1, 1, 1, 4, 1], strides = [1, 1, 1, 1, 1]} : vector<3x3x4x4x1xf32> to vector<1x1x1x4x1xf32>
    %1381 = vector.shape_cast %1380 : vector<1x1x1x4x1xf32> to vector<4x1xf32>
    %1382 = vector.shape_cast %1381 : vector<4x1xf32> to vector<1x4x1xf32>
    %1383 = vector.broadcast %1379 : vector<2x1x256xf32> to vector<2x4x256xf32>
    %1384 = vector.broadcast %1382 : vector<1x4x1xf32> to vector<2x4x256xf32>
    %1385 = arith.mulf %1383, %1384 : vector<2x4x256xf32>
    %1386 = arith.addf %1378, %1385 : vector<2x4x256xf32>
    %1387 = vector.extract_strided_slice %1370 {offsets = [0, 2, 0], sizes = [2, 1, 256], strides = [1, 1, 1]} : vector<2x4x256xf32> to vector<2x1x256xf32>
    %1388 = vector.extract_strided_slice %8 {offsets = [2, 1, 2, 0, 0], sizes = [1, 1, 1, 4, 1], strides = [1, 1, 1, 1, 1]} : vector<3x3x4x4x1xf32> to vector<1x1x1x4x1xf32>
    %1389 = vector.shape_cast %1388 : vector<1x1x1x4x1xf32> to vector<4x1xf32>
    %1390 = vector.shape_cast %1389 : vector<4x1xf32> to vector<1x4x1xf32>
    %1391 = vector.broadcast %1387 : vector<2x1x256xf32> to vector<2x4x256xf32>
    %1392 = vector.broadcast %1390 : vector<1x4x1xf32> to vector<2x4x256xf32>
    %1393 = arith.mulf %1391, %1392 : vector<2x4x256xf32>
    %1394 = arith.addf %1386, %1393 : vector<2x4x256xf32>
    %1395 = vector.extract_strided_slice %1370 {offsets = [0, 3, 0], sizes = [2, 1, 256], strides = [1, 1, 1]} : vector<2x4x256xf32> to vector<2x1x256xf32>
    %1396 = vector.extract_strided_slice %8 {offsets = [2, 1, 3, 0, 0], sizes = [1, 1, 1, 4, 1], strides = [1, 1, 1, 1, 1]} : vector<3x3x4x4x1xf32> to vector<1x1x1x4x1xf32>
    %1397 = vector.shape_cast %1396 : vector<1x1x1x4x1xf32> to vector<4x1xf32>
    %1398 = vector.shape_cast %1397 : vector<4x1xf32> to vector<1x4x1xf32>
    %1399 = vector.broadcast %1395 : vector<2x1x256xf32> to vector<2x4x256xf32>
    %1400 = vector.broadcast %1398 : vector<1x4x1xf32> to vector<2x4x256xf32>
    %1401 = arith.mulf %1399, %1400 : vector<2x4x256xf32>
    %1402 = arith.addf %1394, %1401 : vector<2x4x256xf32>
    %c239_i32_233 = arith.constant 239 : i32
    %1403 = tpu.dynamic_rotate %986 by %c239_i32_233 dim 2 : vector<2x4x256xf32>, i32 -> vector<2x4x256xf32>
    %c1_i32_234 = arith.constant 1 : i32
    %1404 = vector.broadcast %c1_i32_234 : i32 to vector<1x1x256xi32>
    %1405 = arith.addi %2, %1404 : vector<1x1x256xi32>
    %c1_i32_235 = arith.constant 1 : i32
    %1406 = vector.broadcast %c1_i32_235 : i32 to vector<1x1x256xi32>
    %1407 = arith.addi %4, %1406 : vector<1x1x256xi32>
    %c0_i32_236 = arith.constant 0 : i32
    %1408 = vector.broadcast %c0_i32_236 : i32 to vector<1x1x256xi32>
    %1409 = arith.cmpi sge, %1405, %1408 : vector<1x1x256xi32>
    %c15_i32_237 = arith.constant 15 : i32
    %1410 = vector.broadcast %c15_i32_237 : i32 to vector<1x1x256xi32>
    %1411 = arith.cmpi slt, %1405, %1410 : vector<1x1x256xi32>
    %1412 = arith.andi %1409, %1411 : vector<1x1x256xi1>
    %c0_i32_238 = arith.constant 0 : i32
    %1413 = vector.broadcast %c0_i32_238 : i32 to vector<1x1x256xi32>
    %1414 = arith.cmpi sge, %1407, %1413 : vector<1x1x256xi32>
    %1415 = arith.andi %1412, %1414 : vector<1x1x256xi1>
    %c15_i32_239 = arith.constant 15 : i32
    %1416 = vector.broadcast %c15_i32_239 : i32 to vector<1x1x256xi32>
    %1417 = arith.cmpi slt, %1407, %1416 : vector<1x1x256xi32>
    %1418 = arith.andi %1415, %1417 : vector<1x1x256xi1>
    %cst_240 = arith.constant 0.000000e+00 : f32
    %1419 = vector.shape_cast %1418 : vector<1x1x256xi1> to vector<1x1x256xi1>
    %1420 = vector.broadcast %1419 : vector<1x1x256xi1> to vector<2x4x256xi1>
    %1421 = vector.broadcast %cst_240 : f32 to vector<2x4x256xf32>
    %1422 = arith.select %1420, %1403, %1421 : vector<2x4x256xi1>, vector<2x4x256xf32>
    %1423 = vector.extract_strided_slice %1422 {offsets = [0, 0, 0], sizes = [2, 1, 256], strides = [1, 1, 1]} : vector<2x4x256xf32> to vector<2x1x256xf32>
    %1424 = vector.extract_strided_slice %8 {offsets = [2, 2, 0, 0, 0], sizes = [1, 1, 1, 4, 1], strides = [1, 1, 1, 1, 1]} : vector<3x3x4x4x1xf32> to vector<1x1x1x4x1xf32>
    %1425 = vector.shape_cast %1424 : vector<1x1x1x4x1xf32> to vector<4x1xf32>
    %1426 = vector.shape_cast %1425 : vector<4x1xf32> to vector<1x4x1xf32>
    %1427 = vector.broadcast %1423 : vector<2x1x256xf32> to vector<2x4x256xf32>
    %1428 = vector.broadcast %1426 : vector<1x4x1xf32> to vector<2x4x256xf32>
    %1429 = arith.mulf %1427, %1428 : vector<2x4x256xf32>
    %1430 = arith.addf %1402, %1429 : vector<2x4x256xf32>
    %1431 = vector.extract_strided_slice %1422 {offsets = [0, 1, 0], sizes = [2, 1, 256], strides = [1, 1, 1]} : vector<2x4x256xf32> to vector<2x1x256xf32>
    %1432 = vector.extract_strided_slice %8 {offsets = [2, 2, 1, 0, 0], sizes = [1, 1, 1, 4, 1], strides = [1, 1, 1, 1, 1]} : vector<3x3x4x4x1xf32> to vector<1x1x1x4x1xf32>
    %1433 = vector.shape_cast %1432 : vector<1x1x1x4x1xf32> to vector<4x1xf32>
    %1434 = vector.shape_cast %1433 : vector<4x1xf32> to vector<1x4x1xf32>
    %1435 = vector.broadcast %1431 : vector<2x1x256xf32> to vector<2x4x256xf32>
    %1436 = vector.broadcast %1434 : vector<1x4x1xf32> to vector<2x4x256xf32>
    %1437 = arith.mulf %1435, %1436 : vector<2x4x256xf32>
    %1438 = arith.addf %1430, %1437 : vector<2x4x256xf32>
    %1439 = vector.extract_strided_slice %1422 {offsets = [0, 2, 0], sizes = [2, 1, 256], strides = [1, 1, 1]} : vector<2x4x256xf32> to vector<2x1x256xf32>
    %1440 = vector.extract_strided_slice %8 {offsets = [2, 2, 2, 0, 0], sizes = [1, 1, 1, 4, 1], strides = [1, 1, 1, 1, 1]} : vector<3x3x4x4x1xf32> to vector<1x1x1x4x1xf32>
    %1441 = vector.shape_cast %1440 : vector<1x1x1x4x1xf32> to vector<4x1xf32>
    %1442 = vector.shape_cast %1441 : vector<4x1xf32> to vector<1x4x1xf32>
    %1443 = vector.broadcast %1439 : vector<2x1x256xf32> to vector<2x4x256xf32>
    %1444 = vector.broadcast %1442 : vector<1x4x1xf32> to vector<2x4x256xf32>
    %1445 = arith.mulf %1443, %1444 : vector<2x4x256xf32>
    %1446 = arith.addf %1438, %1445 : vector<2x4x256xf32>
    %1447 = vector.extract_strided_slice %1422 {offsets = [0, 3, 0], sizes = [2, 1, 256], strides = [1, 1, 1]} : vector<2x4x256xf32> to vector<2x1x256xf32>
    %1448 = vector.extract_strided_slice %8 {offsets = [2, 2, 3, 0, 0], sizes = [1, 1, 1, 4, 1], strides = [1, 1, 1, 1, 1]} : vector<3x3x4x4x1xf32> to vector<1x1x1x4x1xf32>
    %1449 = vector.shape_cast %1448 : vector<1x1x1x4x1xf32> to vector<4x1xf32>
    %1450 = vector.shape_cast %1449 : vector<4x1xf32> to vector<1x4x1xf32>
    %1451 = vector.broadcast %1447 : vector<2x1x256xf32> to vector<2x4x256xf32>
    %1452 = vector.broadcast %1450 : vector<1x4x1xf32> to vector<2x4x256xf32>
    %1453 = arith.mulf %1451, %1452 : vector<2x4x256xf32>
    %1454 = arith.addf %1446, %1453 : vector<2x4x256xf32>
    %c0_241 = arith.constant 0 : index
    %c0_242 = arith.constant 0 : index
    %1455 = vector.load %arg7[%c0_241, %c0_242] : memref<4x1xf32, #tpu.memory_space<vmem>>, vector<4x1xf32>
    %1456 = vector.shape_cast %1455 : vector<4x1xf32> to vector<1x4x1xf32>
    %1457 = vector.broadcast %1456 : vector<1x4x1xf32> to vector<2x4x256xf32>
    %1458 = arith.addf %1454, %1457 : vector<2x4x256xf32>
    %cst_243 = arith.constant 0.000000e+00 : f32
    %1459 = vector.broadcast %cst_243 : f32 to vector<2x4x256xf32>
    %c0_i32_244 = arith.constant 0 : i32
    %1460 = vector.broadcast %c0_i32_244 : i32 to vector<1x1x256xi32>
    %1461 = arith.cmpi sge, %0, %1460 : vector<1x1x256xi32>
    %c15_i32_245 = arith.constant 15 : i32
    %1462 = vector.broadcast %c15_i32_245 : i32 to vector<1x1x256xi32>
    %1463 = arith.cmpi slt, %0, %1462 : vector<1x1x256xi32>
    %1464 = arith.andi %1461, %1463 : vector<1x1x256xi1>
    %cst_246 = arith.constant 0.000000e+00 : f32
    %1465 = vector.shape_cast %1464 : vector<1x1x256xi1> to vector<1x1x256xi1>
    %1466 = vector.broadcast %1465 : vector<1x1x256xi1> to vector<2x4x256xi1>
    %1467 = vector.broadcast %cst_246 : f32 to vector<2x4x256xf32>
    %1468 = arith.select %1466, %1458, %1467 : vector<2x4x256xi1>, vector<2x4x256xf32>
    %1469 = arith.addf %1459, %1468 : vector<2x4x256xf32>
    %c255_i32_247 = arith.constant 255 : i32
    %1470 = tpu.dynamic_rotate %1458 by %c255_i32_247 dim 2 : vector<2x4x256xf32>, i32 -> vector<2x4x256xf32>
    %c15_i32_248 = arith.constant 15 : i32
    %1471 = vector.broadcast %c15_i32_248 : i32 to vector<1x1x256xi32>
    %1472 = arith.cmpi sge, %0, %1471 : vector<1x1x256xi32>
    %c30_i32 = arith.constant 30 : i32
    %1473 = vector.broadcast %c30_i32 : i32 to vector<1x1x256xi32>
    %1474 = arith.cmpi slt, %0, %1473 : vector<1x1x256xi32>
    %1475 = arith.andi %1472, %1474 : vector<1x1x256xi1>
    %cst_249 = arith.constant 0.000000e+00 : f32
    %1476 = vector.shape_cast %1475 : vector<1x1x256xi1> to vector<1x1x256xi1>
    %1477 = vector.broadcast %1476 : vector<1x1x256xi1> to vector<2x4x256xi1>
    %1478 = vector.broadcast %cst_249 : f32 to vector<2x4x256xf32>
    %1479 = arith.select %1477, %1470, %1478 : vector<2x4x256xi1>, vector<2x4x256xf32>
    %1480 = arith.addf %1469, %1479 : vector<2x4x256xf32>
    %c254_i32 = arith.constant 254 : i32
    %1481 = tpu.dynamic_rotate %1458 by %c254_i32 dim 2 : vector<2x4x256xf32>, i32 -> vector<2x4x256xf32>
    %c30_i32_250 = arith.constant 30 : i32
    %1482 = vector.broadcast %c30_i32_250 : i32 to vector<1x1x256xi32>
    %1483 = arith.cmpi sge, %0, %1482 : vector<1x1x256xi32>
    %c45_i32 = arith.constant 45 : i32
    %1484 = vector.broadcast %c45_i32 : i32 to vector<1x1x256xi32>
    %1485 = arith.cmpi slt, %0, %1484 : vector<1x1x256xi32>
    %1486 = arith.andi %1483, %1485 : vector<1x1x256xi1>
    %cst_251 = arith.constant 0.000000e+00 : f32
    %1487 = vector.shape_cast %1486 : vector<1x1x256xi1> to vector<1x1x256xi1>
    %1488 = vector.broadcast %1487 : vector<1x1x256xi1> to vector<2x4x256xi1>
    %1489 = vector.broadcast %cst_251 : f32 to vector<2x4x256xf32>
    %1490 = arith.select %1488, %1481, %1489 : vector<2x4x256xi1>, vector<2x4x256xf32>
    %1491 = arith.addf %1480, %1490 : vector<2x4x256xf32>
    %c253_i32 = arith.constant 253 : i32
    %1492 = tpu.dynamic_rotate %1458 by %c253_i32 dim 2 : vector<2x4x256xf32>, i32 -> vector<2x4x256xf32>
    %c45_i32_252 = arith.constant 45 : i32
    %1493 = vector.broadcast %c45_i32_252 : i32 to vector<1x1x256xi32>
    %1494 = arith.cmpi sge, %0, %1493 : vector<1x1x256xi32>
    %c60_i32 = arith.constant 60 : i32
    %1495 = vector.broadcast %c60_i32 : i32 to vector<1x1x256xi32>
    %1496 = arith.cmpi slt, %0, %1495 : vector<1x1x256xi32>
    %1497 = arith.andi %1494, %1496 : vector<1x1x256xi1>
    %cst_253 = arith.constant 0.000000e+00 : f32
    %1498 = vector.shape_cast %1497 : vector<1x1x256xi1> to vector<1x1x256xi1>
    %1499 = vector.broadcast %1498 : vector<1x1x256xi1> to vector<2x4x256xi1>
    %1500 = vector.broadcast %cst_253 : f32 to vector<2x4x256xf32>
    %1501 = arith.select %1499, %1492, %1500 : vector<2x4x256xi1>, vector<2x4x256xf32>
    %1502 = arith.addf %1491, %1501 : vector<2x4x256xf32>
    %c252_i32 = arith.constant 252 : i32
    %1503 = tpu.dynamic_rotate %1458 by %c252_i32 dim 2 : vector<2x4x256xf32>, i32 -> vector<2x4x256xf32>
    %c60_i32_254 = arith.constant 60 : i32
    %1504 = vector.broadcast %c60_i32_254 : i32 to vector<1x1x256xi32>
    %1505 = arith.cmpi sge, %0, %1504 : vector<1x1x256xi32>
    %c75_i32 = arith.constant 75 : i32
    %1506 = vector.broadcast %c75_i32 : i32 to vector<1x1x256xi32>
    %1507 = arith.cmpi slt, %0, %1506 : vector<1x1x256xi32>
    %1508 = arith.andi %1505, %1507 : vector<1x1x256xi1>
    %cst_255 = arith.constant 0.000000e+00 : f32
    %1509 = vector.shape_cast %1508 : vector<1x1x256xi1> to vector<1x1x256xi1>
    %1510 = vector.broadcast %1509 : vector<1x1x256xi1> to vector<2x4x256xi1>
    %1511 = vector.broadcast %cst_255 : f32 to vector<2x4x256xf32>
    %1512 = arith.select %1510, %1503, %1511 : vector<2x4x256xi1>, vector<2x4x256xf32>
    %1513 = arith.addf %1502, %1512 : vector<2x4x256xf32>
    %c251_i32 = arith.constant 251 : i32
    %1514 = tpu.dynamic_rotate %1458 by %c251_i32 dim 2 : vector<2x4x256xf32>, i32 -> vector<2x4x256xf32>
    %c75_i32_256 = arith.constant 75 : i32
    %1515 = vector.broadcast %c75_i32_256 : i32 to vector<1x1x256xi32>
    %1516 = arith.cmpi sge, %0, %1515 : vector<1x1x256xi32>
    %c90_i32 = arith.constant 90 : i32
    %1517 = vector.broadcast %c90_i32 : i32 to vector<1x1x256xi32>
    %1518 = arith.cmpi slt, %0, %1517 : vector<1x1x256xi32>
    %1519 = arith.andi %1516, %1518 : vector<1x1x256xi1>
    %cst_257 = arith.constant 0.000000e+00 : f32
    %1520 = vector.shape_cast %1519 : vector<1x1x256xi1> to vector<1x1x256xi1>
    %1521 = vector.broadcast %1520 : vector<1x1x256xi1> to vector<2x4x256xi1>
    %1522 = vector.broadcast %cst_257 : f32 to vector<2x4x256xf32>
    %1523 = arith.select %1521, %1514, %1522 : vector<2x4x256xi1>, vector<2x4x256xf32>
    %1524 = arith.addf %1513, %1523 : vector<2x4x256xf32>
    %c250_i32 = arith.constant 250 : i32
    %1525 = tpu.dynamic_rotate %1458 by %c250_i32 dim 2 : vector<2x4x256xf32>, i32 -> vector<2x4x256xf32>
    %c90_i32_258 = arith.constant 90 : i32
    %1526 = vector.broadcast %c90_i32_258 : i32 to vector<1x1x256xi32>
    %1527 = arith.cmpi sge, %0, %1526 : vector<1x1x256xi32>
    %c105_i32 = arith.constant 105 : i32
    %1528 = vector.broadcast %c105_i32 : i32 to vector<1x1x256xi32>
    %1529 = arith.cmpi slt, %0, %1528 : vector<1x1x256xi32>
    %1530 = arith.andi %1527, %1529 : vector<1x1x256xi1>
    %cst_259 = arith.constant 0.000000e+00 : f32
    %1531 = vector.shape_cast %1530 : vector<1x1x256xi1> to vector<1x1x256xi1>
    %1532 = vector.broadcast %1531 : vector<1x1x256xi1> to vector<2x4x256xi1>
    %1533 = vector.broadcast %cst_259 : f32 to vector<2x4x256xf32>
    %1534 = arith.select %1532, %1525, %1533 : vector<2x4x256xi1>, vector<2x4x256xf32>
    %1535 = arith.addf %1524, %1534 : vector<2x4x256xf32>
    %c249_i32 = arith.constant 249 : i32
    %1536 = tpu.dynamic_rotate %1458 by %c249_i32 dim 2 : vector<2x4x256xf32>, i32 -> vector<2x4x256xf32>
    %c105_i32_260 = arith.constant 105 : i32
    %1537 = vector.broadcast %c105_i32_260 : i32 to vector<1x1x256xi32>
    %1538 = arith.cmpi sge, %0, %1537 : vector<1x1x256xi32>
    %c120_i32 = arith.constant 120 : i32
    %1539 = vector.broadcast %c120_i32 : i32 to vector<1x1x256xi32>
    %1540 = arith.cmpi slt, %0, %1539 : vector<1x1x256xi32>
    %1541 = arith.andi %1538, %1540 : vector<1x1x256xi1>
    %cst_261 = arith.constant 0.000000e+00 : f32
    %1542 = vector.shape_cast %1541 : vector<1x1x256xi1> to vector<1x1x256xi1>
    %1543 = vector.broadcast %1542 : vector<1x1x256xi1> to vector<2x4x256xi1>
    %1544 = vector.broadcast %cst_261 : f32 to vector<2x4x256xf32>
    %1545 = arith.select %1543, %1536, %1544 : vector<2x4x256xi1>, vector<2x4x256xf32>
    %1546 = arith.addf %1535, %1545 : vector<2x4x256xf32>
    %c248_i32 = arith.constant 248 : i32
    %1547 = tpu.dynamic_rotate %1458 by %c248_i32 dim 2 : vector<2x4x256xf32>, i32 -> vector<2x4x256xf32>
    %c120_i32_262 = arith.constant 120 : i32
    %1548 = vector.broadcast %c120_i32_262 : i32 to vector<1x1x256xi32>
    %1549 = arith.cmpi sge, %0, %1548 : vector<1x1x256xi32>
    %c135_i32 = arith.constant 135 : i32
    %1550 = vector.broadcast %c135_i32 : i32 to vector<1x1x256xi32>
    %1551 = arith.cmpi slt, %0, %1550 : vector<1x1x256xi32>
    %1552 = arith.andi %1549, %1551 : vector<1x1x256xi1>
    %cst_263 = arith.constant 0.000000e+00 : f32
    %1553 = vector.shape_cast %1552 : vector<1x1x256xi1> to vector<1x1x256xi1>
    %1554 = vector.broadcast %1553 : vector<1x1x256xi1> to vector<2x4x256xi1>
    %1555 = vector.broadcast %cst_263 : f32 to vector<2x4x256xf32>
    %1556 = arith.select %1554, %1547, %1555 : vector<2x4x256xi1>, vector<2x4x256xf32>
    %1557 = arith.addf %1546, %1556 : vector<2x4x256xf32>
    %c247_i32 = arith.constant 247 : i32
    %1558 = tpu.dynamic_rotate %1458 by %c247_i32 dim 2 : vector<2x4x256xf32>, i32 -> vector<2x4x256xf32>
    %c135_i32_264 = arith.constant 135 : i32
    %1559 = vector.broadcast %c135_i32_264 : i32 to vector<1x1x256xi32>
    %1560 = arith.cmpi sge, %0, %1559 : vector<1x1x256xi32>
    %c150_i32 = arith.constant 150 : i32
    %1561 = vector.broadcast %c150_i32 : i32 to vector<1x1x256xi32>
    %1562 = arith.cmpi slt, %0, %1561 : vector<1x1x256xi32>
    %1563 = arith.andi %1560, %1562 : vector<1x1x256xi1>
    %cst_265 = arith.constant 0.000000e+00 : f32
    %1564 = vector.shape_cast %1563 : vector<1x1x256xi1> to vector<1x1x256xi1>
    %1565 = vector.broadcast %1564 : vector<1x1x256xi1> to vector<2x4x256xi1>
    %1566 = vector.broadcast %cst_265 : f32 to vector<2x4x256xf32>
    %1567 = arith.select %1565, %1558, %1566 : vector<2x4x256xi1>, vector<2x4x256xf32>
    %1568 = arith.addf %1557, %1567 : vector<2x4x256xf32>
    %c246_i32 = arith.constant 246 : i32
    %1569 = tpu.dynamic_rotate %1458 by %c246_i32 dim 2 : vector<2x4x256xf32>, i32 -> vector<2x4x256xf32>
    %c150_i32_266 = arith.constant 150 : i32
    %1570 = vector.broadcast %c150_i32_266 : i32 to vector<1x1x256xi32>
    %1571 = arith.cmpi sge, %0, %1570 : vector<1x1x256xi32>
    %c165_i32 = arith.constant 165 : i32
    %1572 = vector.broadcast %c165_i32 : i32 to vector<1x1x256xi32>
    %1573 = arith.cmpi slt, %0, %1572 : vector<1x1x256xi32>
    %1574 = arith.andi %1571, %1573 : vector<1x1x256xi1>
    %cst_267 = arith.constant 0.000000e+00 : f32
    %1575 = vector.shape_cast %1574 : vector<1x1x256xi1> to vector<1x1x256xi1>
    %1576 = vector.broadcast %1575 : vector<1x1x256xi1> to vector<2x4x256xi1>
    %1577 = vector.broadcast %cst_267 : f32 to vector<2x4x256xf32>
    %1578 = arith.select %1576, %1569, %1577 : vector<2x4x256xi1>, vector<2x4x256xf32>
    %1579 = arith.addf %1568, %1578 : vector<2x4x256xf32>
    %c245_i32 = arith.constant 245 : i32
    %1580 = tpu.dynamic_rotate %1458 by %c245_i32 dim 2 : vector<2x4x256xf32>, i32 -> vector<2x4x256xf32>
    %c165_i32_268 = arith.constant 165 : i32
    %1581 = vector.broadcast %c165_i32_268 : i32 to vector<1x1x256xi32>
    %1582 = arith.cmpi sge, %0, %1581 : vector<1x1x256xi32>
    %c180_i32 = arith.constant 180 : i32
    %1583 = vector.broadcast %c180_i32 : i32 to vector<1x1x256xi32>
    %1584 = arith.cmpi slt, %0, %1583 : vector<1x1x256xi32>
    %1585 = arith.andi %1582, %1584 : vector<1x1x256xi1>
    %cst_269 = arith.constant 0.000000e+00 : f32
    %1586 = vector.shape_cast %1585 : vector<1x1x256xi1> to vector<1x1x256xi1>
    %1587 = vector.broadcast %1586 : vector<1x1x256xi1> to vector<2x4x256xi1>
    %1588 = vector.broadcast %cst_269 : f32 to vector<2x4x256xf32>
    %1589 = arith.select %1587, %1580, %1588 : vector<2x4x256xi1>, vector<2x4x256xf32>
    %1590 = arith.addf %1579, %1589 : vector<2x4x256xf32>
    %c244_i32 = arith.constant 244 : i32
    %1591 = tpu.dynamic_rotate %1458 by %c244_i32 dim 2 : vector<2x4x256xf32>, i32 -> vector<2x4x256xf32>
    %c180_i32_270 = arith.constant 180 : i32
    %1592 = vector.broadcast %c180_i32_270 : i32 to vector<1x1x256xi32>
    %1593 = arith.cmpi sge, %0, %1592 : vector<1x1x256xi32>
    %c195_i32 = arith.constant 195 : i32
    %1594 = vector.broadcast %c195_i32 : i32 to vector<1x1x256xi32>
    %1595 = arith.cmpi slt, %0, %1594 : vector<1x1x256xi32>
    %1596 = arith.andi %1593, %1595 : vector<1x1x256xi1>
    %cst_271 = arith.constant 0.000000e+00 : f32
    %1597 = vector.shape_cast %1596 : vector<1x1x256xi1> to vector<1x1x256xi1>
    %1598 = vector.broadcast %1597 : vector<1x1x256xi1> to vector<2x4x256xi1>
    %1599 = vector.broadcast %cst_271 : f32 to vector<2x4x256xf32>
    %1600 = arith.select %1598, %1591, %1599 : vector<2x4x256xi1>, vector<2x4x256xf32>
    %1601 = arith.addf %1590, %1600 : vector<2x4x256xf32>
    %c243_i32 = arith.constant 243 : i32
    %1602 = tpu.dynamic_rotate %1458 by %c243_i32 dim 2 : vector<2x4x256xf32>, i32 -> vector<2x4x256xf32>
    %c195_i32_272 = arith.constant 195 : i32
    %1603 = vector.broadcast %c195_i32_272 : i32 to vector<1x1x256xi32>
    %1604 = arith.cmpi sge, %0, %1603 : vector<1x1x256xi32>
    %c210_i32 = arith.constant 210 : i32
    %1605 = vector.broadcast %c210_i32 : i32 to vector<1x1x256xi32>
    %1606 = arith.cmpi slt, %0, %1605 : vector<1x1x256xi32>
    %1607 = arith.andi %1604, %1606 : vector<1x1x256xi1>
    %cst_273 = arith.constant 0.000000e+00 : f32
    %1608 = vector.shape_cast %1607 : vector<1x1x256xi1> to vector<1x1x256xi1>
    %1609 = vector.broadcast %1608 : vector<1x1x256xi1> to vector<2x4x256xi1>
    %1610 = vector.broadcast %cst_273 : f32 to vector<2x4x256xf32>
    %1611 = arith.select %1609, %1602, %1610 : vector<2x4x256xi1>, vector<2x4x256xf32>
    %1612 = arith.addf %1601, %1611 : vector<2x4x256xf32>
    %c242_i32 = arith.constant 242 : i32
    %1613 = tpu.dynamic_rotate %1458 by %c242_i32 dim 2 : vector<2x4x256xf32>, i32 -> vector<2x4x256xf32>
    %c210_i32_274 = arith.constant 210 : i32
    %1614 = vector.broadcast %c210_i32_274 : i32 to vector<1x1x256xi32>
    %1615 = arith.cmpi sge, %0, %1614 : vector<1x1x256xi32>
    %c225_i32 = arith.constant 225 : i32
    %1616 = vector.broadcast %c225_i32 : i32 to vector<1x1x256xi32>
    %1617 = arith.cmpi slt, %0, %1616 : vector<1x1x256xi32>
    %1618 = arith.andi %1615, %1617 : vector<1x1x256xi1>
    %cst_275 = arith.constant 0.000000e+00 : f32
    %1619 = vector.shape_cast %1618 : vector<1x1x256xi1> to vector<1x1x256xi1>
    %1620 = vector.broadcast %1619 : vector<1x1x256xi1> to vector<2x4x256xi1>
    %1621 = vector.broadcast %cst_275 : f32 to vector<2x4x256xf32>
    %1622 = arith.select %1620, %1613, %1621 : vector<2x4x256xi1>, vector<2x4x256xf32>
    %1623 = arith.addf %1612, %1622 : vector<2x4x256xf32>
    %1624 = vector.extract_strided_slice %1623 {offsets = [0, 0, 0], sizes = [2, 4, 225], strides = [1, 1, 1]} : vector<2x4x256xf32> to vector<2x4x225xf32>
    %c0_276 = arith.constant 0 : index
    %c0_277 = arith.constant 0 : index
    %c0_278 = arith.constant 0 : index
    %1625 = vector.load %arg8[%c0_276, %c0_277, %c0_278] : memref<2x4x225xf32, #tpu.memory_space<vmem>>, vector<2x4x225xf32>
    tpu.vector_store %arg8[%c0_276, %c0_277, %c0_278], %1624 {strides = array<i32>} : memref<2x4x225xf32, #tpu.memory_space<vmem>>, vector<2x4x225xf32>,
    return
  }
}

</mosaic_0001>

<llo_original>
// kernel: architecture_forward.1
$region0: #{architecture_forward.1}
  #allocation0 [shape = 'u32[]', space=smem, size = 0x4, offset = 0x4, fixed_abs, tag = 'smem constant byte address 0x4 - core index']
  #allocation1 [shape = 'u32[144,128]{1,0:T(1,128)}', space=vmem, size = 0x12000, scoped, tag = 'internal scratch']
  %s0 = inlined_call_operand.vmem [shape: f32[2,4,256], index: 0, kind: input, shape index: {}]
  %s1 = inlined_call_operand.vmem [shape: f32[3,3,4,4,1], index: 1, kind: input, shape index: {}]
  %s2 = inlined_call_operand.vmem [shape: f32[4,1], index: 2, kind: input, shape index: {}]
  %s3 = inlined_call_operand.vmem [shape: f32[4,1], index: 3, kind: input, shape index: {}]
  %s4 = inlined_call_operand.vmem [shape: f32[3,3,4,4,1], index: 4, kind: input, shape index: {}]
  %s5 = inlined_call_operand.vmem [shape: f32[4,1], index: 5, kind: input, shape index: {}]
  %s6 = inlined_call_operand.vmem [shape: f32[3,3,4,4,1], index: 6, kind: input, shape index: {}]
  %s7 = inlined_call_operand.vmem [shape: f32[4,1], index: 7, kind: input, shape index: {}]
  %s8 = inlined_call_operand.vmem [shape: f32[2,4,225], index: 8, kind: output, shape index: {}]
  %s9 = sld [smem:[#allocation0]]
  $region42: #{architecture_forward.1} parent=0
    _
  %s11 = ssub.s32 1, %s9
  %s12 = scalar_select 0, %s11, %s9
  // Predicated region
  $region2: #{architecture_forward.1} parent=0 // pred_check
    _
  $region3: #{architecture_forward.1} parent=0 // pred_check_branch
    %14 = sbr.rel (0) target = $region5
  $region4: #{architecture_forward.1} parent=0 // pred_region
    _
  $region5: #{architecture_forward.1} parent=0 // pred_fallthru
    _
  // Predicated region
  $region6: #{architecture_forward.1} parent=0 // pred_check
    _
  $region7: #{architecture_forward.1} parent=0 // pred_check_branch
    %16 = sbr.rel (0) target = $region9
  $region8: #{architecture_forward.1} parent=0 // pred_region
    _
  $region9: #{architecture_forward.1} parent=0 // pred_fallthru
    _
  // Predicated region
  $region10: #{architecture_forward.1} parent=0 // pred_check
    _
  $region11: #{architecture_forward.1} parent=0 // pred_check_branch
    %18 = sbr.rel (0) target = $region13
  $region12: #{architecture_forward.1} parent=0 // pred_region
    _
  $region13: #{architecture_forward.1} parent=0 // pred_fallthru
    _
  // Predicated region
  $region14: #{architecture_forward.1} parent=0 // pred_check
    _
  $region15: #{architecture_forward.1} parent=0 // pred_check_branch
    %20 = sbr.rel (0) target = $region17
  $region16: #{architecture_forward.1} parent=0 // pred_region
    _
  $region17: #{architecture_forward.1} parent=0 // pred_fallthru
    _
  // Predicated region
  $region18: #{architecture_forward.1} parent=0 // pred_check
    _
  $region19: #{architecture_forward.1} parent=0 // pred_check_branch
    %22 = sbr.rel (0) target = $region21
  $region20: #{architecture_forward.1} parent=0 // pred_region
    _
  $region21: #{architecture_forward.1} parent=0 // pred_fallthru
    _
  // Predicated region
  $region22: #{architecture_forward.1} parent=0 // pred_check
    _
  $region23: #{architecture_forward.1} parent=0 // pred_check_branch
    %24 = sbr.rel (0) target = $region25
  $region24: #{architecture_forward.1} parent=0 // pred_region
    _
  $region25: #{architecture_forward.1} parent=0 // pred_fallthru
    _
  // Predicated region
  $region26: #{architecture_forward.1} parent=0 // pred_check
    _
  $region27: #{architecture_forward.1} parent=0 // pred_check_branch
    %26 = sbr.rel (0) target = $region29
  $region28: #{architecture_forward.1} parent=0 // pred_region
    _
  $region29: #{architecture_forward.1} parent=0 // pred_fallthru
    _
  // Predicated region
  $region30: #{architecture_forward.1} parent=0 // pred_check
    _
  $region31: #{architecture_forward.1} parent=0 // pred_check_branch
    %28 = sbr.rel (0) target = $region33
  $region32: #{architecture_forward.1} parent=0 // pred_region
    _
  $region33: #{architecture_forward.1} parent=0 // pred_fallthru
    _
  %v29 = vlaneseq
  %v30 = vand.u32 %v29, 127
  %v31 = vadd.s32 %v30, 128
  %v32 = vshra.s32 %v30, 4
  %v33 = vshra.s32 %v31, 4
  %v34 = vand.u32 %v30, 15
  %v35 = vand.u32 %v31, 15
  %v36 = vld [vmem:[%s0] sm:$0xff]
  %v37 = vld [vmem:[%s0 + $0x8] sm:$0xff]
  %v38 = vld [vmem:[%s1] sm:$0xf]
  %v39 = vld [vmem:[%s1 + $0x4] sm:$0xf]
  %v40 = vld [vmem:[%s1 + $0x8] sm:$0xf]
  %v41 = vld [vmem:[%s1 + $0xc] sm:$0xf]
  %v42 = vld [vmem:[%s1 + $0x10] sm:$0xf]
  %v43 = vld [vmem:[%s1 + $0x14] sm:$0xf]
  %v44 = vld [vmem:[%s1 + $0x18] sm:$0xf]
  %v45 = vld [vmem:[%s1 + $0x1c] sm:$0xf]
  %v46 = vld [vmem:[%s1 + $0x20] sm:$0xf]
  %v47 = vld [vmem:[%s1 + $0x24] sm:$0xf]
  %v48 = vld [vmem:[%s1 + $0x28] sm:$0xf]
  %v49 = vld [vmem:[%s1 + $0x2c] sm:$0xf]
  %v50 = vld [vmem:[%s1 + $0x30] sm:$0xf]
  %v51 = vld [vmem:[%s1 + $0x34] sm:$0xf]
  %v52 = vld [vmem:[%s1 + $0x38] sm:$0xf]
  %v53 = vld [vmem:[%s1 + $0x3c] sm:$0xf]
  %v54 = vld [vmem:[%s1 + $0x40] sm:$0xf]
  %v55 = vld [vmem:[%s1 + $0x44] sm:$0xf]
  %v56 = vld [vmem:[%s1 + $0x48] sm:$0xf]
  %v57 = vld [vmem:[%s1 + $0x4c] sm:$0xf]
  %v58 = vld [vmem:[%s1 + $0x50] sm:$0xf]
  %v59 = vld [vmem:[%s1 + $0x54] sm:$0xf]
  %v60 = vld [vmem:[%s1 + $0x58] sm:$0xf]
  %v61 = vld [vmem:[%s1 + $0x5c] sm:$0xf]
  %v62 = vld [vmem:[%s1 + $0x60] sm:$0xf]
  %v63 = vld [vmem:[%s1 + $0x64] sm:$0xf]
  %v64 = vld [vmem:[%s1 + $0x68] sm:$0xf]
  %v65 = vld [vmem:[%s1 + $0x6c] sm:$0xf]
  %v66 = vld [vmem:[%s1 + $0x70] sm:$0xf]
  %v67 = vld [vmem:[%s1 + $0x74] sm:$0xf]
  %v68 = vld [vmem:[%s1 + $0x78] sm:$0xf]
  %v69 = vld [vmem:[%s1 + $0x7c] sm:$0xf]
  %v70 = vld [vmem:[%s1 + $0x80] sm:$0xf]
  %v71 = vld [vmem:[%s1 + $0x84] sm:$0xf]
  %v72 = vld [vmem:[%s1 + $0x88] sm:$0xf]
  %v73 = vld [vmem:[%s1 + $0x8c] sm:$0xf]
  %v74 = vld [vmem:[%s4] sm:$0xf]
  %v75 = vld [vmem:[%s4 + $0x4] sm:$0xf]
  %v76 = vld [vmem:[%s4 + $0x8] sm:$0xf]
  %v77 = vld [vmem:[%s4 + $0xc] sm:$0xf]
  %v78 = vld [vmem:[%s4 + $0x10] sm:$0xf]
  %v79 = vld [vmem:[%s4 + $0x14] sm:$0xf]
  %v80 = vld [vmem:[%s4 + $0x18] sm:$0xf]
  %v81 = vld [vmem:[%s4 + $0x1c] sm:$0xf]
  %v82 = vld [vmem:[%s4 + $0x20] sm:$0xf]
  %v83 = vld [vmem:[%s4 + $0x24] sm:$0xf]
  %v84 = vld [vmem:[%s4 + $0x28] sm:$0xf]
  %v85 = vld [vmem:[%s4 + $0x2c] sm:$0xf]
  %v86 = vld [vmem:[%s4 + $0x30] sm:$0xf]
  %v87 = vld [vmem:[%s4 + $0x34] sm:$0xf]
  %v88 = vld [vmem:[%s4 + $0x38] sm:$0xf]
  %v89 = vld [vmem:[%s4 + $0x3c] sm:$0xf]
  %v90 = vld [vmem:[%s4 + $0x40] sm:$0xf]
  %v91 = vld [vmem:[%s4 + $0x44] sm:$0xf]
  %v92 = vld [vmem:[%s4 + $0x48] sm:$0xf]
  %v93 = vld [vmem:[%s4 + $0x4c] sm:$0xf]
  %v94 = vld [vmem:[%s4 + $0x50] sm:$0xf]
  %v95 = vld [vmem:[%s4 + $0x54] sm:$0xf]
  %v96 = vld [vmem:[%s4 + $0x58] sm:$0xf]
  %v97 = vld [vmem:[%s4 + $0x5c] sm:$0xf]
  %v98 = vld [vmem:[%s4 + $0x60] sm:$0xf]
  %v99 = vld [vmem:[%s4 + $0x64] sm:$0xf]
  %v100 = vld [vmem:[%s4 + $0x68] sm:$0xf]
  %v101 = vld [vmem:[%s4 + $0x6c] sm:$0xf]
  %v102 = vld [vmem:[%s4 + $0x70] sm:$0xf]
  %v103 = vld [vmem:[%s4 + $0x74] sm:$0xf]
  %v104 = vld [vmem:[%s4 + $0x78] sm:$0xf]
  %v105 = vld [vmem:[%s4 + $0x7c] sm:$0xf]
  %v106 = vld [vmem:[%s4 + $0x80] sm:$0xf]
  %v107 = vld [vmem:[%s4 + $0x84] sm:$0xf]
  %v108 = vld [vmem:[%s4 + $0x88] sm:$0xf]
  %v109 = vld [vmem:[%s4 + $0x8c] sm:$0xf]
  %v110 = vld [vmem:[%s6] sm:$0xf]
  %v111 = vld [vmem:[%s6 + $0x4] sm:$0xf]
  %v112 = vld [vmem:[%s6 + $0x8] sm:$0xf]
  %v113 = vld [vmem:[%s6 + $0xc] sm:$0xf]
  %v114 = vld [vmem:[%s6 + $0x10] sm:$0xf]
  %v115 = vld [vmem:[%s6 + $0x14] sm:$0xf]
  %v116 = vld [vmem:[%s6 + $0x18] sm:$0xf]
  %v117 = vld [vmem:[%s6 + $0x1c] sm:$0xf]
  %v118 = vld [vmem:[%s6 + $0x20] sm:$0xf]
  %v119 = vld [vmem:[%s6 + $0x24] sm:$0xf]
  %v120 = vld [vmem:[%s6 + $0x28] sm:$0xf]
  %v121 = vld [vmem:[%s6 + $0x2c] sm:$0xf]
  %v122 = vld [vmem:[%s6 + $0x30] sm:$0xf]
  %v123 = vld [vmem:[%s6 + $0x34] sm:$0xf]
  %v124 = vld [vmem:[%s6 + $0x38] sm:$0xf]
  %v125 = vld [vmem:[%s6 + $0x3c] sm:$0xf]
  %v126 = vld [vmem:[%s6 + $0x40] sm:$0xf]
  %v127 = vld [vmem:[%s6 + $0x44] sm:$0xf]
  %v128 = vld [vmem:[%s6 + $0x48] sm:$0xf]
  %v129 = vld [vmem:[%s6 + $0x4c] sm:$0xf]
  %v130 = vld [vmem:[%s6 + $0x50] sm:$0xf]
  %v131 = vld [vmem:[%s6 + $0x54] sm:$0xf]
  %v132 = vld [vmem:[%s6 + $0x58] sm:$0xf]
  %v133 = vld [vmem:[%s6 + $0x5c] sm:$0xf]
  %v134 = vld [vmem:[%s6 + $0x60] sm:$0xf]
  %v135 = vld [vmem:[%s6 + $0x64] sm:$0xf]
  %v136 = vld [vmem:[%s6 + $0x68] sm:$0xf]
  %v137 = vld [vmem:[%s6 + $0x6c] sm:$0xf]
  %v138 = vld [vmem:[%s6 + $0x70] sm:$0xf]
  %v139 = vld [vmem:[%s6 + $0x74] sm:$0xf]
  %v140 = vld [vmem:[%s6 + $0x78] sm:$0xf]
  %v141 = vld [vmem:[%s6 + $0x7c] sm:$0xf]
  %v142 = vld [vmem:[%s6 + $0x80] sm:$0xf]
  %v143 = vld [vmem:[%s6 + $0x84] sm:$0xf]
  %v144 = vld [vmem:[%s6 + $0x88] sm:$0xf]
  %v145 = vld [vmem:[%s6 + $0x8c] sm:$0xf]
  %v148 = vcombine.high %v36, %v36
  %v149 = vcombine.high %v37, %v37
  %152 = vrot.lane.b32.xlu0 %v36, 17
  %v153 = vpop.permute.xlu0 %152
  %154 = vrot.lane.b32.xlu0 %v37, 17
  %v155 = vpop.permute.xlu0 %154
  %156 = vrot.lane.b32.xlu0 %v148, 17
  %v157 = vpop.permute.xlu0 %156
  %158 = vrot.lane.b32.xlu0 %v149, 17
  %v159 = vpop.permute.xlu0 %158
  %vm160 = vcmp.lt.s32.totalorder %v30, 17
  %v161 = vsel %vm160, %v153, %v157
  %v162 = vsel %vm160, %v155, %v159
  %v163 = vsel %vm160, %v157, %v153
  %v164 = vsel %vm160, %v159, %v155
  %v165 = vadd.s32 %v32, 4294967295
  %v166 = vadd.s32 %v33, 4294967295
  %v167 = vadd.s32 %v34, 4294967295
  %v168 = vadd.s32 %v35, 4294967295
  %vm169 = vcmp.ge.s32.totalorder %v165, 0
  %vm170 = vcmp.ge.s32.totalorder %v166, 0
  %vm171 = vcmp.lt.s32.totalorder %v165, 16
  %vm172 = vcmp.lt.s32.totalorder %v166, 16
  %vm173 = vmand %vm169, %vm171
  %vm174 = vmand %vm170, %vm172
  %vm175 = vcmp.ge.s32.totalorder %v167, 0
  %vm176 = vcmp.ge.s32.totalorder %v168, 0
  %vm177 = vmand %vm173, %vm175
  %vm178 = vmand %vm174, %vm176
  %vm179 = vcmp.lt.s32.totalorder %v167, 16
  %vm180 = vcmp.lt.s32.totalorder %v168, 16
  %vm181 = vmand %vm177, %vm179
  %vm182 = vmand %vm178, %vm180
  %v183 = vsel %vm181, 1, 0
  %v184 = vsel %vm182, 1, 0
  %vm185 = vcmp.eq.s32.totalorder %v183, 1
  %vm186 = vcmp.eq.s32.totalorder %v184, 1
  %v187 = vsel %vm185, %v163, 0.0
  %v188 = vsel %vm186, %v161, 0.0
  %v189 = vsel %vm185, %v164, 0.0
  %v190 = vsel %vm186, %v162, 0.0
  %v191 = vlaneseq
  %v192 = vshrl.u32 %v191, 7
  %v193 = vsub.s32 0, %v192
  %v194 = vrot.slane %v187, %v193
  %v195 = vlaneseq
  %v196 = vshrl.u32 %v195, 7
  %v197 = vsub.s32 0, %v196
  %v198 = vrot.slane %v188, %v197
  %v199 = vlaneseq
  %v200 = vshrl.u32 %v199, 7
  %v201 = vsub.s32 0, %v200
  %v202 = vrot.slane %v189, %v201
  %v203 = vlaneseq
  %v204 = vshrl.u32 %v203, 7
  %v205 = vsub.s32 0, %v204
  %v206 = vrot.slane %v190, %v205
  %208 = vset.pattern.permute.xlu0 0
  %209 = vperm.xlu0 %208, %v38
  %v210 = vpop.permute.xlu0 %209
  %v212 = vmul.f32 %v194, %v210
  %v213 = vmul.f32 %v198, %v210
  %v214 = vmul.f32 %v202, %v210
  %v215 = vmul.f32 %v206, %v210
  %v216 = vadd.f32 %v212, 0.0
  %v217 = vadd.f32 %v213, 0.0
  %v218 = vadd.f32 %v214, 0.0
  %v219 = vadd.f32 %v215, 0.0
  %v220 = vlaneseq
  %v221 = vshrl.u32 %v220, 7
  %v222 = vsub.s32 1, %v221
  %v223 = vrot.slane %v187, %v222
  %v224 = vlaneseq
  %v225 = vshrl.u32 %v224, 7
  %v226 = vsub.s32 1, %v225
  %v227 = vrot.slane %v188, %v226
  %v228 = vlaneseq
  %v229 = vshrl.u32 %v228, 7
  %v230 = vsub.s32 1, %v229
  %v231 = vrot.slane %v189, %v230
  %v232 = vlaneseq
  %v233 = vshrl.u32 %v232, 7
  %v234 = vsub.s32 1, %v233
  %v235 = vrot.slane %v190, %v234
  %237 = vset.pattern.permute.xlu0 0
  %238 = vperm.xlu0 %237, %v39
  %v239 = vpop.permute.xlu0 %238
  %v241 = vmul.f32 %v223, %v239
  %v242 = vmul.f32 %v227, %v239
  %v243 = vmul.f32 %v231, %v239
  %v244 = vmul.f32 %v235, %v239
  %v245 = vadd.f32 %v216, %v241
  %v246 = vadd.f32 %v217, %v242
  %v247 = vadd.f32 %v218, %v243
  %v248 = vadd.f32 %v219, %v244
  %v249 = vlaneseq
  %v250 = vshrl.u32 %v249, 7
  %v251 = vsub.s32 2, %v250
  %v252 = vrot.slane %v187, %v251
  %v253 = vlaneseq
  %v254 = vshrl.u32 %v253, 7
  %v255 = vsub.s32 2, %v254
  %v256 = vrot.slane %v188, %v255
  %v257 = vlaneseq
  %v258 = vshrl.u32 %v257, 7
  %v259 = vsub.s32 2, %v258
  %v260 = vrot.slane %v189, %v259
  %v261 = vlaneseq
  %v262 = vshrl.u32 %v261, 7
  %v263 = vsub.s32 2, %v262
  %v264 = vrot.slane %v190, %v263
  %266 = vset.pattern.permute.xlu0 0
  %267 = vperm.xlu0 %266, %v40
  %v268 = vpop.permute.xlu0 %267
  %v270 = vmul.f32 %v252, %v268
  %v271 = vmul.f32 %v256, %v268
  %v272 = vmul.f32 %v260, %v268
  %v273 = vmul.f32 %v264, %v268
  %v274 = vadd.f32 %v245, %v270
  %v275 = vadd.f32 %v246, %v271
  %v276 = vadd.f32 %v247, %v272
  %v277 = vadd.f32 %v248, %v273
  %v278 = vlaneseq
  %v279 = vshrl.u32 %v278, 7
  %v280 = vsub.s32 3, %v279
  %v281 = vrot.slane %v187, %v280
  %v282 = vlaneseq
  %v283 = vshrl.u32 %v282, 7
  %v284 = vsub.s32 3, %v283
  %v285 = vrot.slane %v188, %v284
  %v286 = vlaneseq
  %v287 = vshrl.u32 %v286, 7
  %v288 = vsub.s32 3, %v287
  %v289 = vrot.slane %v189, %v288
  %v290 = vlaneseq
  %v291 = vshrl.u32 %v290, 7
  %v292 = vsub.s32 3, %v291
  %v293 = vrot.slane %v190, %v292
  %295 = vset.pattern.permute.xlu0 0
  %296 = vperm.xlu0 %295, %v41
  %v297 = vpop.permute.xlu0 %296
  %v299 = vmul.f32 %v281, %v297
  %v300 = vmul.f32 %v285, %v297
  %v301 = vmul.f32 %v289, %v297
  %v302 = vmul.f32 %v293, %v297
  %v303 = vadd.f32 %v274, %v299
  %v304 = vadd.f32 %v275, %v300
  %v305 = vadd.f32 %v276, %v301
  %v306 = vadd.f32 %v277, %v302
  %307 = vrot.lane.b32.xlu0 %v36, 16
  %v308 = vpop.permute.xlu0 %307
  %309 = vrot.lane.b32.xlu0 %v37, 16
  %v310 = vpop.permute.xlu0 %309
  %311 = vrot.lane.b32.xlu0 %v148, 16
  %v312 = vpop.permute.xlu0 %311
  %313 = vrot.lane.b32.xlu0 %v149, 16
  %v314 = vpop.permute.xlu0 %313
  %vm315 = vcmp.lt.s32.totalorder %v30, 16
  %v316 = vsel %vm315, %v308, %v312
  %v317 = vsel %vm315, %v310, %v314
  %v318 = vsel %vm315, %v312, %v308
  %v319 = vsel %vm315, %v314, %v310
  %vm320 = vcmp.ge.s32.totalorder %v34, 0
  %vm321 = vcmp.ge.s32.totalorder %v35, 0
  %vm322 = vmand %vm173, %vm320
  %vm323 = vmand %vm174, %vm321
  %vm324 = vcmp.lt.s32.totalorder %v34, 16
  %vm325 = vcmp.lt.s32.totalorder %v35, 16
  %vm326 = vmand %vm322, %vm324
  %vm327 = vmand %vm323, %vm325
  %v328 = vsel %vm326, 1, 0
  %v329 = vsel %vm327, 1, 0
  %vm330 = vcmp.eq.s32.totalorder %v328, 1
  %vm331 = vcmp.eq.s32.totalorder %v329, 1
  %v332 = vsel %vm330, %v318, 0.0
  %v333 = vsel %vm331, %v316, 0.0
  %v334 = vsel %vm330, %v319, 0.0
  %v335 = vsel %vm331, %v317, 0.0
  %v336 = vlaneseq
  %v337 = vshrl.u32 %v336, 7
  %v338 = vsub.s32 0, %v337
  %v339 = vrot.slane %v332, %v338
  %v340 = vlaneseq
  %v341 = vshrl.u32 %v340, 7
  %v342 = vsub.s32 0, %v341
  %v343 = vrot.slane %v333, %v342
  %v344 = vlaneseq
  %v345 = vshrl.u32 %v344, 7
  %v346 = vsub.s32 0, %v345
  %v347 = vrot.slane %v334, %v346
  %v348 = vlaneseq
  %v349 = vshrl.u32 %v348, 7
  %v350 = vsub.s32 0, %v349
  %v351 = vrot.slane %v335, %v350
  %353 = vset.pattern.permute.xlu0 0
  %354 = vperm.xlu0 %353, %v42
  %v355 = vpop.permute.xlu0 %354
  %v357 = vmul.f32 %v339, %v355
  %v358 = vmul.f32 %v343, %v355
  %v359 = vmul.f32 %v347, %v355
  %v360 = vmul.f32 %v351, %v355
  %v361 = vadd.f32 %v303, %v357
  %v362 = vadd.f32 %v304, %v358
  %v363 = vadd.f32 %v305, %v359
  %v364 = vadd.f32 %v306, %v360
  %v365 = vlaneseq
  %v366 = vshrl.u32 %v365, 7
  %v367 = vsub.s32 1, %v366
  %v368 = vrot.slane %v332, %v367
  %v369 = vlaneseq
  %v370 = vshrl.u32 %v369, 7
  %v371 = vsub.s32 1, %v370
  %v372 = vrot.slane %v333, %v371
  %v373 = vlaneseq
  %v374 = vshrl.u32 %v373, 7
  %v375 = vsub.s32 1, %v374
  %v376 = vrot.slane %v334, %v375
  %v377 = vlaneseq
  %v378 = vshrl.u32 %v377, 7
  %v379 = vsub.s32 1, %v378
  %v380 = vrot.slane %v335, %v379
  %382 = vset.pattern.permute.xlu0 0
  %383 = vperm.xlu0 %382, %v43
  %v384 = vpop.permute.xlu0 %383
  %v386 = vmul.f32 %v368, %v384
  %v387 = vmul.f32 %v372, %v384
  %v388 = vmul.f32 %v376, %v384
  %v389 = vmul.f32 %v380, %v384
  %v390 = vadd.f32 %v361, %v386
  %v391 = vadd.f32 %v362, %v387
  %v392 = vadd.f32 %v363, %v388
  %v393 = vadd.f32 %v364, %v389
  %v394 = vlaneseq
  %v395 = vshrl.u32 %v394, 7
  %v396 = vsub.s32 2, %v395
  %v397 = vrot.slane %v332, %v396
  %v398 = vlaneseq
  %v399 = vshrl.u32 %v398, 7
  %v400 = vsub.s32 2, %v399
  %v401 = vrot.slane %v333, %v400
  %v402 = vlaneseq
  %v403 = vshrl.u32 %v402, 7
  %v404 = vsub.s32 2, %v403
  %v405 = vrot.slane %v334, %v404
  %v406 = vlaneseq
  %v407 = vshrl.u32 %v406, 7
  %v408 = vsub.s32 2, %v407
  %v409 = vrot.slane %v335, %v408
  %411 = vset.pattern.permute.xlu0 0
  %412 = vperm.xlu0 %411, %v44
  %v413 = vpop.permute.xlu0 %412
  %v415 = vmul.f32 %v397, %v413
  %v416 = vmul.f32 %v401, %v413
  %v417 = vmul.f32 %v405, %v413
  %v418 = vmul.f32 %v409, %v413
  %v419 = vadd.f32 %v390, %v415
  %v420 = vadd.f32 %v391, %v416
  %v421 = vadd.f32 %v392, %v417
  %v422 = vadd.f32 %v393, %v418
  %v423 = vlaneseq
  %v424 = vshrl.u32 %v423, 7
  %v425 = vsub.s32 3, %v424
  %v426 = vrot.slane %v332, %v425
  %v427 = vlaneseq
  %v428 = vshrl.u32 %v427, 7
  %v429 = vsub.s32 3, %v428
  %v430 = vrot.slane %v333, %v429
  %v431 = vlaneseq
  %v432 = vshrl.u32 %v431, 7
  %v433 = vsub.s32 3, %v432
  %v434 = vrot.slane %v334, %v433
  %v435 = vlaneseq
  %v436 = vshrl.u32 %v435, 7
  %v437 = vsub.s32 3, %v436
  %v438 = vrot.slane %v335, %v437
  %440 = vset.pattern.permute.xlu0 0
  %441 = vperm.xlu0 %440, %v45
  %v442 = vpop.permute.xlu0 %441
  %v444 = vmul.f32 %v426, %v442
  %v445 = vmul.f32 %v430, %v442
  %v446 = vmul.f32 %v434, %v442
  %v447 = vmul.f32 %v438, %v442
  %v448 = vadd.f32 %v419, %v444
  %v449 = vadd.f32 %v420, %v445
  %v450 = vadd.f32 %v421, %v446
  %v451 = vadd.f32 %v422, %v447
  %452 = vrot.lane.b32.xlu0 %v36, 15
  %v453 = vpop.permute.xlu0 %452
  %454 = vrot.lane.b32.xlu0 %v37, 15
  %v455 = vpop.permute.xlu0 %454
  %456 = vrot.lane.b32.xlu0 %v148, 15
  %v457 = vpop.permute.xlu0 %456
  %458 = vrot.lane.b32.xlu0 %v149, 15
  %v459 = vpop.permute.xlu0 %458
  %vm460 = vcmp.lt.s32.totalorder %v30, 15
  %v461 = vsel %vm460, %v453, %v457
  %v462 = vsel %vm460, %v455, %v459
  %v463 = vsel %vm460, %v457, %v453
  %v464 = vsel %vm460, %v459, %v455
  %v465 = vadd.s32 %v34, 1
  %v466 = vadd.s32 %v35, 1
  %vm467 = vcmp.ge.s32.totalorder %v465, 0
  %vm468 = vcmp.ge.s32.totalorder %v466, 0
  %vm469 = vmand %vm173, %vm467
  %vm470 = vmand %vm174, %vm468
  %vm471 = vcmp.lt.s32.totalorder %v465, 16
  %vm472 = vcmp.lt.s32.totalorder %v466, 16
  %vm473 = vmand %vm469, %vm471
  %vm474 = vmand %vm470, %vm472
  %v475 = vsel %vm473, 1, 0
  %v476 = vsel %vm474, 1, 0
  %vm477 = vcmp.eq.s32.totalorder %v475, 1
  %vm478 = vcmp.eq.s32.totalorder %v476, 1
  %v479 = vsel %vm477, %v463, 0.0
  %v480 = vsel %vm478, %v461, 0.0
  %v481 = vsel %vm477, %v464, 0.0
  %v482 = vsel %vm478, %v462, 0.0
  %v483 = vlaneseq
  %v484 = vshrl.u32 %v483, 7
  %v485 = vsub.s32 0, %v484
  %v486 = vrot.slane %v479, %v485
  %v487 = vlaneseq
  %v488 = vshrl.u32 %v487, 7
  %v489 = vsub.s32 0, %v488
  %v490 = vrot.slane %v480, %v489
  %v491 = vlaneseq
  %v492 = vshrl.u32 %v491, 7
  %v493 = vsub.s32 0, %v492
  %v494 = vrot.slane %v481, %v493
  %v495 = vlaneseq
  %v496 = vshrl.u32 %v495, 7
  %v497 = vsub.s32 0, %v496
  %v498 = vrot.slane %v482, %v497
  %500 = vset.pattern.permute.xlu0 0
  %501 = vperm.xlu0 %500, %v46
  %v502 = vpop.permute.xlu0 %501
  %v504 = vmul.f32 %v486, %v502
  %v505 = vmul.f32 %v490, %v502
  %v506 = vmul.f32 %v494, %v502
  %v507 = vmul.f32 %v498, %v502
  %v508 = vadd.f32 %v448, %v504
  %v509 = vadd.f32 %v449, %v505
  %v510 = vadd.f32 %v450, %v506
  %v511 = vadd.f32 %v451, %v507
  %v512 = vlaneseq
  %v513 = vshrl.u32 %v512, 7
  %v514 = vsub.s32 1, %v513
  %v515 = vrot.slane %v479, %v514
  %v516 = vlaneseq
  %v517 = vshrl.u32 %v516, 7
  %v518 = vsub.s32 1, %v517
  %v519 = vrot.slane %v480, %v518
  %v520 = vlaneseq
  %v521 = vshrl.u32 %v520, 7
  %v522 = vsub.s32 1, %v521
  %v523 = vrot.slane %v481, %v522
  %v524 = vlaneseq
  %v525 = vshrl.u32 %v524, 7
  %v526 = vsub.s32 1, %v525
  %v527 = vrot.slane %v482, %v526
  %529 = vset.pattern.permute.xlu0 0
  %530 = vperm.xlu0 %529, %v47
  %v531 = vpop.permute.xlu0 %530
  %v533 = vmul.f32 %v515, %v531
  %v534 = vmul.f32 %v519, %v531
  %v535 = vmul.f32 %v523, %v531
  %v536 = vmul.f32 %v527, %v531
  %v537 = vadd.f32 %v508, %v533
  %v538 = vadd.f32 %v509, %v534
  %v539 = vadd.f32 %v510, %v535
  %v540 = vadd.f32 %v511, %v536
  %v541 = vlaneseq
  %v542 = vshrl.u32 %v541, 7
  %v543 = vsub.s32 2, %v542
  %v544 = vrot.slane %v479, %v543
  %v545 = vlaneseq
  %v546 = vshrl.u32 %v545, 7
  %v547 = vsub.s32 2, %v546
  %v548 = vrot.slane %v480, %v547
  %v549 = vlaneseq
  %v550 = vshrl.u32 %v549, 7
  %v551 = vsub.s32 2, %v550
  %v552 = vrot.slane %v481, %v551
  %v553 = vlaneseq
  %v554 = vshrl.u32 %v553, 7
  %v555 = vsub.s32 2, %v554
  %v556 = vrot.slane %v482, %v555
  %558 = vset.pattern.permute.xlu0 0
  %559 = vperm.xlu0 %558, %v48
  %v560 = vpop.permute.xlu0 %559
  %v562 = vmul.f32 %v544, %v560
  %v563 = vmul.f32 %v548, %v560
  %v564 = vmul.f32 %v552, %v560
  %v565 = vmul.f32 %v556, %v560
  %v566 = vadd.f32 %v537, %v562
  %v567 = vadd.f32 %v538, %v563
  %v568 = vadd.f32 %v539, %v564
  %v569 = vadd.f32 %v540, %v565
  %v570 = vlaneseq
  %v571 = vshrl.u32 %v570, 7
  %v572 = vsub.s32 3, %v571
  %v573 = vrot.slane %v479, %v572
  %v574 = vlaneseq
  %v575 = vshrl.u32 %v574, 7
  %v576 = vsub.s32 3, %v575
  %v577 = vrot.slane %v480, %v576
  %v578 = vlaneseq
  %v579 = vshrl.u32 %v578, 7
  %v580 = vsub.s32 3, %v579
  %v581 = vrot.slane %v481, %v580
  %v582 = vlaneseq
  %v583 = vshrl.u32 %v582, 7
  %v584 = vsub.s32 3, %v583
  %v585 = vrot.slane %v482, %v584
  %587 = vset.pattern.permute.xlu0 0
  %588 = vperm.xlu0 %587, %v49
  %v589 = vpop.permute.xlu0 %588
  %v591 = vmul.f32 %v573, %v589
  %v592 = vmul.f32 %v577, %v589
  %v593 = vmul.f32 %v581, %v589
  %v594 = vmul.f32 %v585, %v589
  %v595 = vadd.f32 %v566, %v591
  %v596 = vadd.f32 %v567, %v592
  %v597 = vadd.f32 %v568, %v593
  %v598 = vadd.f32 %v569, %v594
  %599 = vrot.lane.b32.xlu0 %v36, 1
  %v600 = vpop.permute.xlu0 %599
  %601 = vrot.lane.b32.xlu0 %v37, 1
  %v602 = vpop.permute.xlu0 %601
  %603 = vrot.lane.b32.xlu0 %v148, 1
  %v604 = vpop.permute.xlu0 %603
  %605 = vrot.lane.b32.xlu0 %v149, 1
  %v606 = vpop.permute.xlu0 %605
  %vm607 = vcmp.lt.s32.totalorder %v30, 1
  %v608 = vsel %vm607, %v600, %v604
  %v609 = vsel %vm607, %v602, %v606
  %v610 = vsel %vm607, %v604, %v600
  %v611 = vsel %vm607, %v606, %v602
  %vm612 = vcmp.ge.s32.totalorder %v32, 0
  %vm613 = vcmp.ge.s32.totalorder %v33, 0
  %vm614 = vcmp.lt.s32.totalorder %v32, 16
  %vm615 = vcmp.lt.s32.totalorder %v33, 16
  %vm616 = vmand %vm612, %vm614
  %vm617 = vmand %vm613, %vm615
  %vm618 = vmand %vm616, %vm175
  %vm619 = vmand %vm617, %vm176
  %vm620 = vmand %vm618, %vm179
  %vm621 = vmand %vm619, %vm180
  %v622 = vsel %vm620, 1, 0
  %v623 = vsel %vm621, 1, 0
  %vm624 = vcmp.eq.s32.totalorder %v622, 1
  %vm625 = vcmp.eq.s32.totalorder %v623, 1
  %v626 = vsel %vm624, %v610, 0.0
  %v627 = vsel %vm625, %v608, 0.0
  %v628 = vsel %vm624, %v611, 0.0
  %v629 = vsel %vm625, %v609, 0.0
  %v630 = vlaneseq
  %v631 = vshrl.u32 %v630, 7
  %v632 = vsub.s32 0, %v631
  %v633 = vrot.slane %v626, %v632
  %v634 = vlaneseq
  %v635 = vshrl.u32 %v634, 7
  %v636 = vsub.s32 0, %v635
  %v637 = vrot.slane %v627, %v636
  %v638 = vlaneseq
  %v639 = vshrl.u32 %v638, 7
  %v640 = vsub.s32 0, %v639
  %v641 = vrot.slane %v628, %v640
  %v642 = vlaneseq
  %v643 = vshrl.u32 %v642, 7
  %v644 = vsub.s32 0, %v643
  %v645 = vrot.slane %v629, %v644
  %647 = vset.pattern.permute.xlu0 0
  %648 = vperm.xlu0 %647, %v50
  %v649 = vpop.permute.xlu0 %648
  %v651 = vmul.f32 %v633, %v649
  %v652 = vmul.f32 %v637, %v649
  %v653 = vmul.f32 %v641, %v649
  %v654 = vmul.f32 %v645, %v649
  %v655 = vadd.f32 %v595, %v651
  %v656 = vadd.f32 %v596, %v652
  %v657 = vadd.f32 %v597, %v653
  %v658 = vadd.f32 %v598, %v654
  %v659 = vlaneseq
  %v660 = vshrl.u32 %v659, 7
  %v661 = vsub.s32 1, %v660
  %v662 = vrot.slane %v626, %v661
  %v663 = vlaneseq
  %v664 = vshrl.u32 %v663, 7
  %v665 = vsub.s32 1, %v664
  %v666 = vrot.slane %v627, %v665
  %v667 = vlaneseq
  %v668 = vshrl.u32 %v667, 7
  %v669 = vsub.s32 1, %v668
  %v670 = vrot.slane %v628, %v669
  %v671 = vlaneseq
  %v672 = vshrl.u32 %v671, 7
  %v673 = vsub.s32 1, %v672
  %v674 = vrot.slane %v629, %v673
  %676 = vset.pattern.permute.xlu0 0
  %677 = vperm.xlu0 %676, %v51
  %v678 = vpop.permute.xlu0 %677
  %v680 = vmul.f32 %v662, %v678
  %v681 = vmul.f32 %v666, %v678
  %v682 = vmul.f32 %v670, %v678
  %v683 = vmul.f32 %v674, %v678
  %v684 = vadd.f32 %v655, %v680
  %v685 = vadd.f32 %v656, %v681
  %v686 = vadd.f32 %v657, %v682
  %v687 = vadd.f32 %v658, %v683
  %v688 = vlaneseq
  %v689 = vshrl.u32 %v688, 7
  %v690 = vsub.s32 2, %v689
  %v691 = vrot.slane %v626, %v690
  %v692 = vlaneseq
  %v693 = vshrl.u32 %v692, 7
  %v694 = vsub.s32 2, %v693
  %v695 = vrot.slane %v627, %v694
  %v696 = vlaneseq
  %v697 = vshrl.u32 %v696, 7
  %v698 = vsub.s32 2, %v697
  %v699 = vrot.slane %v628, %v698
  %v700 = vlaneseq
  %v701 = vshrl.u32 %v700, 7
  %v702 = vsub.s32 2, %v701
  %v703 = vrot.slane %v629, %v702
  %705 = vset.pattern.permute.xlu0 0
  %706 = vperm.xlu0 %705, %v52
  %v707 = vpop.permute.xlu0 %706
  %v709 = vmul.f32 %v691, %v707
  %v710 = vmul.f32 %v695, %v707
  %v711 = vmul.f32 %v699, %v707
  %v712 = vmul.f32 %v703, %v707
  %v713 = vadd.f32 %v684, %v709
  %v714 = vadd.f32 %v685, %v710
  %v715 = vadd.f32 %v686, %v711
  %v716 = vadd.f32 %v687, %v712
  %v717 = vlaneseq
  %v718 = vshrl.u32 %v717, 7
  %v719 = vsub.s32 3, %v718
  %v720 = vrot.slane %v626, %v719
  %v721 = vlaneseq
  %v722 = vshrl.u32 %v721, 7
  %v723 = vsub.s32 3, %v722
  %v724 = vrot.slane %v627, %v723
  %v725 = vlaneseq
  %v726 = vshrl.u32 %v725, 7
  %v727 = vsub.s32 3, %v726
  %v728 = vrot.slane %v628, %v727
  %v729 = vlaneseq
  %v730 = vshrl.u32 %v729, 7
  %v731 = vsub.s32 3, %v730
  %v732 = vrot.slane %v629, %v731
  %734 = vset.pattern.permute.xlu0 0
  %735 = vperm.xlu0 %734, %v53
  %v736 = vpop.permute.xlu0 %735
  %v738 = vmul.f32 %v720, %v736
  %v739 = vmul.f32 %v724, %v736
  %v740 = vmul.f32 %v728, %v736
  %v741 = vmul.f32 %v732, %v736
  %v742 = vadd.f32 %v713, %v738
  %v743 = vadd.f32 %v714, %v739
  %v744 = vadd.f32 %v715, %v740
  %v745 = vadd.f32 %v716, %v741
  %vm746 = vmand %vm616, %vm320
  %vm747 = vmand %vm617, %vm321
  %vm748 = vmand %vm746, %vm324
  %vm749 = vmand %vm747, %vm325
  %v750 = vsel %vm748, 1, 0
  %v751 = vsel %vm749, 1, 0
  %vm752 = vcmp.eq.s32.totalorder %v750, 1
  %vm753 = vcmp.eq.s32.totalorder %v751, 1
  %v754 = vsel %vm752, %v36, 0.0
  %v755 = vsel %vm753, %v148, 0.0
  %v756 = vsel %vm752, %v37, 0.0
  %v757 = vsel %vm753, %v149, 0.0
  %v758 = vlaneseq
  %v759 = vshrl.u32 %v758, 7
  %v760 = vsub.s32 0, %v759
  %v761 = vrot.slane %v754, %v760
  %v762 = vlaneseq
  %v763 = vshrl.u32 %v762, 7
  %v764 = vsub.s32 0, %v763
  %v765 = vrot.slane %v755, %v764
  %v766 = vlaneseq
  %v767 = vshrl.u32 %v766, 7
  %v768 = vsub.s32 0, %v767
  %v769 = vrot.slane %v756, %v768
  %v770 = vlaneseq
  %v771 = vshrl.u32 %v770, 7
  %v772 = vsub.s32 0, %v771
  %v773 = vrot.slane %v757, %v772
  %775 = vset.pattern.permute.xlu0 0
  %776 = vperm.xlu0 %775, %v54
  %v777 = vpop.permute.xlu0 %776
  %v779 = vmul.f32 %v761, %v777
  %v780 = vmul.f32 %v765, %v777
  %v781 = vmul.f32 %v769, %v777
  %v782 = vmul.f32 %v773, %v777
  %v783 = vadd.f32 %v742, %v779
  %v784 = vadd.f32 %v743, %v780
  %v785 = vadd.f32 %v744, %v781
  %v786 = vadd.f32 %v745, %v782
  %v787 = vlaneseq
  %v788 = vshrl.u32 %v787, 7
  %v789 = vsub.s32 1, %v788
  %v790 = vrot.slane %v754, %v789
  %v791 = vlaneseq
  %v792 = vshrl.u32 %v791, 7
  %v793 = vsub.s32 1, %v792
  %v794 = vrot.slane %v755, %v793
  %v795 = vlaneseq
  %v796 = vshrl.u32 %v795, 7
  %v797 = vsub.s32 1, %v796
  %v798 = vrot.slane %v756, %v797
  %v799 = vlaneseq
  %v800 = vshrl.u32 %v799, 7
  %v801 = vsub.s32 1, %v800
  %v802 = vrot.slane %v757, %v801
  %804 = vset.pattern.permute.xlu0 0
  %805 = vperm.xlu0 %804, %v55
  %v806 = vpop.permute.xlu0 %805
  %v808 = vmul.f32 %v790, %v806
  %v809 = vmul.f32 %v794, %v806
  %v810 = vmul.f32 %v798, %v806
  %v811 = vmul.f32 %v802, %v806
  %v812 = vadd.f32 %v783, %v808
  %v813 = vadd.f32 %v784, %v809
  %v814 = vadd.f32 %v785, %v810
  %v815 = vadd.f32 %v786, %v811
  %v816 = vlaneseq
  %v817 = vshrl.u32 %v816, 7
  %v818 = vsub.s32 2, %v817
  %v819 = vrot.slane %v754, %v818
  %v820 = vlaneseq
  %v821 = vshrl.u32 %v820, 7
  %v822 = vsub.s32 2, %v821
  %v823 = vrot.slane %v755, %v822
  %v824 = vlaneseq
  %v825 = vshrl.u32 %v824, 7
  %v826 = vsub.s32 2, %v825
  %v827 = vrot.slane %v756, %v826
  %v828 = vlaneseq
  %v829 = vshrl.u32 %v828, 7
  %v830 = vsub.s32 2, %v829
  %v831 = vrot.slane %v757, %v830
  %833 = vset.pattern.permute.xlu0 0
  %834 = vperm.xlu0 %833, %v56
  %v835 = vpop.permute.xlu0 %834
  %v837 = vmul.f32 %v819, %v835
  %v838 = vmul.f32 %v823, %v835
  %v839 = vmul.f32 %v827, %v835
  %v840 = vmul.f32 %v831, %v835
  %v841 = vadd.f32 %v812, %v837
  %v842 = vadd.f32 %v813, %v838
  %v843 = vadd.f32 %v814, %v839
  %v844 = vadd.f32 %v815, %v840
  %v845 = vlaneseq
  %v846 = vshrl.u32 %v845, 7
  %v847 = vsub.s32 3, %v846
  %v848 = vrot.slane %v754, %v847
  %v849 = vlaneseq
  %v850 = vshrl.u32 %v849, 7
  %v851 = vsub.s32 3, %v850
  %v852 = vrot.slane %v755, %v851
  %v853 = vlaneseq
  %v854 = vshrl.u32 %v853, 7
  %v855 = vsub.s32 3, %v854
  %v856 = vrot.slane %v756, %v855
  %v857 = vlaneseq
  %v858 = vshrl.u32 %v857, 7
  %v859 = vsub.s32 3, %v858
  %v860 = vrot.slane %v757, %v859
  %862 = vset.pattern.permute.xlu0 0
  %863 = vperm.xlu0 %862, %v57
  %v864 = vpop.permute.xlu0 %863
  %v866 = vmul.f32 %v848, %v864
  %v867 = vmul.f32 %v852, %v864
  %v868 = vmul.f32 %v856, %v864
  %v869 = vmul.f32 %v860, %v864
  %v870 = vadd.f32 %v841, %v866
  %v871 = vadd.f32 %v842, %v867
  %v872 = vadd.f32 %v843, %v868
  %v873 = vadd.f32 %v844, %v869
  %874 = vrot.lane.b32.xlu0 %v36, 127
  %v875 = vpop.permute.xlu0 %874
  %876 = vrot.lane.b32.xlu0 %v37, 127
  %v877 = vpop.permute.xlu0 %876
  %878 = vrot.lane.b32.xlu0 %v148, 127
  %v879 = vpop.permute.xlu0 %878
  %880 = vrot.lane.b32.xlu0 %v149, 127
  %v881 = vpop.permute.xlu0 %880
  %vm882 = vcmp.lt.s32.totalorder %v30, 127
  %v883 = vsel %vm882, %v875, %v879
  %v884 = vsel %vm882, %v877, %v881
  %v885 = vsel %vm882, %v879, %v875
  %v886 = vsel %vm882, %v881, %v877
  %vm887 = vmand %vm616, %vm467
  %vm888 = vmand %vm617, %vm468
  %vm889 = vmand %vm887, %vm471
  %vm890 = vmand %vm888, %vm472
  %v891 = vsel %vm889, 1, 0
  %v892 = vsel %vm890, 1, 0
  %vm893 = vcmp.eq.s32.totalorder %v891, 1
  %vm894 = vcmp.eq.s32.totalorder %v892, 1
  %v895 = vsel %vm893, %v883, 0.0
  %v896 = vsel %vm894, %v885, 0.0
  %v897 = vsel %vm893, %v884, 0.0
  %v898 = vsel %vm894, %v886, 0.0
  %v899 = vlaneseq
  %v900 = vshrl.u32 %v899, 7
  %v901 = vsub.s32 0, %v900
  %v902 = vrot.slane %v895, %v901
  %v903 = vlaneseq
  %v904 = vshrl.u32 %v903, 7
  %v905 = vsub.s32 0, %v904
  %v906 = vrot.slane %v896, %v905
  %v907 = vlaneseq
  %v908 = vshrl.u32 %v907, 7
  %v909 = vsub.s32 0, %v908
  %v910 = vrot.slane %v897, %v909
  %v911 = vlaneseq
  %v912 = vshrl.u32 %v911, 7
  %v913 = vsub.s32 0, %v912
  %v914 = vrot.slane %v898, %v913
  %916 = vset.pattern.permute.xlu0 0
  %917 = vperm.xlu0 %916, %v58
  %v918 = vpop.permute.xlu0 %917
  %v920 = vmul.f32 %v902, %v918
  %v921 = vmul.f32 %v906, %v918
  %v922 = vmul.f32 %v910, %v918
  %v923 = vmul.f32 %v914, %v918
  %v924 = vadd.f32 %v870, %v920
  %v925 = vadd.f32 %v871, %v921
  %v926 = vadd.f32 %v872, %v922
  %v927 = vadd.f32 %v873, %v923
  %v928 = vlaneseq
  %v929 = vshrl.u32 %v928, 7
  %v930 = vsub.s32 1, %v929
  %v931 = vrot.slane %v895, %v930
  %v932 = vlaneseq
  %v933 = vshrl.u32 %v932, 7
  %v934 = vsub.s32 1, %v933
  %v935 = vrot.slane %v896, %v934
  %v936 = vlaneseq
  %v937 = vshrl.u32 %v936, 7
  %v938 = vsub.s32 1, %v937
  %v939 = vrot.slane %v897, %v938
  %v940 = vlaneseq
  %v941 = vshrl.u32 %v940, 7
  %v942 = vsub.s32 1, %v941
  %v943 = vrot.slane %v898, %v942
  %945 = vset.pattern.permute.xlu0 0
  %946 = vperm.xlu0 %945, %v59
  %v947 = vpop.permute.xlu0 %946
  %v949 = vmul.f32 %v931, %v947
  %v950 = vmul.f32 %v935, %v947
  %v951 = vmul.f32 %v939, %v947
  %v952 = vmul.f32 %v943, %v947
  %v953 = vadd.f32 %v924, %v949
  %v954 = vadd.f32 %v925, %v950
  %v955 = vadd.f32 %v926, %v951
  %v956 = vadd.f32 %v927, %v952
  %v957 = vlaneseq
  %v958 = vshrl.u32 %v957, 7
  %v959 = vsub.s32 2, %v958
  %v960 = vrot.slane %v895, %v959
  %v961 = vlaneseq
  %v962 = vshrl.u32 %v961, 7
  %v963 = vsub.s32 2, %v962
  %v964 = vrot.slane %v896, %v963
  %v965 = vlaneseq
  %v966 = vshrl.u32 %v965, 7
  %v967 = vsub.s32 2, %v966
  %v968 = vrot.slane %v897, %v967
  %v969 = vlaneseq
  %v970 = vshrl.u32 %v969, 7
  %v971 = vsub.s32 2, %v970
  %v972 = vrot.slane %v898, %v971
  %974 = vset.pattern.permute.xlu0 0
  %975 = vperm.xlu0 %974, %v60
  %v976 = vpop.permute.xlu0 %975
  %v978 = vmul.f32 %v960, %v976
  %v979 = vmul.f32 %v964, %v976
  %v980 = vmul.f32 %v968, %v976
  %v981 = vmul.f32 %v972, %v976
  %v982 = vadd.f32 %v953, %v978
  %v983 = vadd.f32 %v954, %v979
  %v984 = vadd.f32 %v955, %v980
  %v985 = vadd.f32 %v956, %v981
  %v986 = vlaneseq
  %v987 = vshrl.u32 %v986, 7
  %v988 = vsub.s32 3, %v987
  %v989 = vrot.slane %v895, %v988
  %v990 = vlaneseq
  %v991 = vshrl.u32 %v990, 7
  %v992 = vsub.s32 3, %v991
  %v993 = vrot.slane %v896, %v992
  %v994 = vlaneseq
  %v995 = vshrl.u32 %v994, 7
  %v996 = vsub.s32 3, %v995
  %v997 = vrot.slane %v897, %v996
  %v998 = vlaneseq
  %v999 = vshrl.u32 %v998, 7
  %v1000 = vsub.s32 3, %v999
  %v1001 = vrot.slane %v898, %v1000
  %1003 = vset.pattern.permute.xlu0 0
  %1004 = vperm.xlu0 %1003, %v61
  %v1005 = vpop.permute.xlu0 %1004
  %v1007 = vmul.f32 %v989, %v1005
  %v1008 = vmul.f32 %v993, %v1005
  %v1009 = vmul.f32 %v997, %v1005
  %v1010 = vmul.f32 %v1001, %v1005
  %v1011 = vadd.f32 %v982, %v1007
  %v1012 = vadd.f32 %v983, %v1008
  %v1013 = vadd.f32 %v984, %v1009
  %v1014 = vadd.f32 %v985, %v1010
  %1015 = vrot.lane.b32.xlu0 %v36, 113
  %v1016 = vpop.permute.xlu0 %1015
  %1017 = vrot.lane.b32.xlu0 %v37, 113
  %v1018 = vpop.permute.xlu0 %1017
  %1019 = vrot.lane.b32.xlu0 %v148, 113
  %v1020 = vpop.permute.xlu0 %1019
  %1021 = vrot.lane.b32.xlu0 %v149, 113
  %v1022 = vpop.permute.xlu0 %1021
  %vm1023 = vcmp.lt.s32.totalorder %v30, 113
  %v1024 = vsel %vm1023, %v1016, %v1020
  %v1025 = vsel %vm1023, %v1018, %v1022
  %v1026 = vsel %vm1023, %v1020, %v1016
  %v1027 = vsel %vm1023, %v1022, %v1018
  %v1028 = vadd.s32 %v32, 1
  %v1029 = vadd.s32 %v33, 1
  %vm1030 = vcmp.ge.s32.totalorder %v1028, 0
  %vm1031 = vcmp.ge.s32.totalorder %v1029, 0
  %vm1032 = vcmp.lt.s32.totalorder %v1028, 16
  %vm1033 = vcmp.lt.s32.totalorder %v1029, 16
  %vm1034 = vmand %vm1030, %vm1032
  %vm1035 = vmand %vm1031, %vm1033
  %vm1036 = vmand %vm1034, %vm175
  %vm1037 = vmand %vm1035, %vm176
  %vm1038 = vmand %vm1036, %vm179
  %vm1039 = vmand %vm1037, %vm180
  %v1040 = vsel %vm1038, 1, 0
  %v1041 = vsel %vm1039, 1, 0
  %vm1042 = vcmp.eq.s32.totalorder %v1040, 1
  %vm1043 = vcmp.eq.s32.totalorder %v1041, 1
  %v1044 = vsel %vm1042, %v1024, 0.0
  %v1045 = vsel %vm1043, %v1026, 0.0
  %v1046 = vsel %vm1042, %v1025, 0.0
  %v1047 = vsel %vm1043, %v1027, 0.0
  %v1048 = vlaneseq
  %v1049 = vshrl.u32 %v1048, 7
  %v1050 = vsub.s32 0, %v1049
  %v1051 = vrot.slane %v1044, %v1050
  %v1052 = vlaneseq
  %v1053 = vshrl.u32 %v1052, 7
  %v1054 = vsub.s32 0, %v1053
  %v1055 = vrot.slane %v1045, %v1054
  %v1056 = vlaneseq
  %v1057 = vshrl.u32 %v1056, 7
  %v1058 = vsub.s32 0, %v1057
  %v1059 = vrot.slane %v1046, %v1058
  %v1060 = vlaneseq
  %v1061 = vshrl.u32 %v1060, 7
  %v1062 = vsub.s32 0, %v1061
  %v1063 = vrot.slane %v1047, %v1062
  %1065 = vset.pattern.permute.xlu0 0
  %1066 = vperm.xlu0 %1065, %v62
  %v1067 = vpop.permute.xlu0 %1066
  %v1069 = vmul.f32 %v1051, %v1067
  %v1070 = vmul.f32 %v1055, %v1067
  %v1071 = vmul.f32 %v1059, %v1067
  %v1072 = vmul.f32 %v1063, %v1067
  %v1073 = vadd.f32 %v1011, %v1069
  %v1074 = vadd.f32 %v1012, %v1070
  %v1075 = vadd.f32 %v1013, %v1071
  %v1076 = vadd.f32 %v1014, %v1072
  %v1077 = vlaneseq
  %v1078 = vshrl.u32 %v1077, 7
  %v1079 = vsub.s32 1, %v1078
  %v1080 = vrot.slane %v1044, %v1079
  %v1081 = vlaneseq
  %v1082 = vshrl.u32 %v1081, 7
  %v1083 = vsub.s32 1, %v1082
  %v1084 = vrot.slane %v1045, %v1083
  %v1085 = vlaneseq
  %v1086 = vshrl.u32 %v1085, 7
  %v1087 = vsub.s32 1, %v1086
  %v1088 = vrot.slane %v1046, %v1087
  %v1089 = vlaneseq
  %v1090 = vshrl.u32 %v1089, 7
  %v1091 = vsub.s32 1, %v1090
  %v1092 = vrot.slane %v1047, %v1091
  %1094 = vset.pattern.permute.xlu0 0
  %1095 = vperm.xlu0 %1094, %v63
  %v1096 = vpop.permute.xlu0 %1095
  %v1098 = vmul.f32 %v1080, %v1096
  %v1099 = vmul.f32 %v1084, %v1096
  %v1100 = vmul.f32 %v1088, %v1096
  %v1101 = vmul.f32 %v1092, %v1096
  %v1102 = vadd.f32 %v1073, %v1098
  %v1103 = vadd.f32 %v1074, %v1099
  %v1104 = vadd.f32 %v1075, %v1100
  %v1105 = vadd.f32 %v1076, %v1101
  %v1106 = vlaneseq
  %v1107 = vshrl.u32 %v1106, 7
  %v1108 = vsub.s32 2, %v1107
  %v1109 = vrot.slane %v1044, %v1108
  %v1110 = vlaneseq
  %v1111 = vshrl.u32 %v1110, 7
  %v1112 = vsub.s32 2, %v1111
  %v1113 = vrot.slane %v1045, %v1112
  %v1114 = vlaneseq
  %v1115 = vshrl.u32 %v1114, 7
  %v1116 = vsub.s32 2, %v1115
  %v1117 = vrot.slane %v1046, %v1116
  %v1118 = vlaneseq
  %v1119 = vshrl.u32 %v1118, 7
  %v1120 = vsub.s32 2, %v1119
  %v1121 = vrot.slane %v1047, %v1120
  %1123 = vset.pattern.permute.xlu0 0
  %1124 = vperm.xlu0 %1123, %v64
  %v1125 = vpop.permute.xlu0 %1124
  %v1127 = vmul.f32 %v1109, %v1125
  %v1128 = vmul.f32 %v1113, %v1125
  %v1129 = vmul.f32 %v1117, %v1125
  %v1130 = vmul.f32 %v1121, %v1125
  %v1131 = vadd.f32 %v1102, %v1127
  %v1132 = vadd.f32 %v1103, %v1128
  %v1133 = vadd.f32 %v1104, %v1129
  %v1134 = vadd.f32 %v1105, %v1130
  %v1135 = vlaneseq
  %v1136 = vshrl.u32 %v1135, 7
  %v1137 = vsub.s32 3, %v1136
  %v1138 = vrot.slane %v1044, %v1137
  %v1139 = vlaneseq
  %v1140 = vshrl.u32 %v1139, 7
  %v1141 = vsub.s32 3, %v1140
  %v1142 = vrot.slane %v1045, %v1141
  %v1143 = vlaneseq
  %v1144 = vshrl.u32 %v1143, 7
  %v1145 = vsub.s32 3, %v1144
  %v1146 = vrot.slane %v1046, %v1145
  %v1147 = vlaneseq
  %v1148 = vshrl.u32 %v1147, 7
  %v1149 = vsub.s32 3, %v1148
  %v1150 = vrot.slane %v1047, %v1149
  %1152 = vset.pattern.permute.xlu0 0
  %1153 = vperm.xlu0 %1152, %v65
  %v1154 = vpop.permute.xlu0 %1153
  %v1156 = vmul.f32 %v1138, %v1154
  %v1157 = vmul.f32 %v1142, %v1154
  %v1158 = vmul.f32 %v1146, %v1154
  %v1159 = vmul.f32 %v1150, %v1154
  %v1160 = vadd.f32 %v1131, %v1156
  %v1161 = vadd.f32 %v1132, %v1157
  %v1162 = vadd.f32 %v1133, %v1158
  %v1163 = vadd.f32 %v1134, %v1159
  %1164 = vrot.lane.b32.xlu0 %v36, 112
  %v1165 = vpop.permute.xlu0 %1164
  %1166 = vrot.lane.b32.xlu0 %v37, 112
  %v1167 = vpop.permute.xlu0 %1166
  %1168 = vrot.lane.b32.xlu0 %v148, 112
  %v1169 = vpop.permute.xlu0 %1168
  %1170 = vrot.lane.b32.xlu0 %v149, 112
  %v1171 = vpop.permute.xlu0 %1170
  %vm1172 = vcmp.lt.s32.totalorder %v30, 112
  %v1173 = vsel %vm1172, %v1165, %v1169
  %v1174 = vsel %vm1172, %v1167, %v1171
  %v1175 = vsel %vm1172, %v1169, %v1165
  %v1176 = vsel %vm1172, %v1171, %v1167
  %vm1177 = vmand %vm1034, %vm320
  %vm1178 = vmand %vm1035, %vm321
  %vm1179 = vmand %vm1177, %vm324
  %vm1180 = vmand %vm1178, %vm325
  %v1181 = vsel %vm1179, 1, 0
  %v1182 = vsel %vm1180, 1, 0
  %vm1183 = vcmp.eq.s32.totalorder %v1181, 1
  %vm1184 = vcmp.eq.s32.totalorder %v1182, 1
  %v1185 = vsel %vm1183, %v1173, 0.0
  %v1186 = vsel %vm1184, %v1175, 0.0
  %v1187 = vsel %vm1183, %v1174, 0.0
  %v1188 = vsel %vm1184, %v1176, 0.0
  %v1189 = vlaneseq
  %v1190 = vshrl.u32 %v1189, 7
  %v1191 = vsub.s32 0, %v1190
  %v1192 = vrot.slane %v1185, %v1191
  %v1193 = vlaneseq
  %v1194 = vshrl.u32 %v1193, 7
  %v1195 = vsub.s32 0, %v1194
  %v1196 = vrot.slane %v1186, %v1195
  %v1197 = vlaneseq
  %v1198 = vshrl.u32 %v1197, 7
  %v1199 = vsub.s32 0, %v1198
  %v1200 = vrot.slane %v1187, %v1199
  %v1201 = vlaneseq
  %v1202 = vshrl.u32 %v1201, 7
  %v1203 = vsub.s32 0, %v1202
  %v1204 = vrot.slane %v1188, %v1203
  %1206 = vset.pattern.permute.xlu0 0
  %1207 = vperm.xlu0 %1206, %v66
  %v1208 = vpop.permute.xlu0 %1207
  %v1210 = vmul.f32 %v1192, %v1208
  %v1211 = vmul.f32 %v1196, %v1208
  %v1212 = vmul.f32 %v1200, %v1208
  %v1213 = vmul.f32 %v1204, %v1208
  %v1214 = vadd.f32 %v1160, %v1210
  %v1215 = vadd.f32 %v1161, %v1211
  %v1216 = vadd.f32 %v1162, %v1212
  %v1217 = vadd.f32 %v1163, %v1213
  %v1218 = vlaneseq
  %v1219 = vshrl.u32 %v1218, 7
  %v1220 = vsub.s32 1, %v1219
  %v1221 = vrot.slane %v1185, %v1220
  %v1222 = vlaneseq
  %v1223 = vshrl.u32 %v1222, 7
  %v1224 = vsub.s32 1, %v1223
  %v1225 = vrot.slane %v1186, %v1224
  %v1226 = vlaneseq
  %v1227 = vshrl.u32 %v1226, 7
  %v1228 = vsub.s32 1, %v1227
  %v1229 = vrot.slane %v1187, %v1228
  %v1230 = vlaneseq
  %v1231 = vshrl.u32 %v1230, 7
  %v1232 = vsub.s32 1, %v1231
  %v1233 = vrot.slane %v1188, %v1232
  %1235 = vset.pattern.permute.xlu0 0
  %1236 = vperm.xlu0 %1235, %v67
  %v1237 = vpop.permute.xlu0 %1236
  %v1239 = vmul.f32 %v1221, %v1237
  %v1240 = vmul.f32 %v1225, %v1237
  %v1241 = vmul.f32 %v1229, %v1237
  %v1242 = vmul.f32 %v1233, %v1237
  %v1243 = vadd.f32 %v1214, %v1239
  %v1244 = vadd.f32 %v1215, %v1240
  %v1245 = vadd.f32 %v1216, %v1241
  %v1246 = vadd.f32 %v1217, %v1242
  %v1247 = vlaneseq
  %v1248 = vshrl.u32 %v1247, 7
  %v1249 = vsub.s32 2, %v1248
  %v1250 = vrot.slane %v1185, %v1249
  %v1251 = vlaneseq
  %v1252 = vshrl.u32 %v1251, 7
  %v1253 = vsub.s32 2, %v1252
  %v1254 = vrot.slane %v1186, %v1253
  %v1255 = vlaneseq
  %v1256 = vshrl.u32 %v1255, 7
  %v1257 = vsub.s32 2, %v1256
  %v1258 = vrot.slane %v1187, %v1257
  %v1259 = vlaneseq
  %v1260 = vshrl.u32 %v1259, 7
  %v1261 = vsub.s32 2, %v1260
  %v1262 = vrot.slane %v1188, %v1261
  %1264 = vset.pattern.permute.xlu0 0
  %1265 = vperm.xlu0 %1264, %v68
  %v1266 = vpop.permute.xlu0 %1265
  %v1268 = vmul.f32 %v1250, %v1266
  %v1269 = vmul.f32 %v1254, %v1266
  %v1270 = vmul.f32 %v1258, %v1266
  %v1271 = vmul.f32 %v1262, %v1266
  %v1272 = vadd.f32 %v1243, %v1268
  %v1273 = vadd.f32 %v1244, %v1269
  %v1274 = vadd.f32 %v1245, %v1270
  %v1275 = vadd.f32 %v1246, %v1271
  %v1276 = vlaneseq
  %v1277 = vshrl.u32 %v1276, 7
  %v1278 = vsub.s32 3, %v1277
  %v1279 = vrot.slane %v1185, %v1278
  %v1280 = vlaneseq
  %v1281 = vshrl.u32 %v1280, 7
  %v1282 = vsub.s32 3, %v1281
  %v1283 = vrot.slane %v1186, %v1282
  %v1284 = vlaneseq
  %v1285 = vshrl.u32 %v1284, 7
  %v1286 = vsub.s32 3, %v1285
  %v1287 = vrot.slane %v1187, %v1286
  %v1288 = vlaneseq
  %v1289 = vshrl.u32 %v1288, 7
  %v1290 = vsub.s32 3, %v1289
  %v1291 = vrot.slane %v1188, %v1290
  %1293 = vset.pattern.permute.xlu0 0
  %1294 = vperm.xlu0 %1293, %v69
  %v1295 = vpop.permute.xlu0 %1294
  %v1297 = vmul.f32 %v1279, %v1295
  %v1298 = vmul.f32 %v1283, %v1295
  %v1299 = vmul.f32 %v1287, %v1295
  %v1300 = vmul.f32 %v1291, %v1295
  %v1301 = vadd.f32 %v1272, %v1297
  %v1302 = vadd.f32 %v1273, %v1298
  %v1303 = vadd.f32 %v1274, %v1299
  %v1304 = vadd.f32 %v1275, %v1300
  %1305 = vrot.lane.b32.xlu0 %v36, 111
  %v1306 = vpop.permute.xlu0 %1305
  %1307 = vrot.lane.b32.xlu0 %v37, 111
  %v1308 = vpop.permute.xlu0 %1307
  %1309 = vrot.lane.b32.xlu0 %v148, 111
  %v1310 = vpop.permute.xlu0 %1309
  %1311 = vrot.lane.b32.xlu0 %v149, 111
  %v1312 = vpop.permute.xlu0 %1311
  %vm1313 = vcmp.lt.s32.totalorder %v30, 111
  %v1314 = vsel %vm1313, %v1306, %v1310
  %v1315 = vsel %vm1313, %v1308, %v1312
  %v1316 = vsel %vm1313, %v1310, %v1306
  %v1317 = vsel %vm1313, %v1312, %v1308
  %vm1318 = vmand %vm1034, %vm467
  %vm1319 = vmand %vm1035, %vm468
  %vm1320 = vmand %vm1318, %vm471
  %vm1321 = vmand %vm1319, %vm472
  %v1322 = vsel %vm1320, 1, 0
  %v1323 = vsel %vm1321, 1, 0
  %vm1324 = vcmp.eq.s32.totalorder %v1322, 1
  %vm1325 = vcmp.eq.s32.totalorder %v1323, 1
  %v1326 = vsel %vm1324, %v1314, 0.0
  %v1327 = vsel %vm1325, %v1316, 0.0
  %v1328 = vsel %vm1324, %v1315, 0.0
  %v1329 = vsel %vm1325, %v1317, 0.0
  %v1330 = vlaneseq
  %v1331 = vshrl.u32 %v1330, 7
  %v1332 = vsub.s32 0, %v1331
  %v1333 = vrot.slane %v1326, %v1332
  %v1334 = vlaneseq
  %v1335 = vshrl.u32 %v1334, 7
  %v1336 = vsub.s32 0, %v1335
  %v1337 = vrot.slane %v1327, %v1336
  %v1338 = vlaneseq
  %v1339 = vshrl.u32 %v1338, 7
  %v1340 = vsub.s32 0, %v1339
  %v1341 = vrot.slane %v1328, %v1340
  %v1342 = vlaneseq
  %v1343 = vshrl.u32 %v1342, 7
  %v1344 = vsub.s32 0, %v1343
  %v1345 = vrot.slane %v1329, %v1344
  %1347 = vset.pattern.permute.xlu0 0
  %1348 = vperm.xlu0 %1347, %v70
  %v1349 = vpop.permute.xlu0 %1348
  %v1351 = vmul.f32 %v1333, %v1349
  %v1352 = vmul.f32 %v1337, %v1349
  %v1353 = vmul.f32 %v1341, %v1349
  %v1354 = vmul.f32 %v1345, %v1349
  %v1355 = vadd.f32 %v1301, %v1351
  %v1356 = vadd.f32 %v1302, %v1352
  %v1357 = vadd.f32 %v1303, %v1353
  %v1358 = vadd.f32 %v1304, %v1354
  %v1359 = vlaneseq
  %v1360 = vshrl.u32 %v1359, 7
  %v1361 = vsub.s32 1, %v1360
  %v1362 = vrot.slane %v1326, %v1361
  %v1363 = vlaneseq
  %v1364 = vshrl.u32 %v1363, 7
  %v1365 = vsub.s32 1, %v1364
  %v1366 = vrot.slane %v1327, %v1365
  %v1367 = vlaneseq
  %v1368 = vshrl.u32 %v1367, 7
  %v1369 = vsub.s32 1, %v1368
  %v1370 = vrot.slane %v1328, %v1369
  %v1371 = vlaneseq
  %v1372 = vshrl.u32 %v1371, 7
  %v1373 = vsub.s32 1, %v1372
  %v1374 = vrot.slane %v1329, %v1373
  %1376 = vset.pattern.permute.xlu0 0
  %1377 = vperm.xlu0 %1376, %v71
  %v1378 = vpop.permute.xlu0 %1377
  %v1380 = vmul.f32 %v1362, %v1378
  %v1381 = vmul.f32 %v1366, %v1378
  %v1382 = vmul.f32 %v1370, %v1378
  %v1383 = vmul.f32 %v1374, %v1378
  %v1384 = vadd.f32 %v1355, %v1380
  %v1385 = vadd.f32 %v1356, %v1381
  %v1386 = vadd.f32 %v1357, %v1382
  %v1387 = vadd.f32 %v1358, %v1383
  %v1388 = vlaneseq
  %v1389 = vshrl.u32 %v1388, 7
  %v1390 = vsub.s32 2, %v1389
  %v1391 = vrot.slane %v1326, %v1390
  %v1392 = vlaneseq
  %v1393 = vshrl.u32 %v1392, 7
  %v1394 = vsub.s32 2, %v1393
  %v1395 = vrot.slane %v1327, %v1394
  %v1396 = vlaneseq
  %v1397 = vshrl.u32 %v1396, 7
  %v1398 = vsub.s32 2, %v1397
  %v1399 = vrot.slane %v1328, %v1398
  %v1400 = vlaneseq
  %v1401 = vshrl.u32 %v1400, 7
  %v1402 = vsub.s32 2, %v1401
  %v1403 = vrot.slane %v1329, %v1402
  %1405 = vset.pattern.permute.xlu0 0
  %1406 = vperm.xlu0 %1405, %v72
  %v1407 = vpop.permute.xlu0 %1406
  %v1409 = vmul.f32 %v1391, %v1407
  %v1410 = vmul.f32 %v1395, %v1407
  %v1411 = vmul.f32 %v1399, %v1407
  %v1412 = vmul.f32 %v1403, %v1407
  %v1413 = vadd.f32 %v1384, %v1409
  %v1414 = vadd.f32 %v1385, %v1410
  %v1415 = vadd.f32 %v1386, %v1411
  %v1416 = vadd.f32 %v1387, %v1412
  %v1417 = vlaneseq
  %v1418 = vshrl.u32 %v1417, 7
  %v1419 = vsub.s32 3, %v1418
  %v1420 = vrot.slane %v1326, %v1419
  %v1421 = vlaneseq
  %v1422 = vshrl.u32 %v1421, 7
  %v1423 = vsub.s32 3, %v1422
  %v1424 = vrot.slane %v1327, %v1423
  %v1425 = vlaneseq
  %v1426 = vshrl.u32 %v1425, 7
  %v1427 = vsub.s32 3, %v1426
  %v1428 = vrot.slane %v1328, %v1427
  %v1429 = vlaneseq
  %v1430 = vshrl.u32 %v1429, 7
  %v1431 = vsub.s32 3, %v1430
  %v1432 = vrot.slane %v1329, %v1431
  %1434 = vset.pattern.permute.xlu0 0
  %1435 = vperm.xlu0 %1434, %v73
  %v1436 = vpop.permute.xlu0 %1435
  %v1438 = vmul.f32 %v1420, %v1436
  %v1439 = vmul.f32 %v1424, %v1436
  %v1440 = vmul.f32 %v1428, %v1436
  %v1441 = vmul.f32 %v1432, %v1436
  %v1442 = vadd.f32 %v1413, %v1438
  %v1443 = vadd.f32 %v1414, %v1439
  %v1444 = vadd.f32 %v1415, %v1440
  %v1445 = vadd.f32 %v1416, %v1441
  %vm1446 = vcmp.ge.f32.partialorder %v1442, 0.0
  %vm1447 = vcmp.ge.f32.partialorder %v1443, 0.0
  %vm1448 = vcmp.ge.f32.partialorder %v1444, 0.0
  %vm1449 = vcmp.ge.f32.partialorder %v1445, 0.0
  %v1450 = vmul.f32 %v1442, 0.1
  %v1451 = vmul.f32 %v1443, 0.1
  %v1452 = vmul.f32 %v1444, 0.1
  %v1453 = vmul.f32 %v1445, 0.1
  %v1454 = vsel %vm1446, %v1442, %v1450
  %v1455 = vsel %vm1447, %v1443, %v1451
  %v1456 = vsel %vm1448, %v1444, %v1452
  %v1457 = vsel %vm1449, %v1445, %v1453
  %vm1458 = vcmask 1043456
  %v1459 = vsel %vm1458, %v1454, 0.0
  %v1460 = vsel %vm1458, %v1455, 0.0
  %v1461 = vadd.f32 %v1459, %v1460
  %1462 = vadd.xlane.f32.xlu0 %v1461
  %v1463 = vpop.xlane.xlu0 %1462
  %v1464 = vsel %vm1458, %v1456, 0.0
  %v1465 = vsel %vm1458, %v1457, 0.0
  %v1466 = vadd.f32 %v1464, %v1465
  %1467 = vadd.xlane.f32.xlu0 %v1466
  %v1468 = vpop.xlane.xlu0 %1467
  %v1469 = vsel %vm1458, %v1463, 0.0
  %v1470 = vsel %vm1458, %v1468, 0.0
  %v1471 = vadd.f32 %v1469, %v1470
  %v1472 = vmul.f32 %v1471, 0.001953125
  %v1473 = vsub.f32 %v1454, %v1472
  %v1474 = vsub.f32 %v1455, %v1472
  %v1475 = vsub.f32 %v1456, %v1472
  %v1476 = vsub.f32 %v1457, %v1472
  %v1477 = vmul.f32 %v1473, %v1473
  %v1478 = vmul.f32 %v1474, %v1474
  %v1479 = vmul.f32 %v1475, %v1475
  %v1480 = vmul.f32 %v1476, %v1476
  %v1481 = vsel %vm1458, %v1477, 0.0
  %v1482 = vsel %vm1458, %v1478, 0.0
  %v1483 = vadd.f32 %v1481, %v1482
  %1484 = vadd.xlane.f32.xlu0 %v1483
  %v1485 = vpop.xlane.xlu0 %1484
  %v1486 = vsel %vm1458, %v1479, 0.0
  %v1487 = vsel %vm1458, %v1480, 0.0
  %v1488 = vadd.f32 %v1486, %v1487
  %1489 = vadd.xlane.f32.xlu0 %v1488
  %v1490 = vpop.xlane.xlu0 %1489
  %v1491 = vsel %vm1458, %v1485, 0.0
  %v1492 = vsel %vm1458, %v1490, 0.0
  %v1493 = vadd.f32 %v1491, %v1492
  %v1494 = vmul.f32 %v1493, 0.001953125
  %v1495 = vadd.f32 %v1494, 1e-05
  %v1496 = vrsqrt.pop %v1495
  %v1497 = vld [vmem:[%s2] sm:$0xf]
  %v1498 = vmul.f32 %v1496, %v1497
  %1500 = vset.pattern.permute.xlu0 0
  %1501 = vperm.xlu0 %1500, %v1498
  %v1502 = vpop.permute.xlu0 %1501
  %v1504 = vmul.f32 %v1473, %v1502
  %v1505 = vmul.f32 %v1474, %v1502
  %v1506 = vmul.f32 %v1475, %v1502
  %v1507 = vmul.f32 %v1476, %v1502
  %v1508 = vld [vmem:[%s3] sm:$0xf]
  %1510 = vset.pattern.permute.xlu0 0
  %1511 = vperm.xlu0 %1510, %v1508
  %v1512 = vpop.permute.xlu0 %1511
  %v1514 = vadd.f32 %v1504, %v1512
  %v1515 = vadd.f32 %v1505, %v1512
  %v1516 = vadd.f32 %v1506, %v1512
  %v1517 = vadd.f32 %v1507, %v1512
  %1518 = vrot.lane.b32.xlu0 %v1514, 17
  %v1519 = vpop.permute.xlu0 %1518
  %1520 = vrot.lane.b32.xlu0 %v1516, 17
  %v1521 = vpop.permute.xlu0 %1520
  %1522 = vrot.lane.b32.xlu0 %v1515, 17
  %v1523 = vpop.permute.xlu0 %1522
  %1524 = vrot.lane.b32.xlu0 %v1517, 17
  %v1525 = vpop.permute.xlu0 %1524
  %v1526 = vsel %vm160, %v1519, %v1523
  %v1527 = vsel %vm160, %v1521, %v1525
  %v1528 = vsel %vm160, %v1523, %v1519
  %v1529 = vsel %vm160, %v1525, %v1521
  %v1530 = vsel %vm185, %v1528, 0.0
  %v1531 = vsel %vm186, %v1526, 0.0
  %v1532 = vsel %vm185, %v1529, 0.0
  %v1533 = vsel %vm186, %v1527, 0.0
  %v1534 = vlaneseq
  %v1535 = vshrl.u32 %v1534, 7
  %v1536 = vsub.s32 0, %v1535
  %v1537 = vrot.slane %v1530, %v1536
  %v1538 = vlaneseq
  %v1539 = vshrl.u32 %v1538, 7
  %v1540 = vsub.s32 0, %v1539
  %v1541 = vrot.slane %v1531, %v1540
  %v1542 = vlaneseq
  %v1543 = vshrl.u32 %v1542, 7
  %v1544 = vsub.s32 0, %v1543
  %v1545 = vrot.slane %v1532, %v1544
  %v1546 = vlaneseq
  %v1547 = vshrl.u32 %v1546, 7
  %v1548 = vsub.s32 0, %v1547
  %v1549 = vrot.slane %v1533, %v1548
  %1551 = vset.pattern.permute.xlu0 0
  %1552 = vperm.xlu0 %1551, %v74
  %v1553 = vpop.permute.xlu0 %1552
  %v1555 = vmul.f32 %v1537, %v1553
  %v1556 = vmul.f32 %v1541, %v1553
  %v1557 = vmul.f32 %v1545, %v1553
  %v1558 = vmul.f32 %v1549, %v1553
  %v1559 = vadd.f32 %v1555, 0.0
  %v1560 = vadd.f32 %v1556, 0.0
  %v1561 = vadd.f32 %v1557, 0.0
  %v1562 = vadd.f32 %v1558, 0.0
  %v1563 = vlaneseq
  %v1564 = vshrl.u32 %v1563, 7
  %v1565 = vsub.s32 1, %v1564
  %v1566 = vrot.slane %v1530, %v1565
  %v1567 = vlaneseq
  %v1568 = vshrl.u32 %v1567, 7
  %v1569 = vsub.s32 1, %v1568
  %v1570 = vrot.slane %v1531, %v1569
  %v1571 = vlaneseq
  %v1572 = vshrl.u32 %v1571, 7
  %v1573 = vsub.s32 1, %v1572
  %v1574 = vrot.slane %v1532, %v1573
  %v1575 = vlaneseq
  %v1576 = vshrl.u32 %v1575, 7
  %v1577 = vsub.s32 1, %v1576
  %v1578 = vrot.slane %v1533, %v1577
  %1580 = vset.pattern.permute.xlu0 0
  %1581 = vperm.xlu0 %1580, %v75
  %v1582 = vpop.permute.xlu0 %1581
  %v1584 = vmul.f32 %v1566, %v1582
  %v1585 = vmul.f32 %v1570, %v1582
  %v1586 = vmul.f32 %v1574, %v1582
  %v1587 = vmul.f32 %v1578, %v1582
  %v1588 = vadd.f32 %v1559, %v1584
  %v1589 = vadd.f32 %v1560, %v1585
  %v1590 = vadd.f32 %v1561, %v1586
  %v1591 = vadd.f32 %v1562, %v1587
  %v1592 = vlaneseq
  %v1593 = vshrl.u32 %v1592, 7
  %v1594 = vsub.s32 2, %v1593
  %v1595 = vrot.slane %v1530, %v1594
  %v1596 = vlaneseq
  %v1597 = vshrl.u32 %v1596, 7
  %v1598 = vsub.s32 2, %v1597
  %v1599 = vrot.slane %v1531, %v1598
  %v1600 = vlaneseq
  %v1601 = vshrl.u32 %v1600, 7
  %v1602 = vsub.s32 2, %v1601
  %v1603 = vrot.slane %v1532, %v1602
  %v1604 = vlaneseq
  %v1605 = vshrl.u32 %v1604, 7
  %v1606 = vsub.s32 2, %v1605
  %v1607 = vrot.slane %v1533, %v1606
  %1609 = vset.pattern.permute.xlu0 0
  %1610 = vperm.xlu0 %1609, %v76
  %v1611 = vpop.permute.xlu0 %1610
  %v1613 = vmul.f32 %v1595, %v1611
  %v1614 = vmul.f32 %v1599, %v1611
  %v1615 = vmul.f32 %v1603, %v1611
  %v1616 = vmul.f32 %v1607, %v1611
  %v1617 = vadd.f32 %v1588, %v1613
  %v1618 = vadd.f32 %v1589, %v1614
  %v1619 = vadd.f32 %v1590, %v1615
  %v1620 = vadd.f32 %v1591, %v1616
  %v1621 = vlaneseq
  %v1622 = vshrl.u32 %v1621, 7
  %v1623 = vsub.s32 3, %v1622
  %v1624 = vrot.slane %v1530, %v1623
  %v1625 = vlaneseq
  %v1626 = vshrl.u32 %v1625, 7
  %v1627 = vsub.s32 3, %v1626
  %v1628 = vrot.slane %v1531, %v1627
  %v1629 = vlaneseq
  %v1630 = vshrl.u32 %v1629, 7
  %v1631 = vsub.s32 3, %v1630
  %v1632 = vrot.slane %v1532, %v1631
  %v1633 = vlaneseq
  %v1634 = vshrl.u32 %v1633, 7
  %v1635 = vsub.s32 3, %v1634
  %v1636 = vrot.slane %v1533, %v1635
  %1638 = vset.pattern.permute.xlu0 0
  %1639 = vperm.xlu0 %1638, %v77
  %v1640 = vpop.permute.xlu0 %1639
  %v1642 = vmul.f32 %v1624, %v1640
  %v1643 = vmul.f32 %v1628, %v1640
  %v1644 = vmul.f32 %v1632, %v1640
  %v1645 = vmul.f32 %v1636, %v1640
  %v1646 = vadd.f32 %v1617, %v1642
  %v1647 = vadd.f32 %v1618, %v1643
  %v1648 = vadd.f32 %v1619, %v1644
  %v1649 = vadd.f32 %v1620, %v1645
  %1650 = vrot.lane.b32.xlu0 %v1514, 16
  %v1651 = vpop.permute.xlu0 %1650
  %1652 = vrot.lane.b32.xlu0 %v1516, 16
  %v1653 = vpop.permute.xlu0 %1652
  %1654 = vrot.lane.b32.xlu0 %v1515, 16
  %v1655 = vpop.permute.xlu0 %1654
  %1656 = vrot.lane.b32.xlu0 %v1517, 16
  %v1657 = vpop.permute.xlu0 %1656
  %v1658 = vsel %vm315, %v1651, %v1655
  %v1659 = vsel %vm315, %v1653, %v1657
  %v1660 = vsel %vm315, %v1655, %v1651
  %v1661 = vsel %vm315, %v1657, %v1653
  %v1662 = vsel %vm330, %v1660, 0.0
  %v1663 = vsel %vm331, %v1658, 0.0
  %v1664 = vsel %vm330, %v1661, 0.0
  %v1665 = vsel %vm331, %v1659, 0.0
  %v1666 = vlaneseq
  %v1667 = vshrl.u32 %v1666, 7
  %v1668 = vsub.s32 0, %v1667
  %v1669 = vrot.slane %v1662, %v1668
  %v1670 = vlaneseq
  %v1671 = vshrl.u32 %v1670, 7
  %v1672 = vsub.s32 0, %v1671
  %v1673 = vrot.slane %v1663, %v1672
  %v1674 = vlaneseq
  %v1675 = vshrl.u32 %v1674, 7
  %v1676 = vsub.s32 0, %v1675
  %v1677 = vrot.slane %v1664, %v1676
  %v1678 = vlaneseq
  %v1679 = vshrl.u32 %v1678, 7
  %v1680 = vsub.s32 0, %v1679
  %v1681 = vrot.slane %v1665, %v1680
  %1683 = vset.pattern.permute.xlu0 0
  %1684 = vperm.xlu0 %1683, %v78
  %v1685 = vpop.permute.xlu0 %1684
  %v1687 = vmul.f32 %v1669, %v1685
  %v1688 = vmul.f32 %v1673, %v1685
  %v1689 = vmul.f32 %v1677, %v1685
  %v1690 = vmul.f32 %v1681, %v1685
  %v1691 = vadd.f32 %v1646, %v1687
  %v1692 = vadd.f32 %v1647, %v1688
  %v1693 = vadd.f32 %v1648, %v1689
  %v1694 = vadd.f32 %v1649, %v1690
  %v1695 = vlaneseq
  %v1696 = vshrl.u32 %v1695, 7
  %v1697 = vsub.s32 1, %v1696
  %v1698 = vrot.slane %v1662, %v1697
  %v1699 = vlaneseq
  %v1700 = vshrl.u32 %v1699, 7
  %v1701 = vsub.s32 1, %v1700
  %v1702 = vrot.slane %v1663, %v1701
  %v1703 = vlaneseq
  %v1704 = vshrl.u32 %v1703, 7
  %v1705 = vsub.s32 1, %v1704
  %v1706 = vrot.slane %v1664, %v1705
  %v1707 = vlaneseq
  %v1708 = vshrl.u32 %v1707, 7
  %v1709 = vsub.s32 1, %v1708
  %v1710 = vrot.slane %v1665, %v1709
  %1712 = vset.pattern.permute.xlu0 0
  %1713 = vperm.xlu0 %1712, %v79
  %v1714 = vpop.permute.xlu0 %1713
  %v1716 = vmul.f32 %v1698, %v1714
  %v1717 = vmul.f32 %v1702, %v1714
  %v1718 = vmul.f32 %v1706, %v1714
  %v1719 = vmul.f32 %v1710, %v1714
  %v1720 = vadd.f32 %v1691, %v1716
  %v1721 = vadd.f32 %v1692, %v1717
  %v1722 = vadd.f32 %v1693, %v1718
  %v1723 = vadd.f32 %v1694, %v1719
  %v1724 = vlaneseq
  %v1725 = vshrl.u32 %v1724, 7
  %v1726 = vsub.s32 2, %v1725
  %v1727 = vrot.slane %v1662, %v1726
  %v1728 = vlaneseq
  %v1729 = vshrl.u32 %v1728, 7
  %v1730 = vsub.s32 2, %v1729
  %v1731 = vrot.slane %v1663, %v1730
  %v1732 = vlaneseq
  %v1733 = vshrl.u32 %v1732, 7
  %v1734 = vsub.s32 2, %v1733
  %v1735 = vrot.slane %v1664, %v1734
  %v1736 = vlaneseq
  %v1737 = vshrl.u32 %v1736, 7
  %v1738 = vsub.s32 2, %v1737
  %v1739 = vrot.slane %v1665, %v1738
  %1741 = vset.pattern.permute.xlu0 0
  %1742 = vperm.xlu0 %1741, %v80
  %v1743 = vpop.permute.xlu0 %1742
  %v1745 = vmul.f32 %v1727, %v1743
  %v1746 = vmul.f32 %v1731, %v1743
  %v1747 = vmul.f32 %v1735, %v1743
  %v1748 = vmul.f32 %v1739, %v1743
  %v1749 = vadd.f32 %v1720, %v1745
  %v1750 = vadd.f32 %v1721, %v1746
  %v1751 = vadd.f32 %v1722, %v1747
  %v1752 = vadd.f32 %v1723, %v1748
  %v1753 = vlaneseq
  %v1754 = vshrl.u32 %v1753, 7
  %v1755 = vsub.s32 3, %v1754
  %v1756 = vrot.slane %v1662, %v1755
  %v1757 = vlaneseq
  %v1758 = vshrl.u32 %v1757, 7
  %v1759 = vsub.s32 3, %v1758
  %v1760 = vrot.slane %v1663, %v1759
  %v1761 = vlaneseq
  %v1762 = vshrl.u32 %v1761, 7
  %v1763 = vsub.s32 3, %v1762
  %v1764 = vrot.slane %v1664, %v1763
  %v1765 = vlaneseq
  %v1766 = vshrl.u32 %v1765, 7
  %v1767 = vsub.s32 3, %v1766
  %v1768 = vrot.slane %v1665, %v1767
  %1770 = vset.pattern.permute.xlu0 0
  %1771 = vperm.xlu0 %1770, %v81
  %v1772 = vpop.permute.xlu0 %1771
  %v1774 = vmul.f32 %v1756, %v1772
  %v1775 = vmul.f32 %v1760, %v1772
  %v1776 = vmul.f32 %v1764, %v1772
  %v1777 = vmul.f32 %v1768, %v1772
  %v1778 = vadd.f32 %v1749, %v1774
  %v1779 = vadd.f32 %v1750, %v1775
  %v1780 = vadd.f32 %v1751, %v1776
  %v1781 = vadd.f32 %v1752, %v1777
  %1782 = vrot.lane.b32.xlu0 %v1514, 15
  %v1783 = vpop.permute.xlu0 %1782
  %1784 = vrot.lane.b32.xlu0 %v1516, 15
  %v1785 = vpop.permute.xlu0 %1784
  %1786 = vrot.lane.b32.xlu0 %v1515, 15
  %v1787 = vpop.permute.xlu0 %1786
  %1788 = vrot.lane.b32.xlu0 %v1517, 15
  %v1789 = vpop.permute.xlu0 %1788
  %v1790 = vsel %vm460, %v1783, %v1787
  %v1791 = vsel %vm460, %v1785, %v1789
  %v1792 = vsel %vm460, %v1787, %v1783
  %v1793 = vsel %vm460, %v1789, %v1785
  %v1794 = vsel %vm477, %v1792, 0.0
  %v1795 = vsel %vm478, %v1790, 0.0
  %v1796 = vsel %vm477, %v1793, 0.0
  %v1797 = vsel %vm478, %v1791, 0.0
  %v1798 = vlaneseq
  %v1799 = vshrl.u32 %v1798, 7
  %v1800 = vsub.s32 0, %v1799
  %v1801 = vrot.slane %v1794, %v1800
  %v1802 = vlaneseq
  %v1803 = vshrl.u32 %v1802, 7
  %v1804 = vsub.s32 0, %v1803
  %v1805 = vrot.slane %v1795, %v1804
  %v1806 = vlaneseq
  %v1807 = vshrl.u32 %v1806, 7
  %v1808 = vsub.s32 0, %v1807
  %v1809 = vrot.slane %v1796, %v1808
  %v1810 = vlaneseq
  %v1811 = vshrl.u32 %v1810, 7
  %v1812 = vsub.s32 0, %v1811
  %v1813 = vrot.slane %v1797, %v1812
  %1815 = vset.pattern.permute.xlu0 0
  %1816 = vperm.xlu0 %1815, %v82
  %v1817 = vpop.permute.xlu0 %1816
  %v1819 = vmul.f32 %v1801, %v1817
  %v1820 = vmul.f32 %v1805, %v1817
  %v1821 = vmul.f32 %v1809, %v1817
  %v1822 = vmul.f32 %v1813, %v1817
  %v1823 = vadd.f32 %v1778, %v1819
  %v1824 = vadd.f32 %v1779, %v1820
  %v1825 = vadd.f32 %v1780, %v1821
  %v1826 = vadd.f32 %v1781, %v1822
  %v1827 = vlaneseq
  %v1828 = vshrl.u32 %v1827, 7
  %v1829 = vsub.s32 1, %v1828
  %v1830 = vrot.slane %v1794, %v1829
  %v1831 = vlaneseq
  %v1832 = vshrl.u32 %v1831, 7
  %v1833 = vsub.s32 1, %v1832
  %v1834 = vrot.slane %v1795, %v1833
  %v1835 = vlaneseq
  %v1836 = vshrl.u32 %v1835, 7
  %v1837 = vsub.s32 1, %v1836
  %v1838 = vrot.slane %v1796, %v1837
  %v1839 = vlaneseq
  %v1840 = vshrl.u32 %v1839, 7
  %v1841 = vsub.s32 1, %v1840
  %v1842 = vrot.slane %v1797, %v1841
  %1844 = vset.pattern.permute.xlu0 0
  %1845 = vperm.xlu0 %1844, %v83
  %v1846 = vpop.permute.xlu0 %1845
  %v1848 = vmul.f32 %v1830, %v1846
  %v1849 = vmul.f32 %v1834, %v1846
  %v1850 = vmul.f32 %v1838, %v1846
  %v1851 = vmul.f32 %v1842, %v1846
  %v1852 = vadd.f32 %v1823, %v1848
  %v1853 = vadd.f32 %v1824, %v1849
  %v1854 = vadd.f32 %v1825, %v1850
  %v1855 = vadd.f32 %v1826, %v1851
  %v1856 = vlaneseq
  %v1857 = vshrl.u32 %v1856, 7
  %v1858 = vsub.s32 2, %v1857
  %v1859 = vrot.slane %v1794, %v1858
  %v1860 = vlaneseq
  %v1861 = vshrl.u32 %v1860, 7
  %v1862 = vsub.s32 2, %v1861
  %v1863 = vrot.slane %v1795, %v1862
  %v1864 = vlaneseq
  %v1865 = vshrl.u32 %v1864, 7
  %v1866 = vsub.s32 2, %v1865
  %v1867 = vrot.slane %v1796, %v1866
  %v1868 = vlaneseq
  %v1869 = vshrl.u32 %v1868, 7
  %v1870 = vsub.s32 2, %v1869
  %v1871 = vrot.slane %v1797, %v1870
  %1873 = vset.pattern.permute.xlu0 0
  %1874 = vperm.xlu0 %1873, %v84
  %v1875 = vpop.permute.xlu0 %1874
  %v1877 = vmul.f32 %v1859, %v1875
  %v1878 = vmul.f32 %v1863, %v1875
  %v1879 = vmul.f32 %v1867, %v1875
  %v1880 = vmul.f32 %v1871, %v1875
  %v1881 = vadd.f32 %v1852, %v1877
  %v1882 = vadd.f32 %v1853, %v1878
  %v1883 = vadd.f32 %v1854, %v1879
  %v1884 = vadd.f32 %v1855, %v1880
  %v1885 = vlaneseq
  %v1886 = vshrl.u32 %v1885, 7
  %v1887 = vsub.s32 3, %v1886
  %v1888 = vrot.slane %v1794, %v1887
  %v1889 = vlaneseq
  %v1890 = vshrl.u32 %v1889, 7
  %v1891 = vsub.s32 3, %v1890
  %v1892 = vrot.slane %v1795, %v1891
  %v1893 = vlaneseq
  %v1894 = vshrl.u32 %v1893, 7
  %v1895 = vsub.s32 3, %v1894
  %v1896 = vrot.slane %v1796, %v1895
  %v1897 = vlaneseq
  %v1898 = vshrl.u32 %v1897, 7
  %v1899 = vsub.s32 3, %v1898
  %v1900 = vrot.slane %v1797, %v1899
  %1902 = vset.pattern.permute.xlu0 0
  %1903 = vperm.xlu0 %1902, %v85
  %v1904 = vpop.permute.xlu0 %1903
  %v1906 = vmul.f32 %v1888, %v1904
  %v1907 = vmul.f32 %v1892, %v1904
  %v1908 = vmul.f32 %v1896, %v1904
  %v1909 = vmul.f32 %v1900, %v1904
  %v1910 = vadd.f32 %v1881, %v1906
  %v1911 = vadd.f32 %v1882, %v1907
  %v1912 = vadd.f32 %v1883, %v1908
  %v1913 = vadd.f32 %v1884, %v1909
  %1914 = vrot.lane.b32.xlu0 %v1514, 1
  %v1915 = vpop.permute.xlu0 %1914
  %1916 = vrot.lane.b32.xlu0 %v1516, 1
  %v1917 = vpop.permute.xlu0 %1916
  %1918 = vrot.lane.b32.xlu0 %v1515, 1
  %v1919 = vpop.permute.xlu0 %1918
  %1920 = vrot.lane.b32.xlu0 %v1517, 1
  %v1921 = vpop.permute.xlu0 %1920
  %v1922 = vsel %vm607, %v1915, %v1919
  %v1923 = vsel %vm607, %v1917, %v1921
  %v1924 = vsel %vm607, %v1919, %v1915
  %v1925 = vsel %vm607, %v1921, %v1917
  %v1926 = vsel %vm624, %v1924, 0.0
  %v1927 = vsel %vm625, %v1922, 0.0
  %v1928 = vsel %vm624, %v1925, 0.0
  %v1929 = vsel %vm625, %v1923, 0.0
  %v1930 = vlaneseq
  %v1931 = vshrl.u32 %v1930, 7
  %v1932 = vsub.s32 0, %v1931
  %v1933 = vrot.slane %v1926, %v1932
  %v1934 = vlaneseq
  %v1935 = vshrl.u32 %v1934, 7
  %v1936 = vsub.s32 0, %v1935
  %v1937 = vrot.slane %v1927, %v1936
  %v1938 = vlaneseq
  %v1939 = vshrl.u32 %v1938, 7
  %v1940 = vsub.s32 0, %v1939
  %v1941 = vrot.slane %v1928, %v1940
  %v1942 = vlaneseq
  %v1943 = vshrl.u32 %v1942, 7
  %v1944 = vsub.s32 0, %v1943
  %v1945 = vrot.slane %v1929, %v1944
  %1947 = vset.pattern.permute.xlu0 0
  %1948 = vperm.xlu0 %1947, %v86
  %v1949 = vpop.permute.xlu0 %1948
  %v1951 = vmul.f32 %v1933, %v1949
  %v1952 = vmul.f32 %v1937, %v1949
  %v1953 = vmul.f32 %v1941, %v1949
  %v1954 = vmul.f32 %v1945, %v1949
  %v1955 = vadd.f32 %v1910, %v1951
  %v1956 = vadd.f32 %v1911, %v1952
  %v1957 = vadd.f32 %v1912, %v1953
  %v1958 = vadd.f32 %v1913, %v1954
  %v1959 = vlaneseq
  %v1960 = vshrl.u32 %v1959, 7
  %v1961 = vsub.s32 1, %v1960
  %v1962 = vrot.slane %v1926, %v1961
  %v1963 = vlaneseq
  %v1964 = vshrl.u32 %v1963, 7
  %v1965 = vsub.s32 1, %v1964
  %v1966 = vrot.slane %v1927, %v1965
  %v1967 = vlaneseq
  %v1968 = vshrl.u32 %v1967, 7
  %v1969 = vsub.s32 1, %v1968
  %v1970 = vrot.slane %v1928, %v1969
  %v1971 = vlaneseq
  %v1972 = vshrl.u32 %v1971, 7
  %v1973 = vsub.s32 1, %v1972
  %v1974 = vrot.slane %v1929, %v1973
  %1976 = vset.pattern.permute.xlu0 0
  %1977 = vperm.xlu0 %1976, %v87
  %v1978 = vpop.permute.xlu0 %1977
  %v1980 = vmul.f32 %v1962, %v1978
  %v1981 = vmul.f32 %v1966, %v1978
  %v1982 = vmul.f32 %v1970, %v1978
  %v1983 = vmul.f32 %v1974, %v1978
  %v1984 = vadd.f32 %v1955, %v1980
  %v1985 = vadd.f32 %v1956, %v1981
  %v1986 = vadd.f32 %v1957, %v1982
  %v1987 = vadd.f32 %v1958, %v1983
  %v1988 = vlaneseq
  %v1989 = vshrl.u32 %v1988, 7
  %v1990 = vsub.s32 2, %v1989
  %v1991 = vrot.slane %v1926, %v1990
  %v1992 = vlaneseq
  %v1993 = vshrl.u32 %v1992, 7
  %v1994 = vsub.s32 2, %v1993
  %v1995 = vrot.slane %v1927, %v1994
  %v1996 = vlaneseq
  %v1997 = vshrl.u32 %v1996, 7
  %v1998 = vsub.s32 2, %v1997
  %v1999 = vrot.slane %v1928, %v1998
  %v2000 = vlaneseq
  %v2001 = vshrl.u32 %v2000, 7
  %v2002 = vsub.s32 2, %v2001
  %v2003 = vrot.slane %v1929, %v2002
  %2005 = vset.pattern.permute.xlu0 0
  %2006 = vperm.xlu0 %2005, %v88
  %v2007 = vpop.permute.xlu0 %2006
  %v2009 = vmul.f32 %v1991, %v2007
  %v2010 = vmul.f32 %v1995, %v2007
  %v2011 = vmul.f32 %v1999, %v2007
  %v2012 = vmul.f32 %v2003, %v2007
  %v2013 = vadd.f32 %v1984, %v2009
  %v2014 = vadd.f32 %v1985, %v2010
  %v2015 = vadd.f32 %v1986, %v2011
  %v2016 = vadd.f32 %v1987, %v2012
  %v2017 = vlaneseq
  %v2018 = vshrl.u32 %v2017, 7
  %v2019 = vsub.s32 3, %v2018
  %v2020 = vrot.slane %v1926, %v2019
  %v2021 = vlaneseq
  %v2022 = vshrl.u32 %v2021, 7
  %v2023 = vsub.s32 3, %v2022
  %v2024 = vrot.slane %v1927, %v2023
  %v2025 = vlaneseq
  %v2026 = vshrl.u32 %v2025, 7
  %v2027 = vsub.s32 3, %v2026
  %v2028 = vrot.slane %v1928, %v2027
  %v2029 = vlaneseq
  %v2030 = vshrl.u32 %v2029, 7
  %v2031 = vsub.s32 3, %v2030
  %v2032 = vrot.slane %v1929, %v2031
  %2034 = vset.pattern.permute.xlu0 0
  %2035 = vperm.xlu0 %2034, %v89
  %v2036 = vpop.permute.xlu0 %2035
  %v2038 = vmul.f32 %v2020, %v2036
  %v2039 = vmul.f32 %v2024, %v2036
  %v2040 = vmul.f32 %v2028, %v2036
  %v2041 = vmul.f32 %v2032, %v2036
  %v2042 = vadd.f32 %v2013, %v2038
  %v2043 = vadd.f32 %v2014, %v2039
  %v2044 = vadd.f32 %v2015, %v2040
  %v2045 = vadd.f32 %v2016, %v2041
  %v2046 = vsel %vm752, %v1514, 0.0
  %v2047 = vsel %vm753, %v1515, 0.0
  %v2048 = vsel %vm752, %v1516, 0.0
  %v2049 = vsel %vm753, %v1517, 0.0
  %v2050 = vlaneseq
  %v2051 = vshrl.u32 %v2050, 7
  %v2052 = vsub.s32 0, %v2051
  %v2053 = vrot.slane %v2046, %v2052
  %v2054 = vlaneseq
  %v2055 = vshrl.u32 %v2054, 7
  %v2056 = vsub.s32 0, %v2055
  %v2057 = vrot.slane %v2047, %v2056
  %v2058 = vlaneseq
  %v2059 = vshrl.u32 %v2058, 7
  %v2060 = vsub.s32 0, %v2059
  %v2061 = vrot.slane %v2048, %v2060
  %v2062 = vlaneseq
  %v2063 = vshrl.u32 %v2062, 7
  %v2064 = vsub.s32 0, %v2063
  %v2065 = vrot.slane %v2049, %v2064
  %2067 = vset.pattern.permute.xlu0 0
  %2068 = vperm.xlu0 %2067, %v90
  %v2069 = vpop.permute.xlu0 %2068
  %v2071 = vmul.f32 %v2053, %v2069
  %v2072 = vmul.f32 %v2057, %v2069
  %v2073 = vmul.f32 %v2061, %v2069
  %v2074 = vmul.f32 %v2065, %v2069
  %v2075 = vadd.f32 %v2042, %v2071
  %v2076 = vadd.f32 %v2043, %v2072
  %v2077 = vadd.f32 %v2044, %v2073
  %v2078 = vadd.f32 %v2045, %v2074
  %v2079 = vlaneseq
  %v2080 = vshrl.u32 %v2079, 7
  %v2081 = vsub.s32 1, %v2080
  %v2082 = vrot.slane %v2046, %v2081
  %v2083 = vlaneseq
  %v2084 = vshrl.u32 %v2083, 7
  %v2085 = vsub.s32 1, %v2084
  %v2086 = vrot.slane %v2047, %v2085
  %v2087 = vlaneseq
  %v2088 = vshrl.u32 %v2087, 7
  %v2089 = vsub.s32 1, %v2088
  %v2090 = vrot.slane %v2048, %v2089
  %v2091 = vlaneseq
  %v2092 = vshrl.u32 %v2091, 7
  %v2093 = vsub.s32 1, %v2092
  %v2094 = vrot.slane %v2049, %v2093
  %2096 = vset.pattern.permute.xlu0 0
  %2097 = vperm.xlu0 %2096, %v91
  %v2098 = vpop.permute.xlu0 %2097
  %v2100 = vmul.f32 %v2082, %v2098
  %v2101 = vmul.f32 %v2086, %v2098
  %v2102 = vmul.f32 %v2090, %v2098
  %v2103 = vmul.f32 %v2094, %v2098
  %v2104 = vadd.f32 %v2075, %v2100
  %v2105 = vadd.f32 %v2076, %v2101
  %v2106 = vadd.f32 %v2077, %v2102
  %v2107 = vadd.f32 %v2078, %v2103
  %v2108 = vlaneseq
  %v2109 = vshrl.u32 %v2108, 7
  %v2110 = vsub.s32 2, %v2109
  %v2111 = vrot.slane %v2046, %v2110
  %v2112 = vlaneseq
  %v2113 = vshrl.u32 %v2112, 7
  %v2114 = vsub.s32 2, %v2113
  %v2115 = vrot.slane %v2047, %v2114
  %v2116 = vlaneseq
  %v2117 = vshrl.u32 %v2116, 7
  %v2118 = vsub.s32 2, %v2117
  %v2119 = vrot.slane %v2048, %v2118
  %v2120 = vlaneseq
  %v2121 = vshrl.u32 %v2120, 7
  %v2122 = vsub.s32 2, %v2121
  %v2123 = vrot.slane %v2049, %v2122
  %2125 = vset.pattern.permute.xlu0 0
  %2126 = vperm.xlu0 %2125, %v92
  %v2127 = vpop.permute.xlu0 %2126
  %v2129 = vmul.f32 %v2111, %v2127
  %v2130 = vmul.f32 %v2115, %v2127
  %v2131 = vmul.f32 %v2119, %v2127
  %v2132 = vmul.f32 %v2123, %v2127
  %v2133 = vadd.f32 %v2104, %v2129
  %v2134 = vadd.f32 %v2105, %v2130
  %v2135 = vadd.f32 %v2106, %v2131
  %v2136 = vadd.f32 %v2107, %v2132
  %v2137 = vlaneseq
  %v2138 = vshrl.u32 %v2137, 7
  %v2139 = vsub.s32 3, %v2138
  %v2140 = vrot.slane %v2046, %v2139
  %v2141 = vlaneseq
  %v2142 = vshrl.u32 %v2141, 7
  %v2143 = vsub.s32 3, %v2142
  %v2144 = vrot.slane %v2047, %v2143
  %v2145 = vlaneseq
  %v2146 = vshrl.u32 %v2145, 7
  %v2147 = vsub.s32 3, %v2146
  %v2148 = vrot.slane %v2048, %v2147
  %v2149 = vlaneseq
  %v2150 = vshrl.u32 %v2149, 7
  %v2151 = vsub.s32 3, %v2150
  %v2152 = vrot.slane %v2049, %v2151
  %2154 = vset.pattern.permute.xlu0 0
  %2155 = vperm.xlu0 %2154, %v93
  %v2156 = vpop.permute.xlu0 %2155
  %v2158 = vmul.f32 %v2140, %v2156
  %v2159 = vmul.f32 %v2144, %v2156
  %v2160 = vmul.f32 %v2148, %v2156
  %v2161 = vmul.f32 %v2152, %v2156
  %v2162 = vadd.f32 %v2133, %v2158
  %v2163 = vadd.f32 %v2134, %v2159
  %v2164 = vadd.f32 %v2135, %v2160
  %v2165 = vadd.f32 %v2136, %v2161
  %2166 = vrot.lane.b32.xlu0 %v1514, 127
  %v2167 = vpop.permute.xlu0 %2166
  %2168 = vrot.lane.b32.xlu0 %v1516, 127
  %v2169 = vpop.permute.xlu0 %2168
  %2170 = vrot.lane.b32.xlu0 %v1515, 127
  %v2171 = vpop.permute.xlu0 %2170
  %2172 = vrot.lane.b32.xlu0 %v1517, 127
  %v2173 = vpop.permute.xlu0 %2172
  %v2174 = vsel %vm882, %v2167, %v2171
  %v2175 = vsel %vm882, %v2169, %v2173
  %v2176 = vsel %vm882, %v2171, %v2167
  %v2177 = vsel %vm882, %v2173, %v2169
  %v2178 = vsel %vm893, %v2174, 0.0
  %v2179 = vsel %vm894, %v2176, 0.0
  %v2180 = vsel %vm893, %v2175, 0.0
  %v2181 = vsel %vm894, %v2177, 0.0
  %v2182 = vlaneseq
  %v2183 = vshrl.u32 %v2182, 7
  %v2184 = vsub.s32 0, %v2183
  %v2185 = vrot.slane %v2178, %v2184
  %v2186 = vlaneseq
  %v2187 = vshrl.u32 %v2186, 7
  %v2188 = vsub.s32 0, %v2187
  %v2189 = vrot.slane %v2179, %v2188
  %v2190 = vlaneseq
  %v2191 = vshrl.u32 %v2190, 7
  %v2192 = vsub.s32 0, %v2191
  %v2193 = vrot.slane %v2180, %v2192
  %v2194 = vlaneseq
  %v2195 = vshrl.u32 %v2194, 7
  %v2196 = vsub.s32 0, %v2195
  %v2197 = vrot.slane %v2181, %v2196
  %2199 = vset.pattern.permute.xlu0 0
  %2200 = vperm.xlu0 %2199, %v94
  %v2201 = vpop.permute.xlu0 %2200
  %v2203 = vmul.f32 %v2185, %v2201
  %v2204 = vmul.f32 %v2189, %v2201
  %v2205 = vmul.f32 %v2193, %v2201
  %v2206 = vmul.f32 %v2197, %v2201
  %v2207 = vadd.f32 %v2162, %v2203
  %v2208 = vadd.f32 %v2163, %v2204
  %v2209 = vadd.f32 %v2164, %v2205
  %v2210 = vadd.f32 %v2165, %v2206
  %v2211 = vlaneseq
  %v2212 = vshrl.u32 %v2211, 7
  %v2213 = vsub.s32 1, %v2212
  %v2214 = vrot.slane %v2178, %v2213
  %v2215 = vlaneseq
  %v2216 = vshrl.u32 %v2215, 7
  %v2217 = vsub.s32 1, %v2216
  %v2218 = vrot.slane %v2179, %v2217
  %v2219 = vlaneseq
  %v2220 = vshrl.u32 %v2219, 7
  %v2221 = vsub.s32 1, %v2220
  %v2222 = vrot.slane %v2180, %v2221
  %v2223 = vlaneseq
  %v2224 = vshrl.u32 %v2223, 7
  %v2225 = vsub.s32 1, %v2224
  %v2226 = vrot.slane %v2181, %v2225
  %2228 = vset.pattern.permute.xlu0 0
  %2229 = vperm.xlu0 %2228, %v95
  %v2230 = vpop.permute.xlu0 %2229
  %v2232 = vmul.f32 %v2214, %v2230
  %v2233 = vmul.f32 %v2218, %v2230
  %v2234 = vmul.f32 %v2222, %v2230
  %v2235 = vmul.f32 %v2226, %v2230
  %v2236 = vadd.f32 %v2207, %v2232
  %v2237 = vadd.f32 %v2208, %v2233
  %v2238 = vadd.f32 %v2209, %v2234
  %v2239 = vadd.f32 %v2210, %v2235
  %v2240 = vlaneseq
  %v2241 = vshrl.u32 %v2240, 7
  %v2242 = vsub.s32 2, %v2241
  %v2243 = vrot.slane %v2178, %v2242
  %v2244 = vlaneseq
  %v2245 = vshrl.u32 %v2244, 7
  %v2246 = vsub.s32 2, %v2245
  %v2247 = vrot.slane %v2179, %v2246
  %v2248 = vlaneseq
  %v2249 = vshrl.u32 %v2248, 7
  %v2250 = vsub.s32 2, %v2249
  %v2251 = vrot.slane %v2180, %v2250
  %v2252 = vlaneseq
  %v2253 = vshrl.u32 %v2252, 7
  %v2254 = vsub.s32 2, %v2253
  %v2255 = vrot.slane %v2181, %v2254
  %2257 = vset.pattern.permute.xlu0 0
  %2258 = vperm.xlu0 %2257, %v96
  %v2259 = vpop.permute.xlu0 %2258
  %v2261 = vmul.f32 %v2243, %v2259
  %v2262 = vmul.f32 %v2247, %v2259
  %v2263 = vmul.f32 %v2251, %v2259
  %v2264 = vmul.f32 %v2255, %v2259
  %v2265 = vadd.f32 %v2236, %v2261
  %v2266 = vadd.f32 %v2237, %v2262
  %v2267 = vadd.f32 %v2238, %v2263
  %v2268 = vadd.f32 %v2239, %v2264
  %v2269 = vlaneseq
  %v2270 = vshrl.u32 %v2269, 7
  %v2271 = vsub.s32 3, %v2270
  %v2272 = vrot.slane %v2178, %v2271
  %v2273 = vlaneseq
  %v2274 = vshrl.u32 %v2273, 7
  %v2275 = vsub.s32 3, %v2274
  %v2276 = vrot.slane %v2179, %v2275
  %v2277 = vlaneseq
  %v2278 = vshrl.u32 %v2277, 7
  %v2279 = vsub.s32 3, %v2278
  %v2280 = vrot.slane %v2180, %v2279
  %v2281 = vlaneseq
  %v2282 = vshrl.u32 %v2281, 7
  %v2283 = vsub.s32 3, %v2282
  %v2284 = vrot.slane %v2181, %v2283
  %2286 = vset.pattern.permute.xlu0 0
  %2287 = vperm.xlu0 %2286, %v97
  %v2288 = vpop.permute.xlu0 %2287
  %v2290 = vmul.f32 %v2272, %v2288
  %v2291 = vmul.f32 %v2276, %v2288
  %v2292 = vmul.f32 %v2280, %v2288
  %v2293 = vmul.f32 %v2284, %v2288
  %v2294 = vadd.f32 %v2265, %v2290
  %v2295 = vadd.f32 %v2266, %v2291
  %v2296 = vadd.f32 %v2267, %v2292
  %v2297 = vadd.f32 %v2268, %v2293
  %2298 = vrot.lane.b32.xlu0 %v1514, 113
  %v2299 = vpop.permute.xlu0 %2298
  %2300 = vrot.lane.b32.xlu0 %v1516, 113
  %v2301 = vpop.permute.xlu0 %2300
  %2302 = vrot.lane.b32.xlu0 %v1515, 113
  %v2303 = vpop.permute.xlu0 %2302
  %2304 = vrot.lane.b32.xlu0 %v1517, 113
  %v2305 = vpop.permute.xlu0 %2304
  %v2306 = vsel %vm1023, %v2299, %v2303
  %v2307 = vsel %vm1023, %v2301, %v2305
  %v2308 = vsel %vm1023, %v2303, %v2299
  %v2309 = vsel %vm1023, %v2305, %v2301
  %v2310 = vsel %vm1042, %v2306, 0.0
  %v2311 = vsel %vm1043, %v2308, 0.0
  %v2312 = vsel %vm1042, %v2307, 0.0
  %v2313 = vsel %vm1043, %v2309, 0.0
  %v2314 = vlaneseq
  %v2315 = vshrl.u32 %v2314, 7
  %v2316 = vsub.s32 0, %v2315
  %v2317 = vrot.slane %v2310, %v2316
  %v2318 = vlaneseq
  %v2319 = vshrl.u32 %v2318, 7
  %v2320 = vsub.s32 0, %v2319
  %v2321 = vrot.slane %v2311, %v2320
  %v2322 = vlaneseq
  %v2323 = vshrl.u32 %v2322, 7
  %v2324 = vsub.s32 0, %v2323
  %v2325 = vrot.slane %v2312, %v2324
  %v2326 = vlaneseq
  %v2327 = vshrl.u32 %v2326, 7
  %v2328 = vsub.s32 0, %v2327
  %v2329 = vrot.slane %v2313, %v2328
  %2331 = vset.pattern.permute.xlu0 0
  %2332 = vperm.xlu0 %2331, %v98
  %v2333 = vpop.permute.xlu0 %2332
  %v2335 = vmul.f32 %v2317, %v2333
  %v2336 = vmul.f32 %v2321, %v2333
  %v2337 = vmul.f32 %v2325, %v2333
  %v2338 = vmul.f32 %v2329, %v2333
  %v2339 = vadd.f32 %v2294, %v2335
  %v2340 = vadd.f32 %v2295, %v2336
  %v2341 = vadd.f32 %v2296, %v2337
  %v2342 = vadd.f32 %v2297, %v2338
  %v2343 = vlaneseq
  %v2344 = vshrl.u32 %v2343, 7
  %v2345 = vsub.s32 1, %v2344
  %v2346 = vrot.slane %v2310, %v2345
  %v2347 = vlaneseq
  %v2348 = vshrl.u32 %v2347, 7
  %v2349 = vsub.s32 1, %v2348
  %v2350 = vrot.slane %v2311, %v2349
  %v2351 = vlaneseq
  %v2352 = vshrl.u32 %v2351, 7
  %v2353 = vsub.s32 1, %v2352
  %v2354 = vrot.slane %v2312, %v2353
  %v2355 = vlaneseq
  %v2356 = vshrl.u32 %v2355, 7
  %v2357 = vsub.s32 1, %v2356
  %v2358 = vrot.slane %v2313, %v2357
  %2360 = vset.pattern.permute.xlu0 0
  %2361 = vperm.xlu0 %2360, %v99
  %v2362 = vpop.permute.xlu0 %2361
  %v2364 = vmul.f32 %v2346, %v2362
  %v2365 = vmul.f32 %v2350, %v2362
  %v2366 = vmul.f32 %v2354, %v2362
  %v2367 = vmul.f32 %v2358, %v2362
  %v2368 = vadd.f32 %v2339, %v2364
  %v2369 = vadd.f32 %v2340, %v2365
  %v2370 = vadd.f32 %v2341, %v2366
  %v2371 = vadd.f32 %v2342, %v2367
  %v2372 = vlaneseq
  %v2373 = vshrl.u32 %v2372, 7
  %v2374 = vsub.s32 2, %v2373
  %v2375 = vrot.slane %v2310, %v2374
  %v2376 = vlaneseq
  %v2377 = vshrl.u32 %v2376, 7
  %v2378 = vsub.s32 2, %v2377
  %v2379 = vrot.slane %v2311, %v2378
  %v2380 = vlaneseq
  %v2381 = vshrl.u32 %v2380, 7
  %v2382 = vsub.s32 2, %v2381
  %v2383 = vrot.slane %v2312, %v2382
  %v2384 = vlaneseq
  %v2385 = vshrl.u32 %v2384, 7
  %v2386 = vsub.s32 2, %v2385
  %v2387 = vrot.slane %v2313, %v2386
  %2389 = vset.pattern.permute.xlu0 0
  %2390 = vperm.xlu0 %2389, %v100
  %v2391 = vpop.permute.xlu0 %2390
  %v2393 = vmul.f32 %v2375, %v2391
  %v2394 = vmul.f32 %v2379, %v2391
  %v2395 = vmul.f32 %v2383, %v2391
  %v2396 = vmul.f32 %v2387, %v2391
  %v2397 = vadd.f32 %v2368, %v2393
  %v2398 = vadd.f32 %v2369, %v2394
  %v2399 = vadd.f32 %v2370, %v2395
  %v2400 = vadd.f32 %v2371, %v2396
  %v2401 = vlaneseq
  %v2402 = vshrl.u32 %v2401, 7
  %v2403 = vsub.s32 3, %v2402
  %v2404 = vrot.slane %v2310, %v2403
  %v2405 = vlaneseq
  %v2406 = vshrl.u32 %v2405, 7
  %v2407 = vsub.s32 3, %v2406
  %v2408 = vrot.slane %v2311, %v2407
  %v2409 = vlaneseq
  %v2410 = vshrl.u32 %v2409, 7
  %v2411 = vsub.s32 3, %v2410
  %v2412 = vrot.slane %v2312, %v2411
  %v2413 = vlaneseq
  %v2414 = vshrl.u32 %v2413, 7
  %v2415 = vsub.s32 3, %v2414
  %v2416 = vrot.slane %v2313, %v2415
  %2418 = vset.pattern.permute.xlu0 0
  %2419 = vperm.xlu0 %2418, %v101
  %v2420 = vpop.permute.xlu0 %2419
  %v2422 = vmul.f32 %v2404, %v2420
  %v2423 = vmul.f32 %v2408, %v2420
  %v2424 = vmul.f32 %v2412, %v2420
  %v2425 = vmul.f32 %v2416, %v2420
  %v2426 = vadd.f32 %v2397, %v2422
  %v2427 = vadd.f32 %v2398, %v2423
  %v2428 = vadd.f32 %v2399, %v2424
  %v2429 = vadd.f32 %v2400, %v2425
  %2430 = vrot.lane.b32.xlu0 %v1514, 112
  %v2431 = vpop.permute.xlu0 %2430
  %2432 = vrot.lane.b32.xlu0 %v1516, 112
  %v2433 = vpop.permute.xlu0 %2432
  %2434 = vrot.lane.b32.xlu0 %v1515, 112
  %v2435 = vpop.permute.xlu0 %2434
  %2436 = vrot.lane.b32.xlu0 %v1517, 112
  %v2437 = vpop.permute.xlu0 %2436
  %v2438 = vsel %vm1172, %v2431, %v2435
  %v2439 = vsel %vm1172, %v2433, %v2437
  %v2440 = vsel %vm1172, %v2435, %v2431
  %v2441 = vsel %vm1172, %v2437, %v2433
  %v2442 = vsel %vm1183, %v2438, 0.0
  %v2443 = vsel %vm1184, %v2440, 0.0
  %v2444 = vsel %vm1183, %v2439, 0.0
  %v2445 = vsel %vm1184, %v2441, 0.0
  %v2446 = vlaneseq
  %v2447 = vshrl.u32 %v2446, 7
  %v2448 = vsub.s32 0, %v2447
  %v2449 = vrot.slane %v2442, %v2448
  %v2450 = vlaneseq
  %v2451 = vshrl.u32 %v2450, 7
  %v2452 = vsub.s32 0, %v2451
  %v2453 = vrot.slane %v2443, %v2452
  %v2454 = vlaneseq
  %v2455 = vshrl.u32 %v2454, 7
  %v2456 = vsub.s32 0, %v2455
  %v2457 = vrot.slane %v2444, %v2456
  %v2458 = vlaneseq
  %v2459 = vshrl.u32 %v2458, 7
  %v2460 = vsub.s32 0, %v2459
  %v2461 = vrot.slane %v2445, %v2460
  %2463 = vset.pattern.permute.xlu0 0
  %2464 = vperm.xlu0 %2463, %v102
  %v2465 = vpop.permute.xlu0 %2464
  %v2467 = vmul.f32 %v2449, %v2465
  %v2468 = vmul.f32 %v2453, %v2465
  %v2469 = vmul.f32 %v2457, %v2465
  %v2470 = vmul.f32 %v2461, %v2465
  %v2471 = vadd.f32 %v2426, %v2467
  %v2472 = vadd.f32 %v2427, %v2468
  %v2473 = vadd.f32 %v2428, %v2469
  %v2474 = vadd.f32 %v2429, %v2470
  %v2475 = vlaneseq
  %v2476 = vshrl.u32 %v2475, 7
  %v2477 = vsub.s32 1, %v2476
  %v2478 = vrot.slane %v2442, %v2477
  %v2479 = vlaneseq
  %v2480 = vshrl.u32 %v2479, 7
  %v2481 = vsub.s32 1, %v2480
  %v2482 = vrot.slane %v2443, %v2481
  %v2483 = vlaneseq
  %v2484 = vshrl.u32 %v2483, 7
  %v2485 = vsub.s32 1, %v2484
  %v2486 = vrot.slane %v2444, %v2485
  %v2487 = vlaneseq
  %v2488 = vshrl.u32 %v2487, 7
  %v2489 = vsub.s32 1, %v2488
  %v2490 = vrot.slane %v2445, %v2489
  %2492 = vset.pattern.permute.xlu0 0
  %2493 = vperm.xlu0 %2492, %v103
  %v2494 = vpop.permute.xlu0 %2493
  %v2496 = vmul.f32 %v2478, %v2494
  %v2497 = vmul.f32 %v2482, %v2494
  %v2498 = vmul.f32 %v2486, %v2494
  %v2499 = vmul.f32 %v2490, %v2494
  %v2500 = vadd.f32 %v2471, %v2496
  %v2501 = vadd.f32 %v2472, %v2497
  %v2502 = vadd.f32 %v2473, %v2498
  %v2503 = vadd.f32 %v2474, %v2499
  %v2504 = vlaneseq
  %v2505 = vshrl.u32 %v2504, 7
  %v2506 = vsub.s32 2, %v2505
  %v2507 = vrot.slane %v2442, %v2506
  %v2508 = vlaneseq
  %v2509 = vshrl.u32 %v2508, 7
  %v2510 = vsub.s32 2, %v2509
  %v2511 = vrot.slane %v2443, %v2510
  %v2512 = vlaneseq
  %v2513 = vshrl.u32 %v2512, 7
  %v2514 = vsub.s32 2, %v2513
  %v2515 = vrot.slane %v2444, %v2514
  %v2516 = vlaneseq
  %v2517 = vshrl.u32 %v2516, 7
  %v2518 = vsub.s32 2, %v2517
  %v2519 = vrot.slane %v2445, %v2518
  %2521 = vset.pattern.permute.xlu0 0
  %2522 = vperm.xlu0 %2521, %v104
  %v2523 = vpop.permute.xlu0 %2522
  %v2525 = vmul.f32 %v2507, %v2523
  %v2526 = vmul.f32 %v2511, %v2523
  %v2527 = vmul.f32 %v2515, %v2523
  %v2528 = vmul.f32 %v2519, %v2523
  %v2529 = vadd.f32 %v2500, %v2525
  %v2530 = vadd.f32 %v2501, %v2526
  %v2531 = vadd.f32 %v2502, %v2527
  %v2532 = vadd.f32 %v2503, %v2528
  %v2533 = vlaneseq
  %v2534 = vshrl.u32 %v2533, 7
  %v2535 = vsub.s32 3, %v2534
  %v2536 = vrot.slane %v2442, %v2535
  %v2537 = vlaneseq
  %v2538 = vshrl.u32 %v2537, 7
  %v2539 = vsub.s32 3, %v2538
  %v2540 = vrot.slane %v2443, %v2539
  %v2541 = vlaneseq
  %v2542 = vshrl.u32 %v2541, 7
  %v2543 = vsub.s32 3, %v2542
  %v2544 = vrot.slane %v2444, %v2543
  %v2545 = vlaneseq
  %v2546 = vshrl.u32 %v2545, 7
  %v2547 = vsub.s32 3, %v2546
  %v2548 = vrot.slane %v2445, %v2547
  %2550 = vset.pattern.permute.xlu0 0
  %2551 = vperm.xlu0 %2550, %v105
  %v2552 = vpop.permute.xlu0 %2551
  %v2554 = vmul.f32 %v2536, %v2552
  %v2555 = vmul.f32 %v2540, %v2552
  %v2556 = vmul.f32 %v2544, %v2552
  %v2557 = vmul.f32 %v2548, %v2552
  %v2558 = vadd.f32 %v2529, %v2554
  %v2559 = vadd.f32 %v2530, %v2555
  %v2560 = vadd.f32 %v2531, %v2556
  %v2561 = vadd.f32 %v2532, %v2557
  %2562 = vrot.lane.b32.xlu0 %v1514, 111
  %v2563 = vpop.permute.xlu0 %2562
  %2564 = vrot.lane.b32.xlu0 %v1516, 111
  %v2565 = vpop.permute.xlu0 %2564
  %2566 = vrot.lane.b32.xlu0 %v1515, 111
  %v2567 = vpop.permute.xlu0 %2566
  %2568 = vrot.lane.b32.xlu0 %v1517, 111
  %v2569 = vpop.permute.xlu0 %2568
  %v2570 = vsel %vm1313, %v2563, %v2567
  %v2571 = vsel %vm1313, %v2565, %v2569
  %v2572 = vsel %vm1313, %v2567, %v2563
  %v2573 = vsel %vm1313, %v2569, %v2565
  %v2574 = vsel %vm1324, %v2570, 0.0
  %v2575 = vsel %vm1325, %v2572, 0.0
  %v2576 = vsel %vm1324, %v2571, 0.0
  %v2577 = vsel %vm1325, %v2573, 0.0
  %v2578 = vlaneseq
  %v2579 = vshrl.u32 %v2578, 7
  %v2580 = vsub.s32 0, %v2579
  %v2581 = vrot.slane %v2574, %v2580
  %v2582 = vlaneseq
  %v2583 = vshrl.u32 %v2582, 7
  %v2584 = vsub.s32 0, %v2583
  %v2585 = vrot.slane %v2575, %v2584
  %v2586 = vlaneseq
  %v2587 = vshrl.u32 %v2586, 7
  %v2588 = vsub.s32 0, %v2587
  %v2589 = vrot.slane %v2576, %v2588
  %v2590 = vlaneseq
  %v2591 = vshrl.u32 %v2590, 7
  %v2592 = vsub.s32 0, %v2591
  %v2593 = vrot.slane %v2577, %v2592
  %2595 = vset.pattern.permute.xlu0 0
  %2596 = vperm.xlu0 %2595, %v106
  %v2597 = vpop.permute.xlu0 %2596
  %v2599 = vmul.f32 %v2581, %v2597
  %v2600 = vmul.f32 %v2585, %v2597
  %v2601 = vmul.f32 %v2589, %v2597
  %v2602 = vmul.f32 %v2593, %v2597
  %v2603 = vadd.f32 %v2558, %v2599
  %v2604 = vadd.f32 %v2559, %v2600
  %v2605 = vadd.f32 %v2560, %v2601
  %v2606 = vadd.f32 %v2561, %v2602
  %v2607 = vlaneseq
  %v2608 = vshrl.u32 %v2607, 7
  %v2609 = vsub.s32 1, %v2608
  %v2610 = vrot.slane %v2574, %v2609
  %v2611 = vlaneseq
  %v2612 = vshrl.u32 %v2611, 7
  %v2613 = vsub.s32 1, %v2612
  %v2614 = vrot.slane %v2575, %v2613
  %v2615 = vlaneseq
  %v2616 = vshrl.u32 %v2615, 7
  %v2617 = vsub.s32 1, %v2616
  %v2618 = vrot.slane %v2576, %v2617
  %v2619 = vlaneseq
  %v2620 = vshrl.u32 %v2619, 7
  %v2621 = vsub.s32 1, %v2620
  %v2622 = vrot.slane %v2577, %v2621
  %2624 = vset.pattern.permute.xlu0 0
  %2625 = vperm.xlu0 %2624, %v107
  %v2626 = vpop.permute.xlu0 %2625
  %v2628 = vmul.f32 %v2610, %v2626
  %v2629 = vmul.f32 %v2614, %v2626
  %v2630 = vmul.f32 %v2618, %v2626
  %v2631 = vmul.f32 %v2622, %v2626
  %v2632 = vadd.f32 %v2603, %v2628
  %v2633 = vadd.f32 %v2604, %v2629
  %v2634 = vadd.f32 %v2605, %v2630
  %v2635 = vadd.f32 %v2606, %v2631
  %v2636 = vlaneseq
  %v2637 = vshrl.u32 %v2636, 7
  %v2638 = vsub.s32 2, %v2637
  %v2639 = vrot.slane %v2574, %v2638
  %v2640 = vlaneseq
  %v2641 = vshrl.u32 %v2640, 7
  %v2642 = vsub.s32 2, %v2641
  %v2643 = vrot.slane %v2575, %v2642
  %v2644 = vlaneseq
  %v2645 = vshrl.u32 %v2644, 7
  %v2646 = vsub.s32 2, %v2645
  %v2647 = vrot.slane %v2576, %v2646
  %v2648 = vlaneseq
  %v2649 = vshrl.u32 %v2648, 7
  %v2650 = vsub.s32 2, %v2649
  %v2651 = vrot.slane %v2577, %v2650
  %2653 = vset.pattern.permute.xlu0 0
  %2654 = vperm.xlu0 %2653, %v108
  %v2655 = vpop.permute.xlu0 %2654
  %v2657 = vmul.f32 %v2639, %v2655
  %v2658 = vmul.f32 %v2643, %v2655
  %v2659 = vmul.f32 %v2647, %v2655
  %v2660 = vmul.f32 %v2651, %v2655
  %v2661 = vadd.f32 %v2632, %v2657
  %v2662 = vadd.f32 %v2633, %v2658
  %v2663 = vadd.f32 %v2634, %v2659
  %v2664 = vadd.f32 %v2635, %v2660
  %v2665 = vlaneseq
  %v2666 = vshrl.u32 %v2665, 7
  %v2667 = vsub.s32 3, %v2666
  %v2668 = vrot.slane %v2574, %v2667
  %v2669 = vlaneseq
  %v2670 = vshrl.u32 %v2669, 7
  %v2671 = vsub.s32 3, %v2670
  %v2672 = vrot.slane %v2575, %v2671
  %v2673 = vlaneseq
  %v2674 = vshrl.u32 %v2673, 7
  %v2675 = vsub.s32 3, %v2674
  %v2676 = vrot.slane %v2576, %v2675
  %v2677 = vlaneseq
  %v2678 = vshrl.u32 %v2677, 7
  %v2679 = vsub.s32 3, %v2678
  %v2680 = vrot.slane %v2577, %v2679
  %2682 = vset.pattern.permute.xlu0 0
  %2683 = vperm.xlu0 %2682, %v109
  %v2684 = vpop.permute.xlu0 %2683
  %v2686 = vmul.f32 %v2668, %v2684
  %v2687 = vmul.f32 %v2672, %v2684
  %v2688 = vmul.f32 %v2676, %v2684
  %v2689 = vmul.f32 %v2680, %v2684
  %v2690 = vadd.f32 %v2661, %v2686
  %v2691 = vadd.f32 %v2662, %v2687
  %v2692 = vadd.f32 %v2663, %v2688
  %v2693 = vadd.f32 %v2664, %v2689
  %v2694 = vld [vmem:[%s5] sm:$0xf]
  %2696 = vset.pattern.permute.xlu0 0
  %2697 = vperm.xlu0 %2696, %v2694
  %v2698 = vpop.permute.xlu0 %2697
  %v2700 = vadd.f32 %v2690, %v2698
  %v2701 = vadd.f32 %v2691, %v2698
  %v2702 = vadd.f32 %v2692, %v2698
  %v2703 = vadd.f32 %v2693, %v2698
  %2704 = vrot.lane.b32.xlu0 %v2700, 127
  %v2705 = vpop.permute.xlu0 %2704
  %2706 = vrot.lane.b32.xlu0 %v2702, 127
  %v2707 = vpop.permute.xlu0 %2706
  %2708 = vrot.lane.b32.xlu0 %v2701, 127
  %v2709 = vpop.permute.xlu0 %2708
  %2710 = vrot.lane.b32.xlu0 %v2703, 127
  %v2711 = vpop.permute.xlu0 %2710
  %v2712 = vsel %vm882, %v2705, %v2709
  %v2713 = vsel %vm882, %v2707, %v2711
  %v2714 = vsel %vm882, %v2709, %v2705
  %v2715 = vsel %vm882, %v2711, %v2707
  %v2716 = vmax.f32 %v2700, %v2712
  %v2717 = vmax.f32 %v2701, %v2714
  %v2718 = vmax.f32 %v2702, %v2713
  %v2719 = vmax.f32 %v2703, %v2715
  %2720 = vrot.lane.b32.xlu0 %v2700, 112
  %v2721 = vpop.permute.xlu0 %2720
  %2722 = vrot.lane.b32.xlu0 %v2702, 112
  %v2723 = vpop.permute.xlu0 %2722
  %2724 = vrot.lane.b32.xlu0 %v2701, 112
  %v2725 = vpop.permute.xlu0 %2724
  %2726 = vrot.lane.b32.xlu0 %v2703, 112
  %v2727 = vpop.permute.xlu0 %2726
  %v2728 = vsel %vm1172, %v2721, %v2725
  %v2729 = vsel %vm1172, %v2723, %v2727
  %v2730 = vsel %vm1172, %v2725, %v2721
  %v2731 = vsel %vm1172, %v2727, %v2723
  %2732 = vrot.lane.b32.xlu0 %v2700, 111
  %v2733 = vpop.permute.xlu0 %2732
  %2734 = vrot.lane.b32.xlu0 %v2702, 111
  %v2735 = vpop.permute.xlu0 %2734
  %2736 = vrot.lane.b32.xlu0 %v2701, 111
  %v2737 = vpop.permute.xlu0 %2736
  %2738 = vrot.lane.b32.xlu0 %v2703, 111
  %v2739 = vpop.permute.xlu0 %2738
  %v2740 = vsel %vm1313, %v2733, %v2737
  %v2741 = vsel %vm1313, %v2735, %v2739
  %v2742 = vsel %vm1313, %v2737, %v2733
  %v2743 = vsel %vm1313, %v2739, %v2735
  %v2744 = vmax.f32 %v2728, %v2740
  %v2745 = vmax.f32 %v2730, %v2742
  %v2746 = vmax.f32 %v2729, %v2741
  %v2747 = vmax.f32 %v2731, %v2743
  %v2748 = vmax.f32 %v2716, %v2744
  %v2749 = vmax.f32 %v2717, %v2745
  %v2750 = vmax.f32 %v2718, %v2746
  %v2751 = vmax.f32 %v2719, %v2747
  %2752 = vrot.lane.b32.xlu0 %v2748, 17
  %v2753 = vpop.permute.xlu0 %2752
  %2754 = vrot.lane.b32.xlu0 %v2750, 17
  %v2755 = vpop.permute.xlu0 %2754
  %2756 = vrot.lane.b32.xlu0 %v2749, 17
  %v2757 = vpop.permute.xlu0 %2756
  %2758 = vrot.lane.b32.xlu0 %v2751, 17
  %v2759 = vpop.permute.xlu0 %2758
  %v2760 = vsel %vm160, %v2753, %v2757
  %v2761 = vsel %vm160, %v2755, %v2759
  %v2762 = vsel %vm160, %v2757, %v2753
  %v2763 = vsel %vm160, %v2759, %v2755
  %vm2764 = vcmp.lt.s32.totalorder %v165, 15
  %vm2765 = vcmp.lt.s32.totalorder %v166, 15
  %vm2766 = vmand %vm169, %vm2764
  %vm2767 = vmand %vm170, %vm2765
  %vm2768 = vmand %vm2766, %vm175
  %vm2769 = vmand %vm2767, %vm176
  %vm2770 = vcmp.lt.s32.totalorder %v167, 15
  %vm2771 = vcmp.lt.s32.totalorder %v168, 15
  %vm2772 = vmand %vm2768, %vm2770
  %vm2773 = vmand %vm2769, %vm2771
  %v2774 = vsel %vm2772, 1, 0
  %v2775 = vsel %vm2773, 1, 0
  %vm2776 = vcmp.eq.s32.totalorder %v2774, 1
  %vm2777 = vcmp.eq.s32.totalorder %v2775, 1
  %v2778 = vsel %vm2776, %v2762, 0.0
  %v2779 = vsel %vm2777, %v2760, 0.0
  %v2780 = vsel %vm2776, %v2763, 0.0
  %v2781 = vsel %vm2777, %v2761, 0.0
  %v2782 = vlaneseq
  %v2783 = vshrl.u32 %v2782, 7
  %v2784 = vsub.s32 0, %v2783
  %v2785 = vrot.slane %v2778, %v2784
  %v2786 = vlaneseq
  %v2787 = vshrl.u32 %v2786, 7
  %v2788 = vsub.s32 0, %v2787
  %v2789 = vrot.slane %v2779, %v2788
  %v2790 = vlaneseq
  %v2791 = vshrl.u32 %v2790, 7
  %v2792 = vsub.s32 0, %v2791
  %v2793 = vrot.slane %v2780, %v2792
  %v2794 = vlaneseq
  %v2795 = vshrl.u32 %v2794, 7
  %v2796 = vsub.s32 0, %v2795
  %v2797 = vrot.slane %v2781, %v2796
  %2799 = vset.pattern.permute.xlu0 0
  %2800 = vperm.xlu0 %2799, %v110
  %v2801 = vpop.permute.xlu0 %2800
  %v2803 = vmul.f32 %v2785, %v2801
  %v2804 = vmul.f32 %v2789, %v2801
  %v2805 = vmul.f32 %v2793, %v2801
  %v2806 = vmul.f32 %v2797, %v2801
  %v2807 = vadd.f32 %v2803, 0.0
  %v2808 = vadd.f32 %v2804, 0.0
  %v2809 = vadd.f32 %v2805, 0.0
  %v2810 = vadd.f32 %v2806, 0.0
  %v2811 = vlaneseq
  %v2812 = vshrl.u32 %v2811, 7
  %v2813 = vsub.s32 1, %v2812
  %v2814 = vrot.slane %v2778, %v2813
  %v2815 = vlaneseq
  %v2816 = vshrl.u32 %v2815, 7
  %v2817 = vsub.s32 1, %v2816
  %v2818 = vrot.slane %v2779, %v2817
  %v2819 = vlaneseq
  %v2820 = vshrl.u32 %v2819, 7
  %v2821 = vsub.s32 1, %v2820
  %v2822 = vrot.slane %v2780, %v2821
  %v2823 = vlaneseq
  %v2824 = vshrl.u32 %v2823, 7
  %v2825 = vsub.s32 1, %v2824
  %v2826 = vrot.slane %v2781, %v2825
  %2828 = vset.pattern.permute.xlu0 0
  %2829 = vperm.xlu0 %2828, %v111
  %v2830 = vpop.permute.xlu0 %2829
  %v2832 = vmul.f32 %v2814, %v2830
  %v2833 = vmul.f32 %v2818, %v2830
  %v2834 = vmul.f32 %v2822, %v2830
  %v2835 = vmul.f32 %v2826, %v2830
  %v2836 = vadd.f32 %v2807, %v2832
  %v2837 = vadd.f32 %v2808, %v2833
  %v2838 = vadd.f32 %v2809, %v2834
  %v2839 = vadd.f32 %v2810, %v2835
  %v2840 = vlaneseq
  %v2841 = vshrl.u32 %v2840, 7
  %v2842 = vsub.s32 2, %v2841
  %v2843 = vrot.slane %v2778, %v2842
  %v2844 = vlaneseq
  %v2845 = vshrl.u32 %v2844, 7
  %v2846 = vsub.s32 2, %v2845
  %v2847 = vrot.slane %v2779, %v2846
  %v2848 = vlaneseq
  %v2849 = vshrl.u32 %v2848, 7
  %v2850 = vsub.s32 2, %v2849
  %v2851 = vrot.slane %v2780, %v2850
  %v2852 = vlaneseq
  %v2853 = vshrl.u32 %v2852, 7
  %v2854 = vsub.s32 2, %v2853
  %v2855 = vrot.slane %v2781, %v2854
  %2857 = vset.pattern.permute.xlu0 0
  %2858 = vperm.xlu0 %2857, %v112
  %v2859 = vpop.permute.xlu0 %2858
  %v2861 = vmul.f32 %v2843, %v2859
  %v2862 = vmul.f32 %v2847, %v2859
  %v2863 = vmul.f32 %v2851, %v2859
  %v2864 = vmul.f32 %v2855, %v2859
  %v2865 = vadd.f32 %v2836, %v2861
  %v2866 = vadd.f32 %v2837, %v2862
  %v2867 = vadd.f32 %v2838, %v2863
  %v2868 = vadd.f32 %v2839, %v2864
  %v2869 = vlaneseq
  %v2870 = vshrl.u32 %v2869, 7
  %v2871 = vsub.s32 3, %v2870
  %v2872 = vrot.slane %v2778, %v2871
  %v2873 = vlaneseq
  %v2874 = vshrl.u32 %v2873, 7
  %v2875 = vsub.s32 3, %v2874
  %v2876 = vrot.slane %v2779, %v2875
  %v2877 = vlaneseq
  %v2878 = vshrl.u32 %v2877, 7
  %v2879 = vsub.s32 3, %v2878
  %v2880 = vrot.slane %v2780, %v2879
  %v2881 = vlaneseq
  %v2882 = vshrl.u32 %v2881, 7
  %v2883 = vsub.s32 3, %v2882
  %v2884 = vrot.slane %v2781, %v2883
  %2886 = vset.pattern.permute.xlu0 0
  %2887 = vperm.xlu0 %2886, %v113
  %v2888 = vpop.permute.xlu0 %2887
  %v2890 = vmul.f32 %v2872, %v2888
  %v2891 = vmul.f32 %v2876, %v2888
  %v2892 = vmul.f32 %v2880, %v2888
  %v2893 = vmul.f32 %v2884, %v2888
  %v2894 = vadd.f32 %v2865, %v2890
  %v2895 = vadd.f32 %v2866, %v2891
  %v2896 = vadd.f32 %v2867, %v2892
  %v2897 = vadd.f32 %v2868, %v2893
  %2898 = vrot.lane.b32.xlu0 %v2748, 16
  %v2899 = vpop.permute.xlu0 %2898
  %2900 = vrot.lane.b32.xlu0 %v2750, 16
  %v2901 = vpop.permute.xlu0 %2900
  %2902 = vrot.lane.b32.xlu0 %v2749, 16
  %v2903 = vpop.permute.xlu0 %2902
  %2904 = vrot.lane.b32.xlu0 %v2751, 16
  %v2905 = vpop.permute.xlu0 %2904
  %v2906 = vsel %vm315, %v2899, %v2903
  %v2907 = vsel %vm315, %v2901, %v2905
  %v2908 = vsel %vm315, %v2903, %v2899
  %v2909 = vsel %vm315, %v2905, %v2901
  %vm2910 = vmand %vm2766, %vm320
  %vm2911 = vmand %vm2767, %vm321
  %vm2912 = vcmp.lt.s32.totalorder %v34, 15
  %vm2913 = vcmp.lt.s32.totalorder %v35, 15
  %vm2914 = vmand %vm2910, %vm2912
  %vm2915 = vmand %vm2911, %vm2913
  %v2916 = vsel %vm2914, 1, 0
  %v2917 = vsel %vm2915, 1, 0
  %vm2918 = vcmp.eq.s32.totalorder %v2916, 1
  %vm2919 = vcmp.eq.s32.totalorder %v2917, 1
  %v2920 = vsel %vm2918, %v2908, 0.0
  %v2921 = vsel %vm2919, %v2906, 0.0
  %v2922 = vsel %vm2918, %v2909, 0.0
  %v2923 = vsel %vm2919, %v2907, 0.0
  %v2924 = vlaneseq
  %v2925 = vshrl.u32 %v2924, 7
  %v2926 = vsub.s32 0, %v2925
  %v2927 = vrot.slane %v2920, %v2926
  %v2928 = vlaneseq
  %v2929 = vshrl.u32 %v2928, 7
  %v2930 = vsub.s32 0, %v2929
  %v2931 = vrot.slane %v2921, %v2930
  %v2932 = vlaneseq
  %v2933 = vshrl.u32 %v2932, 7
  %v2934 = vsub.s32 0, %v2933
  %v2935 = vrot.slane %v2922, %v2934
  %v2936 = vlaneseq
  %v2937 = vshrl.u32 %v2936, 7
  %v2938 = vsub.s32 0, %v2937
  %v2939 = vrot.slane %v2923, %v2938
  %2941 = vset.pattern.permute.xlu0 0
  %2942 = vperm.xlu0 %2941, %v114
  %v2943 = vpop.permute.xlu0 %2942
  %v2945 = vmul.f32 %v2927, %v2943
  %v2946 = vmul.f32 %v2931, %v2943
  %v2947 = vmul.f32 %v2935, %v2943
  %v2948 = vmul.f32 %v2939, %v2943
  %v2949 = vadd.f32 %v2894, %v2945
  %v2950 = vadd.f32 %v2895, %v2946
  %v2951 = vadd.f32 %v2896, %v2947
  %v2952 = vadd.f32 %v2897, %v2948
  %v2953 = vlaneseq
  %v2954 = vshrl.u32 %v2953, 7
  %v2955 = vsub.s32 1, %v2954
  %v2956 = vrot.slane %v2920, %v2955
  %v2957 = vlaneseq
  %v2958 = vshrl.u32 %v2957, 7
  %v2959 = vsub.s32 1, %v2958
  %v2960 = vrot.slane %v2921, %v2959
  %v2961 = vlaneseq
  %v2962 = vshrl.u32 %v2961, 7
  %v2963 = vsub.s32 1, %v2962
  %v2964 = vrot.slane %v2922, %v2963
  %v2965 = vlaneseq
  %v2966 = vshrl.u32 %v2965, 7
  %v2967 = vsub.s32 1, %v2966
  %v2968 = vrot.slane %v2923, %v2967
  %2970 = vset.pattern.permute.xlu0 0
  %2971 = vperm.xlu0 %2970, %v115
  %v2972 = vpop.permute.xlu0 %2971
  %v2974 = vmul.f32 %v2956, %v2972
  %v2975 = vmul.f32 %v2960, %v2972
  %v2976 = vmul.f32 %v2964, %v2972
  %v2977 = vmul.f32 %v2968, %v2972
  %v2978 = vadd.f32 %v2949, %v2974
  %v2979 = vadd.f32 %v2950, %v2975
  %v2980 = vadd.f32 %v2951, %v2976
  %v2981 = vadd.f32 %v2952, %v2977
  %v2982 = vlaneseq
  %v2983 = vshrl.u32 %v2982, 7
  %v2984 = vsub.s32 2, %v2983
  %v2985 = vrot.slane %v2920, %v2984
  %v2986 = vlaneseq
  %v2987 = vshrl.u32 %v2986, 7
  %v2988 = vsub.s32 2, %v2987
  %v2989 = vrot.slane %v2921, %v2988
  %v2990 = vlaneseq
  %v2991 = vshrl.u32 %v2990, 7
  %v2992 = vsub.s32 2, %v2991
  %v2993 = vrot.slane %v2922, %v2992
  %v2994 = vlaneseq
  %v2995 = vshrl.u32 %v2994, 7
  %v2996 = vsub.s32 2, %v2995
  %v2997 = vrot.slane %v2923, %v2996
  %2999 = vset.pattern.permute.xlu0 0
  %3000 = vperm.xlu0 %2999, %v116
  %v3001 = vpop.permute.xlu0 %3000
  %v3003 = vmul.f32 %v2985, %v3001
  %v3004 = vmul.f32 %v2989, %v3001
  %v3005 = vmul.f32 %v2993, %v3001
  %v3006 = vmul.f32 %v2997, %v3001
  %v3007 = vadd.f32 %v2978, %v3003
  %v3008 = vadd.f32 %v2979, %v3004
  %v3009 = vadd.f32 %v2980, %v3005
  %v3010 = vadd.f32 %v2981, %v3006
  %v3011 = vlaneseq
  %v3012 = vshrl.u32 %v3011, 7
  %v3013 = vsub.s32 3, %v3012
  %v3014 = vrot.slane %v2920, %v3013
  %v3015 = vlaneseq
  %v3016 = vshrl.u32 %v3015, 7
  %v3017 = vsub.s32 3, %v3016
  %v3018 = vrot.slane %v2921, %v3017
  %v3019 = vlaneseq
  %v3020 = vshrl.u32 %v3019, 7
  %v3021 = vsub.s32 3, %v3020
  %v3022 = vrot.slane %v2922, %v3021
  %v3023 = vlaneseq
  %v3024 = vshrl.u32 %v3023, 7
  %v3025 = vsub.s32 3, %v3024
  %v3026 = vrot.slane %v2923, %v3025
  %3028 = vset.pattern.permute.xlu0 0
  %3029 = vperm.xlu0 %3028, %v117
  %v3030 = vpop.permute.xlu0 %3029
  %v3032 = vmul.f32 %v3014, %v3030
  %v3033 = vmul.f32 %v3018, %v3030
  %v3034 = vmul.f32 %v3022, %v3030
  %v3035 = vmul.f32 %v3026, %v3030
  %v3036 = vadd.f32 %v3007, %v3032
  %v3037 = vadd.f32 %v3008, %v3033
  %v3038 = vadd.f32 %v3009, %v3034
  %v3039 = vadd.f32 %v3010, %v3035
  %3040 = vrot.lane.b32.xlu0 %v2748, 15
  %v3041 = vpop.permute.xlu0 %3040
  %3042 = vrot.lane.b32.xlu0 %v2750, 15
  %v3043 = vpop.permute.xlu0 %3042
  %3044 = vrot.lane.b32.xlu0 %v2749, 15
  %v3045 = vpop.permute.xlu0 %3044
  %3046 = vrot.lane.b32.xlu0 %v2751, 15
  %v3047 = vpop.permute.xlu0 %3046
  %v3048 = vsel %vm460, %v3041, %v3045
  %v3049 = vsel %vm460, %v3043, %v3047
  %v3050 = vsel %vm460, %v3045, %v3041
  %v3051 = vsel %vm460, %v3047, %v3043
  %vm3052 = vmand %vm2766, %vm467
  %vm3053 = vmand %vm2767, %vm468
  %vm3054 = vcmp.lt.s32.totalorder %v465, 15
  %vm3055 = vcmp.lt.s32.totalorder %v466, 15
  %vm3056 = vmand %vm3052, %vm3054
  %vm3057 = vmand %vm3053, %vm3055
  %v3058 = vsel %vm3056, 1, 0
  %v3059 = vsel %vm3057, 1, 0
  %vm3060 = vcmp.eq.s32.totalorder %v3058, 1
  %vm3061 = vcmp.eq.s32.totalorder %v3059, 1
  %v3062 = vsel %vm3060, %v3050, 0.0
  %v3063 = vsel %vm3061, %v3048, 0.0
  %v3064 = vsel %vm3060, %v3051, 0.0
  %v3065 = vsel %vm3061, %v3049, 0.0
  %v3066 = vlaneseq
  %v3067 = vshrl.u32 %v3066, 7
  %v3068 = vsub.s32 0, %v3067
  %v3069 = vrot.slane %v3062, %v3068
  %v3070 = vlaneseq
  %v3071 = vshrl.u32 %v3070, 7
  %v3072 = vsub.s32 0, %v3071
  %v3073 = vrot.slane %v3063, %v3072
  %v3074 = vlaneseq
  %v3075 = vshrl.u32 %v3074, 7
  %v3076 = vsub.s32 0, %v3075
  %v3077 = vrot.slane %v3064, %v3076
  %v3078 = vlaneseq
  %v3079 = vshrl.u32 %v3078, 7
  %v3080 = vsub.s32 0, %v3079
  %v3081 = vrot.slane %v3065, %v3080
  %3083 = vset.pattern.permute.xlu0 0
  %3084 = vperm.xlu0 %3083, %v118
  %v3085 = vpop.permute.xlu0 %3084
  %v3087 = vmul.f32 %v3069, %v3085
  %v3088 = vmul.f32 %v3073, %v3085
  %v3089 = vmul.f32 %v3077, %v3085
  %v3090 = vmul.f32 %v3081, %v3085
  %v3091 = vadd.f32 %v3036, %v3087
  %v3092 = vadd.f32 %v3037, %v3088
  %v3093 = vadd.f32 %v3038, %v3089
  %v3094 = vadd.f32 %v3039, %v3090
  %v3095 = vlaneseq
  %v3096 = vshrl.u32 %v3095, 7
  %v3097 = vsub.s32 1, %v3096
  %v3098 = vrot.slane %v3062, %v3097
  %v3099 = vlaneseq
  %v3100 = vshrl.u32 %v3099, 7
  %v3101 = vsub.s32 1, %v3100
  %v3102 = vrot.slane %v3063, %v3101
  %v3103 = vlaneseq
  %v3104 = vshrl.u32 %v3103, 7
  %v3105 = vsub.s32 1, %v3104
  %v3106 = vrot.slane %v3064, %v3105
  %v3107 = vlaneseq
  %v3108 = vshrl.u32 %v3107, 7
  %v3109 = vsub.s32 1, %v3108
  %v3110 = vrot.slane %v3065, %v3109
  %3112 = vset.pattern.permute.xlu0 0
  %3113 = vperm.xlu0 %3112, %v119
  %v3114 = vpop.permute.xlu0 %3113
  %v3116 = vmul.f32 %v3098, %v3114
  %v3117 = vmul.f32 %v3102, %v3114
  %v3118 = vmul.f32 %v3106, %v3114
  %v3119 = vmul.f32 %v3110, %v3114
  %v3120 = vadd.f32 %v3091, %v3116
  %v3121 = vadd.f32 %v3092, %v3117
  %v3122 = vadd.f32 %v3093, %v3118
  %v3123 = vadd.f32 %v3094, %v3119
  %v3124 = vlaneseq
  %v3125 = vshrl.u32 %v3124, 7
  %v3126 = vsub.s32 2, %v3125
  %v3127 = vrot.slane %v3062, %v3126
  %v3128 = vlaneseq
  %v3129 = vshrl.u32 %v3128, 7
  %v3130 = vsub.s32 2, %v3129
  %v3131 = vrot.slane %v3063, %v3130
  %v3132 = vlaneseq
  %v3133 = vshrl.u32 %v3132, 7
  %v3134 = vsub.s32 2, %v3133
  %v3135 = vrot.slane %v3064, %v3134
  %v3136 = vlaneseq
  %v3137 = vshrl.u32 %v3136, 7
  %v3138 = vsub.s32 2, %v3137
  %v3139 = vrot.slane %v3065, %v3138
  %3141 = vset.pattern.permute.xlu0 0
  %3142 = vperm.xlu0 %3141, %v120
  %v3143 = vpop.permute.xlu0 %3142
  %v3145 = vmul.f32 %v3127, %v3143
  %v3146 = vmul.f32 %v3131, %v3143
  %v3147 = vmul.f32 %v3135, %v3143
  %v3148 = vmul.f32 %v3139, %v3143
  %v3149 = vadd.f32 %v3120, %v3145
  %v3150 = vadd.f32 %v3121, %v3146
  %v3151 = vadd.f32 %v3122, %v3147
  %v3152 = vadd.f32 %v3123, %v3148
  %v3153 = vlaneseq
  %v3154 = vshrl.u32 %v3153, 7
  %v3155 = vsub.s32 3, %v3154
  %v3156 = vrot.slane %v3062, %v3155
  %v3157 = vlaneseq
  %v3158 = vshrl.u32 %v3157, 7
  %v3159 = vsub.s32 3, %v3158
  %v3160 = vrot.slane %v3063, %v3159
  %v3161 = vlaneseq
  %v3162 = vshrl.u32 %v3161, 7
  %v3163 = vsub.s32 3, %v3162
  %v3164 = vrot.slane %v3064, %v3163
  %v3165 = vlaneseq
  %v3166 = vshrl.u32 %v3165, 7
  %v3167 = vsub.s32 3, %v3166
  %v3168 = vrot.slane %v3065, %v3167
  %3170 = vset.pattern.permute.xlu0 0
  %3171 = vperm.xlu0 %3170, %v121
  %v3172 = vpop.permute.xlu0 %3171
  %v3174 = vmul.f32 %v3156, %v3172
  %v3175 = vmul.f32 %v3160, %v3172
  %v3176 = vmul.f32 %v3164, %v3172
  %v3177 = vmul.f32 %v3168, %v3172
  %v3178 = vadd.f32 %v3149, %v3174
  %v3179 = vadd.f32 %v3150, %v3175
  %v3180 = vadd.f32 %v3151, %v3176
  %v3181 = vadd.f32 %v3152, %v3177
  %3182 = vrot.lane.b32.xlu0 %v2748, 1
  %v3183 = vpop.permute.xlu0 %3182
  %3184 = vrot.lane.b32.xlu0 %v2750, 1
  %v3185 = vpop.permute.xlu0 %3184
  %3186 = vrot.lane.b32.xlu0 %v2749, 1
  %v3187 = vpop.permute.xlu0 %3186
  %3188 = vrot.lane.b32.xlu0 %v2751, 1
  %v3189 = vpop.permute.xlu0 %3188
  %v3190 = vsel %vm607, %v3183, %v3187
  %v3191 = vsel %vm607, %v3185, %v3189
  %v3192 = vsel %vm607, %v3187, %v3183
  %v3193 = vsel %vm607, %v3189, %v3185
  %vm3194 = vcmp.lt.s32.totalorder %v32, 15
  %vm3195 = vcmp.lt.s32.totalorder %v33, 15
  %vm3196 = vmand %vm612, %vm3194
  %vm3197 = vmand %vm613, %vm3195
  %vm3198 = vmand %vm3196, %vm175
  %vm3199 = vmand %vm3197, %vm176
  %vm3200 = vmand %vm3198, %vm2770
  %vm3201 = vmand %vm3199, %vm2771
  %v3202 = vsel %vm3200, 1, 0
  %v3203 = vsel %vm3201, 1, 0
  %vm3204 = vcmp.eq.s32.totalorder %v3202, 1
  %vm3205 = vcmp.eq.s32.totalorder %v3203, 1
  %v3206 = vsel %vm3204, %v3192, 0.0
  %v3207 = vsel %vm3205, %v3190, 0.0
  %v3208 = vsel %vm3204, %v3193, 0.0
  %v3209 = vsel %vm3205, %v3191, 0.0
  %v3210 = vlaneseq
  %v3211 = vshrl.u32 %v3210, 7
  %v3212 = vsub.s32 0, %v3211
  %v3213 = vrot.slane %v3206, %v3212
  %v3214 = vlaneseq
  %v3215 = vshrl.u32 %v3214, 7
  %v3216 = vsub.s32 0, %v3215
  %v3217 = vrot.slane %v3207, %v3216
  %v3218 = vlaneseq
  %v3219 = vshrl.u32 %v3218, 7
  %v3220 = vsub.s32 0, %v3219
  %v3221 = vrot.slane %v3208, %v3220
  %v3222 = vlaneseq
  %v3223 = vshrl.u32 %v3222, 7
  %v3224 = vsub.s32 0, %v3223
  %v3225 = vrot.slane %v3209, %v3224
  %3227 = vset.pattern.permute.xlu0 0
  %3228 = vperm.xlu0 %3227, %v122
  %v3229 = vpop.permute.xlu0 %3228
  %v3231 = vmul.f32 %v3213, %v3229
  %v3232 = vmul.f32 %v3217, %v3229
  %v3233 = vmul.f32 %v3221, %v3229
  %v3234 = vmul.f32 %v3225, %v3229
  %v3235 = vadd.f32 %v3178, %v3231
  %v3236 = vadd.f32 %v3179, %v3232
  %v3237 = vadd.f32 %v3180, %v3233
  %v3238 = vadd.f32 %v3181, %v3234
  %v3239 = vlaneseq
  %v3240 = vshrl.u32 %v3239, 7
  %v3241 = vsub.s32 1, %v3240
  %v3242 = vrot.slane %v3206, %v3241
  %v3243 = vlaneseq
  %v3244 = vshrl.u32 %v3243, 7
  %v3245 = vsub.s32 1, %v3244
  %v3246 = vrot.slane %v3207, %v3245
  %v3247 = vlaneseq
  %v3248 = vshrl.u32 %v3247, 7
  %v3249 = vsub.s32 1, %v3248
  %v3250 = vrot.slane %v3208, %v3249
  %v3251 = vlaneseq
  %v3252 = vshrl.u32 %v3251, 7
  %v3253 = vsub.s32 1, %v3252
  %v3254 = vrot.slane %v3209, %v3253
  %3256 = vset.pattern.permute.xlu0 0
  %3257 = vperm.xlu0 %3256, %v123
  %v3258 = vpop.permute.xlu0 %3257
  %v3260 = vmul.f32 %v3242, %v3258
  %v3261 = vmul.f32 %v3246, %v3258
  %v3262 = vmul.f32 %v3250, %v3258
  %v3263 = vmul.f32 %v3254, %v3258
  %v3264 = vadd.f32 %v3235, %v3260
  %v3265 = vadd.f32 %v3236, %v3261
  %v3266 = vadd.f32 %v3237, %v3262
  %v3267 = vadd.f32 %v3238, %v3263
  %v3268 = vlaneseq
  %v3269 = vshrl.u32 %v3268, 7
  %v3270 = vsub.s32 2, %v3269
  %v3271 = vrot.slane %v3206, %v3270
  %v3272 = vlaneseq
  %v3273 = vshrl.u32 %v3272, 7
  %v3274 = vsub.s32 2, %v3273
  %v3275 = vrot.slane %v3207, %v3274
  %v3276 = vlaneseq
  %v3277 = vshrl.u32 %v3276, 7
  %v3278 = vsub.s32 2, %v3277
  %v3279 = vrot.slane %v3208, %v3278
  %v3280 = vlaneseq
  %v3281 = vshrl.u32 %v3280, 7
  %v3282 = vsub.s32 2, %v3281
  %v3283 = vrot.slane %v3209, %v3282
  %3285 = vset.pattern.permute.xlu0 0
  %3286 = vperm.xlu0 %3285, %v124
  %v3287 = vpop.permute.xlu0 %3286
  %v3289 = vmul.f32 %v3271, %v3287
  %v3290 = vmul.f32 %v3275, %v3287
  %v3291 = vmul.f32 %v3279, %v3287
  %v3292 = vmul.f32 %v3283, %v3287
  %v3293 = vadd.f32 %v3264, %v3289
  %v3294 = vadd.f32 %v3265, %v3290
  %v3295 = vadd.f32 %v3266, %v3291
  %v3296 = vadd.f32 %v3267, %v3292
  %v3297 = vlaneseq
  %v3298 = vshrl.u32 %v3297, 7
  %v3299 = vsub.s32 3, %v3298
  %v3300 = vrot.slane %v3206, %v3299
  %v3301 = vlaneseq
  %v3302 = vshrl.u32 %v3301, 7
  %v3303 = vsub.s32 3, %v3302
  %v3304 = vrot.slane %v3207, %v3303
  %v3305 = vlaneseq
  %v3306 = vshrl.u32 %v3305, 7
  %v3307 = vsub.s32 3, %v3306
  %v3308 = vrot.slane %v3208, %v3307
  %v3309 = vlaneseq
  %v3310 = vshrl.u32 %v3309, 7
  %v3311 = vsub.s32 3, %v3310
  %v3312 = vrot.slane %v3209, %v3311
  %3314 = vset.pattern.permute.xlu0 0
  %3315 = vperm.xlu0 %3314, %v125
  %v3316 = vpop.permute.xlu0 %3315
  %v3318 = vmul.f32 %v3300, %v3316
  %v3319 = vmul.f32 %v3304, %v3316
  %v3320 = vmul.f32 %v3308, %v3316
  %v3321 = vmul.f32 %v3312, %v3316
  %v3322 = vadd.f32 %v3293, %v3318
  %v3323 = vadd.f32 %v3294, %v3319
  %v3324 = vadd.f32 %v3295, %v3320
  %v3325 = vadd.f32 %v3296, %v3321
  %vm3326 = vmand %vm3196, %vm320
  %vm3327 = vmand %vm3197, %vm321
  %vm3328 = vmand %vm3326, %vm2912
  %vm3329 = vmand %vm3327, %vm2913
  %v3330 = vsel %vm3328, 1, 0
  %v3331 = vsel %vm3329, 1, 0
  %vm3332 = vcmp.eq.s32.totalorder %v3330, 1
  %vm3333 = vcmp.eq.s32.totalorder %v3331, 1
  %v3334 = vsel %vm3332, %v2748, 0.0
  %v3335 = vsel %vm3333, %v2749, 0.0
  %v3336 = vsel %vm3332, %v2750, 0.0
  %v3337 = vsel %vm3333, %v2751, 0.0
  %v3338 = vlaneseq
  %v3339 = vshrl.u32 %v3338, 7
  %v3340 = vsub.s32 0, %v3339
  %v3341 = vrot.slane %v3334, %v3340
  %v3342 = vlaneseq
  %v3343 = vshrl.u32 %v3342, 7
  %v3344 = vsub.s32 0, %v3343
  %v3345 = vrot.slane %v3335, %v3344
  %v3346 = vlaneseq
  %v3347 = vshrl.u32 %v3346, 7
  %v3348 = vsub.s32 0, %v3347
  %v3349 = vrot.slane %v3336, %v3348
  %v3350 = vlaneseq
  %v3351 = vshrl.u32 %v3350, 7
  %v3352 = vsub.s32 0, %v3351
  %v3353 = vrot.slane %v3337, %v3352
  %3355 = vset.pattern.permute.xlu0 0
  %3356 = vperm.xlu0 %3355, %v126
  %v3357 = vpop.permute.xlu0 %3356
  %v3359 = vmul.f32 %v3341, %v3357
  %v3360 = vmul.f32 %v3345, %v3357
  %v3361 = vmul.f32 %v3349, %v3357
  %v3362 = vmul.f32 %v3353, %v3357
  %v3363 = vadd.f32 %v3322, %v3359
  %v3364 = vadd.f32 %v3323, %v3360
  %v3365 = vadd.f32 %v3324, %v3361
  %v3366 = vadd.f32 %v3325, %v3362
  %v3367 = vlaneseq
  %v3368 = vshrl.u32 %v3367, 7
  %v3369 = vsub.s32 1, %v3368
  %v3370 = vrot.slane %v3334, %v3369
  %v3371 = vlaneseq
  %v3372 = vshrl.u32 %v3371, 7
  %v3373 = vsub.s32 1, %v3372
  %v3374 = vrot.slane %v3335, %v3373
  %v3375 = vlaneseq
  %v3376 = vshrl.u32 %v3375, 7
  %v3377 = vsub.s32 1, %v3376
  %v3378 = vrot.slane %v3336, %v3377
  %v3379 = vlaneseq
  %v3380 = vshrl.u32 %v3379, 7
  %v3381 = vsub.s32 1, %v3380
  %v3382 = vrot.slane %v3337, %v3381
  %3384 = vset.pattern.permute.xlu0 0
  %3385 = vperm.xlu0 %3384, %v127
  %v3386 = vpop.permute.xlu0 %3385
  %v3388 = vmul.f32 %v3370, %v3386
  %v3389 = vmul.f32 %v3374, %v3386
  %v3390 = vmul.f32 %v3378, %v3386
  %v3391 = vmul.f32 %v3382, %v3386
  %v3392 = vadd.f32 %v3363, %v3388
  %v3393 = vadd.f32 %v3364, %v3389
  %v3394 = vadd.f32 %v3365, %v3390
  %v3395 = vadd.f32 %v3366, %v3391
  %v3396 = vlaneseq
  %v3397 = vshrl.u32 %v3396, 7
  %v3398 = vsub.s32 2, %v3397
  %v3399 = vrot.slane %v3334, %v3398
  %v3400 = vlaneseq
  %v3401 = vshrl.u32 %v3400, 7
  %v3402 = vsub.s32 2, %v3401
  %v3403 = vrot.slane %v3335, %v3402
  %v3404 = vlaneseq
  %v3405 = vshrl.u32 %v3404, 7
  %v3406 = vsub.s32 2, %v3405
  %v3407 = vrot.slane %v3336, %v3406
  %v3408 = vlaneseq
  %v3409 = vshrl.u32 %v3408, 7
  %v3410 = vsub.s32 2, %v3409
  %v3411 = vrot.slane %v3337, %v3410
  %3413 = vset.pattern.permute.xlu0 0
  %3414 = vperm.xlu0 %3413, %v128
  %v3415 = vpop.permute.xlu0 %3414
  %v3417 = vmul.f32 %v3399, %v3415
  %v3418 = vmul.f32 %v3403, %v3415
  %v3419 = vmul.f32 %v3407, %v3415
  %v3420 = vmul.f32 %v3411, %v3415
  %v3421 = vadd.f32 %v3392, %v3417
  %v3422 = vadd.f32 %v3393, %v3418
  %v3423 = vadd.f32 %v3394, %v3419
  %v3424 = vadd.f32 %v3395, %v3420
  %v3425 = vlaneseq
  %v3426 = vshrl.u32 %v3425, 7
  %v3427 = vsub.s32 3, %v3426
  %v3428 = vrot.slane %v3334, %v3427
  %v3429 = vlaneseq
  %v3430 = vshrl.u32 %v3429, 7
  %v3431 = vsub.s32 3, %v3430
  %v3432 = vrot.slane %v3335, %v3431
  %v3433 = vlaneseq
  %v3434 = vshrl.u32 %v3433, 7
  %v3435 = vsub.s32 3, %v3434
  %v3436 = vrot.slane %v3336, %v3435
  %v3437 = vlaneseq
  %v3438 = vshrl.u32 %v3437, 7
  %v3439 = vsub.s32 3, %v3438
  %v3440 = vrot.slane %v3337, %v3439
  %3442 = vset.pattern.permute.xlu0 0
  %3443 = vperm.xlu0 %3442, %v129
  %v3444 = vpop.permute.xlu0 %3443
  %v3446 = vmul.f32 %v3428, %v3444
  %v3447 = vmul.f32 %v3432, %v3444
  %v3448 = vmul.f32 %v3436, %v3444
  %v3449 = vmul.f32 %v3440, %v3444
  %v3450 = vadd.f32 %v3421, %v3446
  %v3451 = vadd.f32 %v3422, %v3447
  %v3452 = vadd.f32 %v3423, %v3448
  %v3453 = vadd.f32 %v3424, %v3449
  %3454 = vrot.lane.b32.xlu0 %v2748, 127
  %v3455 = vpop.permute.xlu0 %3454
  %3456 = vrot.lane.b32.xlu0 %v2750, 127
  %v3457 = vpop.permute.xlu0 %3456
  %3458 = vrot.lane.b32.xlu0 %v2749, 127
  %v3459 = vpop.permute.xlu0 %3458
  %3460 = vrot.lane.b32.xlu0 %v2751, 127
  %v3461 = vpop.permute.xlu0 %3460
  %v3462 = vsel %vm882, %v3455, %v3459
  %v3463 = vsel %vm882, %v3457, %v3461
  %v3464 = vsel %vm882, %v3459, %v3455
  %v3465 = vsel %vm882, %v3461, %v3457
  %vm3466 = vmand %vm3196, %vm467
  %vm3467 = vmand %vm3197, %vm468
  %vm3468 = vmand %vm3466, %vm3054
  %vm3469 = vmand %vm3467, %vm3055
  %v3470 = vsel %vm3468, 1, 0
  %v3471 = vsel %vm3469, 1, 0
  %vm3472 = vcmp.eq.s32.totalorder %v3470, 1
  %vm3473 = vcmp.eq.s32.totalorder %v3471, 1
  %v3474 = vsel %vm3472, %v3462, 0.0
  %v3475 = vsel %vm3473, %v3464, 0.0
  %v3476 = vsel %vm3472, %v3463, 0.0
  %v3477 = vsel %vm3473, %v3465, 0.0
  %v3478 = vlaneseq
  %v3479 = vshrl.u32 %v3478, 7
  %v3480 = vsub.s32 0, %v3479
  %v3481 = vrot.slane %v3474, %v3480
  %v3482 = vlaneseq
  %v3483 = vshrl.u32 %v3482, 7
  %v3484 = vsub.s32 0, %v3483
  %v3485 = vrot.slane %v3475, %v3484
  %v3486 = vlaneseq
  %v3487 = vshrl.u32 %v3486, 7
  %v3488 = vsub.s32 0, %v3487
  %v3489 = vrot.slane %v3476, %v3488
  %v3490 = vlaneseq
  %v3491 = vshrl.u32 %v3490, 7
  %v3492 = vsub.s32 0, %v3491
  %v3493 = vrot.slane %v3477, %v3492
  %3495 = vset.pattern.permute.xlu0 0
  %3496 = vperm.xlu0 %3495, %v130
  %v3497 = vpop.permute.xlu0 %3496
  %v3499 = vmul.f32 %v3481, %v3497
  %v3500 = vmul.f32 %v3485, %v3497
  %v3501 = vmul.f32 %v3489, %v3497
  %v3502 = vmul.f32 %v3493, %v3497
  %v3503 = vadd.f32 %v3450, %v3499
  %v3504 = vadd.f32 %v3451, %v3500
  %v3505 = vadd.f32 %v3452, %v3501
  %v3506 = vadd.f32 %v3453, %v3502
  %v3507 = vlaneseq
  %v3508 = vshrl.u32 %v3507, 7
  %v3509 = vsub.s32 1, %v3508
  %v3510 = vrot.slane %v3474, %v3509
  %v3511 = vlaneseq
  %v3512 = vshrl.u32 %v3511, 7
  %v3513 = vsub.s32 1, %v3512
  %v3514 = vrot.slane %v3475, %v3513
  %v3515 = vlaneseq
  %v3516 = vshrl.u32 %v3515, 7
  %v3517 = vsub.s32 1, %v3516
  %v3518 = vrot.slane %v3476, %v3517
  %v3519 = vlaneseq
  %v3520 = vshrl.u32 %v3519, 7
  %v3521 = vsub.s32 1, %v3520
  %v3522 = vrot.slane %v3477, %v3521
  %3524 = vset.pattern.permute.xlu0 0
  %3525 = vperm.xlu0 %3524, %v131
  %v3526 = vpop.permute.xlu0 %3525
  %v3528 = vmul.f32 %v3510, %v3526
  %v3529 = vmul.f32 %v3514, %v3526
  %v3530 = vmul.f32 %v3518, %v3526
  %v3531 = vmul.f32 %v3522, %v3526
  %v3532 = vadd.f32 %v3503, %v3528
  %v3533 = vadd.f32 %v3504, %v3529
  %v3534 = vadd.f32 %v3505, %v3530
  %v3535 = vadd.f32 %v3506, %v3531
  %v3536 = vlaneseq
  %v3537 = vshrl.u32 %v3536, 7
  %v3538 = vsub.s32 2, %v3537
  %v3539 = vrot.slane %v3474, %v3538
  %v3540 = vlaneseq
  %v3541 = vshrl.u32 %v3540, 7
  %v3542 = vsub.s32 2, %v3541
  %v3543 = vrot.slane %v3475, %v3542
  %v3544 = vlaneseq
  %v3545 = vshrl.u32 %v3544, 7
  %v3546 = vsub.s32 2, %v3545
  %v3547 = vrot.slane %v3476, %v3546
  %v3548 = vlaneseq
  %v3549 = vshrl.u32 %v3548, 7
  %v3550 = vsub.s32 2, %v3549
  %v3551 = vrot.slane %v3477, %v3550
  %3553 = vset.pattern.permute.xlu0 0
  %3554 = vperm.xlu0 %3553, %v132
  %v3555 = vpop.permute.xlu0 %3554
  %v3557 = vmul.f32 %v3539, %v3555
  %v3558 = vmul.f32 %v3543, %v3555
  %v3559 = vmul.f32 %v3547, %v3555
  %v3560 = vmul.f32 %v3551, %v3555
  %v3561 = vadd.f32 %v3532, %v3557
  %v3562 = vadd.f32 %v3533, %v3558
  %v3563 = vadd.f32 %v3534, %v3559
  %v3564 = vadd.f32 %v3535, %v3560
  %v3565 = vlaneseq
  %v3566 = vshrl.u32 %v3565, 7
  %v3567 = vsub.s32 3, %v3566
  %v3568 = vrot.slane %v3474, %v3567
  %v3569 = vlaneseq
  %v3570 = vshrl.u32 %v3569, 7
  %v3571 = vsub.s32 3, %v3570
  %v3572 = vrot.slane %v3475, %v3571
  %v3573 = vlaneseq
  %v3574 = vshrl.u32 %v3573, 7
  %v3575 = vsub.s32 3, %v3574
  %v3576 = vrot.slane %v3476, %v3575
  %v3577 = vlaneseq
  %v3578 = vshrl.u32 %v3577, 7
  %v3579 = vsub.s32 3, %v3578
  %v3580 = vrot.slane %v3477, %v3579
  %3582 = vset.pattern.permute.xlu0 0
  %3583 = vperm.xlu0 %3582, %v133
  %v3584 = vpop.permute.xlu0 %3583
  %v3586 = vmul.f32 %v3568, %v3584
  %v3587 = vmul.f32 %v3572, %v3584
  %v3588 = vmul.f32 %v3576, %v3584
  %v3589 = vmul.f32 %v3580, %v3584
  %v3590 = vadd.f32 %v3561, %v3586
  %v3591 = vadd.f32 %v3562, %v3587
  %v3592 = vadd.f32 %v3563, %v3588
  %v3593 = vadd.f32 %v3564, %v3589
  %3594 = vrot.lane.b32.xlu0 %v2748, 113
  %v3595 = vpop.permute.xlu0 %3594
  %3596 = vrot.lane.b32.xlu0 %v2750, 113
  %v3597 = vpop.permute.xlu0 %3596
  %3598 = vrot.lane.b32.xlu0 %v2749, 113
  %v3599 = vpop.permute.xlu0 %3598
  %3600 = vrot.lane.b32.xlu0 %v2751, 113
  %v3601 = vpop.permute.xlu0 %3600
  %v3602 = vsel %vm1023, %v3595, %v3599
  %v3603 = vsel %vm1023, %v3597, %v3601
  %v3604 = vsel %vm1023, %v3599, %v3595
  %v3605 = vsel %vm1023, %v3601, %v3597
  %vm3606 = vcmp.lt.s32.totalorder %v1028, 15
  %vm3607 = vcmp.lt.s32.totalorder %v1029, 15
  %vm3608 = vmand %vm1030, %vm3606
  %vm3609 = vmand %vm1031, %vm3607
  %vm3610 = vmand %vm3608, %vm175
  %vm3611 = vmand %vm3609, %vm176
  %vm3612 = vmand %vm3610, %vm2770
  %vm3613 = vmand %vm3611, %vm2771
  %v3614 = vsel %vm3612, 1, 0
  %v3615 = vsel %vm3613, 1, 0
  %vm3616 = vcmp.eq.s32.totalorder %v3614, 1
  %vm3617 = vcmp.eq.s32.totalorder %v3615, 1
  %v3618 = vsel %vm3616, %v3602, 0.0
  %v3619 = vsel %vm3617, %v3604, 0.0
  %v3620 = vsel %vm3616, %v3603, 0.0
  %v3621 = vsel %vm3617, %v3605, 0.0
  %v3622 = vlaneseq
  %v3623 = vshrl.u32 %v3622, 7
  %v3624 = vsub.s32 0, %v3623
  %v3625 = vrot.slane %v3618, %v3624
  %v3626 = vlaneseq
  %v3627 = vshrl.u32 %v3626, 7
  %v3628 = vsub.s32 0, %v3627
  %v3629 = vrot.slane %v3619, %v3628
  %v3630 = vlaneseq
  %v3631 = vshrl.u32 %v3630, 7
  %v3632 = vsub.s32 0, %v3631
  %v3633 = vrot.slane %v3620, %v3632
  %v3634 = vlaneseq
  %v3635 = vshrl.u32 %v3634, 7
  %v3636 = vsub.s32 0, %v3635
  %v3637 = vrot.slane %v3621, %v3636
  %3639 = vset.pattern.permute.xlu0 0
  %3640 = vperm.xlu0 %3639, %v134
  %v3641 = vpop.permute.xlu0 %3640
  %v3643 = vmul.f32 %v3625, %v3641
  %v3644 = vmul.f32 %v3629, %v3641
  %v3645 = vmul.f32 %v3633, %v3641
  %v3646 = vmul.f32 %v3637, %v3641
  %v3647 = vadd.f32 %v3590, %v3643
  %v3648 = vadd.f32 %v3591, %v3644
  %v3649 = vadd.f32 %v3592, %v3645
  %v3650 = vadd.f32 %v3593, %v3646
  %v3651 = vlaneseq
  %v3652 = vshrl.u32 %v3651, 7
  %v3653 = vsub.s32 1, %v3652
  %v3654 = vrot.slane %v3618, %v3653
  %v3655 = vlaneseq
  %v3656 = vshrl.u32 %v3655, 7
  %v3657 = vsub.s32 1, %v3656
  %v3658 = vrot.slane %v3619, %v3657
  %v3659 = vlaneseq
  %v3660 = vshrl.u32 %v3659, 7
  %v3661 = vsub.s32 1, %v3660
  %v3662 = vrot.slane %v3620, %v3661
  %v3663 = vlaneseq
  %v3664 = vshrl.u32 %v3663, 7
  %v3665 = vsub.s32 1, %v3664
  %v3666 = vrot.slane %v3621, %v3665
  %3668 = vset.pattern.permute.xlu0 0
  %3669 = vperm.xlu0 %3668, %v135
  %v3670 = vpop.permute.xlu0 %3669
  %v3672 = vmul.f32 %v3654, %v3670
  %v3673 = vmul.f32 %v3658, %v3670
  %v3674 = vmul.f32 %v3662, %v3670
  %v3675 = vmul.f32 %v3666, %v3670
  %v3676 = vadd.f32 %v3647, %v3672
  %v3677 = vadd.f32 %v3648, %v3673
  %v3678 = vadd.f32 %v3649, %v3674
  %v3679 = vadd.f32 %v3650, %v3675
  %v3680 = vlaneseq
  %v3681 = vshrl.u32 %v3680, 7
  %v3682 = vsub.s32 2, %v3681
  %v3683 = vrot.slane %v3618, %v3682
  %v3684 = vlaneseq
  %v3685 = vshrl.u32 %v3684, 7
  %v3686 = vsub.s32 2, %v3685
  %v3687 = vrot.slane %v3619, %v3686
  %v3688 = vlaneseq
  %v3689 = vshrl.u32 %v3688, 7
  %v3690 = vsub.s32 2, %v3689
  %v3691 = vrot.slane %v3620, %v3690
  %v3692 = vlaneseq
  %v3693 = vshrl.u32 %v3692, 7
  %v3694 = vsub.s32 2, %v3693
  %v3695 = vrot.slane %v3621, %v3694
  %3697 = vset.pattern.permute.xlu0 0
  %3698 = vperm.xlu0 %3697, %v136
  %v3699 = vpop.permute.xlu0 %3698
  %v3701 = vmul.f32 %v3683, %v3699
  %v3702 = vmul.f32 %v3687, %v3699
  %v3703 = vmul.f32 %v3691, %v3699
  %v3704 = vmul.f32 %v3695, %v3699
  %v3705 = vadd.f32 %v3676, %v3701
  %v3706 = vadd.f32 %v3677, %v3702
  %v3707 = vadd.f32 %v3678, %v3703
  %v3708 = vadd.f32 %v3679, %v3704
  %v3709 = vlaneseq
  %v3710 = vshrl.u32 %v3709, 7
  %v3711 = vsub.s32 3, %v3710
  %v3712 = vrot.slane %v3618, %v3711
  %v3713 = vlaneseq
  %v3714 = vshrl.u32 %v3713, 7
  %v3715 = vsub.s32 3, %v3714
  %v3716 = vrot.slane %v3619, %v3715
  %v3717 = vlaneseq
  %v3718 = vshrl.u32 %v3717, 7
  %v3719 = vsub.s32 3, %v3718
  %v3720 = vrot.slane %v3620, %v3719
  %v3721 = vlaneseq
  %v3722 = vshrl.u32 %v3721, 7
  %v3723 = vsub.s32 3, %v3722
  %v3724 = vrot.slane %v3621, %v3723
  %3726 = vset.pattern.permute.xlu0 0
  %3727 = vperm.xlu0 %3726, %v137
  %v3728 = vpop.permute.xlu0 %3727
  %v3730 = vmul.f32 %v3712, %v3728
  %v3731 = vmul.f32 %v3716, %v3728
  %v3732 = vmul.f32 %v3720, %v3728
  %v3733 = vmul.f32 %v3724, %v3728
  %v3734 = vadd.f32 %v3705, %v3730
  %v3735 = vadd.f32 %v3706, %v3731
  %v3736 = vadd.f32 %v3707, %v3732
  %v3737 = vadd.f32 %v3708, %v3733
  %3738 = vrot.lane.b32.xlu0 %v2748, 112
  %v3739 = vpop.permute.xlu0 %3738
  %3740 = vrot.lane.b32.xlu0 %v2750, 112
  %v3741 = vpop.permute.xlu0 %3740
  %3742 = vrot.lane.b32.xlu0 %v2749, 112
  %v3743 = vpop.permute.xlu0 %3742
  %3744 = vrot.lane.b32.xlu0 %v2751, 112
  %v3745 = vpop.permute.xlu0 %3744
  %v3746 = vsel %vm1172, %v3739, %v3743
  %v3747 = vsel %vm1172, %v3741, %v3745
  %v3748 = vsel %vm1172, %v3743, %v3739
  %v3749 = vsel %vm1172, %v3745, %v3741
  %vm3750 = vmand %vm3608, %vm320
  %vm3751 = vmand %vm3609, %vm321
  %vm3752 = vmand %vm3750, %vm2912
  %vm3753 = vmand %vm3751, %vm2913
  %v3754 = vsel %vm3752, 1, 0
  %v3755 = vsel %vm3753, 1, 0
  %vm3756 = vcmp.eq.s32.totalorder %v3754, 1
  %vm3757 = vcmp.eq.s32.totalorder %v3755, 1
  %v3758 = vsel %vm3756, %v3746, 0.0
  %v3759 = vsel %vm3757, %v3748, 0.0
  %v3760 = vsel %vm3756, %v3747, 0.0
  %v3761 = vsel %vm3757, %v3749, 0.0
  %v3762 = vlaneseq
  %v3763 = vshrl.u32 %v3762, 7
  %v3764 = vsub.s32 0, %v3763
  %v3765 = vrot.slane %v3758, %v3764
  %v3766 = vlaneseq
  %v3767 = vshrl.u32 %v3766, 7
  %v3768 = vsub.s32 0, %v3767
  %v3769 = vrot.slane %v3759, %v3768
  %v3770 = vlaneseq
  %v3771 = vshrl.u32 %v3770, 7
  %v3772 = vsub.s32 0, %v3771
  %v3773 = vrot.slane %v3760, %v3772
  %v3774 = vlaneseq
  %v3775 = vshrl.u32 %v3774, 7
  %v3776 = vsub.s32 0, %v3775
  %v3777 = vrot.slane %v3761, %v3776
  %3779 = vset.pattern.permute.xlu0 0
  %3780 = vperm.xlu0 %3779, %v138
  %v3781 = vpop.permute.xlu0 %3780
  %v3783 = vmul.f32 %v3765, %v3781
  %v3784 = vmul.f32 %v3769, %v3781
  %v3785 = vmul.f32 %v3773, %v3781
  %v3786 = vmul.f32 %v3777, %v3781
  %v3787 = vadd.f32 %v3734, %v3783
  %v3788 = vadd.f32 %v3735, %v3784
  %v3789 = vadd.f32 %v3736, %v3785
  %v3790 = vadd.f32 %v3737, %v3786
  %v3791 = vlaneseq
  %v3792 = vshrl.u32 %v3791, 7
  %v3793 = vsub.s32 1, %v3792
  %v3794 = vrot.slane %v3758, %v3793
  %v3795 = vlaneseq
  %v3796 = vshrl.u32 %v3795, 7
  %v3797 = vsub.s32 1, %v3796
  %v3798 = vrot.slane %v3759, %v3797
  %v3799 = vlaneseq
  %v3800 = vshrl.u32 %v3799, 7
  %v3801 = vsub.s32 1, %v3800
  %v3802 = vrot.slane %v3760, %v3801
  %v3803 = vlaneseq
  %v3804 = vshrl.u32 %v3803, 7
  %v3805 = vsub.s32 1, %v3804
  %v3806 = vrot.slane %v3761, %v3805
  %3808 = vset.pattern.permute.xlu0 0
  %3809 = vperm.xlu0 %3808, %v139
  %v3810 = vpop.permute.xlu0 %3809
  %v3812 = vmul.f32 %v3794, %v3810
  %v3813 = vmul.f32 %v3798, %v3810
  %v3814 = vmul.f32 %v3802, %v3810
  %v3815 = vmul.f32 %v3806, %v3810
  %v3816 = vadd.f32 %v3787, %v3812
  %v3817 = vadd.f32 %v3788, %v3813
  %v3818 = vadd.f32 %v3789, %v3814
  %v3819 = vadd.f32 %v3790, %v3815
  %v3820 = vlaneseq
  %v3821 = vshrl.u32 %v3820, 7
  %v3822 = vsub.s32 2, %v3821
  %v3823 = vrot.slane %v3758, %v3822
  %v3824 = vlaneseq
  %v3825 = vshrl.u32 %v3824, 7
  %v3826 = vsub.s32 2, %v3825
  %v3827 = vrot.slane %v3759, %v3826
  %v3828 = vlaneseq
  %v3829 = vshrl.u32 %v3828, 7
  %v3830 = vsub.s32 2, %v3829
  %v3831 = vrot.slane %v3760, %v3830
  %v3832 = vlaneseq
  %v3833 = vshrl.u32 %v3832, 7
  %v3834 = vsub.s32 2, %v3833
  %v3835 = vrot.slane %v3761, %v3834
  %3837 = vset.pattern.permute.xlu0 0
  %3838 = vperm.xlu0 %3837, %v140
  %v3839 = vpop.permute.xlu0 %3838
  %v3841 = vmul.f32 %v3823, %v3839
  %v3842 = vmul.f32 %v3827, %v3839
  %v3843 = vmul.f32 %v3831, %v3839
  %v3844 = vmul.f32 %v3835, %v3839
  %v3845 = vadd.f32 %v3816, %v3841
  %v3846 = vadd.f32 %v3817, %v3842
  %v3847 = vadd.f32 %v3818, %v3843
  %v3848 = vadd.f32 %v3819, %v3844
  %v3849 = vlaneseq
  %v3850 = vshrl.u32 %v3849, 7
  %v3851 = vsub.s32 3, %v3850
  %v3852 = vrot.slane %v3758, %v3851
  %v3853 = vlaneseq
  %v3854 = vshrl.u32 %v3853, 7
  %v3855 = vsub.s32 3, %v3854
  %v3856 = vrot.slane %v3759, %v3855
  %v3857 = vlaneseq
  %v3858 = vshrl.u32 %v3857, 7
  %v3859 = vsub.s32 3, %v3858
  %v3860 = vrot.slane %v3760, %v3859
  %v3861 = vlaneseq
  %v3862 = vshrl.u32 %v3861, 7
  %v3863 = vsub.s32 3, %v3862
  %v3864 = vrot.slane %v3761, %v3863
  %3866 = vset.pattern.permute.xlu0 0
  %3867 = vperm.xlu0 %3866, %v141
  %v3868 = vpop.permute.xlu0 %3867
  %v3870 = vmul.f32 %v3852, %v3868
  %v3871 = vmul.f32 %v3856, %v3868
  %v3872 = vmul.f32 %v3860, %v3868
  %v3873 = vmul.f32 %v3864, %v3868
  %v3874 = vadd.f32 %v3845, %v3870
  %v3875 = vadd.f32 %v3846, %v3871
  %v3876 = vadd.f32 %v3847, %v3872
  %v3877 = vadd.f32 %v3848, %v3873
  %3878 = vrot.lane.b32.xlu0 %v2748, 111
  %v3879 = vpop.permute.xlu0 %3878
  %3880 = vrot.lane.b32.xlu0 %v2750, 111
  %v3881 = vpop.permute.xlu0 %3880
  %3882 = vrot.lane.b32.xlu0 %v2749, 111
  %v3883 = vpop.permute.xlu0 %3882
  %3884 = vrot.lane.b32.xlu0 %v2751, 111
  %v3885 = vpop.permute.xlu0 %3884
  %v3886 = vsel %vm1313, %v3879, %v3883
  %v3887 = vsel %vm1313, %v3881, %v3885
  %v3888 = vsel %vm1313, %v3883, %v3879
  %v3889 = vsel %vm1313, %v3885, %v3881
  %vm3890 = vmand %vm3608, %vm467
  %vm3891 = vmand %vm3609, %vm468
  %vm3892 = vmand %vm3890, %vm3054
  %vm3893 = vmand %vm3891, %vm3055
  %v3894 = vsel %vm3892, 1, 0
  %v3895 = vsel %vm3893, 1, 0
  %vm3896 = vcmp.eq.s32.totalorder %v3894, 1
  %vm3897 = vcmp.eq.s32.totalorder %v3895, 1
  %v3898 = vsel %vm3896, %v3886, 0.0
  %v3899 = vsel %vm3897, %v3888, 0.0
  %v3900 = vsel %vm3896, %v3887, 0.0
  %v3901 = vsel %vm3897, %v3889, 0.0
  %v3902 = vlaneseq
  %v3903 = vshrl.u32 %v3902, 7
  %v3904 = vsub.s32 0, %v3903
  %v3905 = vrot.slane %v3898, %v3904
  %v3906 = vlaneseq
  %v3907 = vshrl.u32 %v3906, 7
  %v3908 = vsub.s32 0, %v3907
  %v3909 = vrot.slane %v3899, %v3908
  %v3910 = vlaneseq
  %v3911 = vshrl.u32 %v3910, 7
  %v3912 = vsub.s32 0, %v3911
  %v3913 = vrot.slane %v3900, %v3912
  %v3914 = vlaneseq
  %v3915 = vshrl.u32 %v3914, 7
  %v3916 = vsub.s32 0, %v3915
  %v3917 = vrot.slane %v3901, %v3916
  %3919 = vset.pattern.permute.xlu0 0
  %3920 = vperm.xlu0 %3919, %v142
  %v3921 = vpop.permute.xlu0 %3920
  %v3923 = vmul.f32 %v3905, %v3921
  %v3924 = vmul.f32 %v3909, %v3921
  %v3925 = vmul.f32 %v3913, %v3921
  %v3926 = vmul.f32 %v3917, %v3921
  %v3927 = vadd.f32 %v3874, %v3923
  %v3928 = vadd.f32 %v3875, %v3924
  %v3929 = vadd.f32 %v3876, %v3925
  %v3930 = vadd.f32 %v3877, %v3926
  %v3931 = vlaneseq
  %v3932 = vshrl.u32 %v3931, 7
  %v3933 = vsub.s32 1, %v3932
  %v3934 = vrot.slane %v3898, %v3933
  %v3935 = vlaneseq
  %v3936 = vshrl.u32 %v3935, 7
  %v3937 = vsub.s32 1, %v3936
  %v3938 = vrot.slane %v3899, %v3937
  %v3939 = vlaneseq
  %v3940 = vshrl.u32 %v3939, 7
  %v3941 = vsub.s32 1, %v3940
  %v3942 = vrot.slane %v3900, %v3941
  %v3943 = vlaneseq
  %v3944 = vshrl.u32 %v3943, 7
  %v3945 = vsub.s32 1, %v3944
  %v3946 = vrot.slane %v3901, %v3945
  %3948 = vset.pattern.permute.xlu0 0
  %3949 = vperm.xlu0 %3948, %v143
  %v3950 = vpop.permute.xlu0 %3949
  %v3952 = vmul.f32 %v3934, %v3950
  %v3953 = vmul.f32 %v3938, %v3950
  %v3954 = vmul.f32 %v3942, %v3950
  %v3955 = vmul.f32 %v3946, %v3950
  %v3956 = vadd.f32 %v3927, %v3952
  %v3957 = vadd.f32 %v3928, %v3953
  %v3958 = vadd.f32 %v3929, %v3954
  %v3959 = vadd.f32 %v3930, %v3955
  %v3960 = vlaneseq
  %v3961 = vshrl.u32 %v3960, 7
  %v3962 = vsub.s32 2, %v3961
  %v3963 = vrot.slane %v3898, %v3962
  %v3964 = vlaneseq
  %v3965 = vshrl.u32 %v3964, 7
  %v3966 = vsub.s32 2, %v3965
  %v3967 = vrot.slane %v3899, %v3966
  %v3968 = vlaneseq
  %v3969 = vshrl.u32 %v3968, 7
  %v3970 = vsub.s32 2, %v3969
  %v3971 = vrot.slane %v3900, %v3970
  %v3972 = vlaneseq
  %v3973 = vshrl.u32 %v3972, 7
  %v3974 = vsub.s32 2, %v3973
  %v3975 = vrot.slane %v3901, %v3974
  %3977 = vset.pattern.permute.xlu0 0
  %3978 = vperm.xlu0 %3977, %v144
  %v3979 = vpop.permute.xlu0 %3978
  %v3981 = vmul.f32 %v3963, %v3979
  %v3982 = vmul.f32 %v3967, %v3979
  %v3983 = vmul.f32 %v3971, %v3979
  %v3984 = vmul.f32 %v3975, %v3979
  %v3985 = vadd.f32 %v3956, %v3981
  %v3986 = vadd.f32 %v3957, %v3982
  %v3987 = vadd.f32 %v3958, %v3983
  %v3988 = vadd.f32 %v3959, %v3984
  %v3989 = vlaneseq
  %v3990 = vshrl.u32 %v3989, 7
  %v3991 = vsub.s32 3, %v3990
  %v3992 = vrot.slane %v3898, %v3991
  %v3993 = vlaneseq
  %v3994 = vshrl.u32 %v3993, 7
  %v3995 = vsub.s32 3, %v3994
  %v3996 = vrot.slane %v3899, %v3995
  %v3997 = vlaneseq
  %v3998 = vshrl.u32 %v3997, 7
  %v3999 = vsub.s32 3, %v3998
  %v4000 = vrot.slane %v3900, %v3999
  %v4001 = vlaneseq
  %v4002 = vshrl.u32 %v4001, 7
  %v4003 = vsub.s32 3, %v4002
  %v4004 = vrot.slane %v3901, %v4003
  %4006 = vset.pattern.permute.xlu0 0
  %4007 = vperm.xlu0 %4006, %v145
  %v4008 = vpop.permute.xlu0 %4007
  %v4010 = vmul.f32 %v3992, %v4008
  %v4011 = vmul.f32 %v3996, %v4008
  %v4012 = vmul.f32 %v4000, %v4008
  %v4013 = vmul.f32 %v4004, %v4008
  %v4014 = vadd.f32 %v3985, %v4010
  %v4015 = vadd.f32 %v3986, %v4011
  %v4016 = vadd.f32 %v3987, %v4012
  %v4017 = vadd.f32 %v3988, %v4013
  %v4018 = vld [vmem:[%s7] sm:$0xf]
  %4020 = vset.pattern.permute.xlu0 0
  %4021 = vperm.xlu0 %4020, %v4018
  %v4022 = vpop.permute.xlu0 %4021
  %v4024 = vadd.f32 %v4014, %v4022
  %v4025 = vadd.f32 %v4015, %v4022
  %v4026 = vadd.f32 %v4016, %v4022
  %v4027 = vadd.f32 %v4017, %v4022
  %vm4028 = vcmp.ge.s32.totalorder %v30, 0
  %vm4029 = vcmp.ge.s32.totalorder %v31, 0
  %vm4030 = vcmp.lt.s32.totalorder %v31, 15
  %vm4031 = vmand %vm4028, %vm460
  %vm4032 = vmand %vm4029, %vm4030
  %v4033 = vsel %vm4031, 1, 0
  %v4034 = vsel %vm4032, 1, 0
  %vm4035 = vcmp.eq.s32.totalorder %v4033, 1
  %vm4036 = vcmp.eq.s32.totalorder %v4034, 1
  %v4037 = vsel %vm4035, %v4024, 0.0
  %v4038 = vsel %vm4036, %v4025, 0.0
  %v4039 = vsel %vm4035, %v4026, 0.0
  %v4040 = vsel %vm4036, %v4027, 0.0
  %v4041 = vadd.f32 %v4037, 0.0
  %v4042 = vadd.f32 %v4038, 0.0
  %v4043 = vadd.f32 %v4039, 0.0
  %v4044 = vadd.f32 %v4040, 0.0
  %4045 = vrot.lane.b32.xlu0 %v4024, 127
  %v4046 = vpop.permute.xlu0 %4045
  %4047 = vrot.lane.b32.xlu0 %v4026, 127
  %v4048 = vpop.permute.xlu0 %4047
  %4049 = vrot.lane.b32.xlu0 %v4025, 127
  %v4050 = vpop.permute.xlu0 %4049
  %4051 = vrot.lane.b32.xlu0 %v4027, 127
  %v4052 = vpop.permute.xlu0 %4051
  %v4053 = vsel %vm882, %v4046, %v4050
  %v4054 = vsel %vm882, %v4048, %v4052
  %v4055 = vsel %vm882, %v4050, %v4046
  %v4056 = vsel %vm882, %v4052, %v4048
  %vm4057 = vcmp.ge.s32.totalorder %v30, 15
  %vm4058 = vcmp.ge.s32.totalorder %v31, 15
  %vm4059 = vcmp.lt.s32.totalorder %v30, 30
  %vm4060 = vcmp.lt.s32.totalorder %v31, 30
  %vm4061 = vmand %vm4057, %vm4059
  %vm4062 = vmand %vm4058, %vm4060
  %v4063 = vsel %vm4061, 1, 0
  %v4064 = vsel %vm4062, 1, 0
  %vm4065 = vcmp.eq.s32.totalorder %v4063, 1
  %vm4066 = vcmp.eq.s32.totalorder %v4064, 1
  %v4067 = vsel %vm4065, %v4053, 0.0
  %v4068 = vsel %vm4066, %v4055, 0.0
  %v4069 = vsel %vm4065, %v4054, 0.0
  %v4070 = vsel %vm4066, %v4056, 0.0
  %v4071 = vadd.f32 %v4041, %v4067
  %v4072 = vadd.f32 %v4042, %v4068
  %v4073 = vadd.f32 %v4043, %v4069
  %v4074 = vadd.f32 %v4044, %v4070
  %4075 = vrot.lane.b32.xlu0 %v4024, 126
  %v4076 = vpop.permute.xlu0 %4075
  %4077 = vrot.lane.b32.xlu0 %v4026, 126
  %v4078 = vpop.permute.xlu0 %4077
  %4079 = vrot.lane.b32.xlu0 %v4025, 126
  %v4080 = vpop.permute.xlu0 %4079
  %4081 = vrot.lane.b32.xlu0 %v4027, 126
  %v4082 = vpop.permute.xlu0 %4081
  %vm4083 = vcmp.lt.s32.totalorder %v30, 126
  %v4084 = vsel %vm4083, %v4076, %v4080
  %v4085 = vsel %vm4083, %v4078, %v4082
  %v4086 = vsel %vm4083, %v4080, %v4076
  %v4087 = vsel %vm4083, %v4082, %v4078
  %vm4088 = vcmp.ge.s32.totalorder %v30, 30
  %vm4089 = vcmp.ge.s32.totalorder %v31, 30
  %vm4090 = vcmp.lt.s32.totalorder %v30, 45
  %vm4091 = vcmp.lt.s32.totalorder %v31, 45
  %vm4092 = vmand %vm4088, %vm4090
  %vm4093 = vmand %vm4089, %vm4091
  %v4094 = vsel %vm4092, 1, 0
  %v4095 = vsel %vm4093, 1, 0
  %vm4096 = vcmp.eq.s32.totalorder %v4094, 1
  %vm4097 = vcmp.eq.s32.totalorder %v4095, 1
  %v4098 = vsel %vm4096, %v4084, 0.0
  %v4099 = vsel %vm4097, %v4086, 0.0
  %v4100 = vsel %vm4096, %v4085, 0.0
  %v4101 = vsel %vm4097, %v4087, 0.0
  %v4102 = vadd.f32 %v4071, %v4098
  %v4103 = vadd.f32 %v4072, %v4099
  %v4104 = vadd.f32 %v4073, %v4100
  %v4105 = vadd.f32 %v4074, %v4101
  %4106 = vrot.lane.b32.xlu0 %v4024, 125
  %v4107 = vpop.permute.xlu0 %4106
  %4108 = vrot.lane.b32.xlu0 %v4026, 125
  %v4109 = vpop.permute.xlu0 %4108
  %4110 = vrot.lane.b32.xlu0 %v4025, 125
  %v4111 = vpop.permute.xlu0 %4110
  %4112 = vrot.lane.b32.xlu0 %v4027, 125
  %v4113 = vpop.permute.xlu0 %4112
  %vm4114 = vcmp.lt.s32.totalorder %v30, 125
  %v4115 = vsel %vm4114, %v4107, %v4111
  %v4116 = vsel %vm4114, %v4109, %v4113
  %v4117 = vsel %vm4114, %v4111, %v4107
  %v4118 = vsel %vm4114, %v4113, %v4109
  %vm4119 = vcmp.ge.s32.totalorder %v30, 45
  %vm4120 = vcmp.ge.s32.totalorder %v31, 45
  %vm4121 = vcmp.lt.s32.totalorder %v30, 60
  %vm4122 = vcmp.lt.s32.totalorder %v31, 60
  %vm4123 = vmand %vm4119, %vm4121
  %vm4124 = vmand %vm4120, %vm4122
  %v4125 = vsel %vm4123, 1, 0
  %v4126 = vsel %vm4124, 1, 0
  %vm4127 = vcmp.eq.s32.totalorder %v4125, 1
  %vm4128 = vcmp.eq.s32.totalorder %v4126, 1
  %v4129 = vsel %vm4127, %v4115, 0.0
  %v4130 = vsel %vm4128, %v4117, 0.0
  %v4131 = vsel %vm4127, %v4116, 0.0
  %v4132 = vsel %vm4128, %v4118, 0.0
  %v4133 = vadd.f32 %v4102, %v4129
  %v4134 = vadd.f32 %v4103, %v4130
  %v4135 = vadd.f32 %v4104, %v4131
  %v4136 = vadd.f32 %v4105, %v4132
  %4137 = vrot.lane.b32.xlu0 %v4024, 124
  %v4138 = vpop.permute.xlu0 %4137
  %4139 = vrot.lane.b32.xlu0 %v4026, 124
  %v4140 = vpop.permute.xlu0 %4139
  %4141 = vrot.lane.b32.xlu0 %v4025, 124
  %v4142 = vpop.permute.xlu0 %4141
  %4143 = vrot.lane.b32.xlu0 %v4027, 124
  %v4144 = vpop.permute.xlu0 %4143
  %vm4145 = vcmp.lt.s32.totalorder %v30, 124
  %v4146 = vsel %vm4145, %v4138, %v4142
  %v4147 = vsel %vm4145, %v4140, %v4144
  %v4148 = vsel %vm4145, %v4142, %v4138
  %v4149 = vsel %vm4145, %v4144, %v4140
  %vm4150 = vcmp.ge.s32.totalorder %v30, 60
  %vm4151 = vcmp.ge.s32.totalorder %v31, 60
  %vm4152 = vcmp.lt.s32.totalorder %v30, 75
  %vm4153 = vcmp.lt.s32.totalorder %v31, 75
  %vm4154 = vmand %vm4150, %vm4152
  %vm4155 = vmand %vm4151, %vm4153
  %v4156 = vsel %vm4154, 1, 0
  %v4157 = vsel %vm4155, 1, 0
  %vm4158 = vcmp.eq.s32.totalorder %v4156, 1
  %vm4159 = vcmp.eq.s32.totalorder %v4157, 1
  %v4160 = vsel %vm4158, %v4146, 0.0
  %v4161 = vsel %vm4159, %v4148, 0.0
  %v4162 = vsel %vm4158, %v4147, 0.0
  %v4163 = vsel %vm4159, %v4149, 0.0
  %v4164 = vadd.f32 %v4133, %v4160
  %v4165 = vadd.f32 %v4134, %v4161
  %v4166 = vadd.f32 %v4135, %v4162
  %v4167 = vadd.f32 %v4136, %v4163
  %4168 = vrot.lane.b32.xlu0 %v4024, 123
  %v4169 = vpop.permute.xlu0 %4168
  %4170 = vrot.lane.b32.xlu0 %v4026, 123
  %v4171 = vpop.permute.xlu0 %4170
  %4172 = vrot.lane.b32.xlu0 %v4025, 123
  %v4173 = vpop.permute.xlu0 %4172
  %4174 = vrot.lane.b32.xlu0 %v4027, 123
  %v4175 = vpop.permute.xlu0 %4174
  %vm4176 = vcmp.lt.s32.totalorder %v30, 123
  %v4177 = vsel %vm4176, %v4169, %v4173
  %v4178 = vsel %vm4176, %v4171, %v4175
  %v4179 = vsel %vm4176, %v4173, %v4169
  %v4180 = vsel %vm4176, %v4175, %v4171
  %vm4181 = vcmp.ge.s32.totalorder %v30, 75
  %vm4182 = vcmp.ge.s32.totalorder %v31, 75
  %vm4183 = vcmp.lt.s32.totalorder %v30, 90
  %vm4184 = vcmp.lt.s32.totalorder %v31, 90
  %vm4185 = vmand %vm4181, %vm4183
  %vm4186 = vmand %vm4182, %vm4184
  %v4187 = vsel %vm4185, 1, 0
  %v4188 = vsel %vm4186, 1, 0
  %vm4189 = vcmp.eq.s32.totalorder %v4187, 1
  %vm4190 = vcmp.eq.s32.totalorder %v4188, 1
  %v4191 = vsel %vm4189, %v4177, 0.0
  %v4192 = vsel %vm4190, %v4179, 0.0
  %v4193 = vsel %vm4189, %v4178, 0.0
  %v4194 = vsel %vm4190, %v4180, 0.0
  %v4195 = vadd.f32 %v4164, %v4191
  %v4196 = vadd.f32 %v4165, %v4192
  %v4197 = vadd.f32 %v4166, %v4193
  %v4198 = vadd.f32 %v4167, %v4194
  %4199 = vrot.lane.b32.xlu0 %v4024, 122
  %v4200 = vpop.permute.xlu0 %4199
  %4201 = vrot.lane.b32.xlu0 %v4026, 122
  %v4202 = vpop.permute.xlu0 %4201
  %4203 = vrot.lane.b32.xlu0 %v4025, 122
  %v4204 = vpop.permute.xlu0 %4203
  %4205 = vrot.lane.b32.xlu0 %v4027, 122
  %v4206 = vpop.permute.xlu0 %4205
  %vm4207 = vcmp.lt.s32.totalorder %v30, 122
  %v4208 = vsel %vm4207, %v4200, %v4204
  %v4209 = vsel %vm4207, %v4202, %v4206
  %v4210 = vsel %vm4207, %v4204, %v4200
  %v4211 = vsel %vm4207, %v4206, %v4202
  %vm4212 = vcmp.ge.s32.totalorder %v30, 90
  %vm4213 = vcmp.ge.s32.totalorder %v31, 90
  %vm4214 = vcmp.lt.s32.totalorder %v30, 105
  %vm4215 = vcmp.lt.s32.totalorder %v31, 105
  %vm4216 = vmand %vm4212, %vm4214
  %vm4217 = vmand %vm4213, %vm4215
  %v4218 = vsel %vm4216, 1, 0
  %v4219 = vsel %vm4217, 1, 0
  %vm4220 = vcmp.eq.s32.totalorder %v4218, 1
  %vm4221 = vcmp.eq.s32.totalorder %v4219, 1
  %v4222 = vsel %vm4220, %v4208, 0.0
  %v4223 = vsel %vm4221, %v4210, 0.0
  %v4224 = vsel %vm4220, %v4209, 0.0
  %v4225 = vsel %vm4221, %v4211, 0.0
  %v4226 = vadd.f32 %v4195, %v4222
  %v4227 = vadd.f32 %v4196, %v4223
  %v4228 = vadd.f32 %v4197, %v4224
  %v4229 = vadd.f32 %v4198, %v4225
  %4230 = vrot.lane.b32.xlu0 %v4024, 121
  %v4231 = vpop.permute.xlu0 %4230
  %4232 = vrot.lane.b32.xlu0 %v4026, 121
  %v4233 = vpop.permute.xlu0 %4232
  %4234 = vrot.lane.b32.xlu0 %v4025, 121
  %v4235 = vpop.permute.xlu0 %4234
  %4236 = vrot.lane.b32.xlu0 %v4027, 121
  %v4237 = vpop.permute.xlu0 %4236
  %vm4238 = vcmp.lt.s32.totalorder %v30, 121
  %v4239 = vsel %vm4238, %v4231, %v4235
  %v4240 = vsel %vm4238, %v4233, %v4237
  %v4241 = vsel %vm4238, %v4235, %v4231
  %v4242 = vsel %vm4238, %v4237, %v4233
  %vm4243 = vcmp.ge.s32.totalorder %v30, 105
  %vm4244 = vcmp.ge.s32.totalorder %v31, 105
  %vm4245 = vcmp.lt.s32.totalorder %v30, 120
  %vm4246 = vcmp.lt.s32.totalorder %v31, 120
  %vm4247 = vmand %vm4243, %vm4245
  %vm4248 = vmand %vm4244, %vm4246
  %v4249 = vsel %vm4247, 1, 0
  %v4250 = vsel %vm4248, 1, 0
  %vm4251 = vcmp.eq.s32.totalorder %v4249, 1
  %vm4252 = vcmp.eq.s32.totalorder %v4250, 1
  %v4253 = vsel %vm4251, %v4239, 0.0
  %v4254 = vsel %vm4252, %v4241, 0.0
  %v4255 = vsel %vm4251, %v4240, 0.0
  %v4256 = vsel %vm4252, %v4242, 0.0
  %v4257 = vadd.f32 %v4226, %v4253
  %v4258 = vadd.f32 %v4227, %v4254
  %v4259 = vadd.f32 %v4228, %v4255
  %v4260 = vadd.f32 %v4229, %v4256
  %4261 = vrot.lane.b32.xlu0 %v4024, 120
  %v4262 = vpop.permute.xlu0 %4261
  %4263 = vrot.lane.b32.xlu0 %v4026, 120
  %v4264 = vpop.permute.xlu0 %4263
  %4265 = vrot.lane.b32.xlu0 %v4025, 120
  %v4266 = vpop.permute.xlu0 %4265
  %4267 = vrot.lane.b32.xlu0 %v4027, 120
  %v4268 = vpop.permute.xlu0 %4267
  %v4269 = vsel %vm4245, %v4262, %v4266
  %v4270 = vsel %vm4245, %v4264, %v4268
  %v4271 = vsel %vm4245, %v4266, %v4262
  %v4272 = vsel %vm4245, %v4268, %v4264
  %vm4273 = vcmp.ge.s32.totalorder %v30, 120
  %vm4274 = vcmp.ge.s32.totalorder %v31, 120
  %vm4275 = vcmp.lt.s32.totalorder %v30, 135
  %vm4276 = vcmp.lt.s32.totalorder %v31, 135
  %vm4277 = vmand %vm4273, %vm4275
  %vm4278 = vmand %vm4274, %vm4276
  %v4279 = vsel %vm4277, 1, 0
  %v4280 = vsel %vm4278, 1, 0
  %vm4281 = vcmp.eq.s32.totalorder %v4279, 1
  %vm4282 = vcmp.eq.s32.totalorder %v4280, 1
  %v4283 = vsel %vm4281, %v4269, 0.0
  %v4284 = vsel %vm4282, %v4271, 0.0
  %v4285 = vsel %vm4281, %v4270, 0.0
  %v4286 = vsel %vm4282, %v4272, 0.0
  %v4287 = vadd.f32 %v4257, %v4283
  %v4288 = vadd.f32 %v4258, %v4284
  %v4289 = vadd.f32 %v4259, %v4285
  %v4290 = vadd.f32 %v4260, %v4286
  %4291 = vrot.lane.b32.xlu0 %v4024, 119
  %v4292 = vpop.permute.xlu0 %4291
  %4293 = vrot.lane.b32.xlu0 %v4026, 119
  %v4294 = vpop.permute.xlu0 %4293
  %4295 = vrot.lane.b32.xlu0 %v4025, 119
  %v4296 = vpop.permute.xlu0 %4295
  %4297 = vrot.lane.b32.xlu0 %v4027, 119
  %v4298 = vpop.permute.xlu0 %4297
  %vm4299 = vcmp.lt.s32.totalorder %v30, 119
  %v4300 = vsel %vm4299, %v4292, %v4296
  %v4301 = vsel %vm4299, %v4294, %v4298
  %v4302 = vsel %vm4299, %v4296, %v4292
  %v4303 = vsel %vm4299, %v4298, %v4294
  %vm4304 = vcmp.ge.s32.totalorder %v30, 135
  %vm4305 = vcmp.ge.s32.totalorder %v31, 135
  %vm4306 = vcmp.lt.s32.totalorder %v30, 150
  %vm4307 = vcmp.lt.s32.totalorder %v31, 150
  %vm4308 = vmand %vm4304, %vm4306
  %vm4309 = vmand %vm4305, %vm4307
  %v4310 = vsel %vm4308, 1, 0
  %v4311 = vsel %vm4309, 1, 0
  %vm4312 = vcmp.eq.s32.totalorder %v4310, 1
  %vm4313 = vcmp.eq.s32.totalorder %v4311, 1
  %v4314 = vsel %vm4312, %v4300, 0.0
  %v4315 = vsel %vm4313, %v4302, 0.0
  %v4316 = vsel %vm4312, %v4301, 0.0
  %v4317 = vsel %vm4313, %v4303, 0.0
  %v4318 = vadd.f32 %v4287, %v4314
  %v4319 = vadd.f32 %v4288, %v4315
  %v4320 = vadd.f32 %v4289, %v4316
  %v4321 = vadd.f32 %v4290, %v4317
  %4322 = vrot.lane.b32.xlu0 %v4024, 118
  %v4323 = vpop.permute.xlu0 %4322
  %4324 = vrot.lane.b32.xlu0 %v4026, 118
  %v4325 = vpop.permute.xlu0 %4324
  %4326 = vrot.lane.b32.xlu0 %v4025, 118
  %v4327 = vpop.permute.xlu0 %4326
  %4328 = vrot.lane.b32.xlu0 %v4027, 118
  %v4329 = vpop.permute.xlu0 %4328
  %vm4330 = vcmp.lt.s32.totalorder %v30, 118
  %v4331 = vsel %vm4330, %v4323, %v4327
  %v4332 = vsel %vm4330, %v4325, %v4329
  %v4333 = vsel %vm4330, %v4327, %v4323
  %v4334 = vsel %vm4330, %v4329, %v4325
  %vm4335 = vcmp.ge.s32.totalorder %v30, 150
  %vm4336 = vcmp.ge.s32.totalorder %v31, 150
  %vm4337 = vcmp.lt.s32.totalorder %v30, 165
  %vm4338 = vcmp.lt.s32.totalorder %v31, 165
  %vm4339 = vmand %vm4335, %vm4337
  %vm4340 = vmand %vm4336, %vm4338
  %v4341 = vsel %vm4339, 1, 0
  %v4342 = vsel %vm4340, 1, 0
  %vm4343 = vcmp.eq.s32.totalorder %v4341, 1
  %vm4344 = vcmp.eq.s32.totalorder %v4342, 1
  %v4345 = vsel %vm4343, %v4331, 0.0
  %v4346 = vsel %vm4344, %v4333, 0.0
  %v4347 = vsel %vm4343, %v4332, 0.0
  %v4348 = vsel %vm4344, %v4334, 0.0
  %v4349 = vadd.f32 %v4318, %v4345
  %v4350 = vadd.f32 %v4319, %v4346
  %v4351 = vadd.f32 %v4320, %v4347
  %v4352 = vadd.f32 %v4321, %v4348
  %4353 = vrot.lane.b32.xlu0 %v4024, 117
  %v4354 = vpop.permute.xlu0 %4353
  %4355 = vrot.lane.b32.xlu0 %v4026, 117
  %v4356 = vpop.permute.xlu0 %4355
  %4357 = vrot.lane.b32.xlu0 %v4025, 117
  %v4358 = vpop.permute.xlu0 %4357
  %4359 = vrot.lane.b32.xlu0 %v4027, 117
  %v4360 = vpop.permute.xlu0 %4359
  %vm4361 = vcmp.lt.s32.totalorder %v30, 117
  %v4362 = vsel %vm4361, %v4354, %v4358
  %v4363 = vsel %vm4361, %v4356, %v4360
  %v4364 = vsel %vm4361, %v4358, %v4354
  %v4365 = vsel %vm4361, %v4360, %v4356
  %vm4366 = vcmp.ge.s32.totalorder %v30, 165
  %vm4367 = vcmp.ge.s32.totalorder %v31, 165
  %vm4368 = vcmp.lt.s32.totalorder %v30, 180
  %vm4369 = vcmp.lt.s32.totalorder %v31, 180
  %vm4370 = vmand %vm4366, %vm4368
  %vm4371 = vmand %vm4367, %vm4369
  %v4372 = vsel %vm4370, 1, 0
  %v4373 = vsel %vm4371, 1, 0
  %vm4374 = vcmp.eq.s32.totalorder %v4372, 1
  %vm4375 = vcmp.eq.s32.totalorder %v4373, 1
  %v4376 = vsel %vm4374, %v4362, 0.0
  %v4377 = vsel %vm4375, %v4364, 0.0
  %v4378 = vsel %vm4374, %v4363, 0.0
  %v4379 = vsel %vm4375, %v4365, 0.0
  %v4380 = vadd.f32 %v4349, %v4376
  %v4381 = vadd.f32 %v4350, %v4377
  %v4382 = vadd.f32 %v4351, %v4378
  %v4383 = vadd.f32 %v4352, %v4379
  %4384 = vrot.lane.b32.xlu0 %v4024, 116
  %v4385 = vpop.permute.xlu0 %4384
  %4386 = vrot.lane.b32.xlu0 %v4026, 116
  %v4387 = vpop.permute.xlu0 %4386
  %4388 = vrot.lane.b32.xlu0 %v4025, 116
  %v4389 = vpop.permute.xlu0 %4388
  %4390 = vrot.lane.b32.xlu0 %v4027, 116
  %v4391 = vpop.permute.xlu0 %4390
  %vm4392 = vcmp.lt.s32.totalorder %v30, 116
  %v4393 = vsel %vm4392, %v4385, %v4389
  %v4394 = vsel %vm4392, %v4387, %v4391
  %v4395 = vsel %vm4392, %v4389, %v4385
  %v4396 = vsel %vm4392, %v4391, %v4387
  %vm4397 = vcmp.ge.s32.totalorder %v30, 180
  %vm4398 = vcmp.ge.s32.totalorder %v31, 180
  %vm4399 = vcmp.lt.s32.totalorder %v30, 195
  %vm4400 = vcmp.lt.s32.totalorder %v31, 195
  %vm4401 = vmand %vm4397, %vm4399
  %vm4402 = vmand %vm4398, %vm4400
  %v4403 = vsel %vm4401, 1, 0
  %v4404 = vsel %vm4402, 1, 0
  %vm4405 = vcmp.eq.s32.totalorder %v4403, 1
  %vm4406 = vcmp.eq.s32.totalorder %v4404, 1
  %v4407 = vsel %vm4405, %v4393, 0.0
  %v4408 = vsel %vm4406, %v4395, 0.0
  %v4409 = vsel %vm4405, %v4394, 0.0
  %v4410 = vsel %vm4406, %v4396, 0.0
  %v4411 = vadd.f32 %v4380, %v4407
  %v4412 = vadd.f32 %v4381, %v4408
  %v4413 = vadd.f32 %v4382, %v4409
  %v4414 = vadd.f32 %v4383, %v4410
  %4415 = vrot.lane.b32.xlu0 %v4024, 115
  %v4416 = vpop.permute.xlu0 %4415
  %4417 = vrot.lane.b32.xlu0 %v4026, 115
  %v4418 = vpop.permute.xlu0 %4417
  %4419 = vrot.lane.b32.xlu0 %v4025, 115
  %v4420 = vpop.permute.xlu0 %4419
  %4421 = vrot.lane.b32.xlu0 %v4027, 115
  %v4422 = vpop.permute.xlu0 %4421
  %vm4423 = vcmp.lt.s32.totalorder %v30, 115
  %v4424 = vsel %vm4423, %v4416, %v4420
  %v4425 = vsel %vm4423, %v4418, %v4422
  %v4426 = vsel %vm4423, %v4420, %v4416
  %v4427 = vsel %vm4423, %v4422, %v4418
  %vm4428 = vcmp.ge.s32.totalorder %v30, 195
  %vm4429 = vcmp.ge.s32.totalorder %v31, 195
  %vm4430 = vcmp.lt.s32.totalorder %v30, 210
  %vm4431 = vcmp.lt.s32.totalorder %v31, 210
  %vm4432 = vmand %vm4428, %vm4430
  %vm4433 = vmand %vm4429, %vm4431
  %v4434 = vsel %vm4432, 1, 0
  %v4435 = vsel %vm4433, 1, 0
  %vm4436 = vcmp.eq.s32.totalorder %v4434, 1
  %vm4437 = vcmp.eq.s32.totalorder %v4435, 1
  %v4438 = vsel %vm4436, %v4424, 0.0
  %v4439 = vsel %vm4437, %v4426, 0.0
  %v4440 = vsel %vm4436, %v4425, 0.0
  %v4441 = vsel %vm4437, %v4427, 0.0
  %v4442 = vadd.f32 %v4411, %v4438
  %v4443 = vadd.f32 %v4412, %v4439
  %v4444 = vadd.f32 %v4413, %v4440
  %v4445 = vadd.f32 %v4414, %v4441
  %4446 = vrot.lane.b32.xlu0 %v4024, 114
  %v4447 = vpop.permute.xlu0 %4446
  %4448 = vrot.lane.b32.xlu0 %v4026, 114
  %v4449 = vpop.permute.xlu0 %4448
  %4450 = vrot.lane.b32.xlu0 %v4025, 114
  %v4451 = vpop.permute.xlu0 %4450
  %4452 = vrot.lane.b32.xlu0 %v4027, 114
  %v4453 = vpop.permute.xlu0 %4452
  %vm4454 = vcmp.lt.s32.totalorder %v30, 114
  %v4455 = vsel %vm4454, %v4447, %v4451
  %v4456 = vsel %vm4454, %v4449, %v4453
  %v4457 = vsel %vm4454, %v4451, %v4447
  %v4458 = vsel %vm4454, %v4453, %v4449
  %vm4459 = vcmp.ge.s32.totalorder %v30, 210
  %vm4460 = vcmp.ge.s32.totalorder %v31, 210
  %vm4461 = vcmp.lt.s32.totalorder %v30, 225
  %vm4462 = vcmp.lt.s32.totalorder %v31, 225
  %vm4463 = vmand %vm4459, %vm4461
  %vm4464 = vmand %vm4460, %vm4462
  %v4465 = vsel %vm4463, 1, 0
  %v4466 = vsel %vm4464, 1, 0
  %vm4467 = vcmp.eq.s32.totalorder %v4465, 1
  %vm4468 = vcmp.eq.s32.totalorder %v4466, 1
  %v4469 = vsel %vm4467, %v4455, 0.0
  %v4470 = vsel %vm4468, %v4457, 0.0
  %v4471 = vsel %vm4467, %v4456, 0.0
  %v4472 = vsel %vm4468, %v4458, 0.0
  %v4473 = vadd.f32 %v4442, %v4469
  %v4474 = vadd.f32 %v4443, %v4470
  %v4475 = vadd.f32 %v4444, %v4471
  %v4476 = vadd.f32 %v4445, %v4472
  %v4481 = vcombine.low %v4473, %v4474
  %v4482 = vcombine.low %v4475, %v4476
  %vm4485 = vcmask 793604
  %vm4486 = vmor %vm4485, %vm1458
  %4487 = vst.msk [vmem:[%s8] sm:$0xff] %vm4486, %v4481
  %4488 = vst.msk [vmem:[%s8 + $0x8] sm:$0xff] %vm4486, %v4482
  // Predicated region
  $region34: #{architecture_forward.1} parent=0 // pred_check
    _
  $region35: #{architecture_forward.1} parent=0 // pred_check_branch
    %4490 = sbr.rel (0) target = $region37
  $region36: #{architecture_forward.1} parent=0 // pred_region
    _
  $region37: #{architecture_forward.1} parent=0 // pred_fallthru
    _
  // Predicated region
  $region38: #{architecture_forward.1} parent=0 // pred_check
    _
  $region39: #{architecture_forward.1} parent=0 // pred_check_branch
    %4492 = sbr.rel (0) target = $region41
  $region40: #{architecture_forward.1} parent=0 // pred_region
    _
  $region41: #{architecture_forward.1} parent=0 // pred_fallthru
    _

</llo_original>
